<compile_context>
chip_gen: v7x
topology: tpu7x:2x2x1
jax: 0.10.0
libtpu: 0.0.40
codegen_flags: <defaults>
</compile_context>

<pallas_src>
import math
import jax
import jax.numpy as jnp
from jax.experimental import pallas as pl
from jax.experimental.pallas import tpu as pltpu

EPS = 1e-5
INV_STD = 1.0 / math.sqrt(1.0 + EPS)  # eval BN: running_mean=0, running_var=1


# ----------------------------------------------------------------------------
# Pallas kernel 1: fused conv (im2col matmul) + BN affine + PReLU
#   grid = (B,)  ->  per-sample (or shared) (1, N) scale/shift rows broadcast
#   in-kernel; PReLU slopes live in SMEM.
# ----------------------------------------------------------------------------
def _conv_bn_prelu_kernel(a_ref, x_ref, w_ref, s_ref, t_ref, o_ref):
    y = jnp.dot(x_ref[0], w_ref[...], preferred_element_type=jnp.float32)
    y = y * s_ref[0] + t_ref[0]
    a = a_ref[0]
    o_ref[0] = jnp.maximum(y, 0.0) + a * jnp.minimum(y, 0.0)


# Fused conv1 + BN + PReLU + (1x1 conv2) + BN + PReLU (UpBlock skip path):
# the second matmul runs on the tile while it is still in VMEM.
def _conv_bn_prelu_x2_kernel(a_ref, x_ref, w1_ref, s1_ref, t1_ref,
                             w2_ref, s2_ref, t2_ref, o_ref):
    y = jnp.dot(x_ref[0], w1_ref[...], preferred_element_type=jnp.float32)
    y = y * s1_ref[0] + t1_ref[0]
    h = jnp.maximum(y, 0.0) + a_ref[0] * jnp.minimum(y, 0.0)
    y2 = jnp.dot(h, w2_ref[...], preferred_element_type=jnp.float32)
    y2 = y2 * s2_ref[0] + t2_ref[0]
    o_ref[0] = jnp.maximum(y2, 0.0) + a_ref[1] * jnp.minimum(y2, 0.0)


def _row_spec(rows, n):
    """BlockSpec for a (rows, 1, n) scale/shift array; rows is 1 (shared BN)
    or B (per-sample conditional BN)."""
    if rows == 1:
        return pl.BlockSpec((1, 1, n), lambda b: (0, 0, 0))
    return pl.BlockSpec((1, 1, n), lambda b: (b, 0, 0))


def _conv_call(alphas, patches, w1, s1, t1, w2=None, s2=None, t2=None):
    """patches: (B, P, K); w1: (K, N1); s/t: (1|B, 1, N); optional fused 1x1."""
    B, P, K = patches.shape
    N1 = w1.shape[1]
    smem = pl.BlockSpec(memory_space=pltpu.MemorySpace.SMEM)
    x_spec = pl.BlockSpec((1, P, K), lambda b: (b, 0, 0))

    if w2 is None:
        return pl.pallas_call(
            _conv_bn_prelu_kernel,
            out_shape=jax.ShapeDtypeStruct((B, P, N1), jnp.float32),
            grid=(B,),
            in_specs=[smem, x_spec,
                      pl.BlockSpec((K, N1), lambda b: (0, 0)),
                      _row_spec(s1.shape[0], N1), _row_spec(t1.shape[0], N1)],
            out_specs=pl.BlockSpec((1, P, N1), lambda b: (b, 0, 0)),
            compiler_params=pltpu.CompilerParams(
                dimension_semantics=("parallel",)),
        )(alphas, patches, w1, s1, t1)

    N2 = w2.shape[1]
    return pl.pallas_call(
        _conv_bn_prelu_x2_kernel,
        out_shape=jax.ShapeDtypeStruct((B, P, N2), jnp.float32),
        grid=(B,),
        in_specs=[smem, x_spec,
                  pl.BlockSpec((K, N1), lambda b: (0, 0)),
                  _row_spec(s1.shape[0], N1), _row_spec(t1.shape[0], N1),
                  pl.BlockSpec((N1, N2), lambda b: (0, 0)),
                  _row_spec(s2.shape[0], N2), _row_spec(t2.shape[0], N2)],
        out_specs=pl.BlockSpec((1, P, N2), lambda b: (b, 0, 0)),
        compiler_params=pltpu.CompilerParams(
            dimension_semantics=("parallel",)),
    )(alphas, patches, w1, s1, t1, w2, s2, t2)


# ----------------------------------------------------------------------------
# Pallas kernel 2: bidirectional single-layer LSTM (PyTorch gate order i,f,g,o)
#   Input projection is hoisted out of the recurrence (precomputed xproj);
#   both directions share one fori_loop step and one recurrent matmul and
#   write a single (T, B, 2H) buffer.
# ----------------------------------------------------------------------------
def _bilstm_kernel(xproj_ref, whh_ref, out_ref):
    T, B, _ = xproj_ref.shape
    H = whh_ref.shape[0]
    H4 = 4 * H
    whh = whh_ref[...]                       # (H, 8H) = [whh_fwd | whh_bwd]

    def cell(g, c):
        i = jax.nn.sigmoid(g[:, 0 * H:1 * H])
        f = jax.nn.sigmoid(g[:, 1 * H:2 * H])
        gg = jnp.tanh(g[:, 2 * H:3 * H])
        o = jax.nn.sigmoid(g[:, 3 * H:4 * H])
        c_new = f * c + i * gg
        return o * jnp.tanh(c_new), c_new

    def step(s, carry):
        hf, cf, hb, cb = carry
        tb = T - 1 - s
        # One combined recurrent matmul for both directions: (2B, H) x (H, 8H).
        hh = jnp.concatenate([hf, hb], axis=0)
        g_all = jnp.dot(hh, whh, preferred_element_type=jnp.float32)
        gf = xproj_ref[pl.ds(s, 1)][0][:, :H4] + g_all[:B, :H4]
        gb = xproj_ref[pl.ds(tb, 1)][0][:, H4:] + g_all[B:, H4:]
        hf, cf = cell(gf, cf)
        hb, cb = cell(gb, cb)
        out_ref[pl.ds(s, 1), :, 0:H] = hf[None]
        out_ref[pl.ds(tb, 1), :, H:2 * H] = hb[None]
        return hf, cf, hb, cb

    zeros = jnp.zeros((B, H), jnp.float32)
    jax.lax.fori_loop(0, T, step, (zeros, zeros, zeros, zeros))


def bilstm(x_tbc, p):
    """x_tbc: (T, B, C) time-major input. Returns (T, B, 2H)."""
    T, B, C = x_tbc.shape
    H = p["whh_f"].shape[0]
    wih = jnp.concatenate([p["wih_f"], p["wih_b"]], axis=1)          # (C, 8H)
    whh = jnp.concatenate([p["whh_f"], p["whh_b"]], axis=1)          # (H, 8H)
    bias = jnp.concatenate([p["bih_f"] + p["bhh_f"],
                            p["bih_b"] + p["bhh_b"]])[None, :]       # (1, 8H)
    # Hoisted input projection for both directions: a single well-shaped
    # (T*B, C) x (C, 8H) matmul (done in XLA so the kernel needs no in-kernel
    # reshape); only h @ whh + gates remain on the serial recurrent path.
    xproj = (x_tbc.reshape(T * B, C) @ wih + bias).reshape(T, B, 8 * H)
    vmem = pl.BlockSpec(memory_space=pltpu.MemorySpace.VMEM)
    return pl.pallas_call(
        _bilstm_kernel,
        out_shape=jax.ShapeDtypeStruct((T, B, 2 * H), jnp.float32),
        in_specs=[vmem, vmem],
        out_specs=vmem,
    )(xproj, whh)


# ----------------------------------------------------------------------------
# JAX glue (channels-last): im2col, deconv->conv rewrite, block wrappers
# ----------------------------------------------------------------------------
def im2col_nhwc(x, kh, kw, sh, sw):
    B, H, W, C = x.shape
    Ho = (H - kh) // sh + 1
    Wo = (W - kw) // sw + 1
    cols = []
    for p in range(kh):
        for q in range(kw):
            cols.append(x[:, p:p + sh * (Ho - 1) + 1:sh,
                            q:q + sw * (Wo - 1) + 1:sw, :])
    patches = jnp.stack(cols, axis=3)                 # (B, Ho, Wo, kh*kw, C)
    return patches.reshape(B, Ho * Wo, kh * kw * C), Ho, Wo


def dilate_pad_nhwc(x, kh, kw, sh, sw):
    """ConvTranspose2d == zero-dilate + pad + stride-1 conv with flipped W."""
    B, H, W, C = x.shape
    Hd = (H - 1) * sh + 1
    Wd = (W - 1) * sw + 1
    xd = jnp.zeros((B, Hd, Wd, C), x.dtype).at[:, ::sh, ::sw, :].set(x)
    return jnp.pad(xd, ((0, 0), (kh - 1, kh - 1), (kw - 1, kw - 1), (0, 0)))


def down_block(x, pp, kh, kw, sh, sw):
    """Conv2d (NHWC, valid) + BatchNorm2d (eval) + PReLU, one fused kernel."""
    B = x.shape[0]
    Co, Ci = pp["w"].shape[0], pp["w"].shape[1]
    w_mat = pp["w"].transpose(2, 3, 1, 0).reshape(kh * kw * Ci, Co)
    scale = pp["gamma"] * INV_STD                     # (Co,)
    shift = pp["beta"] + pp["b"] * scale              # fold conv bias into BN shift
    s = scale[None, None, :]                          # (1, 1, Co) shared row
    t = shift[None, None, :]
    alphas = jnp.asarray([pp["a"]], jnp.float32)
    patches, Ho, Wo = im2col_nhwc(x, kh, kw, sh, sw)
    out = _conv_call(alphas, patches, w_mat, s, t)
    return out.reshape(B, Ho, Wo, Co)


def _cbn_rows(pp, label, bias):
    """Per-sample scale/shift rows for conditional BN (eval stats)."""
    gamma = pp["gamma_emb"][label] * INV_STD          # (B, Co)
    beta = pp["beta_emb"][label]                      # (B, Co)
    shift = beta + bias[None, :] * gamma
    B, Co = gamma.shape
    return gamma.reshape(B, 1, Co), shift.reshape(B, 1, Co)


def up_block(x, pp1, pp2, label, kh, kw, sh, sw):
    """UpBlock: deconv1 + cBN + PReLU, optionally fused with 1x1 deconv2 + cBN + PReLU."""
    B = x.shape[0]
    xp = dilate_pad_nhwc(x, kh, kw, sh, sw)
    Ci, Co1 = pp1["w"].shape[0], pp1["w"].shape[1]
    w1 = jnp.flip(pp1["w"], axis=(2, 3)).transpose(2, 3, 0, 1).reshape(kh * kw * Ci, Co1)
    s1, t1 = _cbn_rows(pp1, label, pp1["b"])
    patches, Ho, Wo = im2col_nhwc(xp, kh, kw, 1, 1)
    if pp2 is None:
        alphas = jnp.asarray([pp1["a"]], jnp.float32)
        out = _conv_call(alphas, patches, w1, s1, t1)
        return out.reshape(B, Ho, Wo, Co1)
    Co2 = pp2["w"].shape[1]
    w2 = pp2["w"][:, :, 0, 0]                         # 1x1 stride-1 deconv == matmul
    s2, t2 = _cbn_rows(pp2, label, pp2["b"])
    alphas = jnp.asarray([pp1["a"], pp2["a"]], jnp.float32)
    out = _conv_call(alphas, patches, w1, s1, t1, w2, s2, t2)
    return out.reshape(B, Ho, Wo, Co2)


# ----------------------------------------------------------------------------
# Generator
# ----------------------------------------------------------------------------
class GeneratorPallas:
    def __init__(self, Nc, Nt, Nf, ws, factor, key):
        self.Nc, self.Nt1, self.Nf, self.ws, self.factor = Nc, Nt, Nf, ws, factor
        self.Nt2 = Nt * factor
        self.down_k = [math.ceil(k * ws) for k in (20, 12, 8)]
        self.S = [2, 2, 1]
        self.DF1 = (Nt - self.down_k[0]) // self.S[0] + 1
        self.DF2 = (self.DF1 - self.down_k[1]) // self.S[1] + 1
        self.DF3 = (self.DF2 - self.down_k[2]) // self.S[2] + 1
        self.up_k = [0, 0, 0]
        self.up_k[0] = self.DF2 - (self.DF3 - 1) * self.S[2]
        self.up_k[1] = self.DF1 - (self.DF2 - 1) * self.S[1]
        self.up_k[2] = Nt - (self.DF1 - 1) * self.S[0]
        self.D = Nc * 16 * self.DF3
        self.params = self._init_params(key)

    def _init_params(self, key):
        keys = iter(jax.random.split(key, 200))
        Nc, Nf = self.Nc, self.Nf

        def nrm(shape, s=0.1):
            return jax.random.normal(next(keys), shape, jnp.float32) * s

        def down(cin, cout, kh, kw):
            return dict(w=nrm((cout, cin, kh, kw)), b=nrm((cout,)),
                        gamma=1.0 + nrm((cout,)), beta=nrm((cout,)),
                        a=jnp.float32(0.25))

        def up(cin, cout, kh, kw):
            # ConvTranspose2d weight layout: (C_in, C_out, kh, kw)
            return dict(w=nrm((cin, cout, kh, kw)), b=nrm((cout,)),
                        gamma_emb=1.0 + nrm((Nf, cout)), beta_emb=nrm((Nf, cout)),
                        a=jnp.float32(0.25))

        H = 16 * Nc
        p = {
            "ds1": down(1, 2 * Nc, Nc, 1),
            "ds2": down(2 * Nc, 4 * Nc, 1, self.down_k[0]),
            "ds3": down(4 * Nc, 8 * Nc, 1, self.down_k[1]),
            "ds4": down(8 * Nc, 16 * Nc, 1, self.down_k[2]),
            "lstm": dict(
                wih_f=nrm((H, 4 * H)), whh_f=nrm((H, 4 * H)),
                bih_f=nrm((4 * H,)), bhh_f=nrm((4 * H,)),
                wih_b=nrm((H, 4 * H)), whh_b=nrm((H, 4 * H)),
                bih_b=nrm((4 * H,)), bhh_b=nrm((4 * H,))),
            "fc": dict(w=nrm((self.D, Nf)), b=nrm((Nf,))),
            "up1": dict(conv1=up(16 * Nc, 8 * Nc, 1, self.up_k[0])),
            "up2": dict(conv1=up(16 * Nc, 8 * Nc, 1, self.up_k[1]),
                        conv2=up(8 * Nc, 4 * Nc, 1, 1)),
            "up3": dict(conv1=up(8 * Nc, 4 * Nc, 1, self.up_k[2]),
                        conv2=up(4 * Nc, 2 * Nc, 1, 1)),
            "up4": dict(conv1=up(4 * Nc, 2 * Nc, Nc, 1),
                        conv2=up(2 * Nc, Nc, 1, 1)),
            "ext": dict(conv1=up(2 * Nc, Nc, 1, self.factor),
                        conv2=up(Nc, 1, 1, 1)),
        }
        return p

    def forward(self, X_nchw):
        p = self.params
        Nc = self.Nc
        B = X_nchw.shape[0]
        # NCHW -> NHWC once at the input.
        X = jnp.transpose(X_nchw, (0, 2, 3, 1))            # (B, Nc, Nt, 1)

        # -------- Down-sample stage --------
        D1 = down_block(X, p["ds1"], Nc, 1, Nc, 1)         # (B, 1, Nt, 2Nc)
        D2 = down_block(D1, p["ds2"], 1, self.down_k[0], 1, self.S[0])
        D3 = down_block(D2, p["ds3"], 1, self.down_k[1], 1, self.S[1])
        D4 = down_block(D3, p["ds4"], 1, self.down_k[2], 1, self.S[2])  # (B,1,T,C)

        # -------- LSTM stage --------
        C = 16 * Nc
        T = self.DF3
        # torch: r_input = D4.squeeze(2) -> (B, C, T); x = r_input.view(B, T, C)
        r_in_bct = jnp.transpose(D4[:, 0, :, :], (0, 2, 1))   # (B, C, T)
        x_seq = r_in_bct.reshape(B, T, C)                     # .view semantics
        x_tbc = jnp.transpose(x_seq, (1, 0, 2))               # (T, B, C)
        r_out_tb = bilstm(x_tbc, p["lstm"])                   # (T, B, 2C)
        r_out = jnp.transpose(r_out_tb, (1, 0, 2))            # (B, T, 2C)
        flat = r_out.reshape(B, 2 * T * C)
        pooled = 0.5 * (flat[:, 0::2] + flat[:, 1::2])        # AvgPool1d(k=2,s=2)
        # torch: r_out.view(-1, c, 1, T) -> NHWC for the up stage
        r_out4 = jnp.transpose(pooled.reshape(B, C, 1, T), (0, 2, 3, 1))  # (B,1,T,C)

        # -------- FC stage (snlinear; plain XLA matmul) --------
        fc_in = pooled                                        # == Flatten(r_out4 NCHW)
        fc_out = fc_in @ p["fc"]["w"] + p["fc"]["b"]
        label = jnp.argmax(fc_out, axis=1)

        # -------- Up-sample stage --------
        skip_X = jnp.tile(X, (1, 1, 1, Nc))                   # X.repeat(1,Nc,1,1)
        U1 = up_block(r_out4, p["up1"]["conv1"], None, label,
                      1, self.up_k[0], 1, self.S[2])
        U2 = up_block(jnp.concatenate([D3, U1], -1), p["up2"]["conv1"],
                      p["up2"]["conv2"], label, 1, self.up_k[1], 1, self.S[1])
        U3 = up_block(jnp.concatenate([D2, U2], -1), p["up3"]["conv1"],
                      p["up3"]["conv2"], label, 1, self.up_k[2], 1, self.S[0])
        U4 = up_block(jnp.concatenate([D1, U3], -1), p["up4"]["conv1"],
                      p["up4"]["conv2"], label, Nc, 1, Nc, 1)
        out = up_block(jnp.concatenate([skip_X, U4], -1), p["ext"]["conv1"],
                       p["ext"]["conv2"], label, 1, self.factor, 1, self.factor)
        # NHWC -> NCHW once at the output.
        out_nchw = jnp.transpose(out, (0, 3, 1, 2))           # (B, 1, Nc, Nt*factor)
        return out_nchw, fc_out


if __name__ == "__main__":
    # Small, self-consistent configuration.
    Nc, Nt, Nf, ws, factor, B = 4, 64, 4, 0.3, 2, 2
    gen = GeneratorPallas(Nc, Nt, Nf, ws, factor, key=jax.random.PRNGKey(1))

    X = jax.random.normal(jax.random.PRNGKey(0), (B, 1, Nc, Nt), jnp.float32)
    fwd = jax.jit(gen.forward)
    out, fc_out = fwd(X)
    out = jax.block_until_ready(out)
    fc_out = jax.block_until_ready(fc_out)

    assert out.shape == (B, 1, Nc, Nt * factor), out.shape
    assert fc_out.shape == (B, Nf), fc_out.shape
    assert bool(jnp.all(jnp.isfinite(out))) and bool(jnp.all(jnp.isfinite(fc_out)))
    print("KERNEL_OK")
</pallas_src>

<mosaic_0001>
module attributes {stable_mosaic.version = 11 : i64} {
  func.func @_conv_bn_prelu_kernel(%arg0: i32, %arg1: memref<1xf32, #tpu.memory_space<smem>>, %arg2: memref<1x64x4xf32, #tpu.memory_space<vmem>>, %arg3: memref<4x8xf32, #tpu.memory_space<vmem>>, %arg4: memref<1x1x8xf32, #tpu.memory_space<vmem>>, %arg5: memref<1x1x8xf32, #tpu.memory_space<vmem>>, %arg6: memref<1x64x8xf32, #tpu.memory_space<vmem>>) attributes {dimension_semantics = [#tpu.dimension_semantics<parallel>], iteration_bounds = array<i64: 2>, scalar_prefetch = 0 : i64, scratch_operands = 0 : i64, tpu.core_type = #tpu.core_type<tc>, window_params = [{transform_indices = @transform_0, window_bounds = array<i64: 1>}, {transform_indices = @transform_1, window_bounds = array<i64: 1, 64, 4>}, {pipeline_mode = #tpu.pipeline_mode<synchronous>, transform_indices = @transform_2, window_bounds = array<i64: 4, 8>}, {pipeline_mode = #tpu.pipeline_mode<synchronous>, transform_indices = @transform_3, window_bounds = array<i64: 1, 1, 8>}, {pipeline_mode = #tpu.pipeline_mode<synchronous>, transform_indices = @transform_4, window_bounds = array<i64: 1, 1, 8>}, {transform_indices = @transform_5, window_bounds = array<i64: 1, 64, 8>}]} {
    %c0 = arith.constant 0 : index
    %c0_0 = arith.constant 0 : index
    %c0_1 = arith.constant 0 : index
    %0 = vector.load %arg2[%c0, %c0_0, %c0_1] : memref<1x64x4xf32, #tpu.memory_space<vmem>>, vector<1x64x4xf32>
    %1 = vector.shape_cast %0 : vector<1x64x4xf32> to vector<64x4xf32>
    %c0_2 = arith.constant 0 : index
    %c0_3 = arith.constant 0 : index
    %2 = vector.load %arg3[%c0_2, %c0_3] : memref<4x8xf32, #tpu.memory_space<vmem>>, vector<4x8xf32>
    %cst = arith.constant dense<0.000000e+00> : vector<64x8xf32>
    %3 = tpu.matmul %1, %2, %cst {dimension_numbers = #tpu.dot_dimension_numbers<[1], [0], [0], [1], [0, 0, 1, 1], [], []>} : vector<64x4xf32>, vector<4x8xf32>, vector<64x8xf32> -> vector<64x8xf32>
    %c0_4 = arith.constant 0 : index
    %c0_5 = arith.constant 0 : index
    %c0_6 = arith.constant 0 : index
    %4 = vector.load %arg4[%c0_4, %c0_5, %c0_6] : memref<1x1x8xf32, #tpu.memory_space<vmem>>, vector<1x1x8xf32>
    %5 = vector.shape_cast %4 : vector<1x1x8xf32> to vector<1x8xf32>
    %6 = vector.broadcast %5 : vector<1x8xf32> to vector<64x8xf32>
    %7 = arith.mulf %3, %6 : vector<64x8xf32>
    %c0_7 = arith.constant 0 : index
    %c0_8 = arith.constant 0 : index
    %c0_9 = arith.constant 0 : index
    %8 = vector.load %arg5[%c0_7, %c0_8, %c0_9] : memref<1x1x8xf32, #tpu.memory_space<vmem>>, vector<1x1x8xf32>
    %9 = vector.shape_cast %8 : vector<1x1x8xf32> to vector<1x8xf32>
    %10 = vector.broadcast %9 : vector<1x8xf32> to vector<64x8xf32>
    %11 = arith.addf %7, %10 : vector<64x8xf32>
    %c0_10 = arith.constant 0 : index
    %12 = memref.load %arg1[%c0_10] : memref<1xf32, #tpu.memory_space<smem>>
    %cst_11 = arith.constant 0.000000e+00 : f32
    %13 = vector.broadcast %cst_11 : f32 to vector<64x8xf32>
    %14 = arith.maximumf %11, %13 : vector<64x8xf32>
    %cst_12 = arith.constant 0.000000e+00 : f32
    %15 = vector.broadcast %cst_12 : f32 to vector<64x8xf32>
    %16 = arith.minimumf %11, %15 : vector<64x8xf32>
    %17 = vector.broadcast %12 : f32 to vector<64x8xf32>
    %18 = arith.mulf %17, %16 : vector<64x8xf32>
    %19 = arith.addf %14, %18 : vector<64x8xf32>
    %c0_13 = arith.constant 0 : index
    %c0_14 = arith.constant 0 : index
    %c0_15 = arith.constant 0 : index
    %20 = vector.load %arg6[%c0_13, %c0_14, %c0_15] : memref<1x64x8xf32, #tpu.memory_space<vmem>>, vector<1x64x8xf32>
    %21 = vector.shape_cast %20 : vector<1x64x8xf32> to vector<64x8xf32>
    %22 = vector.shape_cast %19 : vector<64x8xf32> to vector<1x64x8xf32>
    tpu.vector_store %arg6[%c0_13, %c0_14, %c0_15], %22 {strides = array<i32>} : memref<1x64x8xf32, #tpu.memory_space<vmem>>, vector<1x64x8xf32>,
    return
  }
  func.func @transform_0(%arg0: i32) -> i32 {
    %c0_i32 = arith.constant 0 : i32
    %c0_i32_0 = arith.constant 0 : i32
    return %c0_i32 : i32
  }
  func.func @transform_1(%arg0: i32) -> (i32, i32, i32) {
    %c0_i32 = arith.constant 0 : i32
    %c0_i32_0 = arith.constant 0 : i32
    %c0_i32_1 = arith.constant 0 : i32
    return %arg0, %c0_i32, %c0_i32_0 : i32, i32, i32
  }
  func.func @transform_2(%arg0: i32) -> (i32, i32) {
    %c0_i32 = arith.constant 0 : i32
    %c0_i32_0 = arith.constant 0 : i32
    %c0_i32_1 = arith.constant 0 : i32
    return %c0_i32, %c0_i32_0 : i32, i32
  }
  func.func @transform_3(%arg0: i32) -> (i32, i32, i32) {
    %c0_i32 = arith.constant 0 : i32
    %c0_i32_0 = arith.constant 0 : i32
    %c0_i32_1 = arith.constant 0 : i32
    %c0_i32_2 = arith.constant 0 : i32
    return %c0_i32, %c0_i32_0, %c0_i32_1 : i32, i32, i32
  }
  func.func @transform_4(%arg0: i32) -> (i32, i32, i32) {
    %c0_i32 = arith.constant 0 : i32
    %c0_i32_0 = arith.constant 0 : i32
    %c0_i32_1 = arith.constant 0 : i32
    %c0_i32_2 = arith.constant 0 : i32
    return %c0_i32, %c0_i32_0, %c0_i32_1 : i32, i32, i32
  }
  func.func @transform_5(%arg0: i32) -> (i32, i32, i32) {
    %c0_i32 = arith.constant 0 : i32
    %c0_i32_0 = arith.constant 0 : i32
    %c0_i32_1 = arith.constant 0 : i32
    return %arg0, %c0_i32, %c0_i32_0 : i32, i32, i32
  }
}

module attributes {stable_mosaic.version = 11 : i64} {
  func.func @_conv_bn_prelu_kernel(%arg0: i32, %arg1: memref<1xf32, #tpu.memory_space<smem>>, %arg2: memref<1x30x48xf32, #tpu.memory_space<vmem>>, %arg3: memref<48x16xf32, #tpu.memory_space<vmem>>, %arg4: memref<1x1x16xf32, #tpu.memory_space<vmem>>, %arg5: memref<1x1x16xf32, #tpu.memory_space<vmem>>, %arg6: memref<1x30x16xf32, #tpu.memory_space<vmem>>) attributes {dimension_semantics = [#tpu.dimension_semantics<parallel>], iteration_bounds = array<i64: 2>, scalar_prefetch = 0 : i64, scratch_operands = 0 : i64, tpu.core_type = #tpu.core_type<tc>, window_params = [{transform_indices = @transform_0, window_bounds = array<i64: 1>}, {transform_indices = @transform_1, window_bounds = array<i64: 1, 30, 48>}, {pipeline_mode = #tpu.pipeline_mode<synchronous>, transform_indices = @transform_2, window_bounds = array<i64: 48, 16>}, {pipeline_mode = #tpu.pipeline_mode<synchronous>, transform_indices = @transform_3, window_bounds = array<i64: 1, 1, 16>}, {pipeline_mode = #tpu.pipeline_mode<synchronous>, transform_indices = @transform_4, window_bounds = array<i64: 1, 1, 16>}, {transform_indices = @transform_5, window_bounds = array<i64: 1, 30, 16>}]} {
    %c0 = arith.constant 0 : index
    %c0_0 = arith.constant 0 : index
    %c0_1 = arith.constant 0 : index
    %0 = vector.load %arg2[%c0, %c0_0, %c0_1] : memref<1x30x48xf32, #tpu.memory_space<vmem>>, vector<1x30x48xf32>
    %1 = vector.shape_cast %0 : vector<1x30x48xf32> to vector<30x48xf32>
    %c0_2 = arith.constant 0 : index
    %c0_3 = arith.constant 0 : index
    %2 = vector.load %arg3[%c0_2, %c0_3] : memref<48x16xf32, #tpu.memory_space<vmem>>, vector<48x16xf32>
    %cst = arith.constant dense<0.000000e+00> : vector<30x16xf32>
    %3 = tpu.matmul %1, %2, %cst {dimension_numbers = #tpu.dot_dimension_numbers<[1], [0], [0], [1], [0, 0, 1, 1], [], []>} : vector<30x48xf32>, vector<48x16xf32>, vector<30x16xf32> -> vector<30x16xf32>
    %c0_4 = arith.constant 0 : index
    %c0_5 = arith.constant 0 : index
    %c0_6 = arith.constant 0 : index
    %4 = vector.load %arg4[%c0_4, %c0_5, %c0_6] : memref<1x1x16xf32, #tpu.memory_space<vmem>>, vector<1x1x16xf32>
    %5 = vector.shape_cast %4 : vector<1x1x16xf32> to vector<1x16xf32>
    %6 = vector.broadcast %5 : vector<1x16xf32> to vector<30x16xf32>
    %7 = arith.mulf %3, %6 : vector<30x16xf32>
    %c0_7 = arith.constant 0 : index
    %c0_8 = arith.constant 0 : index
    %c0_9 = arith.constant 0 : index
    %8 = vector.load %arg5[%c0_7, %c0_8, %c0_9] : memref<1x1x16xf32, #tpu.memory_space<vmem>>, vector<1x1x16xf32>
    %9 = vector.shape_cast %8 : vector<1x1x16xf32> to vector<1x16xf32>
    %10 = vector.broadcast %9 : vector<1x16xf32> to vector<30x16xf32>
    %11 = arith.addf %7, %10 : vector<30x16xf32>
    %c0_10 = arith.constant 0 : index
    %12 = memref.load %arg1[%c0_10] : memref<1xf32, #tpu.memory_space<smem>>
    %cst_11 = arith.constant 0.000000e+00 : f32
    %13 = vector.broadcast %cst_11 : f32 to vector<30x16xf32>
    %14 = arith.maximumf %11, %13 : vector<30x16xf32>
    %cst_12 = arith.constant 0.000000e+00 : f32
    %15 = vector.broadcast %cst_12 : f32 to vector<30x16xf32>
    %16 = arith.minimumf %11, %15 : vector<30x16xf32>
    %17 = vector.broadcast %12 : f32 to vector<30x16xf32>
    %18 = arith.mulf %17, %16 : vector<30x16xf32>
    %19 = arith.addf %14, %18 : vector<30x16xf32>
    %c0_13 = arith.constant 0 : index
    %c0_14 = arith.constant 0 : index
    %c0_15 = arith.constant 0 : index
    %20 = vector.load %arg6[%c0_13, %c0_14, %c0_15] : memref<1x30x16xf32, #tpu.memory_space<vmem>>, vector<1x30x16xf32>
    %21 = vector.shape_cast %20 : vector<1x30x16xf32> to vector<30x16xf32>
    %22 = vector.shape_cast %19 : vector<30x16xf32> to vector<1x30x16xf32>
    tpu.vector_store %arg6[%c0_13, %c0_14, %c0_15], %22 {strides = array<i32>} : memref<1x30x16xf32, #tpu.memory_space<vmem>>, vector<1x30x16xf32>,
    return
  }
  func.func @transform_0(%arg0: i32) -> i32 {
    %c0_i32 = arith.constant 0 : i32
    %c0_i32_0 = arith.constant 0 : i32
    return %c0_i32 : i32
  }
  func.func @transform_1(%arg0: i32) -> (i32, i32, i32) {
    %c0_i32 = arith.constant 0 : i32
    %c0_i32_0 = arith.constant 0 : i32
    %c0_i32_1 = arith.constant 0 : i32
    return %arg0, %c0_i32, %c0_i32_0 : i32, i32, i32
  }
  func.func @transform_2(%arg0: i32) -> (i32, i32) {
    %c0_i32 = arith.constant 0 : i32
    %c0_i32_0 = arith.constant 0 : i32
    %c0_i32_1 = arith.constant 0 : i32
    return %c0_i32, %c0_i32_0 : i32, i32
  }
  func.func @transform_3(%arg0: i32) -> (i32, i32, i32) {
    %c0_i32 = arith.constant 0 : i32
    %c0_i32_0 = arith.constant 0 : i32
    %c0_i32_1 = arith.constant 0 : i32
    %c0_i32_2 = arith.constant 0 : i32
    return %c0_i32, %c0_i32_0, %c0_i32_1 : i32, i32, i32
  }
  func.func @transform_4(%arg0: i32) -> (i32, i32, i32) {
    %c0_i32 = arith.constant 0 : i32
    %c0_i32_0 = arith.constant 0 : i32
    %c0_i32_1 = arith.constant 0 : i32
    %c0_i32_2 = arith.constant 0 : i32
    return %c0_i32, %c0_i32_0, %c0_i32_1 : i32, i32, i32
  }
  func.func @transform_5(%arg0: i32) -> (i32, i32, i32) {
    %c0_i32 = arith.constant 0 : i32
    %c0_i32_0 = arith.constant 0 : i32
    %c0_i32_1 = arith.constant 0 : i32
    return %arg0, %c0_i32, %c0_i32_0 : i32, i32, i32
  }
}

module attributes {stable_mosaic.version = 11 : i64} {
  func.func @_conv_bn_prelu_kernel(%arg0: i32, %arg1: memref<1xf32, #tpu.memory_space<smem>>, %arg2: memref<1x14x64xf32, #tpu.memory_space<vmem>>, %arg3: memref<64x32xf32, #tpu.memory_space<vmem>>, %arg4: memref<1x1x32xf32, #tpu.memory_space<vmem>>, %arg5: memref<1x1x32xf32, #tpu.memory_space<vmem>>, %arg6: memref<1x14x32xf32, #tpu.memory_space<vmem>>) attributes {dimension_semantics = [#tpu.dimension_semantics<parallel>], iteration_bounds = array<i64: 2>, scalar_prefetch = 0 : i64, scratch_operands = 0 : i64, tpu.core_type = #tpu.core_type<tc>, window_params = [{transform_indices = @transform_0, window_bounds = array<i64: 1>}, {transform_indices = @transform_1, window_bounds = array<i64: 1, 14, 64>}, {pipeline_mode = #tpu.pipeline_mode<synchronous>, transform_indices = @transform_2, window_bounds = array<i64: 64, 32>}, {pipeline_mode = #tpu.pipeline_mode<synchronous>, transform_indices = @transform_3, window_bounds = array<i64: 1, 1, 32>}, {pipeline_mode = #tpu.pipeline_mode<synchronous>, transform_indices = @transform_4, window_bounds = array<i64: 1, 1, 32>}, {transform_indices = @transform_5, window_bounds = array<i64: 1, 14, 32>}]} {
    %c0 = arith.constant 0 : index
    %c0_0 = arith.constant 0 : index
    %c0_1 = arith.constant 0 : index
    %0 = vector.load %arg2[%c0, %c0_0, %c0_1] : memref<1x14x64xf32, #tpu.memory_space<vmem>>, vector<1x14x64xf32>
    %1 = vector.shape_cast %0 : vector<1x14x64xf32> to vector<14x64xf32>
    %c0_2 = arith.constant 0 : index
    %c0_3 = arith.constant 0 : index
    %2 = vector.load %arg3[%c0_2, %c0_3] : memref<64x32xf32, #tpu.memory_space<vmem>>, vector<64x32xf32>
    %cst = arith.constant dense<0.000000e+00> : vector<14x32xf32>
    %3 = tpu.matmul %1, %2, %cst {dimension_numbers = #tpu.dot_dimension_numbers<[1], [0], [0], [1], [0, 0, 1, 1], [], []>} : vector<14x64xf32>, vector<64x32xf32>, vector<14x32xf32> -> vector<14x32xf32>
    %c0_4 = arith.constant 0 : index
    %c0_5 = arith.constant 0 : index
    %c0_6 = arith.constant 0 : index
    %4 = vector.load %arg4[%c0_4, %c0_5, %c0_6] : memref<1x1x32xf32, #tpu.memory_space<vmem>>, vector<1x1x32xf32>
    %5 = vector.shape_cast %4 : vector<1x1x32xf32> to vector<1x32xf32>
    %6 = vector.broadcast %5 : vector<1x32xf32> to vector<14x32xf32>
    %7 = arith.mulf %3, %6 : vector<14x32xf32>
    %c0_7 = arith.constant 0 : index
    %c0_8 = arith.constant 0 : index
    %c0_9 = arith.constant 0 : index
    %8 = vector.load %arg5[%c0_7, %c0_8, %c0_9] : memref<1x1x32xf32, #tpu.memory_space<vmem>>, vector<1x1x32xf32>
    %9 = vector.shape_cast %8 : vector<1x1x32xf32> to vector<1x32xf32>
    %10 = vector.broadcast %9 : vector<1x32xf32> to vector<14x32xf32>
    %11 = arith.addf %7, %10 : vector<14x32xf32>
    %c0_10 = arith.constant 0 : index
    %12 = memref.load %arg1[%c0_10] : memref<1xf32, #tpu.memory_space<smem>>
    %cst_11 = arith.constant 0.000000e+00 : f32
    %13 = vector.broadcast %cst_11 : f32 to vector<14x32xf32>
    %14 = arith.maximumf %11, %13 : vector<14x32xf32>
    %cst_12 = arith.constant 0.000000e+00 : f32
    %15 = vector.broadcast %cst_12 : f32 to vector<14x32xf32>
    %16 = arith.minimumf %11, %15 : vector<14x32xf32>
    %17 = vector.broadcast %12 : f32 to vector<14x32xf32>
    %18 = arith.mulf %17, %16 : vector<14x32xf32>
    %19 = arith.addf %14, %18 : vector<14x32xf32>
    %c0_13 = arith.constant 0 : index
    %c0_14 = arith.constant 0 : index
    %c0_15 = arith.constant 0 : index
    %20 = vector.load %arg6[%c0_13, %c0_14, %c0_15] : memref<1x14x32xf32, #tpu.memory_space<vmem>>, vector<1x14x32xf32>
    %21 = vector.shape_cast %20 : vector<1x14x32xf32> to vector<14x32xf32>
    %22 = vector.shape_cast %19 : vector<14x32xf32> to vector<1x14x32xf32>
    tpu.vector_store %arg6[%c0_13, %c0_14, %c0_15], %22 {strides = array<i32>} : memref<1x14x32xf32, #tpu.memory_space<vmem>>, vector<1x14x32xf32>,
    return
  }
  func.func @transform_0(%arg0: i32) -> i32 {
    %c0_i32 = arith.constant 0 : i32
    %c0_i32_0 = arith.constant 0 : i32
    return %c0_i32 : i32
  }
  func.func @transform_1(%arg0: i32) -> (i32, i32, i32) {
    %c0_i32 = arith.constant 0 : i32
    %c0_i32_0 = arith.constant 0 : i32
    %c0_i32_1 = arith.constant 0 : i32
    return %arg0, %c0_i32, %c0_i32_0 : i32, i32, i32
  }
  func.func @transform_2(%arg0: i32) -> (i32, i32) {
    %c0_i32 = arith.constant 0 : i32
    %c0_i32_0 = arith.constant 0 : i32
    %c0_i32_1 = arith.constant 0 : i32
    return %c0_i32, %c0_i32_0 : i32, i32
  }
  func.func @transform_3(%arg0: i32) -> (i32, i32, i32) {
    %c0_i32 = arith.constant 0 : i32
    %c0_i32_0 = arith.constant 0 : i32
    %c0_i32_1 = arith.constant 0 : i32
    %c0_i32_2 = arith.constant 0 : i32
    return %c0_i32, %c0_i32_0, %c0_i32_1 : i32, i32, i32
  }
  func.func @transform_4(%arg0: i32) -> (i32, i32, i32) {
    %c0_i32 = arith.constant 0 : i32
    %c0_i32_0 = arith.constant 0 : i32
    %c0_i32_1 = arith.constant 0 : i32
    %c0_i32_2 = arith.constant 0 : i32
    return %c0_i32, %c0_i32_0, %c0_i32_1 : i32, i32, i32
  }
  func.func @transform_5(%arg0: i32) -> (i32, i32, i32) {
    %c0_i32 = arith.constant 0 : i32
    %c0_i32_0 = arith.constant 0 : i32
    %c0_i32_1 = arith.constant 0 : i32
    return %arg0, %c0_i32, %c0_i32_0 : i32, i32, i32
  }
}

module attributes {stable_mosaic.version = 11 : i64} {
  func.func @_conv_bn_prelu_kernel(%arg0: i32, %arg1: memref<1xf32, #tpu.memory_space<smem>>, %arg2: memref<1x12x96xf32, #tpu.memory_space<vmem>>, %arg3: memref<96x64xf32, #tpu.memory_space<vmem>>, %arg4: memref<1x1x64xf32, #tpu.memory_space<vmem>>, %arg5: memref<1x1x64xf32, #tpu.memory_space<vmem>>, %arg6: memref<1x12x64xf32, #tpu.memory_space<vmem>>) attributes {dimension_semantics = [#tpu.dimension_semantics<parallel>], iteration_bounds = array<i64: 2>, scalar_prefetch = 0 : i64, scratch_operands = 0 : i64, tpu.core_type = #tpu.core_type<tc>, window_params = [{transform_indices = @transform_0, window_bounds = array<i64: 1>}, {transform_indices = @transform_1, window_bounds = array<i64: 1, 12, 96>}, {pipeline_mode = #tpu.pipeline_mode<synchronous>, transform_indices = @transform_2, window_bounds = array<i64: 96, 64>}, {pipeline_mode = #tpu.pipeline_mode<synchronous>, transform_indices = @transform_3, window_bounds = array<i64: 1, 1, 64>}, {pipeline_mode = #tpu.pipeline_mode<synchronous>, transform_indices = @transform_4, window_bounds = array<i64: 1, 1, 64>}, {transform_indices = @transform_5, window_bounds = array<i64: 1, 12, 64>}]} {
    %c0 = arith.constant 0 : index
    %c0_0 = arith.constant 0 : index
    %c0_1 = arith.constant 0 : index
    %0 = vector.load %arg2[%c0, %c0_0, %c0_1] : memref<1x12x96xf32, #tpu.memory_space<vmem>>, vector<1x12x96xf32>
    %1 = vector.shape_cast %0 : vector<1x12x96xf32> to vector<12x96xf32>
    %c0_2 = arith.constant 0 : index
    %c0_3 = arith.constant 0 : index
    %2 = vector.load %arg3[%c0_2, %c0_3] : memref<96x64xf32, #tpu.memory_space<vmem>>, vector<96x64xf32>
    %cst = arith.constant dense<0.000000e+00> : vector<12x64xf32>
    %3 = tpu.matmul %1, %2, %cst {dimension_numbers = #tpu.dot_dimension_numbers<[1], [0], [0], [1], [0, 0, 1, 1], [], []>} : vector<12x96xf32>, vector<96x64xf32>, vector<12x64xf32> -> vector<12x64xf32>
    %c0_4 = arith.constant 0 : index
    %c0_5 = arith.constant 0 : index
    %c0_6 = arith.constant 0 : index
    %4 = vector.load %arg4[%c0_4, %c0_5, %c0_6] : memref<1x1x64xf32, #tpu.memory_space<vmem>>, vector<1x1x64xf32>
    %5 = vector.shape_cast %4 : vector<1x1x64xf32> to vector<1x64xf32>
    %6 = vector.broadcast %5 : vector<1x64xf32> to vector<12x64xf32>
    %7 = arith.mulf %3, %6 : vector<12x64xf32>
    %c0_7 = arith.constant 0 : index
    %c0_8 = arith.constant 0 : index
    %c0_9 = arith.constant 0 : index
    %8 = vector.load %arg5[%c0_7, %c0_8, %c0_9] : memref<1x1x64xf32, #tpu.memory_space<vmem>>, vector<1x1x64xf32>
    %9 = vector.shape_cast %8 : vector<1x1x64xf32> to vector<1x64xf32>
    %10 = vector.broadcast %9 : vector<1x64xf32> to vector<12x64xf32>
    %11 = arith.addf %7, %10 : vector<12x64xf32>
    %c0_10 = arith.constant 0 : index
    %12 = memref.load %arg1[%c0_10] : memref<1xf32, #tpu.memory_space<smem>>
    %cst_11 = arith.constant 0.000000e+00 : f32
    %13 = vector.broadcast %cst_11 : f32 to vector<12x64xf32>
    %14 = arith.maximumf %11, %13 : vector<12x64xf32>
    %cst_12 = arith.constant 0.000000e+00 : f32
    %15 = vector.broadcast %cst_12 : f32 to vector<12x64xf32>
    %16 = arith.minimumf %11, %15 : vector<12x64xf32>
    %17 = vector.broadcast %12 : f32 to vector<12x64xf32>
    %18 = arith.mulf %17, %16 : vector<12x64xf32>
    %19 = arith.addf %14, %18 : vector<12x64xf32>
    %c0_13 = arith.constant 0 : index
    %c0_14 = arith.constant 0 : index
    %c0_15 = arith.constant 0 : index
    %20 = vector.load %arg6[%c0_13, %c0_14, %c0_15] : memref<1x12x64xf32, #tpu.memory_space<vmem>>, vector<1x12x64xf32>
    %21 = vector.shape_cast %20 : vector<1x12x64xf32> to vector<12x64xf32>
    %22 = vector.shape_cast %19 : vector<12x64xf32> to vector<1x12x64xf32>
    tpu.vector_store %arg6[%c0_13, %c0_14, %c0_15], %22 {strides = array<i32>} : memref<1x12x64xf32, #tpu.memory_space<vmem>>, vector<1x12x64xf32>,
    return
  }
  func.func @transform_0(%arg0: i32) -> i32 {
    %c0_i32 = arith.constant 0 : i32
    %c0_i32_0 = arith.constant 0 : i32
    return %c0_i32 : i32
  }
  func.func @transform_1(%arg0: i32) -> (i32, i32, i32) {
    %c0_i32 = arith.constant 0 : i32
    %c0_i32_0 = arith.constant 0 : i32
    %c0_i32_1 = arith.constant 0 : i32
    return %arg0, %c0_i32, %c0_i32_0 : i32, i32, i32
  }
  func.func @transform_2(%arg0: i32) -> (i32, i32) {
    %c0_i32 = arith.constant 0 : i32
    %c0_i32_0 = arith.constant 0 : i32
    %c0_i32_1 = arith.constant 0 : i32
    return %c0_i32, %c0_i32_0 : i32, i32
  }
  func.func @transform_3(%arg0: i32) -> (i32, i32, i32) {
    %c0_i32 = arith.constant 0 : i32
    %c0_i32_0 = arith.constant 0 : i32
    %c0_i32_1 = arith.constant 0 : i32
    %c0_i32_2 = arith.constant 0 : i32
    return %c0_i32, %c0_i32_0, %c0_i32_1 : i32, i32, i32
  }
  func.func @transform_4(%arg0: i32) -> (i32, i32, i32) {
    %c0_i32 = arith.constant 0 : i32
    %c0_i32_0 = arith.constant 0 : i32
    %c0_i32_1 = arith.constant 0 : i32
    %c0_i32_2 = arith.constant 0 : i32
    return %c0_i32, %c0_i32_0, %c0_i32_1 : i32, i32, i32
  }
  func.func @transform_5(%arg0: i32) -> (i32, i32, i32) {
    %c0_i32 = arith.constant 0 : i32
    %c0_i32_0 = arith.constant 0 : i32
    %c0_i32_1 = arith.constant 0 : i32
    return %arg0, %c0_i32, %c0_i32_0 : i32, i32, i32
  }
}

module attributes {stable_mosaic.version = 11 : i64} {
  func.func @_bilstm_kernel(%arg0: memref<12x2x512xf32, #tpu.memory_space<vmem>>, %arg1: memref<64x512xf32, #tpu.memory_space<vmem>>, %arg2: memref<12x2x128xf32, #tpu.memory_space<vmem>>) attributes {dimension_semantics = [], scalar_prefetch = 0 : i64, scratch_operands = 0 : i64, tpu.core_type = #tpu.core_type<tc>} {
    %c0 = arith.constant 0 : index
    %c0_0 = arith.constant 0 : index
    %0 = vector.load %arg1[%c0, %c0_0] : memref<64x512xf32, #tpu.memory_space<vmem>>, vector<64x512xf32>
    %cst = arith.constant 0.000000e+00 : f32
    %1 = vector.broadcast %cst : f32 to vector<2x64xf32>
    %c0_i32 = arith.constant 0 : i32
    %c12_i32 = arith.constant 12 : i32
    %2 = arith.addi %c0_i32, %c12_i32 : i32
    %c1_i32 = arith.constant 1 : i32
    %3:4 = scf.for %arg3 = %c0_i32 to %2 step %c1_i32 iter_args(%arg4 = %1, %arg5 = %1, %arg6 = %1, %arg7 = %1) -> (vector<2x64xf32>, vector<2x64xf32>, vector<2x64xf32>, vector<2x64xf32>)  : i32 {
      %c11_i32 = arith.constant 11 : i32
      %4 = arith.subi %c11_i32, %arg3 : i32
      %5 = tpu.concatenate %arg4, %arg6 in 0 : vector<2x64xf32>, vector<2x64xf32> -> vector<4x64xf32>
      %cst_2 = arith.constant dense<0.000000e+00> : vector<4x512xf32>
      %6 = tpu.matmul %5, %0, %cst_2 {dimension_numbers = #tpu.dot_dimension_numbers<[1], [0], [0], [1], [0, 0, 1, 1], [], []>} : vector<4x64xf32>, vector<64x512xf32>, vector<4x512xf32> -> vector<4x512xf32>
      %7 = arith.index_cast %arg3 : i32 to index
      %c0_3 = arith.constant 0 : index
      %c0_4 = arith.constant 0 : index
      %8 = vector.load %arg0[%7, %c0_3, %c0_4] : memref<12x2x512xf32, #tpu.memory_space<vmem>>, vector<1x2x512xf32>
      %9 = vector.shape_cast %8 : vector<1x2x512xf32> to vector<2x512xf32>
      %10 = vector.extract_strided_slice %9 {offsets = [0, 0], sizes = [2, 256], strides = [1, 1]} : vector<2x512xf32> to vector<2x256xf32>
      %11 = vector.extract_strided_slice %6 {offsets = [0, 0], sizes = [2, 256], strides = [1, 1]} : vector<4x512xf32> to vector<2x256xf32>
      %12 = arith.addf %10, %11 : vector<2x256xf32>
      %13 = arith.index_cast %4 : i32 to index
      %c0_5 = arith.constant 0 : index
      %c0_6 = arith.constant 0 : index
      %14 = vector.load %arg0[%13, %c0_5, %c0_6] : memref<12x2x512xf32, #tpu.memory_space<vmem>>, vector<1x2x512xf32>
      %15 = vector.shape_cast %14 : vector<1x2x512xf32> to vector<2x512xf32>
      %16 = vector.extract_strided_slice %15 {offsets = [0, 256], sizes = [2, 256], strides = [1, 1]} : vector<2x512xf32> to vector<2x256xf32>
      %17 = vector.extract_strided_slice %6 {offsets = [2, 256], sizes = [2, 256], strides = [1, 1]} : vector<4x512xf32> to vector<2x256xf32>
      %18 = arith.addf %16, %17 : vector<2x256xf32>
      %19 = vector.extract_strided_slice %12 {offsets = [0, 0], sizes = [2, 64], strides = [1, 1]} : vector<2x256xf32> to vector<2x64xf32>
      %20 = arith.negf %19 : vector<2x64xf32>
      %21 = math.exp %20 : vector<2x64xf32>
      %cst_7 = arith.constant 1.000000e+00 : f32
      %22 = vector.broadcast %cst_7 : f32 to vector<2x64xf32>
      %23 = arith.addf %22, %21 : vector<2x64xf32>
      %24 = arith.divf %22, %23 : vector<2x64xf32>
      %25 = vector.extract_strided_slice %12 {offsets = [0, 64], sizes = [2, 64], strides = [1, 1]} : vector<2x256xf32> to vector<2x64xf32>
      %26 = arith.negf %25 : vector<2x64xf32>
      %27 = math.exp %26 : vector<2x64xf32>
      %cst_8 = arith.constant 1.000000e+00 : f32
      %28 = vector.broadcast %cst_8 : f32 to vector<2x64xf32>
      %29 = arith.addf %28, %27 : vector<2x64xf32>
      %30 = arith.divf %28, %29 : vector<2x64xf32>
      %31 = vector.extract_strided_slice %12 {offsets = [0, 128], sizes = [2, 64], strides = [1, 1]} : vector<2x256xf32> to vector<2x64xf32>
      %32 = math.tanh %31 : vector<2x64xf32>
      %33 = vector.extract_strided_slice %12 {offsets = [0, 192], sizes = [2, 64], strides = [1, 1]} : vector<2x256xf32> to vector<2x64xf32>
      %34 = arith.negf %33 : vector<2x64xf32>
      %35 = math.exp %34 : vector<2x64xf32>
      %cst_9 = arith.constant 1.000000e+00 : f32
      %36 = vector.broadcast %cst_9 : f32 to vector<2x64xf32>
      %37 = arith.addf %36, %35 : vector<2x64xf32>
      %38 = arith.divf %36, %37 : vector<2x64xf32>
      %39 = arith.mulf %30, %arg5 : vector<2x64xf32>
      %40 = arith.mulf %24, %32 : vector<2x64xf32>
      %41 = arith.addf %39, %40 : vector<2x64xf32>
      %42 = math.tanh %41 : vector<2x64xf32>
      %43 = arith.mulf %38, %42 : vector<2x64xf32>
      %44 = vector.extract_strided_slice %18 {offsets = [0, 0], sizes = [2, 64], strides = [1, 1]} : vector<2x256xf32> to vector<2x64xf32>
      %45 = arith.negf %44 : vector<2x64xf32>
      %46 = math.exp %45 : vector<2x64xf32>
      %cst_10 = arith.constant 1.000000e+00 : f32
      %47 = vector.broadcast %cst_10 : f32 to vector<2x64xf32>
      %48 = arith.addf %47, %46 : vector<2x64xf32>
      %49 = arith.divf %47, %48 : vector<2x64xf32>
      %50 = vector.extract_strided_slice %18 {offsets = [0, 64], sizes = [2, 64], strides = [1, 1]} : vector<2x256xf32> to vector<2x64xf32>
      %51 = arith.negf %50 : vector<2x64xf32>
      %52 = math.exp %51 : vector<2x64xf32>
      %cst_11 = arith.constant 1.000000e+00 : f32
      %53 = vector.broadcast %cst_11 : f32 to vector<2x64xf32>
      %54 = arith.addf %53, %52 : vector<2x64xf32>
      %55 = arith.divf %53, %54 : vector<2x64xf32>
      %56 = vector.extract_strided_slice %18 {offsets = [0, 128], sizes = [2, 64], strides = [1, 1]} : vector<2x256xf32> to vector<2x64xf32>
      %57 = math.tanh %56 : vector<2x64xf32>
      %58 = vector.extract_strided_slice %18 {offsets = [0, 192], sizes = [2, 64], strides = [1, 1]} : vector<2x256xf32> to vector<2x64xf32>
      %59 = arith.negf %58 : vector<2x64xf32>
      %60 = math.exp %59 : vector<2x64xf32>
      %cst_12 = arith.constant 1.000000e+00 : f32
      %61 = vector.broadcast %cst_12 : f32 to vector<2x64xf32>
      %62 = arith.addf %61, %60 : vector<2x64xf32>
      %63 = arith.divf %61, %62 : vector<2x64xf32>
      %64 = arith.mulf %55, %arg7 : vector<2x64xf32>
      %65 = arith.mulf %49, %57 : vector<2x64xf32>
      %66 = arith.addf %64, %65 : vector<2x64xf32>
      %67 = math.tanh %66 : vector<2x64xf32>
      %68 = arith.mulf %63, %67 : vector<2x64xf32>
      %69 = vector.shape_cast %43 : vector<2x64xf32> to vector<1x2x64xf32>
      %70 = arith.index_cast %arg3 : i32 to index
      %c0_13 = arith.constant 0 : index
      %c0_14 = arith.constant 0 : index
      %71 = vector.load %arg2[%70, %c0_13, %c0_14] : memref<12x2x128xf32, #tpu.memory_space<vmem>>, vector<1x2x64xf32>
      tpu.vector_store %arg2[%70, %c0_13, %c0_14], %69 {strides = array<i32>} : memref<12x2x128xf32, #tpu.memory_space<vmem>>, vector<1x2x64xf32>,
      %72 = vector.shape_cast %68 : vector<2x64xf32> to vector<1x2x64xf32>
      %73 = arith.index_cast %4 : i32 to index
      %c0_15 = arith.constant 0 : index
      %c64 = arith.constant 64 : index
      %74 = vector.load %arg2[%73, %c0_15, %c64] : memref<12x2x128xf32, #tpu.memory_space<vmem>>, vector<1x2x64xf32>
      tpu.vector_store %arg2[%73, %c0_15, %c64], %72 {strides = array<i32>} : memref<12x2x128xf32, #tpu.memory_space<vmem>>, vector<1x2x64xf32>,
      scf.yield %43, %41, %68, %66 : vector<2x64xf32>, vector<2x64xf32>, vector<2x64xf32>, vector<2x64xf32>
    }
    %c12_i32_1 = arith.constant 12 : i32
    return
  }
}

module attributes {stable_mosaic.version = 11 : i64} {
  func.func @_conv_bn_prelu_kernel(%arg0: i32, %arg1: memref<1xf32, #tpu.memory_space<smem>>, %arg2: memref<1x14x192xf32, #tpu.memory_space<vmem>>, %arg3: memref<192x32xf32, #tpu.memory_space<vmem>>, %arg4: memref<1x1x32xf32, #tpu.memory_space<vmem>>, %arg5: memref<1x1x32xf32, #tpu.memory_space<vmem>>, %arg6: memref<1x14x32xf32, #tpu.memory_space<vmem>>) attributes {dimension_semantics = [#tpu.dimension_semantics<parallel>], iteration_bounds = array<i64: 2>, scalar_prefetch = 0 : i64, scratch_operands = 0 : i64, tpu.core_type = #tpu.core_type<tc>, window_params = [{transform_indices = @transform_0, window_bounds = array<i64: 1>}, {transform_indices = @transform_1, window_bounds = array<i64: 1, 14, 192>}, {pipeline_mode = #tpu.pipeline_mode<synchronous>, transform_indices = @transform_2, window_bounds = array<i64: 192, 32>}, {transform_indices = @transform_3, window_bounds = array<i64: 1, 1, 32>}, {transform_indices = @transform_4, window_bounds = array<i64: 1, 1, 32>}, {transform_indices = @transform_5, window_bounds = array<i64: 1, 14, 32>}]} {
    %c0 = arith.constant 0 : index
    %c0_0 = arith.constant 0 : index
    %c0_1 = arith.constant 0 : index
    %0 = vector.load %arg2[%c0, %c0_0, %c0_1] : memref<1x14x192xf32, #tpu.memory_space<vmem>>, vector<1x14x192xf32>
    %1 = vector.shape_cast %0 : vector<1x14x192xf32> to vector<14x192xf32>
    %c0_2 = arith.constant 0 : index
    %c0_3 = arith.constant 0 : index
    %2 = vector.load %arg3[%c0_2, %c0_3] : memref<192x32xf32, #tpu.memory_space<vmem>>, vector<192x32xf32>
    %cst = arith.constant dense<0.000000e+00> : vector<14x32xf32>
    %3 = tpu.matmul %1, %2, %cst {dimension_numbers = #tpu.dot_dimension_numbers<[1], [0], [0], [1], [0, 0, 1, 1], [], []>} : vector<14x192xf32>, vector<192x32xf32>, vector<14x32xf32> -> vector<14x32xf32>
    %c0_4 = arith.constant 0 : index
    %c0_5 = arith.constant 0 : index
    %c0_6 = arith.constant 0 : index
    %4 = vector.load %arg4[%c0_4, %c0_5, %c0_6] : memref<1x1x32xf32, #tpu.memory_space<vmem>>, vector<1x1x32xf32>
    %5 = vector.shape_cast %4 : vector<1x1x32xf32> to vector<1x32xf32>
    %6 = vector.broadcast %5 : vector<1x32xf32> to vector<14x32xf32>
    %7 = arith.mulf %3, %6 : vector<14x32xf32>
    %c0_7 = arith.constant 0 : index
    %c0_8 = arith.constant 0 : index
    %c0_9 = arith.constant 0 : index
    %8 = vector.load %arg5[%c0_7, %c0_8, %c0_9] : memref<1x1x32xf32, #tpu.memory_space<vmem>>, vector<1x1x32xf32>
    %9 = vector.shape_cast %8 : vector<1x1x32xf32> to vector<1x32xf32>
    %10 = vector.broadcast %9 : vector<1x32xf32> to vector<14x32xf32>
    %11 = arith.addf %7, %10 : vector<14x32xf32>
    %c0_10 = arith.constant 0 : index
    %12 = memref.load %arg1[%c0_10] : memref<1xf32, #tpu.memory_space<smem>>
    %cst_11 = arith.constant 0.000000e+00 : f32
    %13 = vector.broadcast %cst_11 : f32 to vector<14x32xf32>
    %14 = arith.maximumf %11, %13 : vector<14x32xf32>
    %cst_12 = arith.constant 0.000000e+00 : f32
    %15 = vector.broadcast %cst_12 : f32 to vector<14x32xf32>
    %16 = arith.minimumf %11, %15 : vector<14x32xf32>
    %17 = vector.broadcast %12 : f32 to vector<14x32xf32>
    %18 = arith.mulf %17, %16 : vector<14x32xf32>
    %19 = arith.addf %14, %18 : vector<14x32xf32>
    %c0_13 = arith.constant 0 : index
    %c0_14 = arith.constant 0 : index
    %c0_15 = arith.constant 0 : index
    %20 = vector.load %arg6[%c0_13, %c0_14, %c0_15] : memref<1x14x32xf32, #tpu.memory_space<vmem>>, vector<1x14x32xf32>
    %21 = vector.shape_cast %20 : vector<1x14x32xf32> to vector<14x32xf32>
    %22 = vector.shape_cast %19 : vector<14x32xf32> to vector<1x14x32xf32>
    tpu.vector_store %arg6[%c0_13, %c0_14, %c0_15], %22 {strides = array<i32>} : memref<1x14x32xf32, #tpu.memory_space<vmem>>, vector<1x14x32xf32>,
    return
  }
  func.func @transform_0(%arg0: i32) -> i32 {
    %c0_i32 = arith.constant 0 : i32
    %c0_i32_0 = arith.constant 0 : i32
    return %c0_i32 : i32
  }
  func.func @transform_1(%arg0: i32) -> (i32, i32, i32) {
    %c0_i32 = arith.constant 0 : i32
    %c0_i32_0 = arith.constant 0 : i32
    %c0_i32_1 = arith.constant 0 : i32
    return %arg0, %c0_i32, %c0_i32_0 : i32, i32, i32
  }
  func.func @transform_2(%arg0: i32) -> (i32, i32) {
    %c0_i32 = arith.constant 0 : i32
    %c0_i32_0 = arith.constant 0 : i32
    %c0_i32_1 = arith.constant 0 : i32
    return %c0_i32, %c0_i32_0 : i32, i32
  }
  func.func @transform_3(%arg0: i32) -> (i32, i32, i32) {
    %c0_i32 = arith.constant 0 : i32
    %c0_i32_0 = arith.constant 0 : i32
    %c0_i32_1 = arith.constant 0 : i32
    return %arg0, %c0_i32, %c0_i32_0 : i32, i32, i32
  }
  func.func @transform_4(%arg0: i32) -> (i32, i32, i32) {
    %c0_i32 = arith.constant 0 : i32
    %c0_i32_0 = arith.constant 0 : i32
    %c0_i32_1 = arith.constant 0 : i32
    return %arg0, %c0_i32, %c0_i32_0 : i32, i32, i32
  }
  func.func @transform_5(%arg0: i32) -> (i32, i32, i32) {
    %c0_i32 = arith.constant 0 : i32
    %c0_i32_0 = arith.constant 0 : i32
    %c0_i32_1 = arith.constant 0 : i32
    return %arg0, %c0_i32, %c0_i32_0 : i32, i32, i32
  }
}

module attributes {stable_mosaic.version = 11 : i64} {
  func.func @_conv_bn_prelu_x2_kernel(%arg0: i32, %arg1: memref<2xf32, #tpu.memory_space<smem>>, %arg2: memref<1x30x256xf32, #tpu.memory_space<vmem>>, %arg3: memref<256x32xf32, #tpu.memory_space<vmem>>, %arg4: memref<1x1x32xf32, #tpu.memory_space<vmem>>, %arg5: memref<1x1x32xf32, #tpu.memory_space<vmem>>, %arg6: memref<32x16xf32, #tpu.memory_space<vmem>>, %arg7: memref<1x1x16xf32, #tpu.memory_space<vmem>>, %arg8: memref<1x1x16xf32, #tpu.memory_space<vmem>>, %arg9: memref<1x30x16xf32, #tpu.memory_space<vmem>>) attributes {dimension_semantics = [#tpu.dimension_semantics<parallel>], iteration_bounds = array<i64: 2>, scalar_prefetch = 0 : i64, scratch_operands = 0 : i64, tpu.core_type = #tpu.core_type<tc>, window_params = [{transform_indices = @transform_0, window_bounds = array<i64: 2>}, {transform_indices = @transform_1, window_bounds = array<i64: 1, 30, 256>}, {pipeline_mode = #tpu.pipeline_mode<synchronous>, transform_indices = @transform_2, window_bounds = array<i64: 256, 32>}, {transform_indices = @transform_3, window_bounds = array<i64: 1, 1, 32>}, {transform_indices = @transform_4, window_bounds = array<i64: 1, 1, 32>}, {pipeline_mode = #tpu.pipeline_mode<synchronous>, transform_indices = @transform_5, window_bounds = array<i64: 32, 16>}, {transform_indices = @transform_6, window_bounds = array<i64: 1, 1, 16>}, {transform_indices = @transform_7, window_bounds = array<i64: 1, 1, 16>}, {transform_indices = @transform_8, window_bounds = array<i64: 1, 30, 16>}]} {
    %c0 = arith.constant 0 : index
    %c0_0 = arith.constant 0 : index
    %c0_1 = arith.constant 0 : index
    %0 = vector.load %arg2[%c0, %c0_0, %c0_1] : memref<1x30x256xf32, #tpu.memory_space<vmem>>, vector<1x30x256xf32>
    %1 = vector.shape_cast %0 : vector<1x30x256xf32> to vector<30x256xf32>
    %c0_2 = arith.constant 0 : index
    %c0_3 = arith.constant 0 : index
    %2 = vector.load %arg3[%c0_2, %c0_3] : memref<256x32xf32, #tpu.memory_space<vmem>>, vector<256x32xf32>
    %cst = arith.constant dense<0.000000e+00> : vector<30x32xf32>
    %3 = tpu.matmul %1, %2, %cst {dimension_numbers = #tpu.dot_dimension_numbers<[1], [0], [0], [1], [0, 0, 1, 1], [], []>} : vector<30x256xf32>, vector<256x32xf32>, vector<30x32xf32> -> vector<30x32xf32>
    %c0_4 = arith.constant 0 : index
    %c0_5 = arith.constant 0 : index
    %c0_6 = arith.constant 0 : index
    %4 = vector.load %arg4[%c0_4, %c0_5, %c0_6] : memref<1x1x32xf32, #tpu.memory_space<vmem>>, vector<1x1x32xf32>
    %5 = vector.shape_cast %4 : vector<1x1x32xf32> to vector<1x32xf32>
    %6 = vector.broadcast %5 : vector<1x32xf32> to vector<30x32xf32>
    %7 = arith.mulf %3, %6 : vector<30x32xf32>
    %c0_7 = arith.constant 0 : index
    %c0_8 = arith.constant 0 : index
    %c0_9 = arith.constant 0 : index
    %8 = vector.load %arg5[%c0_7, %c0_8, %c0_9] : memref<1x1x32xf32, #tpu.memory_space<vmem>>, vector<1x1x32xf32>
    %9 = vector.shape_cast %8 : vector<1x1x32xf32> to vector<1x32xf32>
    %10 = vector.broadcast %9 : vector<1x32xf32> to vector<30x32xf32>
    %11 = arith.addf %7, %10 : vector<30x32xf32>
    %cst_10 = arith.constant 0.000000e+00 : f32
    %12 = vector.broadcast %cst_10 : f32 to vector<30x32xf32>
    %13 = arith.maximumf %11, %12 : vector<30x32xf32>
    %c0_11 = arith.constant 0 : index
    %14 = memref.load %arg1[%c0_11] : memref<2xf32, #tpu.memory_space<smem>>
    %cst_12 = arith.constant 0.000000e+00 : f32
    %15 = vector.broadcast %cst_12 : f32 to vector<30x32xf32>
    %16 = arith.minimumf %11, %15 : vector<30x32xf32>
    %17 = vector.broadcast %14 : f32 to vector<30x32xf32>
    %18 = arith.mulf %17, %16 : vector<30x32xf32>
    %19 = arith.addf %13, %18 : vector<30x32xf32>
    %c0_13 = arith.constant 0 : index
    %c0_14 = arith.constant 0 : index
    %20 = vector.load %arg6[%c0_13, %c0_14] : memref<32x16xf32, #tpu.memory_space<vmem>>, vector<32x16xf32>
    %cst_15 = arith.constant dense<0.000000e+00> : vector<30x16xf32>
    %21 = tpu.matmul %19, %20, %cst_15 {dimension_numbers = #tpu.dot_dimension_numbers<[1], [0], [0], [1], [0, 0, 1, 1], [], []>} : vector<30x32xf32>, vector<32x16xf32>, vector<30x16xf32> -> vector<30x16xf32>
    %c0_16 = arith.constant 0 : index
    %c0_17 = arith.constant 0 : index
    %c0_18 = arith.constant 0 : index
    %22 = vector.load %arg7[%c0_16, %c0_17, %c0_18] : memref<1x1x16xf32, #tpu.memory_space<vmem>>, vector<1x1x16xf32>
    %23 = vector.shape_cast %22 : vector<1x1x16xf32> to vector<1x16xf32>
    %24 = vector.broadcast %23 : vector<1x16xf32> to vector<30x16xf32>
    %25 = arith.mulf %21, %24 : vector<30x16xf32>
    %c0_19 = arith.constant 0 : index
    %c0_20 = arith.constant 0 : index
    %c0_21 = arith.constant 0 : index
    %26 = vector.load %arg8[%c0_19, %c0_20, %c0_21] : memref<1x1x16xf32, #tpu.memory_space<vmem>>, vector<1x1x16xf32>
    %27 = vector.shape_cast %26 : vector<1x1x16xf32> to vector<1x16xf32>
    %28 = vector.broadcast %27 : vector<1x16xf32> to vector<30x16xf32>
    %29 = arith.addf %25, %28 : vector<30x16xf32>
    %cst_22 = arith.constant 0.000000e+00 : f32
    %30 = vector.broadcast %cst_22 : f32 to vector<30x16xf32>
    %31 = arith.maximumf %29, %30 : vector<30x16xf32>
    %c1 = arith.constant 1 : index
    %32 = memref.load %arg1[%c1] : memref<2xf32, #tpu.memory_space<smem>>
    %cst_23 = arith.constant 0.000000e+00 : f32
    %33 = vector.broadcast %cst_23 : f32 to vector<30x16xf32>
    %34 = arith.minimumf %29, %33 : vector<30x16xf32>
    %35 = vector.broadcast %32 : f32 to vector<30x16xf32>
    %36 = arith.mulf %35, %34 : vector<30x16xf32>
    %37 = arith.addf %31, %36 : vector<30x16xf32>
    %c0_24 = arith.constant 0 : index
    %c0_25 = arith.constant 0 : index
    %c0_26 = arith.constant 0 : index
    %38 = vector.load %arg9[%c0_24, %c0_25, %c0_26] : memref<1x30x16xf32, #tpu.memory_space<vmem>>, vector<1x30x16xf32>
    %39 = vector.shape_cast %38 : vector<1x30x16xf32> to vector<30x16xf32>
    %40 = vector.shape_cast %37 : vector<30x16xf32> to vector<1x30x16xf32>
    tpu.vector_store %arg9[%c0_24, %c0_25, %c0_26], %40 {strides = array<i32>} : memref<1x30x16xf32, #tpu.memory_space<vmem>>, vector<1x30x16xf32>,
    return
  }
  func.func @transform_0(%arg0: i32) -> i32 {
    %c0_i32 = arith.constant 0 : i32
    %c0_i32_0 = arith.constant 0 : i32
    return %c0_i32 : i32
  }
  func.func @transform_1(%arg0: i32) -> (i32, i32, i32) {
    %c0_i32 = arith.constant 0 : i32
    %c0_i32_0 = arith.constant 0 : i32
    %c0_i32_1 = arith.constant 0 : i32
    return %arg0, %c0_i32, %c0_i32_0 : i32, i32, i32
  }
  func.func @transform_2(%arg0: i32) -> (i32, i32) {
    %c0_i32 = arith.constant 0 : i32
    %c0_i32_0 = arith.constant 0 : i32
    %c0_i32_1 = arith.constant 0 : i32
    return %c0_i32, %c0_i32_0 : i32, i32
  }
  func.func @transform_3(%arg0: i32) -> (i32, i32, i32) {
    %c0_i32 = arith.constant 0 : i32
    %c0_i32_0 = arith.constant 0 : i32
    %c0_i32_1 = arith.constant 0 : i32
    return %arg0, %c0_i32, %c0_i32_0 : i32, i32, i32
  }
  func.func @transform_4(%arg0: i32) -> (i32, i32, i32) {
    %c0_i32 = arith.constant 0 : i32
    %c0_i32_0 = arith.constant 0 : i32
    %c0_i32_1 = arith.constant 0 : i32
    return %arg0, %c0_i32, %c0_i32_0 : i32, i32, i32
  }
  func.func @transform_5(%arg0: i32) -> (i32, i32) {
    %c0_i32 = arith.constant 0 : i32
    %c0_i32_0 = arith.constant 0 : i32
    %c0_i32_1 = arith.constant 0 : i32
    return %c0_i32, %c0_i32_0 : i32, i32
  }
  func.func @transform_6(%arg0: i32) -> (i32, i32, i32) {
    %c0_i32 = arith.constant 0 : i32
    %c0_i32_0 = arith.constant 0 : i32
    %c0_i32_1 = arith.constant 0 : i32
    return %arg0, %c0_i32, %c0_i32_0 : i32, i32, i32
  }
  func.func @transform_7(%arg0: i32) -> (i32, i32, i32) {
    %c0_i32 = arith.constant 0 : i32
    %c0_i32_0 = arith.constant 0 : i32
    %c0_i32_1 = arith.constant 0 : i32
    return %arg0, %c0_i32, %c0_i32_0 : i32, i32, i32
  }
  func.func @transform_8(%arg0: i32) -> (i32, i32, i32) {
    %c0_i32 = arith.constant 0 : i32
    %c0_i32_0 = arith.constant 0 : i32
    %c0_i32_1 = arith.constant 0 : i32
    return %arg0, %c0_i32, %c0_i32_0 : i32, i32, i32
  }
}

module attributes {stable_mosaic.version = 11 : i64} {
  func.func @_conv_bn_prelu_x2_kernel(%arg0: i32, %arg1: memref<2xf32, #tpu.memory_space<smem>>, %arg2: memref<1x64x192xf32, #tpu.memory_space<vmem>>, %arg3: memref<192x16xf32, #tpu.memory_space<vmem>>, %arg4: memref<1x1x16xf32, #tpu.memory_space<vmem>>, %arg5: memref<1x1x16xf32, #tpu.memory_space<vmem>>, %arg6: memref<16x8xf32, #tpu.memory_space<vmem>>, %arg7: memref<1x1x8xf32, #tpu.memory_space<vmem>>, %arg8: memref<1x1x8xf32, #tpu.memory_space<vmem>>, %arg9: memref<1x64x8xf32, #tpu.memory_space<vmem>>) attributes {dimension_semantics = [#tpu.dimension_semantics<parallel>], iteration_bounds = array<i64: 2>, scalar_prefetch = 0 : i64, scratch_operands = 0 : i64, tpu.core_type = #tpu.core_type<tc>, window_params = [{transform_indices = @transform_0, window_bounds = array<i64: 2>}, {transform_indices = @transform_1, window_bounds = array<i64: 1, 64, 192>}, {pipeline_mode = #tpu.pipeline_mode<synchronous>, transform_indices = @transform_2, window_bounds = array<i64: 192, 16>}, {transform_indices = @transform_3, window_bounds = array<i64: 1, 1, 16>}, {transform_indices = @transform_4, window_bounds = array<i64: 1, 1, 16>}, {pipeline_mode = #tpu.pipeline_mode<synchronous>, transform_indices = @transform_5, window_bounds = array<i64: 16, 8>}, {transform_indices = @transform_6, window_bounds = array<i64: 1, 1, 8>}, {transform_indices = @transform_7, window_bounds = array<i64: 1, 1, 8>}, {transform_indices = @transform_8, window_bounds = array<i64: 1, 64, 8>}]} {
    %c0 = arith.constant 0 : index
    %c0_0 = arith.constant 0 : index
    %c0_1 = arith.constant 0 : index
    %0 = vector.load %arg2[%c0, %c0_0, %c0_1] : memref<1x64x192xf32, #tpu.memory_space<vmem>>, vector<1x64x192xf32>
    %1 = vector.shape_cast %0 : vector<1x64x192xf32> to vector<64x192xf32>
    %c0_2 = arith.constant 0 : index
    %c0_3 = arith.constant 0 : index
    %2 = vector.load %arg3[%c0_2, %c0_3] : memref<192x16xf32, #tpu.memory_space<vmem>>, vector<192x16xf32>
    %cst = arith.constant dense<0.000000e+00> : vector<64x16xf32>
    %3 = tpu.matmul %1, %2, %cst {dimension_numbers = #tpu.dot_dimension_numbers<[1], [0], [0], [1], [0, 0, 1, 1], [], []>} : vector<64x192xf32>, vector<192x16xf32>, vector<64x16xf32> -> vector<64x16xf32>
    %c0_4 = arith.constant 0 : index
    %c0_5 = arith.constant 0 : index
    %c0_6 = arith.constant 0 : index
    %4 = vector.load %arg4[%c0_4, %c0_5, %c0_6] : memref<1x1x16xf32, #tpu.memory_space<vmem>>, vector<1x1x16xf32>
    %5 = vector.shape_cast %4 : vector<1x1x16xf32> to vector<1x16xf32>
    %6 = vector.broadcast %5 : vector<1x16xf32> to vector<64x16xf32>
    %7 = arith.mulf %3, %6 : vector<64x16xf32>
    %c0_7 = arith.constant 0 : index
    %c0_8 = arith.constant 0 : index
    %c0_9 = arith.constant 0 : index
    %8 = vector.load %arg5[%c0_7, %c0_8, %c0_9] : memref<1x1x16xf32, #tpu.memory_space<vmem>>, vector<1x1x16xf32>
    %9 = vector.shape_cast %8 : vector<1x1x16xf32> to vector<1x16xf32>
    %10 = vector.broadcast %9 : vector<1x16xf32> to vector<64x16xf32>
    %11 = arith.addf %7, %10 : vector<64x16xf32>
    %cst_10 = arith.constant 0.000000e+00 : f32
    %12 = vector.broadcast %cst_10 : f32 to vector<64x16xf32>
    %13 = arith.maximumf %11, %12 : vector<64x16xf32>
    %c0_11 = arith.constant 0 : index
    %14 = memref.load %arg1[%c0_11] : memref<2xf32, #tpu.memory_space<smem>>
    %cst_12 = arith.constant 0.000000e+00 : f32
    %15 = vector.broadcast %cst_12 : f32 to vector<64x16xf32>
    %16 = arith.minimumf %11, %15 : vector<64x16xf32>
    %17 = vector.broadcast %14 : f32 to vector<64x16xf32>
    %18 = arith.mulf %17, %16 : vector<64x16xf32>
    %19 = arith.addf %13, %18 : vector<64x16xf32>
    %c0_13 = arith.constant 0 : index
    %c0_14 = arith.constant 0 : index
    %20 = vector.load %arg6[%c0_13, %c0_14] : memref<16x8xf32, #tpu.memory_space<vmem>>, vector<16x8xf32>
    %cst_15 = arith.constant dense<0.000000e+00> : vector<64x8xf32>
    %21 = tpu.matmul %19, %20, %cst_15 {dimension_numbers = #tpu.dot_dimension_numbers<[1], [0], [0], [1], [0, 0, 1, 1], [], []>} : vector<64x16xf32>, vector<16x8xf32>, vector<64x8xf32> -> vector<64x8xf32>
    %c0_16 = arith.constant 0 : index
    %c0_17 = arith.constant 0 : index
    %c0_18 = arith.constant 0 : index
    %22 = vector.load %arg7[%c0_16, %c0_17, %c0_18] : memref<1x1x8xf32, #tpu.memory_space<vmem>>, vector<1x1x8xf32>
    %23 = vector.shape_cast %22 : vector<1x1x8xf32> to vector<1x8xf32>
    %24 = vector.broadcast %23 : vector<1x8xf32> to vector<64x8xf32>
    %25 = arith.mulf %21, %24 : vector<64x8xf32>
    %c0_19 = arith.constant 0 : index
    %c0_20 = arith.constant 0 : index
    %c0_21 = arith.constant 0 : index
    %26 = vector.load %arg8[%c0_19, %c0_20, %c0_21] : memref<1x1x8xf32, #tpu.memory_space<vmem>>, vector<1x1x8xf32>
    %27 = vector.shape_cast %26 : vector<1x1x8xf32> to vector<1x8xf32>
    %28 = vector.broadcast %27 : vector<1x8xf32> to vector<64x8xf32>
    %29 = arith.addf %25, %28 : vector<64x8xf32>
    %cst_22 = arith.constant 0.000000e+00 : f32
    %30 = vector.broadcast %cst_22 : f32 to vector<64x8xf32>
    %31 = arith.maximumf %29, %30 : vector<64x8xf32>
    %c1 = arith.constant 1 : index
    %32 = memref.load %arg1[%c1] : memref<2xf32, #tpu.memory_space<smem>>
    %cst_23 = arith.constant 0.000000e+00 : f32
    %33 = vector.broadcast %cst_23 : f32 to vector<64x8xf32>
    %34 = arith.minimumf %29, %33 : vector<64x8xf32>
    %35 = vector.broadcast %32 : f32 to vector<64x8xf32>
    %36 = arith.mulf %35, %34 : vector<64x8xf32>
    %37 = arith.addf %31, %36 : vector<64x8xf32>
    %c0_24 = arith.constant 0 : index
    %c0_25 = arith.constant 0 : index
    %c0_26 = arith.constant 0 : index
    %38 = vector.load %arg9[%c0_24, %c0_25, %c0_26] : memref<1x64x8xf32, #tpu.memory_space<vmem>>, vector<1x64x8xf32>
    %39 = vector.shape_cast %38 : vector<1x64x8xf32> to vector<64x8xf32>
    %40 = vector.shape_cast %37 : vector<64x8xf32> to vector<1x64x8xf32>
    tpu.vector_store %arg9[%c0_24, %c0_25, %c0_26], %40 {strides = array<i32>} : memref<1x64x8xf32, #tpu.memory_space<vmem>>, vector<1x64x8xf32>,
    return
  }
  func.func @transform_0(%arg0: i32) -> i32 {
    %c0_i32 = arith.constant 0 : i32
    %c0_i32_0 = arith.constant 0 : i32
    return %c0_i32 : i32
  }
  func.func @transform_1(%arg0: i32) -> (i32, i32, i32) {
    %c0_i32 = arith.constant 0 : i32
    %c0_i32_0 = arith.constant 0 : i32
    %c0_i32_1 = arith.constant 0 : i32
    return %arg0, %c0_i32, %c0_i32_0 : i32, i32, i32
  }
  func.func @transform_2(%arg0: i32) -> (i32, i32) {
    %c0_i32 = arith.constant 0 : i32
    %c0_i32_0 = arith.constant 0 : i32
    %c0_i32_1 = arith.constant 0 : i32
    return %c0_i32, %c0_i32_0 : i32, i32
  }
  func.func @transform_3(%arg0: i32) -> (i32, i32, i32) {
    %c0_i32 = arith.constant 0 : i32
    %c0_i32_0 = arith.constant 0 : i32
    %c0_i32_1 = arith.constant 0 : i32
    return %arg0, %c0_i32, %c0_i32_0 : i32, i32, i32
  }
  func.func @transform_4(%arg0: i32) -> (i32, i32, i32) {
    %c0_i32 = arith.constant 0 : i32
    %c0_i32_0 = arith.constant 0 : i32
    %c0_i32_1 = arith.constant 0 : i32
    return %arg0, %c0_i32, %c0_i32_0 : i32, i32, i32
  }
  func.func @transform_5(%arg0: i32) -> (i32, i32) {
    %c0_i32 = arith.constant 0 : i32
    %c0_i32_0 = arith.constant 0 : i32
    %c0_i32_1 = arith.constant 0 : i32
    return %c0_i32, %c0_i32_0 : i32, i32
  }
  func.func @transform_6(%arg0: i32) -> (i32, i32, i32) {
    %c0_i32 = arith.constant 0 : i32
    %c0_i32_0 = arith.constant 0 : i32
    %c0_i32_1 = arith.constant 0 : i32
    return %arg0, %c0_i32, %c0_i32_0 : i32, i32, i32
  }
  func.func @transform_7(%arg0: i32) -> (i32, i32, i32) {
    %c0_i32 = arith.constant 0 : i32
    %c0_i32_0 = arith.constant 0 : i32
    %c0_i32_1 = arith.constant 0 : i32
    return %arg0, %c0_i32, %c0_i32_0 : i32, i32, i32
  }
  func.func @transform_8(%arg0: i32) -> (i32, i32, i32) {
    %c0_i32 = arith.constant 0 : i32
    %c0_i32_0 = arith.constant 0 : i32
    %c0_i32_1 = arith.constant 0 : i32
    return %arg0, %c0_i32, %c0_i32_0 : i32, i32, i32
  }
}

module attributes {stable_mosaic.version = 11 : i64} {
  func.func @_conv_bn_prelu_x2_kernel(%arg0: i32, %arg1: memref<2xf32, #tpu.memory_space<smem>>, %arg2: memref<1x256x64xf32, #tpu.memory_space<vmem>>, %arg3: memref<64x8xf32, #tpu.memory_space<vmem>>, %arg4: memref<1x1x8xf32, #tpu.memory_space<vmem>>, %arg5: memref<1x1x8xf32, #tpu.memory_space<vmem>>, %arg6: memref<8x4xf32, #tpu.memory_space<vmem>>, %arg7: memref<1x1x4xf32, #tpu.memory_space<vmem>>, %arg8: memref<1x1x4xf32, #tpu.memory_space<vmem>>, %arg9: memref<1x256x4xf32, #tpu.memory_space<vmem>>) attributes {dimension_semantics = [#tpu.dimension_semantics<parallel>], iteration_bounds = array<i64: 2>, scalar_prefetch = 0 : i64, scratch_operands = 0 : i64, tpu.core_type = #tpu.core_type<tc>, window_params = [{transform_indices = @transform_0, window_bounds = array<i64: 2>}, {transform_indices = @transform_1, window_bounds = array<i64: 1, 256, 64>}, {pipeline_mode = #tpu.pipeline_mode<synchronous>, transform_indices = @transform_2, window_bounds = array<i64: 64, 8>}, {transform_indices = @transform_3, window_bounds = array<i64: 1, 1, 8>}, {transform_indices = @transform_4, window_bounds = array<i64: 1, 1, 8>}, {pipeline_mode = #tpu.pipeline_mode<synchronous>, transform_indices = @transform_5, window_bounds = array<i64: 8, 4>}, {transform_indices = @transform_6, window_bounds = array<i64: 1, 1, 4>}, {transform_indices = @transform_7, window_bounds = array<i64: 1, 1, 4>}, {transform_indices = @transform_8, window_bounds = array<i64: 1, 256, 4>}]} {
    %c0 = arith.constant 0 : index
    %c0_0 = arith.constant 0 : index
    %c0_1 = arith.constant 0 : index
    %0 = vector.load %arg2[%c0, %c0_0, %c0_1] : memref<1x256x64xf32, #tpu.memory_space<vmem>>, vector<1x256x64xf32>
    %1 = vector.shape_cast %0 : vector<1x256x64xf32> to vector<256x64xf32>
    %c0_2 = arith.constant 0 : index
    %c0_3 = arith.constant 0 : index
    %2 = vector.load %arg3[%c0_2, %c0_3] : memref<64x8xf32, #tpu.memory_space<vmem>>, vector<64x8xf32>
    %cst = arith.constant dense<0.000000e+00> : vector<256x8xf32>
    %3 = tpu.matmul %1, %2, %cst {dimension_numbers = #tpu.dot_dimension_numbers<[1], [0], [0], [1], [0, 0, 1, 1], [], []>} : vector<256x64xf32>, vector<64x8xf32>, vector<256x8xf32> -> vector<256x8xf32>
    %c0_4 = arith.constant 0 : index
    %c0_5 = arith.constant 0 : index
    %c0_6 = arith.constant 0 : index
    %4 = vector.load %arg4[%c0_4, %c0_5, %c0_6] : memref<1x1x8xf32, #tpu.memory_space<vmem>>, vector<1x1x8xf32>
    %5 = vector.shape_cast %4 : vector<1x1x8xf32> to vector<1x8xf32>
    %6 = vector.broadcast %5 : vector<1x8xf32> to vector<256x8xf32>
    %7 = arith.mulf %3, %6 : vector<256x8xf32>
    %c0_7 = arith.constant 0 : index
    %c0_8 = arith.constant 0 : index
    %c0_9 = arith.constant 0 : index
    %8 = vector.load %arg5[%c0_7, %c0_8, %c0_9] : memref<1x1x8xf32, #tpu.memory_space<vmem>>, vector<1x1x8xf32>
    %9 = vector.shape_cast %8 : vector<1x1x8xf32> to vector<1x8xf32>
    %10 = vector.broadcast %9 : vector<1x8xf32> to vector<256x8xf32>
    %11 = arith.addf %7, %10 : vector<256x8xf32>
    %cst_10 = arith.constant 0.000000e+00 : f32
    %12 = vector.broadcast %cst_10 : f32 to vector<256x8xf32>
    %13 = arith.maximumf %11, %12 : vector<256x8xf32>
    %c0_11 = arith.constant 0 : index
    %14 = memref.load %arg1[%c0_11] : memref<2xf32, #tpu.memory_space<smem>>
    %cst_12 = arith.constant 0.000000e+00 : f32
    %15 = vector.broadcast %cst_12 : f32 to vector<256x8xf32>
    %16 = arith.minimumf %11, %15 : vector<256x8xf32>
    %17 = vector.broadcast %14 : f32 to vector<256x8xf32>
    %18 = arith.mulf %17, %16 : vector<256x8xf32>
    %19 = arith.addf %13, %18 : vector<256x8xf32>
    %c0_13 = arith.constant 0 : index
    %c0_14 = arith.constant 0 : index
    %20 = vector.load %arg6[%c0_13, %c0_14] : memref<8x4xf32, #tpu.memory_space<vmem>>, vector<8x4xf32>
    %cst_15 = arith.constant dense<0.000000e+00> : vector<256x4xf32>
    %21 = tpu.matmul %19, %20, %cst_15 {dimension_numbers = #tpu.dot_dimension_numbers<[1], [0], [0], [1], [0, 0, 1, 1], [], []>} : vector<256x8xf32>, vector<8x4xf32>, vector<256x4xf32> -> vector<256x4xf32>
    %c0_16 = arith.constant 0 : index
    %c0_17 = arith.constant 0 : index
    %c0_18 = arith.constant 0 : index
    %22 = vector.load %arg7[%c0_16, %c0_17, %c0_18] : memref<1x1x4xf32, #tpu.memory_space<vmem>>, vector<1x1x4xf32>
    %23 = vector.shape_cast %22 : vector<1x1x4xf32> to vector<1x4xf32>
    %24 = vector.broadcast %23 : vector<1x4xf32> to vector<256x4xf32>
    %25 = arith.mulf %21, %24 : vector<256x4xf32>
    %c0_19 = arith.constant 0 : index
    %c0_20 = arith.constant 0 : index
    %c0_21 = arith.constant 0 : index
    %26 = vector.load %arg8[%c0_19, %c0_20, %c0_21] : memref<1x1x4xf32, #tpu.memory_space<vmem>>, vector<1x1x4xf32>
    %27 = vector.shape_cast %26 : vector<1x1x4xf32> to vector<1x4xf32>
    %28 = vector.broadcast %27 : vector<1x4xf32> to vector<256x4xf32>
    %29 = arith.addf %25, %28 : vector<256x4xf32>
    %cst_22 = arith.constant 0.000000e+00 : f32
    %30 = vector.broadcast %cst_22 : f32 to vector<256x4xf32>
    %31 = arith.maximumf %29, %30 : vector<256x4xf32>
    %c1 = arith.constant 1 : index
    %32 = memref.load %arg1[%c1] : memref<2xf32, #tpu.memory_space<smem>>
    %cst_23 = arith.constant 0.000000e+00 : f32
    %33 = vector.broadcast %cst_23 : f32 to vector<256x4xf32>
    %34 = arith.minimumf %29, %33 : vector<256x4xf32>
    %35 = vector.broadcast %32 : f32 to vector<256x4xf32>
    %36 = arith.mulf %35, %34 : vector<256x4xf32>
    %37 = arith.addf %31, %36 : vector<256x4xf32>
    %c0_24 = arith.constant 0 : index
    %c0_25 = arith.constant 0 : index
    %c0_26 = arith.constant 0 : index
    %38 = vector.load %arg9[%c0_24, %c0_25, %c0_26] : memref<1x256x4xf32, #tpu.memory_space<vmem>>, vector<1x256x4xf32>
    %39 = vector.shape_cast %38 : vector<1x256x4xf32> to vector<256x4xf32>
    %40 = vector.shape_cast %37 : vector<256x4xf32> to vector<1x256x4xf32>
    tpu.vector_store %arg9[%c0_24, %c0_25, %c0_26], %40 {strides = array<i32>} : memref<1x256x4xf32, #tpu.memory_space<vmem>>, vector<1x256x4xf32>,
    return
  }
  func.func @transform_0(%arg0: i32) -> i32 {
    %c0_i32 = arith.constant 0 : i32
    %c0_i32_0 = arith.constant 0 : i32
    return %c0_i32 : i32
  }
  func.func @transform_1(%arg0: i32) -> (i32, i32, i32) {
    %c0_i32 = arith.constant 0 : i32
    %c0_i32_0 = arith.constant 0 : i32
    %c0_i32_1 = arith.constant 0 : i32
    return %arg0, %c0_i32, %c0_i32_0 : i32, i32, i32
  }
  func.func @transform_2(%arg0: i32) -> (i32, i32) {
    %c0_i32 = arith.constant 0 : i32
    %c0_i32_0 = arith.constant 0 : i32
    %c0_i32_1 = arith.constant 0 : i32
    return %c0_i32, %c0_i32_0 : i32, i32
  }
  func.func @transform_3(%arg0: i32) -> (i32, i32, i32) {
    %c0_i32 = arith.constant 0 : i32
    %c0_i32_0 = arith.constant 0 : i32
    %c0_i32_1 = arith.constant 0 : i32
    return %arg0, %c0_i32, %c0_i32_0 : i32, i32, i32
  }
  func.func @transform_4(%arg0: i32) -> (i32, i32, i32) {
    %c0_i32 = arith.constant 0 : i32
    %c0_i32_0 = arith.constant 0 : i32
    %c0_i32_1 = arith.constant 0 : i32
    return %arg0, %c0_i32, %c0_i32_0 : i32, i32, i32
  }
  func.func @transform_5(%arg0: i32) -> (i32, i32) {
    %c0_i32 = arith.constant 0 : i32
    %c0_i32_0 = arith.constant 0 : i32
    %c0_i32_1 = arith.constant 0 : i32
    return %c0_i32, %c0_i32_0 : i32, i32
  }
  func.func @transform_6(%arg0: i32) -> (i32, i32, i32) {
    %c0_i32 = arith.constant 0 : i32
    %c0_i32_0 = arith.constant 0 : i32
    %c0_i32_1 = arith.constant 0 : i32
    return %arg0, %c0_i32, %c0_i32_0 : i32, i32, i32
  }
  func.func @transform_7(%arg0: i32) -> (i32, i32, i32) {
    %c0_i32 = arith.constant 0 : i32
    %c0_i32_0 = arith.constant 0 : i32
    %c0_i32_1 = arith.constant 0 : i32
    return %arg0, %c0_i32, %c0_i32_0 : i32, i32, i32
  }
  func.func @transform_8(%arg0: i32) -> (i32, i32, i32) {
    %c0_i32 = arith.constant 0 : i32
    %c0_i32_0 = arith.constant 0 : i32
    %c0_i32_1 = arith.constant 0 : i32
    return %arg0, %c0_i32, %c0_i32_0 : i32, i32, i32
  }
}

module attributes {stable_mosaic.version = 11 : i64} {
  func.func @_conv_bn_prelu_x2_kernel(%arg0: i32, %arg1: memref<2xf32, #tpu.memory_space<smem>>, %arg2: memref<1x512x16xf32, #tpu.memory_space<vmem>>, %arg3: memref<16x4xf32, #tpu.memory_space<vmem>>, %arg4: memref<1x1x4xf32, #tpu.memory_space<vmem>>, %arg5: memref<1x1x4xf32, #tpu.memory_space<vmem>>, %arg6: memref<4x1xf32, #tpu.memory_space<vmem>>, %arg7: memref<1x1x1xf32, #tpu.memory_space<vmem>>, %arg8: memref<1x1x1xf32, #tpu.memory_space<vmem>>, %arg9: memref<1x512x1xf32, #tpu.memory_space<vmem>>) attributes {dimension_semantics = [#tpu.dimension_semantics<parallel>], iteration_bounds = array<i64: 2>, scalar_prefetch = 0 : i64, scratch_operands = 0 : i64, tpu.core_type = #tpu.core_type<tc>, window_params = [{transform_indices = @transform_0, window_bounds = array<i64: 2>}, {transform_indices = @transform_1, window_bounds = array<i64: 1, 512, 16>}, {pipeline_mode = #tpu.pipeline_mode<synchronous>, transform_indices = @transform_2, window_bounds = array<i64: 16, 4>}, {transform_indices = @transform_3, window_bounds = array<i64: 1, 1, 4>}, {transform_indices = @transform_4, window_bounds = array<i64: 1, 1, 4>}, {pipeline_mode = #tpu.pipeline_mode<synchronous>, transform_indices = @transform_5, window_bounds = array<i64: 4, 1>}, {transform_indices = @transform_6, window_bounds = array<i64: 1, 1, 1>}, {transform_indices = @transform_7, window_bounds = array<i64: 1, 1, 1>}, {transform_indices = @transform_8, window_bounds = array<i64: 1, 512, 1>}]} {
    %c0 = arith.constant 0 : index
    %c0_0 = arith.constant 0 : index
    %c0_1 = arith.constant 0 : index
    %0 = vector.load %arg2[%c0, %c0_0, %c0_1] : memref<1x512x16xf32, #tpu.memory_space<vmem>>, vector<1x512x16xf32>
    %1 = vector.shape_cast %0 : vector<1x512x16xf32> to vector<512x16xf32>
    %c0_2 = arith.constant 0 : index
    %c0_3 = arith.constant 0 : index
    %2 = vector.load %arg3[%c0_2, %c0_3] : memref<16x4xf32, #tpu.memory_space<vmem>>, vector<16x4xf32>
    %cst = arith.constant dense<0.000000e+00> : vector<512x4xf32>
    %3 = tpu.matmul %1, %2, %cst {dimension_numbers = #tpu.dot_dimension_numbers<[1], [0], [0], [1], [0, 0, 1, 1], [], []>} : vector<512x16xf32>, vector<16x4xf32>, vector<512x4xf32> -> vector<512x4xf32>
    %c0_4 = arith.constant 0 : index
    %c0_5 = arith.constant 0 : index
    %c0_6 = arith.constant 0 : index
    %4 = vector.load %arg4[%c0_4, %c0_5, %c0_6] : memref<1x1x4xf32, #tpu.memory_space<vmem>>, vector<1x1x4xf32>
    %5 = vector.shape_cast %4 : vector<1x1x4xf32> to vector<1x4xf32>
    %6 = vector.broadcast %5 : vector<1x4xf32> to vector<512x4xf32>
    %7 = arith.mulf %3, %6 : vector<512x4xf32>
    %c0_7 = arith.constant 0 : index
    %c0_8 = arith.constant 0 : index
    %c0_9 = arith.constant 0 : index
    %8 = vector.load %arg5[%c0_7, %c0_8, %c0_9] : memref<1x1x4xf32, #tpu.memory_space<vmem>>, vector<1x1x4xf32>
    %9 = vector.shape_cast %8 : vector<1x1x4xf32> to vector<1x4xf32>
    %10 = vector.broadcast %9 : vector<1x4xf32> to vector<512x4xf32>
    %11 = arith.addf %7, %10 : vector<512x4xf32>
    %cst_10 = arith.constant 0.000000e+00 : f32
    %12 = vector.broadcast %cst_10 : f32 to vector<512x4xf32>
    %13 = arith.maximumf %11, %12 : vector<512x4xf32>
    %c0_11 = arith.constant 0 : index
    %14 = memref.load %arg1[%c0_11] : memref<2xf32, #tpu.memory_space<smem>>
    %cst_12 = arith.constant 0.000000e+00 : f32
    %15 = vector.broadcast %cst_12 : f32 to vector<512x4xf32>
    %16 = arith.minimumf %11, %15 : vector<512x4xf32>
    %17 = vector.broadcast %14 : f32 to vector<512x4xf32>
    %18 = arith.mulf %17, %16 : vector<512x4xf32>
    %19 = arith.addf %13, %18 : vector<512x4xf32>
    %c0_13 = arith.constant 0 : index
    %c0_14 = arith.constant 0 : index
    %20 = vector.load %arg6[%c0_13, %c0_14] : memref<4x1xf32, #tpu.memory_space<vmem>>, vector<4x1xf32>
    %cst_15 = arith.constant dense<0.000000e+00> : vector<512x1xf32>
    %21 = tpu.matmul %19, %20, %cst_15 {dimension_numbers = #tpu.dot_dimension_numbers<[1], [0], [0], [1], [0, 0, 1, 1], [], []>} : vector<512x4xf32>, vector<4x1xf32>, vector<512x1xf32> -> vector<512x1xf32>
    %c0_16 = arith.constant 0 : index
    %c0_17 = arith.constant 0 : index
    %c0_18 = arith.constant 0 : index
    %22 = vector.load %arg7[%c0_16, %c0_17, %c0_18] : memref<1x1x1xf32, #tpu.memory_space<vmem>>, vector<1x1x1xf32>
    %23 = vector.shape_cast %22 : vector<1x1x1xf32> to vector<1x1xf32>
    %24 = vector.broadcast %23 : vector<1x1xf32> to vector<512x1xf32>
    %25 = arith.mulf %21, %24 : vector<512x1xf32>
    %c0_19 = arith.constant 0 : index
    %c0_20 = arith.constant 0 : index
    %c0_21 = arith.constant 0 : index
    %26 = vector.load %arg8[%c0_19, %c0_20, %c0_21] : memref<1x1x1xf32, #tpu.memory_space<vmem>>, vector<1x1x1xf32>
    %27 = vector.shape_cast %26 : vector<1x1x1xf32> to vector<1x1xf32>
    %28 = vector.broadcast %27 : vector<1x1xf32> to vector<512x1xf32>
    %29 = arith.addf %25, %28 : vector<512x1xf32>
    %cst_22 = arith.constant 0.000000e+00 : f32
    %30 = vector.broadcast %cst_22 : f32 to vector<512x1xf32>
    %31 = arith.maximumf %29, %30 : vector<512x1xf32>
    %c1 = arith.constant 1 : index
    %32 = memref.load %arg1[%c1] : memref<2xf32, #tpu.memory_space<smem>>
    %cst_23 = arith.constant 0.000000e+00 : f32
    %33 = vector.broadcast %cst_23 : f32 to vector<512x1xf32>
    %34 = arith.minimumf %29, %33 : vector<512x1xf32>
    %35 = vector.broadcast %32 : f32 to vector<512x1xf32>
    %36 = arith.mulf %35, %34 : vector<512x1xf32>
    %37 = arith.addf %31, %36 : vector<512x1xf32>
    %c0_24 = arith.constant 0 : index
    %c0_25 = arith.constant 0 : index
    %c0_26 = arith.constant 0 : index
    %38 = vector.load %arg9[%c0_24, %c0_25, %c0_26] : memref<1x512x1xf32, #tpu.memory_space<vmem>>, vector<1x512x1xf32>
    %39 = vector.shape_cast %38 : vector<1x512x1xf32> to vector<512x1xf32>
    %40 = vector.shape_cast %37 : vector<512x1xf32> to vector<1x512x1xf32>
    tpu.vector_store %arg9[%c0_24, %c0_25, %c0_26], %40 {strides = array<i32>} : memref<1x512x1xf32, #tpu.memory_space<vmem>>, vector<1x512x1xf32>,
    return
  }
  func.func @transform_0(%arg0: i32) -> i32 {
    %c0_i32 = arith.constant 0 : i32
    %c0_i32_0 = arith.constant 0 : i32
    return %c0_i32 : i32
  }
  func.func @transform_1(%arg0: i32) -> (i32, i32, i32) {
    %c0_i32 = arith.constant 0 : i32
    %c0_i32_0 = arith.constant 0 : i32
    %c0_i32_1 = arith.constant 0 : i32
    return %arg0, %c0_i32, %c0_i32_0 : i32, i32, i32
  }
  func.func @transform_2(%arg0: i32) -> (i32, i32) {
    %c0_i32 = arith.constant 0 : i32
    %c0_i32_0 = arith.constant 0 : i32
    %c0_i32_1 = arith.constant 0 : i32
    return %c0_i32, %c0_i32_0 : i32, i32
  }
  func.func @transform_3(%arg0: i32) -> (i32, i32, i32) {
    %c0_i32 = arith.constant 0 : i32
    %c0_i32_0 = arith.constant 0 : i32
    %c0_i32_1 = arith.constant 0 : i32
    return %arg0, %c0_i32, %c0_i32_0 : i32, i32, i32
  }
  func.func @transform_4(%arg0: i32) -> (i32, i32, i32) {
    %c0_i32 = arith.constant 0 : i32
    %c0_i32_0 = arith.constant 0 : i32
    %c0_i32_1 = arith.constant 0 : i32
    return %arg0, %c0_i32, %c0_i32_0 : i32, i32, i32
  }
  func.func @transform_5(%arg0: i32) -> (i32, i32) {
    %c0_i32 = arith.constant 0 : i32
    %c0_i32_0 = arith.constant 0 : i32
    %c0_i32_1 = arith.constant 0 : i32
    return %c0_i32, %c0_i32_0 : i32, i32
  }
  func.func @transform_6(%arg0: i32) -> (i32, i32, i32) {
    %c0_i32 = arith.constant 0 : i32
    %c0_i32_0 = arith.constant 0 : i32
    %c0_i32_1 = arith.constant 0 : i32
    return %arg0, %c0_i32, %c0_i32_0 : i32, i32, i32
  }
  func.func @transform_7(%arg0: i32) -> (i32, i32, i32) {
    %c0_i32 = arith.constant 0 : i32
    %c0_i32_0 = arith.constant 0 : i32
    %c0_i32_1 = arith.constant 0 : i32
    return %arg0, %c0_i32, %c0_i32_0 : i32, i32, i32
  }
  func.func @transform_8(%arg0: i32) -> (i32, i32, i32) {
    %c0_i32 = arith.constant 0 : i32
    %c0_i32_0 = arith.constant 0 : i32
    %c0_i32_1 = arith.constant 0 : i32
    return %arg0, %c0_i32, %c0_i32_0 : i32, i32, i32
  }
}

</mosaic_0001>

<llo_original>
// kernel: forward.11
$region0: #{forward.11}
  #allocation0 [shape = 'u32[]', space=smem, size = 0x4, offset = 0x4, fixed_abs, tag = 'smem constant byte address 0x4 - core index']
  #allocation1 [shape = 'u32[144,128]{1,0:T(1,128)}', space=vmem, size = 0x12000, scoped, tag = 'internal scratch']
  #allocation2 [shape = 'f32[1]{0:T(128)S(6)}', space=smem, size = 0x200, scoped, tag = 'scoped memory for forward.11']
  %s0 = inlined_call_operand.<no memory space> [shape: f32[1], index: 0, kind: input, shape index: {}]
  %s1 = inlined_call_operand.vmem [shape: f32[2,30,48], index: 1, kind: input, shape index: {}]
  %s2 = inlined_call_operand.vmem [shape: f32[48,16], index: 2, kind: input, shape index: {}]
  %s3 = inlined_call_operand.vmem [shape: f32[1,1,16], index: 3, kind: input, shape index: {}]
  %s4 = inlined_call_operand.vmem [shape: f32[1,1,16], index: 4, kind: input, shape index: {}]
  %s5 = inlined_call_operand.vmem [shape: f32[2,30,16], index: 5, kind: output, shape index: {}]
  %s6 = sld [smem:[#allocation0]]
  $region53: #{forward.11} parent=0
    _
  %s8 = ssub.s32 1, %s6
  %s9 = scalar_select 0, %s8, %s6
  %10 = sst [smem:[#allocation2]] %s0
  loop: start=0, step=1, limit=4
  $region2: #{forward.11} parent=0 // loop_pre_header
    _
  $region3: #{forward.11} parent=0 // loop_header
    %s12 = sphi 0, %s16
    %p13 = scmp.ge.s32.totalorder %s12, 4
    %s20 = sphi 0, %s20
    %s22 = sphi 0, %s20
    %s23 = sphi 0, %s22
    %s37 = sphi 0, %s23
    %s43 = sphi 0, %s45
    %s46 = sphi 0, %s43
    %s47 = sphi 0, %s46
    %s63 = sphi 0, %s47
    %s67 = sphi 0, %s67
    %s69 = sphi 0, %s67
    %s70 = sphi 0, %s69
    %s84 = sphi 0, %s70
    %s88 = sphi 0, %s88
    %s90 = sphi 0, %s88
    %s91 = sphi 0, %s90
    %s105 = sphi 0, %s91
    %s109 = sphi 0, %s109
    %s111 = sphi 0, %s109
    %s112 = sphi 0, %s111
    %s126 = sphi 0, %s112
    %s132 = sphi 0, %s134
    %s135 = sphi 0, %s132
    %s136 = sphi 0, %s135
    %s152 = sphi 0, %s136
  $region4: #{forward.11} parent=0 // loop_header_branch
    %15 = sbr.rel (%p13) target = $region8
  $region5: #{forward.11} parent=0 // loop_body
    %s17 = ssub.s32 %s12, 1
    %s18 = ssub.s32 %s12, 2
    %s19 = sadd.s32 %s12, 1
    %s21 = sadd.s32 %s20, 1
    %p24 = scmp.eq.s32.totalorder %s12, 1
    %p25 = scmp.ne.s32.totalorder %s20, %s22
    %p26 = scmp.eq.s32.totalorder %s12, 0
    %p27 = por %p25, %p26
    %p28 = scmp.ne.s32.totalorder %s20, %s22
    %p29 = scmp.eq.s32.totalorder %s17, 1
    %p30 = por %p28, %p29
    %p31 = scmp.ne.s32.totalorder %s22, %s23
    %p32 = scmp.eq.s32.totalorder %s17, 0
    %p33 = por %p31, %p32
    %p34 = scmp.ne.s32.totalorder %s22, %s23
    %p35 = scmp.eq.s32.totalorder %s18, 1
    %p36 = por %p34, %p35
    %p38 = scmp.ne.s32.totalorder %s23, %s37
    %p39 = scmp.eq.s32.totalorder %s18, 0
    %p40 = por %p38, %p39
    %s41 = ssub.s32 %s12, %s19
    %p42 = scmp.eq.s32.totalorder %s41, 0
    %s44 = sadd.s32 %s43, 1
    %s45 = scalar_select %p42, %s43, %s44
    %p48 = pneg %p42
    %p49 = scmp.eq.s32.totalorder %s12, 1
    %p50 = por %p48, %p49
    %p51 = scmp.ne.s32.totalorder %s43, %s46
    %p52 = scmp.eq.s32.totalorder %s12, 0
    %p53 = por %p51, %p52
    %p54 = scmp.ne.s32.totalorder %s43, %s46
    %p55 = scmp.eq.s32.totalorder %s17, 1
    %p56 = por %p54, %p55
    %p57 = scmp.ne.s32.totalorder %s46, %s47
    %p58 = scmp.eq.s32.totalorder %s17, 0
    %p59 = por %p57, %p58
    %p60 = scmp.ne.s32.totalorder %s46, %s47
    %p61 = scmp.eq.s32.totalorder %s18, 1
    %p62 = por %p60, %p61
    %p64 = scmp.ne.s32.totalorder %s47, %s63
    %p65 = scmp.eq.s32.totalorder %s18, 0
    %p66 = por %p64, %p65
    %s68 = sadd.s32 %s67, 1
    %p71 = scmp.eq.s32.totalorder %s12, 1
    %p72 = scmp.ne.s32.totalorder %s67, %s69
    %p73 = scmp.eq.s32.totalorder %s12, 0
    %p74 = por %p72, %p73
    %p75 = scmp.ne.s32.totalorder %s67, %s69
    %p76 = scmp.eq.s32.totalorder %s17, 1
    %p77 = por %p75, %p76
    %p78 = scmp.ne.s32.totalorder %s69, %s70
    %p79 = scmp.eq.s32.totalorder %s17, 0
    %p80 = por %p78, %p79
    %p81 = scmp.ne.s32.totalorder %s69, %s70
    %p82 = scmp.eq.s32.totalorder %s18, 1
    %p83 = por %p81, %p82
    %p85 = scmp.ne.s32.totalorder %s70, %s84
    %p86 = scmp.eq.s32.totalorder %s18, 0
    %p87 = por %p85, %p86
    %s89 = sadd.s32 %s88, 1
    %p92 = scmp.eq.s32.totalorder %s12, 1
    %p93 = scmp.ne.s32.totalorder %s88, %s90
    %p94 = scmp.eq.s32.totalorder %s12, 0
    %p95 = por %p93, %p94
    %p96 = scmp.ne.s32.totalorder %s88, %s90
    %p97 = scmp.eq.s32.totalorder %s17, 1
    %p98 = por %p96, %p97
    %p99 = scmp.ne.s32.totalorder %s90, %s91
    %p100 = scmp.eq.s32.totalorder %s17, 0
    %p101 = por %p99, %p100
    %p102 = scmp.ne.s32.totalorder %s90, %s91
    %p103 = scmp.eq.s32.totalorder %s18, 1
    %p104 = por %p102, %p103
    %p106 = scmp.ne.s32.totalorder %s91, %s105
    %p107 = scmp.eq.s32.totalorder %s18, 0
    %p108 = por %p106, %p107
    %s110 = sadd.s32 %s109, 1
    %p113 = scmp.eq.s32.totalorder %s12, 1
    %p114 = scmp.ne.s32.totalorder %s109, %s111
    %p115 = scmp.eq.s32.totalorder %s12, 0
    %p116 = por %p114, %p115
    %p117 = scmp.ne.s32.totalorder %s109, %s111
    %p118 = scmp.eq.s32.totalorder %s17, 1
    %p119 = por %p117, %p118
    %p120 = scmp.ne.s32.totalorder %s111, %s112
    %p121 = scmp.eq.s32.totalorder %s17, 0
    %p122 = por %p120, %p121
    %p123 = scmp.ne.s32.totalorder %s111, %s112
    %p124 = scmp.eq.s32.totalorder %s18, 1
    %p125 = por %p123, %p124
    %p127 = scmp.ne.s32.totalorder %s112, %s126
    %p128 = scmp.eq.s32.totalorder %s18, 0
    %p129 = por %p127, %p128
    %s130 = ssub.s32 %s12, %s19
    %p131 = scmp.eq.s32.totalorder %s130, 0
    %s133 = sadd.s32 %s132, 1
    %s134 = scalar_select %p131, %s132, %s133
    %p137 = pneg %p131
    %p138 = scmp.eq.s32.totalorder %s12, 1
    %p139 = por %p137, %p138
    %p140 = scmp.ne.s32.totalorder %s132, %s135
    %p141 = scmp.eq.s32.totalorder %s12, 0
    %p142 = por %p140, %p141
    %p143 = scmp.ne.s32.totalorder %s132, %s135
    %p144 = scmp.eq.s32.totalorder %s17, 1
    %p145 = por %p143, %p144
    %p146 = scmp.ne.s32.totalorder %s135, %s136
    %p147 = scmp.eq.s32.totalorder %s17, 0
    %p148 = por %p146, %p147
    %p149 = scmp.ne.s32.totalorder %s135, %s136
    %p150 = scmp.eq.s32.totalorder %s18, 1
    %p151 = por %p149, %p150
    %p153 = scmp.ne.s32.totalorder %s136, %s152
    %p154 = scmp.eq.s32.totalorder %s18, 0
    %p155 = por %p153, %p154
    %p156 = scmp.le.s32.totalorder 1, %s12
    %p157 = scmp.lt.s32.totalorder %s12, 3
    %p158 = pnand %p156, %p157
    %p159 = pneg %p158
    // Predicated region
    $region9: #{forward.11} parent=5 // pred_check
      _
    $region10: #{forward.11} parent=5 // pred_check_branch
      %161 = sbr.rel (%p158) target = $region12
    $region11: #{forward.11} parent=5 // pred_region
      %s162 = ssub.s32 %s12, 1
      // Predicated region
      $region13: #{forward.11} parent=11 // pred_check
        %p163 = pneg %p33
      $region14: #{forward.11} parent=11 // pred_check_branch
        %165 = sbr.rel (%p163) target = $region16
      $region15: #{forward.11} parent=11 // pred_region
        _
      $region16: #{forward.11} parent=11 // pred_fallthru
        _
      // Predicated region
      $region17: #{forward.11} parent=11 // pred_check
        %p166 = pneg %p80
      $region18: #{forward.11} parent=11 // pred_check_branch
        %168 = sbr.rel (%p166) target = $region20
      $region19: #{forward.11} parent=11 // pred_region
        _
      $region20: #{forward.11} parent=11 // pred_fallthru
        _
      // Predicated region
      $region21: #{forward.11} parent=11 // pred_check
        %p169 = pneg %p101
      $region22: #{forward.11} parent=11 // pred_check_branch
        %171 = sbr.rel (%p169) target = $region24
      $region23: #{forward.11} parent=11 // pred_region
        _
      $region24: #{forward.11} parent=11 // pred_fallthru
        _
      // Predicated region
      $region25: #{forward.11} parent=11 // pred_check
        %p172 = pneg %p122
      $region26: #{forward.11} parent=11 // pred_check_branch
        %174 = sbr.rel (%p172) target = $region28
      $region27: #{forward.11} parent=11 // pred_region
        _
      $region28: #{forward.11} parent=11 // pred_fallthru
        _
    $region12: #{forward.11} parent=5 // pred_fallthru
      _
    %p175 = scmp.lt.s32.totalorder %s12, 2
    // Predicated region
    $region29: #{forward.11} parent=5 // pred_check
      %p176 = pneg %p175
    $region30: #{forward.11} parent=5 // pred_check_branch
      %178 = sbr.rel (%p176) target = $region32
    $region31: #{forward.11} parent=5 // pred_region
      // Predicated region
      $region33: #{forward.11} parent=31 // pred_check
        %p179 = pneg %p53
      $region34: #{forward.11} parent=31 // pred_check_branch
        %181 = sbr.rel (%p179) target = $region36
      $region35: #{forward.11} parent=31 // pred_region
        %p182 = scmp.lt.s32.totalorder %s12, 1
        %s183 = scalar_select %p182, %s12, 1
        %s184 = smul.addr %s183, 4
        %s185 = smul.addr %s184, 8
        %s186 = scalar_lea.vmem %s1, %s185
      $region36: #{forward.11} parent=31 // pred_fallthru
        _
    $region32: #{forward.11} parent=5 // pred_fallthru
      _
    %p187 = scmp.le.s32.totalorder 1, %s12
    %p188 = scmp.lt.s32.totalorder %s12, 3
    %p189 = pnand %p187, %p188
    %p190 = pneg %p189
    // Predicated region
    $region37: #{forward.11} parent=5 // pred_check
      _
    $region38: #{forward.11} parent=5 // pred_check_branch
      %192 = sbr.rel (%p189) target = $region40
    $region39: #{forward.11} parent=5 // pred_region
      %s193 = ssub.s32 %s12, 1
      %p194 = pneg %p33
      %p195 = pneg %p30
      %p196 = scmp.lt.s32.totalorder %s17, 1
      %s197 = scalar_select %p196, %s17, 1
      %s198 = smul.addr %s197, 4
      %s199 = smul.addr %s198, 8
      %s200 = scalar_lea.vmem %s1, %s199
      %p201 = pneg %p59
      %p202 = pneg %p56
      %p203 = pneg %p80
      %p204 = pneg %p77
      %p205 = pneg %p101
      %p206 = pneg %p98
      %p207 = pneg %p122
      %p208 = pneg %p119
      %p209 = pneg %p148
      %p210 = pneg %p145
      %p211 = scmp.lt.s32.totalorder %s17, 1
      %s212 = scalar_select %p211, %s17, 1
      %s213 = smul.addr %s212, 4
      %s214 = smul.addr %s213, 8
      %s215 = scalar_lea.vmem %s5, %s214
      %p216 = scmp.lt.s32.totalorder %s17, 1
      %s217 = scalar_select %p216, %s17, 1
      %s218 = smul.addr %s217, 4
      %s219 = smul.addr %s218, 8
      %s220 = scalar_lea.vmem %s1, %s219
      %p221 = scmp.lt.s32.totalorder %s17, 1
      %s222 = scalar_select %p221, %s17, 1
      %s223 = smul.addr %s222, 4
      %s224 = smul.addr %s223, 8
      %s225 = scalar_lea.vmem %s5, %s224
      %v226 = vld [vmem:[%s220] sm:$0xff]
      %v227 = vld [vmem:[%s220 + $0x8] sm:$0xff]
      %v228 = vld [vmem:[%s220 + $0x10] sm:$0xff]
      %v229 = vld [vmem:[%s220 + $0x18] sm:$0x3f]
      %v230 = vld [vmem:[%s2] sm:$0xff]
      %v231 = vld [vmem:[%s2 + $0x8] sm:$0xff]
      %v232 = vld [vmem:[%s2 + $0x10] sm:$0xff]
      %v233 = vld [vmem:[%s2 + $0x18] sm:$0xff]
      %v234 = vld [vmem:[%s2 + $0x20] sm:$0xff]
      %v235 = vld [vmem:[%s2 + $0x28] sm:$0xff]
      %vm236 = vcmask 392192
      %v238 = vsel %vm236, %v226, 0
      %v241 = vsel %vm236, %v227, 0
      %v244 = vsel %vm236, %v228, 0
      %v247 = vsel %vm236, %v229, 0
      %249 = vmatprep.subr.mxu0 0.0
      %250 = vmatpush1.msra.mxu0 %v230
      %251 = vmatprep.subr.mxu0 0.0
      %252 = vmatpush1.msra.mxu0 %v231
      %253 = vmatprep.subr.mxu0 0.0
      %254 = vmatpush1.msra.mxu0 %v232
      %255 = vmatprep.subr.mxu0 0.0
      %256 = vmatpush1.msra.mxu0 %v233
      %257 = vmatprep.subr.mxu0 0.0
      %258 = vmatpush1.msra.mxu0 %v234
      %259 = vmatprep.subr.mxu0 0.0
      %260 = vmatpush1.msra.mxu0 %v235
      %261 = vmatprep.subr.mxu0 0.0
      %262 = vmatpush1.msra.mxu0 0.0
      %263 = vmatprep.subr.mxu0 0.0
      %264 = vmatpush1.msra.mxu0 0.0
      %265 = vmatprep.subr.mxu0 0.0
      %266 = vmatpush1.msra.mxu0 0.0
      %267 = vmatprep.subr.mxu0 0.0
      %268 = vmatpush1.msra.mxu0 0.0
      %269 = vmatprep.subr.mxu0 0.0
      %270 = vmatpush1.msra.mxu0 0.0
      %271 = vmatprep.subr.mxu0 0.0
      %272 = vmatpush1.msra.mxu0 0.0
      %273 = vmatprep.subr.mxu0 0.0
      %274 = vmatpush1.msra.mxu0 0.0
      %275 = vmatprep.subr.mxu0 0.0
      %276 = vmatpush1.msra.mxu0 0.0
      %277 = vmatprep.subr.mxu0 0.0
      %278 = vmatpush1.msra.mxu0 0.0
      %279 = vmatprep.subr.mxu0 0.0
      %280 = vmatpush1.msra.mxu0 0.0
      %281 = vmatprep.subr.mxu0 0.0
      %282 = vmatpush1.msra.mxu0 0.0
      %283 = vmatprep.subr.mxu0 0.0
      %284 = vmatpush1.msra.mxu0 0.0
      %285 = vmatprep.subr.mxu0 0.0
      %286 = vmatpush1.msra.mxu0 0.0
      %287 = vmatprep.subr.mxu0 0.0
      %288 = vmatpush1.msra.mxu0 0.0
      %289 = vmatprep.subr.mxu0 0.0
      %290 = vmatpush1.msra.mxu0 0.0
      %291 = vmatprep.subr.mxu0 0.0
      %292 = vmatpush1.msra.mxu0 0.0
      %293 = vmatprep.subr.mxu0 0.0
      %294 = vmatpush1.msra.mxu0 0.0
      %295 = vmatprep.subr.mxu0 0.0
      %296 = vmatpush1.msra.mxu0 0.0
      %297 = vmatprep.subr.mxu0 0.0
      %298 = vmatpush1.msra.mxu0 0.0
      %299 = vmatprep.subr.mxu0 0.0
      %300 = vmatpush1.msra.mxu0 0.0
      %301 = vmatprep.subr.mxu0 0.0
      %302 = vmatpush1.msra.mxu0 0.0
      %303 = vmatprep.subr.mxu0 0.0
      %304 = vmatpush1.msra.mxu0 0.0
      %305 = vmatprep.subr.mxu0 0.0
      %306 = vmatpush1.msra.mxu0 0.0
      %307 = vmatprep.subr.mxu0 0.0
      %308 = vmatpush1.msra.mxu0 0.0
      %309 = vmatprep.subr.mxu0 0.0
      %310 = vmatpush1.msra.mxu0 0.0
      %311 = vmatprep.subr.mxu0 0.0
      %312 = vmatpush1.msra.mxu0 0.0
      %313 = vmatprep.mubr.f32.mxu0 0.0
      %314 = vmatmul.mubr.f32.gmra.mrb[0].mxu0 %v238
      %v315 = vpop.f32.mrb[0].mxu0
      %v316 = vadd.f32 0.0, %v315
      %v317 = vpop.f32.mrb[0].mxu0
      %318 = vmatprep.mubr.f32.mxu0 0.0
      %319 = vmatmul.mubr.f32.gmra.mrb[0].mxu0 %v241
      %v320 = vpop.f32.mrb[0].mxu0
      %v321 = vadd.f32 0.0, %v320
      %v322 = vpop.f32.mrb[0].mxu0
      %323 = vmatprep.mubr.f32.mxu0 0.0
      %324 = vmatmul.mubr.f32.gmra.mrb[0].mxu0 %v244
      %v325 = vpop.f32.mrb[0].mxu0
      %v326 = vadd.f32 0.0, %v325
      %v327 = vpop.f32.mrb[0].mxu0
      %328 = vmatprep.mubr.f32.mxu0 0.0
      %329 = vmatmul.mubr.f32.gmra.mrb[0].mxu0 %v247
      %v330 = vpop.f32.mrb[0].mxu0
      %v331 = vadd.f32 0.0, %v330
      %v332 = vpop.f32.mrb[0].mxu0
      %333 = vdwg.mxu0
      %v334 = vld [vmem:[%s3] sm:$0x1]
      %v336 = vlaneseq
      %v337 = vshrl.u32 %v336, 7
      %v338 = vsub.s32 0, %v337
      %v339 = vrot.slane %v334, %v338
      %v341 = vmul.f32 %v316, %v339
      %v342 = vmul.f32 %v321, %v339
      %v343 = vmul.f32 %v326, %v339
      %v344 = vmul.f32 %v331, %v339
      %v345 = vld [vmem:[%s4] sm:$0x1]
      %v347 = vlaneseq
      %v348 = vshrl.u32 %v347, 7
      %v349 = vsub.s32 0, %v348
      %v350 = vrot.slane %v345, %v349
      %v352 = vadd.f32 %v341, %v350
      %v353 = vadd.f32 %v342, %v350
      %v354 = vadd.f32 %v343, %v350
      %v355 = vadd.f32 %v344, %v350
      %s356 = sld [smem:[#allocation2]]
      %v357 = vmax.f32 %v352, 0.0
      %v358 = vmax.f32 %v353, 0.0
      %v359 = vmax.f32 %v354, 0.0
      %v360 = vmax.f32 %v355, 0.0
      %v361 = vmin.f32 %v352, 0.0
      %v362 = vmin.f32 %v353, 0.0
      %v363 = vmin.f32 %v354, 0.0
      %v364 = vmin.f32 %v355, 0.0
      %v365 = vstv %s356
      %v366 = vmul.f32 %v365, %v361
      %v367 = vmul.f32 %v365, %v362
      %v368 = vmul.f32 %v365, %v363
      %v369 = vmul.f32 %v365, %v364
      %v370 = vadd.f32 %v357, %v366
      %v371 = vadd.f32 %v358, %v367
      %v372 = vadd.f32 %v359, %v368
      %v373 = vadd.f32 %v360, %v369
      %vm374 = vcmask 130048
      %375 = vst.msk [vmem:[%s225] sm:$0xff] %vm374, %v370
      %376 = vst.msk [vmem:[%s225 + $0x8] sm:$0xff] %vm374, %v371
      %377 = vst.msk [vmem:[%s225 + $0x10] sm:$0xff] %vm374, %v372
      %vm378 = vcmask 128000
      %379 = vst.msk [vmem:[%s225 + $0x18] sm:$0x3f] %vm378, %v373
      %p380 = scmp.lt.s32.totalorder %s17, 1
      %s381 = scalar_select %p380, %s17, 1
      %s382 = smul.addr %s381, 4
      %s383 = smul.addr %s382, 8
      %s384 = scalar_lea.vmem %s5, %s383
      // Predicated region
      $region41: #{forward.11} parent=39 // pred_check
        %p385 = pneg %p145
      $region42: #{forward.11} parent=39 // pred_check_branch
        %387 = sbr.rel (%p385) target = $region44
      $region43: #{forward.11} parent=39 // pred_region
        _
      $region44: #{forward.11} parent=39 // pred_fallthru
        _
    $region40: #{forward.11} parent=5 // pred_fallthru
      _
    %p388 = scmp.le.s32.totalorder 2, %s12
    // Predicated region
    $region45: #{forward.11} parent=5 // pred_check
      %p389 = pneg %p388
    $region46: #{forward.11} parent=5 // pred_check_branch
      %391 = sbr.rel (%p389) target = $region48
    $region47: #{forward.11} parent=5 // pred_region
      %s392 = ssub.s32 %s12, 2
      // Predicated region
      $region49: #{forward.11} parent=47 // pred_check
        %p393 = pneg %p151
      $region50: #{forward.11} parent=47 // pred_check_branch
        %395 = sbr.rel (%p393) target = $region52
      $region51: #{forward.11} parent=47 // pred_region
        %p396 = scmp.lt.s32.totalorder %s18, 1
        %s397 = scalar_select %p396, %s18, 1
        %s398 = smul.addr %s397, 4
        %s399 = smul.addr %s398, 8
        %s400 = scalar_lea.vmem %s5, %s399
      $region52: #{forward.11} parent=47 // pred_fallthru
        _
    $region48: #{forward.11} parent=5 // pred_fallthru
      _
  $region6: #{forward.11} parent=0 // loop_footer
    %s16 = sadd.s32 1, %s12
  $region7: #{forward.11} parent=0 // loop_footer_branch
    %11 = sbr.rel target = $region3
  $region8: #{forward.11} parent=0 // loop_exit
    _

// kernel: forward.10
$region0: #{forward.10}
  #allocation0 [shape = 'u32[]', space=smem, size = 0x4, offset = 0x4, fixed_abs, tag = 'smem constant byte address 0x4 - core index']
  #allocation1 [shape = 'u32[144,128]{1,0:T(1,128)}', space=vmem, size = 0x12000, scoped, tag = 'internal scratch']
  #allocation2 [shape = 'f32[1]{0:T(128)S(6)}', space=smem, size = 0x200, scoped, tag = 'scoped memory for forward.10']
  %s0 = inlined_call_operand.<no memory space> [shape: f32[1], index: 0, kind: input, shape index: {}]
  %s1 = inlined_call_operand.vmem [shape: f32[2,64,4], index: 1, kind: input, shape index: {}]
  %s2 = inlined_call_operand.vmem [shape: f32[4,8], index: 2, kind: input, shape index: {}]
  %s3 = inlined_call_operand.vmem [shape: f32[1,1,8], index: 3, kind: input, shape index: {}]
  %s4 = inlined_call_operand.vmem [shape: f32[1,1,8], index: 4, kind: input, shape index: {}]
  %s5 = inlined_call_operand.vmem [shape: f32[2,64,8], index: 5, kind: output, shape index: {}]
  %s6 = sld [smem:[#allocation0]]
  $region53: #{forward.10} parent=0
    _
  %s8 = ssub.s32 1, %s6
  %s9 = scalar_select 0, %s8, %s6
  %10 = sst [smem:[#allocation2]] %s0
  loop: start=0, step=1, limit=4
  $region2: #{forward.10} parent=0 // loop_pre_header
    _
  $region3: #{forward.10} parent=0 // loop_header
    %s12 = sphi 0, %s16
    %p13 = scmp.ge.s32.totalorder %s12, 4
    %s20 = sphi 0, %s20
    %s22 = sphi 0, %s20
    %s23 = sphi 0, %s22
    %s37 = sphi 0, %s23
    %s43 = sphi 0, %s45
    %s46 = sphi 0, %s43
    %s47 = sphi 0, %s46
    %s63 = sphi 0, %s47
    %s67 = sphi 0, %s67
    %s69 = sphi 0, %s67
    %s70 = sphi 0, %s69
    %s84 = sphi 0, %s70
    %s88 = sphi 0, %s88
    %s90 = sphi 0, %s88
    %s91 = sphi 0, %s90
    %s105 = sphi 0, %s91
    %s109 = sphi 0, %s109
    %s111 = sphi 0, %s109
    %s112 = sphi 0, %s111
    %s126 = sphi 0, %s112
    %s132 = sphi 0, %s134
    %s135 = sphi 0, %s132
    %s136 = sphi 0, %s135
    %s152 = sphi 0, %s136
  $region4: #{forward.10} parent=0 // loop_header_branch
    %15 = sbr.rel (%p13) target = $region8
  $region5: #{forward.10} parent=0 // loop_body
    %s17 = ssub.s32 %s12, 1
    %s18 = ssub.s32 %s12, 2
    %s19 = sadd.s32 %s12, 1
    %s21 = sadd.s32 %s20, 1
    %p24 = scmp.eq.s32.totalorder %s12, 1
    %p25 = scmp.ne.s32.totalorder %s20, %s22
    %p26 = scmp.eq.s32.totalorder %s12, 0
    %p27 = por %p25, %p26
    %p28 = scmp.ne.s32.totalorder %s20, %s22
    %p29 = scmp.eq.s32.totalorder %s17, 1
    %p30 = por %p28, %p29
    %p31 = scmp.ne.s32.totalorder %s22, %s23
    %p32 = scmp.eq.s32.totalorder %s17, 0
    %p33 = por %p31, %p32
    %p34 = scmp.ne.s32.totalorder %s22, %s23
    %p35 = scmp.eq.s32.totalorder %s18, 1
    %p36 = por %p34, %p35
    %p38 = scmp.ne.s32.totalorder %s23, %s37
    %p39 = scmp.eq.s32.totalorder %s18, 0
    %p40 = por %p38, %p39
    %s41 = ssub.s32 %s12, %s19
    %p42 = scmp.eq.s32.totalorder %s41, 0
    %s44 = sadd.s32 %s43, 1
    %s45 = scalar_select %p42, %s43, %s44
    %p48 = pneg %p42
    %p49 = scmp.eq.s32.totalorder %s12, 1
    %p50 = por %p48, %p49
    %p51 = scmp.ne.s32.totalorder %s43, %s46
    %p52 = scmp.eq.s32.totalorder %s12, 0
    %p53 = por %p51, %p52
    %p54 = scmp.ne.s32.totalorder %s43, %s46
    %p55 = scmp.eq.s32.totalorder %s17, 1
    %p56 = por %p54, %p55
    %p57 = scmp.ne.s32.totalorder %s46, %s47
    %p58 = scmp.eq.s32.totalorder %s17, 0
    %p59 = por %p57, %p58
    %p60 = scmp.ne.s32.totalorder %s46, %s47
    %p61 = scmp.eq.s32.totalorder %s18, 1
    %p62 = por %p60, %p61
    %p64 = scmp.ne.s32.totalorder %s47, %s63
    %p65 = scmp.eq.s32.totalorder %s18, 0
    %p66 = por %p64, %p65
    %s68 = sadd.s32 %s67, 1
    %p71 = scmp.eq.s32.totalorder %s12, 1
    %p72 = scmp.ne.s32.totalorder %s67, %s69
    %p73 = scmp.eq.s32.totalorder %s12, 0
    %p74 = por %p72, %p73
    %p75 = scmp.ne.s32.totalorder %s67, %s69
    %p76 = scmp.eq.s32.totalorder %s17, 1
    %p77 = por %p75, %p76
    %p78 = scmp.ne.s32.totalorder %s69, %s70
    %p79 = scmp.eq.s32.totalorder %s17, 0
    %p80 = por %p78, %p79
    %p81 = scmp.ne.s32.totalorder %s69, %s70
    %p82 = scmp.eq.s32.totalorder %s18, 1
    %p83 = por %p81, %p82
    %p85 = scmp.ne.s32.totalorder %s70, %s84
    %p86 = scmp.eq.s32.totalorder %s18, 0
    %p87 = por %p85, %p86
    %s89 = sadd.s32 %s88, 1
    %p92 = scmp.eq.s32.totalorder %s12, 1
    %p93 = scmp.ne.s32.totalorder %s88, %s90
    %p94 = scmp.eq.s32.totalorder %s12, 0
    %p95 = por %p93, %p94
    %p96 = scmp.ne.s32.totalorder %s88, %s90
    %p97 = scmp.eq.s32.totalorder %s17, 1
    %p98 = por %p96, %p97
    %p99 = scmp.ne.s32.totalorder %s90, %s91
    %p100 = scmp.eq.s32.totalorder %s17, 0
    %p101 = por %p99, %p100
    %p102 = scmp.ne.s32.totalorder %s90, %s91
    %p103 = scmp.eq.s32.totalorder %s18, 1
    %p104 = por %p102, %p103
    %p106 = scmp.ne.s32.totalorder %s91, %s105
    %p107 = scmp.eq.s32.totalorder %s18, 0
    %p108 = por %p106, %p107
    %s110 = sadd.s32 %s109, 1
    %p113 = scmp.eq.s32.totalorder %s12, 1
    %p114 = scmp.ne.s32.totalorder %s109, %s111
    %p115 = scmp.eq.s32.totalorder %s12, 0
    %p116 = por %p114, %p115
    %p117 = scmp.ne.s32.totalorder %s109, %s111
    %p118 = scmp.eq.s32.totalorder %s17, 1
    %p119 = por %p117, %p118
    %p120 = scmp.ne.s32.totalorder %s111, %s112
    %p121 = scmp.eq.s32.totalorder %s17, 0
    %p122 = por %p120, %p121
    %p123 = scmp.ne.s32.totalorder %s111, %s112
    %p124 = scmp.eq.s32.totalorder %s18, 1
    %p125 = por %p123, %p124
    %p127 = scmp.ne.s32.totalorder %s112, %s126
    %p128 = scmp.eq.s32.totalorder %s18, 0
    %p129 = por %p127, %p128
    %s130 = ssub.s32 %s12, %s19
    %p131 = scmp.eq.s32.totalorder %s130, 0
    %s133 = sadd.s32 %s132, 1
    %s134 = scalar_select %p131, %s132, %s133
    %p137 = pneg %p131
    %p138 = scmp.eq.s32.totalorder %s12, 1
    %p139 = por %p137, %p138
    %p140 = scmp.ne.s32.totalorder %s132, %s135
    %p141 = scmp.eq.s32.totalorder %s12, 0
    %p142 = por %p140, %p141
    %p143 = scmp.ne.s32.totalorder %s132, %s135
    %p144 = scmp.eq.s32.totalorder %s17, 1
    %p145 = por %p143, %p144
    %p146 = scmp.ne.s32.totalorder %s135, %s136
    %p147 = scmp.eq.s32.totalorder %s17, 0
    %p148 = por %p146, %p147
    %p149 = scmp.ne.s32.totalorder %s135, %s136
    %p150 = scmp.eq.s32.totalorder %s18, 1
    %p151 = por %p149, %p150
    %p153 = scmp.ne.s32.totalorder %s136, %s152
    %p154 = scmp.eq.s32.totalorder %s18, 0
    %p155 = por %p153, %p154
    %p156 = scmp.le.s32.totalorder 1, %s12
    %p157 = scmp.lt.s32.totalorder %s12, 3
    %p158 = pnand %p156, %p157
    %p159 = pneg %p158
    // Predicated region
    $region9: #{forward.10} parent=5 // pred_check
      _
    $region10: #{forward.10} parent=5 // pred_check_branch
      %161 = sbr.rel (%p158) target = $region12
    $region11: #{forward.10} parent=5 // pred_region
      %s162 = ssub.s32 %s12, 1
      // Predicated region
      $region13: #{forward.10} parent=11 // pred_check
        %p163 = pneg %p33
      $region14: #{forward.10} parent=11 // pred_check_branch
        %165 = sbr.rel (%p163) target = $region16
      $region15: #{forward.10} parent=11 // pred_region
        _
      $region16: #{forward.10} parent=11 // pred_fallthru
        _
      // Predicated region
      $region17: #{forward.10} parent=11 // pred_check
        %p166 = pneg %p80
      $region18: #{forward.10} parent=11 // pred_check_branch
        %168 = sbr.rel (%p166) target = $region20
      $region19: #{forward.10} parent=11 // pred_region
        _
      $region20: #{forward.10} parent=11 // pred_fallthru
        _
      // Predicated region
      $region21: #{forward.10} parent=11 // pred_check
        %p169 = pneg %p101
      $region22: #{forward.10} parent=11 // pred_check_branch
        %171 = sbr.rel (%p169) target = $region24
      $region23: #{forward.10} parent=11 // pred_region
        _
      $region24: #{forward.10} parent=11 // pred_fallthru
        _
      // Predicated region
      $region25: #{forward.10} parent=11 // pred_check
        %p172 = pneg %p122
      $region26: #{forward.10} parent=11 // pred_check_branch
        %174 = sbr.rel (%p172) target = $region28
      $region27: #{forward.10} parent=11 // pred_region
        _
      $region28: #{forward.10} parent=11 // pred_fallthru
        _
    $region12: #{forward.10} parent=5 // pred_fallthru
      _
    %p175 = scmp.lt.s32.totalorder %s12, 2
    // Predicated region
    $region29: #{forward.10} parent=5 // pred_check
      %p176 = pneg %p175
    $region30: #{forward.10} parent=5 // pred_check_branch
      %178 = sbr.rel (%p176) target = $region32
    $region31: #{forward.10} parent=5 // pred_region
      // Predicated region
      $region33: #{forward.10} parent=31 // pred_check
        %p179 = pneg %p53
      $region34: #{forward.10} parent=31 // pred_check_branch
        %181 = sbr.rel (%p179) target = $region36
      $region35: #{forward.10} parent=31 // pred_region
        %p182 = scmp.lt.s32.totalorder %s12, 1
        %s183 = scalar_select %p182, %s12, 1
        %s184 = smul.addr %s183, 8
        %s185 = smul.addr %s184, 8
        %s186 = scalar_lea.vmem %s1, %s185
      $region36: #{forward.10} parent=31 // pred_fallthru
        _
    $region32: #{forward.10} parent=5 // pred_fallthru
      _
    %p187 = scmp.le.s32.totalorder 1, %s12
    %p188 = scmp.lt.s32.totalorder %s12, 3
    %p189 = pnand %p187, %p188
    %p190 = pneg %p189
    // Predicated region
    $region37: #{forward.10} parent=5 // pred_check
      _
    $region38: #{forward.10} parent=5 // pred_check_branch
      %192 = sbr.rel (%p189) target = $region40
    $region39: #{forward.10} parent=5 // pred_region
      %s193 = ssub.s32 %s12, 1
      %p194 = pneg %p33
      %p195 = pneg %p30
      %p196 = scmp.lt.s32.totalorder %s17, 1
      %s197 = scalar_select %p196, %s17, 1
      %s198 = smul.addr %s197, 8
      %s199 = smul.addr %s198, 8
      %s200 = scalar_lea.vmem %s1, %s199
      %p201 = pneg %p59
      %p202 = pneg %p56
      %p203 = pneg %p80
      %p204 = pneg %p77
      %p205 = pneg %p101
      %p206 = pneg %p98
      %p207 = pneg %p122
      %p208 = pneg %p119
      %p209 = pneg %p148
      %p210 = pneg %p145
      %p211 = scmp.lt.s32.totalorder %s17, 1
      %s212 = scalar_select %p211, %s17, 1
      %s213 = smul.addr %s212, 8
      %s214 = smul.addr %s213, 8
      %s215 = scalar_lea.vmem %s5, %s214
      %p216 = scmp.lt.s32.totalorder %s17, 1
      %s217 = scalar_select %p216, %s17, 1
      %s218 = smul.addr %s217, 8
      %s219 = smul.addr %s218, 8
      %s220 = scalar_lea.vmem %s1, %s219
      %p221 = scmp.lt.s32.totalorder %s17, 1
      %s222 = scalar_select %p221, %s17, 1
      %s223 = smul.addr %s222, 8
      %s224 = smul.addr %s223, 8
      %s225 = scalar_lea.vmem %s5, %s224
      %v226 = vld [vmem:[%s220] sm:$0xff]
      %v227 = vld [vmem:[%s220 + $0x8] sm:$0xff]
      %v228 = vld [vmem:[%s220 + $0x10] sm:$0xff]
      %v229 = vld [vmem:[%s220 + $0x18] sm:$0xff]
      %v230 = vld [vmem:[%s220 + $0x20] sm:$0xff]
      %v231 = vld [vmem:[%s220 + $0x28] sm:$0xff]
      %v232 = vld [vmem:[%s220 + $0x30] sm:$0xff]
      %v233 = vld [vmem:[%s220 + $0x38] sm:$0xff]
      %v234 = vld [vmem:[%s2] sm:$0xf]
      %vm235 = vcmask 31744
      %v237 = vsel %vm235, %v226, 0
      %v240 = vsel %vm235, %v227, 0
      %v243 = vsel %vm235, %v228, 0
      %v246 = vsel %vm235, %v229, 0
      %v249 = vsel %vm235, %v230, 0
      %v252 = vsel %vm235, %v231, 0
      %v255 = vsel %vm235, %v232, 0
      %v258 = vsel %vm235, %v233, 0
      %vm260 = vcmask 1043456
      %v262 = vsel %vm260, %v234, 0
      %264 = vmatprep.subr.mxu0 0.0
      %265 = vmatpush1.msra.mxu0 %v262
      %266 = vmatprep.subr.mxu0 0.0
      %267 = vmatpush1.msra.mxu0 0.0
      %268 = vmatprep.subr.mxu0 0.0
      %269 = vmatpush1.msra.mxu0 0.0
      %270 = vmatprep.subr.mxu0 0.0
      %271 = vmatpush1.msra.mxu0 0.0
      %272 = vmatprep.subr.mxu0 0.0
      %273 = vmatpush1.msra.mxu0 0.0
      %274 = vmatprep.subr.mxu0 0.0
      %275 = vmatpush1.msra.mxu0 0.0
      %276 = vmatprep.subr.mxu0 0.0
      %277 = vmatpush1.msra.mxu0 0.0
      %278 = vmatprep.subr.mxu0 0.0
      %279 = vmatpush1.msra.mxu0 0.0
      %280 = vmatprep.subr.mxu0 0.0
      %281 = vmatpush1.msra.mxu0 0.0
      %282 = vmatprep.subr.mxu0 0.0
      %283 = vmatpush1.msra.mxu0 0.0
      %284 = vmatprep.subr.mxu0 0.0
      %285 = vmatpush1.msra.mxu0 0.0
      %286 = vmatprep.subr.mxu0 0.0
      %287 = vmatpush1.msra.mxu0 0.0
      %288 = vmatprep.subr.mxu0 0.0
      %289 = vmatpush1.msra.mxu0 0.0
      %290 = vmatprep.subr.mxu0 0.0
      %291 = vmatpush1.msra.mxu0 0.0
      %292 = vmatprep.subr.mxu0 0.0
      %293 = vmatpush1.msra.mxu0 0.0
      %294 = vmatprep.subr.mxu0 0.0
      %295 = vmatpush1.msra.mxu0 0.0
      %296 = vmatprep.subr.mxu0 0.0
      %297 = vmatpush1.msra.mxu0 0.0
      %298 = vmatprep.subr.mxu0 0.0
      %299 = vmatpush1.msra.mxu0 0.0
      %300 = vmatprep.subr.mxu0 0.0
      %301 = vmatpush1.msra.mxu0 0.0
      %302 = vmatprep.subr.mxu0 0.0
      %303 = vmatpush1.msra.mxu0 0.0
      %304 = vmatprep.subr.mxu0 0.0
      %305 = vmatpush1.msra.mxu0 0.0
      %306 = vmatprep.subr.mxu0 0.0
      %307 = vmatpush1.msra.mxu0 0.0
      %308 = vmatprep.subr.mxu0 0.0
      %309 = vmatpush1.msra.mxu0 0.0
      %310 = vmatprep.subr.mxu0 0.0
      %311 = vmatpush1.msra.mxu0 0.0
      %312 = vmatprep.subr.mxu0 0.0
      %313 = vmatpush1.msra.mxu0 0.0
      %314 = vmatprep.subr.mxu0 0.0
      %315 = vmatpush1.msra.mxu0 0.0
      %316 = vmatprep.subr.mxu0 0.0
      %317 = vmatpush1.msra.mxu0 0.0
      %318 = vmatprep.subr.mxu0 0.0
      %319 = vmatpush1.msra.mxu0 0.0
      %320 = vmatprep.subr.mxu0 0.0
      %321 = vmatpush1.msra.mxu0 0.0
      %322 = vmatprep.subr.mxu0 0.0
      %323 = vmatpush1.msra.mxu0 0.0
      %324 = vmatprep.subr.mxu0 0.0
      %325 = vmatpush1.msra.mxu0 0.0
      %326 = vmatprep.subr.mxu0 0.0
      %327 = vmatpush1.msra.mxu0 0.0
      %328 = vmatprep.mubr.f32.mxu0 0.0
      %329 = vmatmul.mubr.f32.gmra.mrb[0].mxu0 %v237
      %v330 = vpop.f32.mrb[0].mxu0
      %v331 = vadd.f32 0.0, %v330
      %v332 = vpop.f32.mrb[0].mxu0
      %333 = vmatprep.mubr.f32.mxu0 0.0
      %334 = vmatmul.mubr.f32.gmra.mrb[0].mxu0 %v240
      %v335 = vpop.f32.mrb[0].mxu0
      %v336 = vadd.f32 0.0, %v335
      %v337 = vpop.f32.mrb[0].mxu0
      %338 = vmatprep.mubr.f32.mxu0 0.0
      %339 = vmatmul.mubr.f32.gmra.mrb[0].mxu0 %v243
      %v340 = vpop.f32.mrb[0].mxu0
      %v341 = vadd.f32 0.0, %v340
      %v342 = vpop.f32.mrb[0].mxu0
      %343 = vmatprep.mubr.f32.mxu0 0.0
      %344 = vmatmul.mubr.f32.gmra.mrb[0].mxu0 %v246
      %v345 = vpop.f32.mrb[0].mxu0
      %v346 = vadd.f32 0.0, %v345
      %v347 = vpop.f32.mrb[0].mxu0
      %348 = vmatprep.mubr.f32.mxu0 0.0
      %349 = vmatmul.mubr.f32.gmra.mrb[0].mxu0 %v249
      %v350 = vpop.f32.mrb[0].mxu0
      %v351 = vadd.f32 0.0, %v350
      %v352 = vpop.f32.mrb[0].mxu0
      %353 = vmatprep.mubr.f32.mxu0 0.0
      %354 = vmatmul.mubr.f32.gmra.mrb[0].mxu0 %v252
      %v355 = vpop.f32.mrb[0].mxu0
      %v356 = vadd.f32 0.0, %v355
      %v357 = vpop.f32.mrb[0].mxu0
      %358 = vmatprep.mubr.f32.mxu0 0.0
      %359 = vmatmul.mubr.f32.gmra.mrb[0].mxu0 %v255
      %v360 = vpop.f32.mrb[0].mxu0
      %v361 = vadd.f32 0.0, %v360
      %v362 = vpop.f32.mrb[0].mxu0
      %363 = vmatprep.mubr.f32.mxu0 0.0
      %364 = vmatmul.mubr.f32.gmra.mrb[0].mxu0 %v258
      %v365 = vpop.f32.mrb[0].mxu0
      %v366 = vadd.f32 0.0, %v365
      %v367 = vpop.f32.mrb[0].mxu0
      %368 = vdwg.mxu0
      %v369 = vld [vmem:[%s3] sm:$0x1]
      %v371 = vlaneseq
      %v372 = vshrl.u32 %v371, 7
      %v373 = vsub.s32 0, %v372
      %v374 = vrot.slane %v369, %v373
      %v376 = vmul.f32 %v331, %v374
      %v377 = vmul.f32 %v336, %v374
      %v378 = vmul.f32 %v341, %v374
      %v379 = vmul.f32 %v346, %v374
      %v380 = vmul.f32 %v351, %v374
      %v381 = vmul.f32 %v356, %v374
      %v382 = vmul.f32 %v361, %v374
      %v383 = vmul.f32 %v366, %v374
      %v384 = vld [vmem:[%s4] sm:$0x1]
      %v386 = vlaneseq
      %v387 = vshrl.u32 %v386, 7
      %v388 = vsub.s32 0, %v387
      %v389 = vrot.slane %v384, %v388
      %v391 = vadd.f32 %v376, %v389
      %v392 = vadd.f32 %v377, %v389
      %v393 = vadd.f32 %v378, %v389
      %v394 = vadd.f32 %v379, %v389
      %v395 = vadd.f32 %v380, %v389
      %v396 = vadd.f32 %v381, %v389
      %v397 = vadd.f32 %v382, %v389
      %v398 = vadd.f32 %v383, %v389
      %s399 = sld [smem:[#allocation2]]
      %v400 = vmax.f32 %v391, 0.0
      %v401 = vmax.f32 %v392, 0.0
      %v402 = vmax.f32 %v393, 0.0
      %v403 = vmax.f32 %v394, 0.0
      %v404 = vmax.f32 %v395, 0.0
      %v405 = vmax.f32 %v396, 0.0
      %v406 = vmax.f32 %v397, 0.0
      %v407 = vmax.f32 %v398, 0.0
      %v408 = vmin.f32 %v391, 0.0
      %v409 = vmin.f32 %v392, 0.0
      %v410 = vmin.f32 %v393, 0.0
      %v411 = vmin.f32 %v394, 0.0
      %v412 = vmin.f32 %v395, 0.0
      %v413 = vmin.f32 %v396, 0.0
      %v414 = vmin.f32 %v397, 0.0
      %v415 = vmin.f32 %v398, 0.0
      %v416 = vstv %s399
      %v417 = vmul.f32 %v416, %v408
      %v418 = vmul.f32 %v416, %v409
      %v419 = vmul.f32 %v416, %v410
      %v420 = vmul.f32 %v416, %v411
      %v421 = vmul.f32 %v416, %v412
      %v422 = vmul.f32 %v416, %v413
      %v423 = vmul.f32 %v416, %v414
      %v424 = vmul.f32 %v416, %v415
      %v425 = vadd.f32 %v400, %v417
      %v426 = vadd.f32 %v401, %v418
      %v427 = vadd.f32 %v402, %v419
      %v428 = vadd.f32 %v403, %v420
      %v429 = vadd.f32 %v404, %v421
      %v430 = vadd.f32 %v405, %v422
      %v431 = vadd.f32 %v406, %v423
      %v432 = vadd.f32 %v407, %v424
      %vm433 = vcmask 64512
      %434 = vst.msk [vmem:[%s225] sm:$0xff] %vm433, %v425
      %435 = vst.msk [vmem:[%s225 + $0x8] sm:$0xff] %vm433, %v426
      %436 = vst.msk [vmem:[%s225 + $0x10] sm:$0xff] %vm433, %v427
      %437 = vst.msk [vmem:[%s225 + $0x18] sm:$0xff] %vm433, %v428
      %438 = vst.msk [vmem:[%s225 + $0x20] sm:$0xff] %vm433, %v429
      %439 = vst.msk [vmem:[%s225 + $0x28] sm:$0xff] %vm433, %v430
      %440 = vst.msk [vmem:[%s225 + $0x30] sm:$0xff] %vm433, %v431
      %441 = vst.msk [vmem:[%s225 + $0x38] sm:$0xff] %vm433, %v432
      %p442 = scmp.lt.s32.totalorder %s17, 1
      %s443 = scalar_select %p442, %s17, 1
      %s444 = smul.addr %s443, 8
      %s445 = smul.addr %s444, 8
      %s446 = scalar_lea.vmem %s5, %s445
      // Predicated region
      $region41: #{forward.10} parent=39 // pred_check
        %p447 = pneg %p145
      $region42: #{forward.10} parent=39 // pred_check_branch
        %449 = sbr.rel (%p447) target = $region44
      $region43: #{forward.10} parent=39 // pred_region
        _
      $region44: #{forward.10} parent=39 // pred_fallthru
        _
    $region40: #{forward.10} parent=5 // pred_fallthru
      _
    %p450 = scmp.le.s32.totalorder 2, %s12
    // Predicated region
    $region45: #{forward.10} parent=5 // pred_check
      %p451 = pneg %p450
    $region46: #{forward.10} parent=5 // pred_check_branch
      %453 = sbr.rel (%p451) target = $region48
    $region47: #{forward.10} parent=5 // pred_region
      %s454 = ssub.s32 %s12, 2
      // Predicated region
      $region49: #{forward.10} parent=47 // pred_check
        %p455 = pneg %p151
      $region50: #{forward.10} parent=47 // pred_check_branch
        %457 = sbr.rel (%p455) target = $region52
      $region51: #{forward.10} parent=47 // pred_region
        %p458 = scmp.lt.s32.totalorder %s18, 1
        %s459 = scalar_select %p458, %s18, 1
        %s460 = smul.addr %s459, 8
        %s461 = smul.addr %s460, 8
        %s462 = scalar_lea.vmem %s5, %s461
      $region52: #{forward.10} parent=47 // pred_fallthru
        _
    $region48: #{forward.10} parent=5 // pred_fallthru
      _
  $region6: #{forward.10} parent=0 // loop_footer
    %s16 = sadd.s32 1, %s12
  $region7: #{forward.10} parent=0 // loop_footer_branch
    %11 = sbr.rel target = $region3
  $region8: #{forward.10} parent=0 // loop_exit
    _

// kernel: forward.12
$region0: #{forward.12}
  #allocation0 [shape = 'u32[]', space=smem, size = 0x4, offset = 0x4, fixed_abs, tag = 'smem constant byte address 0x4 - core index']
  #allocation1 [shape = 'u32[144,128]{1,0:T(1,128)}', space=vmem, size = 0x12000, scoped, tag = 'internal scratch']
  #allocation2 [shape = 'f32[1]{0:T(128)S(6)}', space=smem, size = 0x200, scoped, tag = 'scoped memory for forward.12']
  %s0 = inlined_call_operand.<no memory space> [shape: f32[1], index: 0, kind: input, shape index: {}]
  %s1 = inlined_call_operand.vmem [shape: f32[2,14,64], index: 1, kind: input, shape index: {}]
  %s2 = inlined_call_operand.vmem [shape: f32[64,32], index: 2, kind: input, shape index: {}]
  %s3 = inlined_call_operand.vmem [shape: f32[1,1,32], index: 3, kind: input, shape index: {}]
  %s4 = inlined_call_operand.vmem [shape: f32[1,1,32], index: 4, kind: input, shape index: {}]
  %s5 = inlined_call_operand.vmem [shape: f32[2,14,32], index: 5, kind: output, shape index: {}]
  %s6 = sld [smem:[#allocation0]]
  $region53: #{forward.12} parent=0
    _
  %s8 = ssub.s32 1, %s6
  %s9 = scalar_select 0, %s8, %s6
  %10 = sst [smem:[#allocation2]] %s0
  loop: start=0, step=1, limit=4
  $region2: #{forward.12} parent=0 // loop_pre_header
    _
  $region3: #{forward.12} parent=0 // loop_header
    %s12 = sphi 0, %s16
    %p13 = scmp.ge.s32.totalorder %s12, 4
    %s20 = sphi 0, %s20
    %s22 = sphi 0, %s20
    %s23 = sphi 0, %s22
    %s37 = sphi 0, %s23
    %s43 = sphi 0, %s45
    %s46 = sphi 0, %s43
    %s47 = sphi 0, %s46
    %s63 = sphi 0, %s47
    %s67 = sphi 0, %s67
    %s69 = sphi 0, %s67
    %s70 = sphi 0, %s69
    %s84 = sphi 0, %s70
    %s88 = sphi 0, %s88
    %s90 = sphi 0, %s88
    %s91 = sphi 0, %s90
    %s105 = sphi 0, %s91
    %s109 = sphi 0, %s109
    %s111 = sphi 0, %s109
    %s112 = sphi 0, %s111
    %s126 = sphi 0, %s112
    %s132 = sphi 0, %s134
    %s135 = sphi 0, %s132
    %s136 = sphi 0, %s135
    %s152 = sphi 0, %s136
  $region4: #{forward.12} parent=0 // loop_header_branch
    %15 = sbr.rel (%p13) target = $region8
  $region5: #{forward.12} parent=0 // loop_body
    %s17 = ssub.s32 %s12, 1
    %s18 = ssub.s32 %s12, 2
    %s19 = sadd.s32 %s12, 1
    %s21 = sadd.s32 %s20, 1
    %p24 = scmp.eq.s32.totalorder %s12, 1
    %p25 = scmp.ne.s32.totalorder %s20, %s22
    %p26 = scmp.eq.s32.totalorder %s12, 0
    %p27 = por %p25, %p26
    %p28 = scmp.ne.s32.totalorder %s20, %s22
    %p29 = scmp.eq.s32.totalorder %s17, 1
    %p30 = por %p28, %p29
    %p31 = scmp.ne.s32.totalorder %s22, %s23
    %p32 = scmp.eq.s32.totalorder %s17, 0
    %p33 = por %p31, %p32
    %p34 = scmp.ne.s32.totalorder %s22, %s23
    %p35 = scmp.eq.s32.totalorder %s18, 1
    %p36 = por %p34, %p35
    %p38 = scmp.ne.s32.totalorder %s23, %s37
    %p39 = scmp.eq.s32.totalorder %s18, 0
    %p40 = por %p38, %p39
    %s41 = ssub.s32 %s12, %s19
    %p42 = scmp.eq.s32.totalorder %s41, 0
    %s44 = sadd.s32 %s43, 1
    %s45 = scalar_select %p42, %s43, %s44
    %p48 = pneg %p42
    %p49 = scmp.eq.s32.totalorder %s12, 1
    %p50 = por %p48, %p49
    %p51 = scmp.ne.s32.totalorder %s43, %s46
    %p52 = scmp.eq.s32.totalorder %s12, 0
    %p53 = por %p51, %p52
    %p54 = scmp.ne.s32.totalorder %s43, %s46
    %p55 = scmp.eq.s32.totalorder %s17, 1
    %p56 = por %p54, %p55
    %p57 = scmp.ne.s32.totalorder %s46, %s47
    %p58 = scmp.eq.s32.totalorder %s17, 0
    %p59 = por %p57, %p58
    %p60 = scmp.ne.s32.totalorder %s46, %s47
    %p61 = scmp.eq.s32.totalorder %s18, 1
    %p62 = por %p60, %p61
    %p64 = scmp.ne.s32.totalorder %s47, %s63
    %p65 = scmp.eq.s32.totalorder %s18, 0
    %p66 = por %p64, %p65
    %s68 = sadd.s32 %s67, 1
    %p71 = scmp.eq.s32.totalorder %s12, 1
    %p72 = scmp.ne.s32.totalorder %s67, %s69
    %p73 = scmp.eq.s32.totalorder %s12, 0
    %p74 = por %p72, %p73
    %p75 = scmp.ne.s32.totalorder %s67, %s69
    %p76 = scmp.eq.s32.totalorder %s17, 1
    %p77 = por %p75, %p76
    %p78 = scmp.ne.s32.totalorder %s69, %s70
    %p79 = scmp.eq.s32.totalorder %s17, 0
    %p80 = por %p78, %p79
    %p81 = scmp.ne.s32.totalorder %s69, %s70
    %p82 = scmp.eq.s32.totalorder %s18, 1
    %p83 = por %p81, %p82
    %p85 = scmp.ne.s32.totalorder %s70, %s84
    %p86 = scmp.eq.s32.totalorder %s18, 0
    %p87 = por %p85, %p86
    %s89 = sadd.s32 %s88, 1
    %p92 = scmp.eq.s32.totalorder %s12, 1
    %p93 = scmp.ne.s32.totalorder %s88, %s90
    %p94 = scmp.eq.s32.totalorder %s12, 0
    %p95 = por %p93, %p94
    %p96 = scmp.ne.s32.totalorder %s88, %s90
    %p97 = scmp.eq.s32.totalorder %s17, 1
    %p98 = por %p96, %p97
    %p99 = scmp.ne.s32.totalorder %s90, %s91
    %p100 = scmp.eq.s32.totalorder %s17, 0
    %p101 = por %p99, %p100
    %p102 = scmp.ne.s32.totalorder %s90, %s91
    %p103 = scmp.eq.s32.totalorder %s18, 1
    %p104 = por %p102, %p103
    %p106 = scmp.ne.s32.totalorder %s91, %s105
    %p107 = scmp.eq.s32.totalorder %s18, 0
    %p108 = por %p106, %p107
    %s110 = sadd.s32 %s109, 1
    %p113 = scmp.eq.s32.totalorder %s12, 1
    %p114 = scmp.ne.s32.totalorder %s109, %s111
    %p115 = scmp.eq.s32.totalorder %s12, 0
    %p116 = por %p114, %p115
    %p117 = scmp.ne.s32.totalorder %s109, %s111
    %p118 = scmp.eq.s32.totalorder %s17, 1
    %p119 = por %p117, %p118
    %p120 = scmp.ne.s32.totalorder %s111, %s112
    %p121 = scmp.eq.s32.totalorder %s17, 0
    %p122 = por %p120, %p121
    %p123 = scmp.ne.s32.totalorder %s111, %s112
    %p124 = scmp.eq.s32.totalorder %s18, 1
    %p125 = por %p123, %p124
    %p127 = scmp.ne.s32.totalorder %s112, %s126
    %p128 = scmp.eq.s32.totalorder %s18, 0
    %p129 = por %p127, %p128
    %s130 = ssub.s32 %s12, %s19
    %p131 = scmp.eq.s32.totalorder %s130, 0
    %s133 = sadd.s32 %s132, 1
    %s134 = scalar_select %p131, %s132, %s133
    %p137 = pneg %p131
    %p138 = scmp.eq.s32.totalorder %s12, 1
    %p139 = por %p137, %p138
    %p140 = scmp.ne.s32.totalorder %s132, %s135
    %p141 = scmp.eq.s32.totalorder %s12, 0
    %p142 = por %p140, %p141
    %p143 = scmp.ne.s32.totalorder %s132, %s135
    %p144 = scmp.eq.s32.totalorder %s17, 1
    %p145 = por %p143, %p144
    %p146 = scmp.ne.s32.totalorder %s135, %s136
    %p147 = scmp.eq.s32.totalorder %s17, 0
    %p148 = por %p146, %p147
    %p149 = scmp.ne.s32.totalorder %s135, %s136
    %p150 = scmp.eq.s32.totalorder %s18, 1
    %p151 = por %p149, %p150
    %p153 = scmp.ne.s32.totalorder %s136, %s152
    %p154 = scmp.eq.s32.totalorder %s18, 0
    %p155 = por %p153, %p154
    %p156 = scmp.le.s32.totalorder 1, %s12
    %p157 = scmp.lt.s32.totalorder %s12, 3
    %p158 = pnand %p156, %p157
    %p159 = pneg %p158
    // Predicated region
    $region9: #{forward.12} parent=5 // pred_check
      _
    $region10: #{forward.12} parent=5 // pred_check_branch
      %161 = sbr.rel (%p158) target = $region12
    $region11: #{forward.12} parent=5 // pred_region
      %s162 = ssub.s32 %s12, 1
      // Predicated region
      $region13: #{forward.12} parent=11 // pred_check
        %p163 = pneg %p33
      $region14: #{forward.12} parent=11 // pred_check_branch
        %165 = sbr.rel (%p163) target = $region16
      $region15: #{forward.12} parent=11 // pred_region
        _
      $region16: #{forward.12} parent=11 // pred_fallthru
        _
      // Predicated region
      $region17: #{forward.12} parent=11 // pred_check
        %p166 = pneg %p80
      $region18: #{forward.12} parent=11 // pred_check_branch
        %168 = sbr.rel (%p166) target = $region20
      $region19: #{forward.12} parent=11 // pred_region
        _
      $region20: #{forward.12} parent=11 // pred_fallthru
        _
      // Predicated region
      $region21: #{forward.12} parent=11 // pred_check
        %p169 = pneg %p101
      $region22: #{forward.12} parent=11 // pred_check_branch
        %171 = sbr.rel (%p169) target = $region24
      $region23: #{forward.12} parent=11 // pred_region
        _
      $region24: #{forward.12} parent=11 // pred_fallthru
        _
      // Predicated region
      $region25: #{forward.12} parent=11 // pred_check
        %p172 = pneg %p122
      $region26: #{forward.12} parent=11 // pred_check_branch
        %174 = sbr.rel (%p172) target = $region28
      $region27: #{forward.12} parent=11 // pred_region
        _
      $region28: #{forward.12} parent=11 // pred_fallthru
        _
    $region12: #{forward.12} parent=5 // pred_fallthru
      _
    %p175 = scmp.lt.s32.totalorder %s12, 2
    // Predicated region
    $region29: #{forward.12} parent=5 // pred_check
      %p176 = pneg %p175
    $region30: #{forward.12} parent=5 // pred_check_branch
      %178 = sbr.rel (%p176) target = $region32
    $region31: #{forward.12} parent=5 // pred_region
      // Predicated region
      $region33: #{forward.12} parent=31 // pred_check
        %p179 = pneg %p53
      $region34: #{forward.12} parent=31 // pred_check_branch
        %181 = sbr.rel (%p179) target = $region36
      $region35: #{forward.12} parent=31 // pred_region
        %p182 = scmp.lt.s32.totalorder %s12, 1
        %s183 = scalar_select %p182, %s12, 1
        %s184 = smul.addr %s183, 2
        %s185 = smul.addr %s184, 8
        %s186 = scalar_lea.vmem %s1, %s185
      $region36: #{forward.12} parent=31 // pred_fallthru
        _
    $region32: #{forward.12} parent=5 // pred_fallthru
      _
    %p187 = scmp.le.s32.totalorder 1, %s12
    %p188 = scmp.lt.s32.totalorder %s12, 3
    %p189 = pnand %p187, %p188
    %p190 = pneg %p189
    // Predicated region
    $region37: #{forward.12} parent=5 // pred_check
      _
    $region38: #{forward.12} parent=5 // pred_check_branch
      %192 = sbr.rel (%p189) target = $region40
    $region39: #{forward.12} parent=5 // pred_region
      %s193 = ssub.s32 %s12, 1
      %p194 = pneg %p33
      %p195 = pneg %p30
      %p196 = scmp.lt.s32.totalorder %s17, 1
      %s197 = scalar_select %p196, %s17, 1
      %s198 = smul.addr %s197, 2
      %s199 = smul.addr %s198, 8
      %s200 = scalar_lea.vmem %s1, %s199
      %p201 = pneg %p59
      %p202 = pneg %p56
      %p203 = pneg %p80
      %p204 = pneg %p77
      %p205 = pneg %p101
      %p206 = pneg %p98
      %p207 = pneg %p122
      %p208 = pneg %p119
      %p209 = pneg %p148
      %p210 = pneg %p145
      %p211 = scmp.lt.s32.totalorder %s17, 1
      %s212 = scalar_select %p211, %s17, 1
      %s213 = smul.addr %s212, 2
      %s214 = smul.addr %s213, 8
      %s215 = scalar_lea.vmem %s5, %s214
      %p216 = scmp.lt.s32.totalorder %s17, 1
      %s217 = scalar_select %p216, %s17, 1
      %s218 = smul.addr %s217, 2
      %s219 = smul.addr %s218, 8
      %s220 = scalar_lea.vmem %s1, %s219
      %p221 = scmp.lt.s32.totalorder %s17, 1
      %s222 = scalar_select %p221, %s17, 1
      %s223 = smul.addr %s222, 2
      %s224 = smul.addr %s223, 8
      %s225 = scalar_lea.vmem %s5, %s224
      %v226 = vld [vmem:[%s220] sm:$0xff]
      %v227 = vld [vmem:[%s220 + $0x8] sm:$0x3f]
      %v228 = vld [vmem:[%s2] sm:$0xff]
      %v229 = vld [vmem:[%s2 + $0x8] sm:$0xff]
      %v230 = vld [vmem:[%s2 + $0x10] sm:$0xff]
      %v231 = vld [vmem:[%s2 + $0x18] sm:$0xff]
      %v232 = vld [vmem:[%s2 + $0x20] sm:$0xff]
      %v233 = vld [vmem:[%s2 + $0x28] sm:$0xff]
      %v234 = vld [vmem:[%s2 + $0x30] sm:$0xff]
      %v235 = vld [vmem:[%s2 + $0x38] sm:$0xff]
      %vm236 = vcmask 523264
      %v238 = vsel %vm236, %v226, 0
      %v241 = vsel %vm236, %v227, 0
      %243 = vmatprep.subr.mxu0 0.0
      %244 = vmatpush1.msra.mxu0 %v228
      %245 = vmatprep.subr.mxu0 0.0
      %246 = vmatpush1.msra.mxu0 %v229
      %247 = vmatprep.subr.mxu0 0.0
      %248 = vmatpush1.msra.mxu0 %v230
      %249 = vmatprep.subr.mxu0 0.0
      %250 = vmatpush1.msra.mxu0 %v231
      %251 = vmatprep.subr.mxu0 0.0
      %252 = vmatpush1.msra.mxu0 %v232
      %253 = vmatprep.subr.mxu0 0.0
      %254 = vmatpush1.msra.mxu0 %v233
      %255 = vmatprep.subr.mxu0 0.0
      %256 = vmatpush1.msra.mxu0 %v234
      %257 = vmatprep.subr.mxu0 0.0
      %258 = vmatpush1.msra.mxu0 %v235
      %259 = vmatprep.subr.mxu0 0.0
      %260 = vmatpush1.msra.mxu0 0.0
      %261 = vmatprep.subr.mxu0 0.0
      %262 = vmatpush1.msra.mxu0 0.0
      %263 = vmatprep.subr.mxu0 0.0
      %264 = vmatpush1.msra.mxu0 0.0
      %265 = vmatprep.subr.mxu0 0.0
      %266 = vmatpush1.msra.mxu0 0.0
      %267 = vmatprep.subr.mxu0 0.0
      %268 = vmatpush1.msra.mxu0 0.0
      %269 = vmatprep.subr.mxu0 0.0
      %270 = vmatpush1.msra.mxu0 0.0
      %271 = vmatprep.subr.mxu0 0.0
      %272 = vmatpush1.msra.mxu0 0.0
      %273 = vmatprep.subr.mxu0 0.0
      %274 = vmatpush1.msra.mxu0 0.0
      %275 = vmatprep.subr.mxu0 0.0
      %276 = vmatpush1.msra.mxu0 0.0
      %277 = vmatprep.subr.mxu0 0.0
      %278 = vmatpush1.msra.mxu0 0.0
      %279 = vmatprep.subr.mxu0 0.0
      %280 = vmatpush1.msra.mxu0 0.0
      %281 = vmatprep.subr.mxu0 0.0
      %282 = vmatpush1.msra.mxu0 0.0
      %283 = vmatprep.subr.mxu0 0.0
      %284 = vmatpush1.msra.mxu0 0.0
      %285 = vmatprep.subr.mxu0 0.0
      %286 = vmatpush1.msra.mxu0 0.0
      %287 = vmatprep.subr.mxu0 0.0
      %288 = vmatpush1.msra.mxu0 0.0
      %289 = vmatprep.subr.mxu0 0.0
      %290 = vmatpush1.msra.mxu0 0.0
      %291 = vmatprep.subr.mxu0 0.0
      %292 = vmatpush1.msra.mxu0 0.0
      %293 = vmatprep.subr.mxu0 0.0
      %294 = vmatpush1.msra.mxu0 0.0
      %295 = vmatprep.subr.mxu0 0.0
      %296 = vmatpush1.msra.mxu0 0.0
      %297 = vmatprep.subr.mxu0 0.0
      %298 = vmatpush1.msra.mxu0 0.0
      %299 = vmatprep.subr.mxu0 0.0
      %300 = vmatpush1.msra.mxu0 0.0
      %301 = vmatprep.subr.mxu0 0.0
      %302 = vmatpush1.msra.mxu0 0.0
      %303 = vmatprep.subr.mxu0 0.0
      %304 = vmatpush1.msra.mxu0 0.0
      %305 = vmatprep.subr.mxu0 0.0
      %306 = vmatpush1.msra.mxu0 0.0
      %307 = vmatprep.mubr.f32.mxu0 0.0
      %308 = vmatmul.mubr.f32.gmra.mrb[0].mxu0 %v238
      %v309 = vpop.f32.mrb[0].mxu0
      %v310 = vadd.f32 0.0, %v309
      %v311 = vpop.f32.mrb[0].mxu0
      %312 = vmatprep.mubr.f32.mxu0 0.0
      %313 = vmatmul.mubr.f32.gmra.mrb[0].mxu0 %v241
      %v314 = vpop.f32.mrb[0].mxu0
      %v315 = vadd.f32 0.0, %v314
      %v316 = vpop.f32.mrb[0].mxu0
      %317 = vdwg.mxu0
      %v318 = vld [vmem:[%s3] sm:$0x1]
      %v320 = vlaneseq
      %v321 = vshrl.u32 %v320, 7
      %v322 = vsub.s32 0, %v321
      %v323 = vrot.slane %v318, %v322
      %v325 = vmul.f32 %v310, %v323
      %v326 = vmul.f32 %v315, %v323
      %v327 = vld [vmem:[%s4] sm:$0x1]
      %v329 = vlaneseq
      %v330 = vshrl.u32 %v329, 7
      %v331 = vsub.s32 0, %v330
      %v332 = vrot.slane %v327, %v331
      %v334 = vadd.f32 %v325, %v332
      %v335 = vadd.f32 %v326, %v332
      %s336 = sld [smem:[#allocation2]]
      %v337 = vmax.f32 %v334, 0.0
      %v338 = vmax.f32 %v335, 0.0
      %v339 = vmin.f32 %v334, 0.0
      %v340 = vmin.f32 %v335, 0.0
      %v341 = vstv %s336
      %v342 = vmul.f32 %v341, %v339
      %v343 = vmul.f32 %v341, %v340
      %v344 = vadd.f32 %v337, %v342
      %v345 = vadd.f32 %v338, %v343
      %vm346 = vcmask 261120
      %347 = vst.msk [vmem:[%s225] sm:$0xff] %vm346, %v344
      %vm348 = vcmask 259072
      %349 = vst.msk [vmem:[%s225 + $0x8] sm:$0x3f] %vm348, %v345
      %p350 = scmp.lt.s32.totalorder %s17, 1
      %s351 = scalar_select %p350, %s17, 1
      %s352 = smul.addr %s351, 2
      %s353 = smul.addr %s352, 8
      %s354 = scalar_lea.vmem %s5, %s353
      // Predicated region
      $region41: #{forward.12} parent=39 // pred_check
        %p355 = pneg %p145
      $region42: #{forward.12} parent=39 // pred_check_branch
        %357 = sbr.rel (%p355) target = $region44
      $region43: #{forward.12} parent=39 // pred_region
        _
      $region44: #{forward.12} parent=39 // pred_fallthru
        _
    $region40: #{forward.12} parent=5 // pred_fallthru
      _
    %p358 = scmp.le.s32.totalorder 2, %s12
    // Predicated region
    $region45: #{forward.12} parent=5 // pred_check
      %p359 = pneg %p358
    $region46: #{forward.12} parent=5 // pred_check_branch
      %361 = sbr.rel (%p359) target = $region48
    $region47: #{forward.12} parent=5 // pred_region
      %s362 = ssub.s32 %s12, 2
      // Predicated region
      $region49: #{forward.12} parent=47 // pred_check
        %p363 = pneg %p151
      $region50: #{forward.12} parent=47 // pred_check_branch
        %365 = sbr.rel (%p363) target = $region52
      $region51: #{forward.12} parent=47 // pred_region
        %p366 = scmp.lt.s32.totalorder %s18, 1
        %s367 = scalar_select %p366, %s18, 1
        %s368 = smul.addr %s367, 2
        %s369 = smul.addr %s368, 8
        %s370 = scalar_lea.vmem %s5, %s369
      $region52: #{forward.12} parent=47 // pred_fallthru
        _
    $region48: #{forward.12} parent=5 // pred_fallthru
      _
  $region6: #{forward.12} parent=0 // loop_footer
    %s16 = sadd.s32 1, %s12
  $region7: #{forward.12} parent=0 // loop_footer_branch
    %11 = sbr.rel target = $region3
  $region8: #{forward.12} parent=0 // loop_exit
    _

// kernel: forward.13
$region0: #{forward.13}
  #allocation0 [shape = 'u32[]', space=smem, size = 0x4, offset = 0x4, fixed_abs, tag = 'smem constant byte address 0x4 - core index']
  #allocation1 [shape = 'u32[144,128]{1,0:T(1,128)}', space=vmem, size = 0x12000, scoped, tag = 'internal scratch']
  #allocation2 [shape = 'f32[1]{0:T(128)S(6)}', space=smem, size = 0x200, scoped, tag = 'scoped memory for forward.13']
  %s0 = inlined_call_operand.<no memory space> [shape: f32[1], index: 0, kind: input, shape index: {}]
  %s1 = inlined_call_operand.vmem [shape: f32[2,12,96], index: 1, kind: input, shape index: {}]
  %s2 = inlined_call_operand.vmem [shape: f32[96,64], index: 2, kind: input, shape index: {}]
  %s3 = inlined_call_operand.vmem [shape: f32[1,1,64], index: 3, kind: input, shape index: {}]
  %s4 = inlined_call_operand.vmem [shape: f32[1,1,64], index: 4, kind: input, shape index: {}]
  %s5 = inlined_call_operand.vmem [shape: f32[2,12,64], index: 5, kind: output, shape index: {}]
  %s6 = sld [smem:[#allocation0]]
  $region53: #{forward.13} parent=0
    _
  %s8 = ssub.s32 1, %s6
  %s9 = scalar_select 0, %s8, %s6
  %10 = sst [smem:[#allocation2]] %s0
  loop: start=0, step=1, limit=4
  $region2: #{forward.13} parent=0 // loop_pre_header
    _
  $region3: #{forward.13} parent=0 // loop_header
    %s12 = sphi 0, %s16
    %p13 = scmp.ge.s32.totalorder %s12, 4
    %s20 = sphi 0, %s20
    %s22 = sphi 0, %s20
    %s23 = sphi 0, %s22
    %s37 = sphi 0, %s23
    %s43 = sphi 0, %s45
    %s46 = sphi 0, %s43
    %s47 = sphi 0, %s46
    %s63 = sphi 0, %s47
    %s67 = sphi 0, %s67
    %s69 = sphi 0, %s67
    %s70 = sphi 0, %s69
    %s84 = sphi 0, %s70
    %s88 = sphi 0, %s88
    %s90 = sphi 0, %s88
    %s91 = sphi 0, %s90
    %s105 = sphi 0, %s91
    %s109 = sphi 0, %s109
    %s111 = sphi 0, %s109
    %s112 = sphi 0, %s111
    %s126 = sphi 0, %s112
    %s132 = sphi 0, %s134
    %s135 = sphi 0, %s132
    %s136 = sphi 0, %s135
    %s152 = sphi 0, %s136
  $region4: #{forward.13} parent=0 // loop_header_branch
    %15 = sbr.rel (%p13) target = $region8
  $region5: #{forward.13} parent=0 // loop_body
    %s17 = ssub.s32 %s12, 1
    %s18 = ssub.s32 %s12, 2
    %s19 = sadd.s32 %s12, 1
    %s21 = sadd.s32 %s20, 1
    %p24 = scmp.eq.s32.totalorder %s12, 1
    %p25 = scmp.ne.s32.totalorder %s20, %s22
    %p26 = scmp.eq.s32.totalorder %s12, 0
    %p27 = por %p25, %p26
    %p28 = scmp.ne.s32.totalorder %s20, %s22
    %p29 = scmp.eq.s32.totalorder %s17, 1
    %p30 = por %p28, %p29
    %p31 = scmp.ne.s32.totalorder %s22, %s23
    %p32 = scmp.eq.s32.totalorder %s17, 0
    %p33 = por %p31, %p32
    %p34 = scmp.ne.s32.totalorder %s22, %s23
    %p35 = scmp.eq.s32.totalorder %s18, 1
    %p36 = por %p34, %p35
    %p38 = scmp.ne.s32.totalorder %s23, %s37
    %p39 = scmp.eq.s32.totalorder %s18, 0
    %p40 = por %p38, %p39
    %s41 = ssub.s32 %s12, %s19
    %p42 = scmp.eq.s32.totalorder %s41, 0
    %s44 = sadd.s32 %s43, 1
    %s45 = scalar_select %p42, %s43, %s44
    %p48 = pneg %p42
    %p49 = scmp.eq.s32.totalorder %s12, 1
    %p50 = por %p48, %p49
    %p51 = scmp.ne.s32.totalorder %s43, %s46
    %p52 = scmp.eq.s32.totalorder %s12, 0
    %p53 = por %p51, %p52
    %p54 = scmp.ne.s32.totalorder %s43, %s46
    %p55 = scmp.eq.s32.totalorder %s17, 1
    %p56 = por %p54, %p55
    %p57 = scmp.ne.s32.totalorder %s46, %s47
    %p58 = scmp.eq.s32.totalorder %s17, 0
    %p59 = por %p57, %p58
    %p60 = scmp.ne.s32.totalorder %s46, %s47
    %p61 = scmp.eq.s32.totalorder %s18, 1
    %p62 = por %p60, %p61
    %p64 = scmp.ne.s32.totalorder %s47, %s63
    %p65 = scmp.eq.s32.totalorder %s18, 0
    %p66 = por %p64, %p65
    %s68 = sadd.s32 %s67, 1
    %p71 = scmp.eq.s32.totalorder %s12, 1
    %p72 = scmp.ne.s32.totalorder %s67, %s69
    %p73 = scmp.eq.s32.totalorder %s12, 0
    %p74 = por %p72, %p73
    %p75 = scmp.ne.s32.totalorder %s67, %s69
    %p76 = scmp.eq.s32.totalorder %s17, 1
    %p77 = por %p75, %p76
    %p78 = scmp.ne.s32.totalorder %s69, %s70
    %p79 = scmp.eq.s32.totalorder %s17, 0
    %p80 = por %p78, %p79
    %p81 = scmp.ne.s32.totalorder %s69, %s70
    %p82 = scmp.eq.s32.totalorder %s18, 1
    %p83 = por %p81, %p82
    %p85 = scmp.ne.s32.totalorder %s70, %s84
    %p86 = scmp.eq.s32.totalorder %s18, 0
    %p87 = por %p85, %p86
    %s89 = sadd.s32 %s88, 1
    %p92 = scmp.eq.s32.totalorder %s12, 1
    %p93 = scmp.ne.s32.totalorder %s88, %s90
    %p94 = scmp.eq.s32.totalorder %s12, 0
    %p95 = por %p93, %p94
    %p96 = scmp.ne.s32.totalorder %s88, %s90
    %p97 = scmp.eq.s32.totalorder %s17, 1
    %p98 = por %p96, %p97
    %p99 = scmp.ne.s32.totalorder %s90, %s91
    %p100 = scmp.eq.s32.totalorder %s17, 0
    %p101 = por %p99, %p100
    %p102 = scmp.ne.s32.totalorder %s90, %s91
    %p103 = scmp.eq.s32.totalorder %s18, 1
    %p104 = por %p102, %p103
    %p106 = scmp.ne.s32.totalorder %s91, %s105
    %p107 = scmp.eq.s32.totalorder %s18, 0
    %p108 = por %p106, %p107
    %s110 = sadd.s32 %s109, 1
    %p113 = scmp.eq.s32.totalorder %s12, 1
    %p114 = scmp.ne.s32.totalorder %s109, %s111
    %p115 = scmp.eq.s32.totalorder %s12, 0
    %p116 = por %p114, %p115
    %p117 = scmp.ne.s32.totalorder %s109, %s111
    %p118 = scmp.eq.s32.totalorder %s17, 1
    %p119 = por %p117, %p118
    %p120 = scmp.ne.s32.totalorder %s111, %s112
    %p121 = scmp.eq.s32.totalorder %s17, 0
    %p122 = por %p120, %p121
    %p123 = scmp.ne.s32.totalorder %s111, %s112
    %p124 = scmp.eq.s32.totalorder %s18, 1
    %p125 = por %p123, %p124
    %p127 = scmp.ne.s32.totalorder %s112, %s126
    %p128 = scmp.eq.s32.totalorder %s18, 0
    %p129 = por %p127, %p128
    %s130 = ssub.s32 %s12, %s19
    %p131 = scmp.eq.s32.totalorder %s130, 0
    %s133 = sadd.s32 %s132, 1
    %s134 = scalar_select %p131, %s132, %s133
    %p137 = pneg %p131
    %p138 = scmp.eq.s32.totalorder %s12, 1
    %p139 = por %p137, %p138
    %p140 = scmp.ne.s32.totalorder %s132, %s135
    %p141 = scmp.eq.s32.totalorder %s12, 0
    %p142 = por %p140, %p141
    %p143 = scmp.ne.s32.totalorder %s132, %s135
    %p144 = scmp.eq.s32.totalorder %s17, 1
    %p145 = por %p143, %p144
    %p146 = scmp.ne.s32.totalorder %s135, %s136
    %p147 = scmp.eq.s32.totalorder %s17, 0
    %p148 = por %p146, %p147
    %p149 = scmp.ne.s32.totalorder %s135, %s136
    %p150 = scmp.eq.s32.totalorder %s18, 1
    %p151 = por %p149, %p150
    %p153 = scmp.ne.s32.totalorder %s136, %s152
    %p154 = scmp.eq.s32.totalorder %s18, 0
    %p155 = por %p153, %p154
    %p156 = scmp.le.s32.totalorder 1, %s12
    %p157 = scmp.lt.s32.totalorder %s12, 3
    %p158 = pnand %p156, %p157
    %p159 = pneg %p158
    // Predicated region
    $region9: #{forward.13} parent=5 // pred_check
      _
    $region10: #{forward.13} parent=5 // pred_check_branch
      %161 = sbr.rel (%p158) target = $region12
    $region11: #{forward.13} parent=5 // pred_region
      %s162 = ssub.s32 %s12, 1
      // Predicated region
      $region13: #{forward.13} parent=11 // pred_check
        %p163 = pneg %p33
      $region14: #{forward.13} parent=11 // pred_check_branch
        %165 = sbr.rel (%p163) target = $region16
      $region15: #{forward.13} parent=11 // pred_region
        _
      $region16: #{forward.13} parent=11 // pred_fallthru
        _
      // Predicated region
      $region17: #{forward.13} parent=11 // pred_check
        %p166 = pneg %p80
      $region18: #{forward.13} parent=11 // pred_check_branch
        %168 = sbr.rel (%p166) target = $region20
      $region19: #{forward.13} parent=11 // pred_region
        _
      $region20: #{forward.13} parent=11 // pred_fallthru
        _
      // Predicated region
      $region21: #{forward.13} parent=11 // pred_check
        %p169 = pneg %p101
      $region22: #{forward.13} parent=11 // pred_check_branch
        %171 = sbr.rel (%p169) target = $region24
      $region23: #{forward.13} parent=11 // pred_region
        _
      $region24: #{forward.13} parent=11 // pred_fallthru
        _
      // Predicated region
      $region25: #{forward.13} parent=11 // pred_check
        %p172 = pneg %p122
      $region26: #{forward.13} parent=11 // pred_check_branch
        %174 = sbr.rel (%p172) target = $region28
      $region27: #{forward.13} parent=11 // pred_region
        _
      $region28: #{forward.13} parent=11 // pred_fallthru
        _
    $region12: #{forward.13} parent=5 // pred_fallthru
      _
    %p175 = scmp.lt.s32.totalorder %s12, 2
    // Predicated region
    $region29: #{forward.13} parent=5 // pred_check
      %p176 = pneg %p175
    $region30: #{forward.13} parent=5 // pred_check_branch
      %178 = sbr.rel (%p176) target = $region32
    $region31: #{forward.13} parent=5 // pred_region
      // Predicated region
      $region33: #{forward.13} parent=31 // pred_check
        %p179 = pneg %p53
      $region34: #{forward.13} parent=31 // pred_check_branch
        %181 = sbr.rel (%p179) target = $region36
      $region35: #{forward.13} parent=31 // pred_region
        %p182 = scmp.lt.s32.totalorder %s12, 1
        %s183 = scalar_select %p182, %s12, 1
        %s184 = smul.addr %s183, 2
        %s185 = smul.addr %s184, 8
        %s186 = scalar_lea.vmem %s1, %s185
      $region36: #{forward.13} parent=31 // pred_fallthru
        _
    $region32: #{forward.13} parent=5 // pred_fallthru
      _
    %p187 = scmp.le.s32.totalorder 1, %s12
    %p188 = scmp.lt.s32.totalorder %s12, 3
    %p189 = pnand %p187, %p188
    %p190 = pneg %p189
    // Predicated region
    $region37: #{forward.13} parent=5 // pred_check
      _
    $region38: #{forward.13} parent=5 // pred_check_branch
      %192 = sbr.rel (%p189) target = $region40
    $region39: #{forward.13} parent=5 // pred_region
      %s193 = ssub.s32 %s12, 1
      %p194 = pneg %p33
      %p195 = pneg %p30
      %p196 = scmp.lt.s32.totalorder %s17, 1
      %s197 = scalar_select %p196, %s17, 1
      %s198 = smul.addr %s197, 2
      %s199 = smul.addr %s198, 8
      %s200 = scalar_lea.vmem %s1, %s199
      %p201 = pneg %p59
      %p202 = pneg %p56
      %p203 = pneg %p80
      %p204 = pneg %p77
      %p205 = pneg %p101
      %p206 = pneg %p98
      %p207 = pneg %p122
      %p208 = pneg %p119
      %p209 = pneg %p148
      %p210 = pneg %p145
      %p211 = scmp.lt.s32.totalorder %s17, 1
      %s212 = scalar_select %p211, %s17, 1
      %s213 = smul.addr %s212, 2
      %s214 = smul.addr %s213, 8
      %s215 = scalar_lea.vmem %s5, %s214
      %p216 = scmp.lt.s32.totalorder %s17, 1
      %s217 = scalar_select %p216, %s17, 1
      %s218 = smul.addr %s217, 2
      %s219 = smul.addr %s218, 8
      %s220 = scalar_lea.vmem %s1, %s219
      %p221 = scmp.lt.s32.totalorder %s17, 1
      %s222 = scalar_select %p221, %s17, 1
      %s223 = smul.addr %s222, 2
      %s224 = smul.addr %s223, 8
      %s225 = scalar_lea.vmem %s5, %s224
      %v226 = vld [vmem:[%s220] sm:$0xff]
      %v227 = vld [vmem:[%s220 + $0x8] sm:$0xf]
      %v228 = vld [vmem:[%s2] sm:$0xff]
      %v229 = vld [vmem:[%s2 + $0x8] sm:$0xff]
      %v230 = vld [vmem:[%s2 + $0x10] sm:$0xff]
      %v231 = vld [vmem:[%s2 + $0x18] sm:$0xff]
      %v232 = vld [vmem:[%s2 + $0x20] sm:$0xff]
      %v233 = vld [vmem:[%s2 + $0x28] sm:$0xff]
      %v234 = vld [vmem:[%s2 + $0x30] sm:$0xff]
      %v235 = vld [vmem:[%s2 + $0x38] sm:$0xff]
      %v236 = vld [vmem:[%s2 + $0x40] sm:$0xff]
      %v237 = vld [vmem:[%s2 + $0x48] sm:$0xff]
      %v238 = vld [vmem:[%s2 + $0x50] sm:$0xff]
      %v239 = vld [vmem:[%s2 + $0x58] sm:$0xff]
      %vm240 = vcmask 785408
      %v242 = vsel %vm240, %v226, 0
      %v245 = vsel %vm240, %v227, 0
      %247 = vmatprep.subr.mxu0 0.0
      %248 = vmatpush1.msra.mxu0 %v228
      %249 = vmatprep.subr.mxu0 0.0
      %250 = vmatpush1.msra.mxu0 %v229
      %251 = vmatprep.subr.mxu0 0.0
      %252 = vmatpush1.msra.mxu0 %v230
      %253 = vmatprep.subr.mxu0 0.0
      %254 = vmatpush1.msra.mxu0 %v231
      %255 = vmatprep.subr.mxu0 0.0
      %256 = vmatpush1.msra.mxu0 %v232
      %257 = vmatprep.subr.mxu0 0.0
      %258 = vmatpush1.msra.mxu0 %v233
      %259 = vmatprep.subr.mxu0 0.0
      %260 = vmatpush1.msra.mxu0 %v234
      %261 = vmatprep.subr.mxu0 0.0
      %262 = vmatpush1.msra.mxu0 %v235
      %263 = vmatprep.subr.mxu0 0.0
      %264 = vmatpush1.msra.mxu0 %v236
      %265 = vmatprep.subr.mxu0 0.0
      %266 = vmatpush1.msra.mxu0 %v237
      %267 = vmatprep.subr.mxu0 0.0
      %268 = vmatpush1.msra.mxu0 %v238
      %269 = vmatprep.subr.mxu0 0.0
      %270 = vmatpush1.msra.mxu0 %v239
      %271 = vmatprep.subr.mxu0 0.0
      %272 = vmatpush1.msra.mxu0 0.0
      %273 = vmatprep.subr.mxu0 0.0
      %274 = vmatpush1.msra.mxu0 0.0
      %275 = vmatprep.subr.mxu0 0.0
      %276 = vmatpush1.msra.mxu0 0.0
      %277 = vmatprep.subr.mxu0 0.0
      %278 = vmatpush1.msra.mxu0 0.0
      %279 = vmatprep.subr.mxu0 0.0
      %280 = vmatpush1.msra.mxu0 0.0
      %281 = vmatprep.subr.mxu0 0.0
      %282 = vmatpush1.msra.mxu0 0.0
      %283 = vmatprep.subr.mxu0 0.0
      %284 = vmatpush1.msra.mxu0 0.0
      %285 = vmatprep.subr.mxu0 0.0
      %286 = vmatpush1.msra.mxu0 0.0
      %287 = vmatprep.subr.mxu0 0.0
      %288 = vmatpush1.msra.mxu0 0.0
      %289 = vmatprep.subr.mxu0 0.0
      %290 = vmatpush1.msra.mxu0 0.0
      %291 = vmatprep.subr.mxu0 0.0
      %292 = vmatpush1.msra.mxu0 0.0
      %293 = vmatprep.subr.mxu0 0.0
      %294 = vmatpush1.msra.mxu0 0.0
      %295 = vmatprep.subr.mxu0 0.0
      %296 = vmatpush1.msra.mxu0 0.0
      %297 = vmatprep.subr.mxu0 0.0
      %298 = vmatpush1.msra.mxu0 0.0
      %299 = vmatprep.subr.mxu0 0.0
      %300 = vmatpush1.msra.mxu0 0.0
      %301 = vmatprep.subr.mxu0 0.0
      %302 = vmatpush1.msra.mxu0 0.0
      %303 = vmatprep.subr.mxu0 0.0
      %304 = vmatpush1.msra.mxu0 0.0
      %305 = vmatprep.subr.mxu0 0.0
      %306 = vmatpush1.msra.mxu0 0.0
      %307 = vmatprep.subr.mxu0 0.0
      %308 = vmatpush1.msra.mxu0 0.0
      %309 = vmatprep.subr.mxu0 0.0
      %310 = vmatpush1.msra.mxu0 0.0
      %311 = vmatprep.mubr.f32.mxu0 0.0
      %312 = vmatmul.mubr.f32.gmra.mrb[0].mxu0 %v242
      %v313 = vpop.f32.mrb[0].mxu0
      %v314 = vadd.f32 0.0, %v313
      %v315 = vpop.f32.mrb[0].mxu0
      %316 = vmatprep.mubr.f32.mxu0 0.0
      %317 = vmatmul.mubr.f32.gmra.mrb[0].mxu0 %v245
      %v318 = vpop.f32.mrb[0].mxu0
      %v319 = vadd.f32 0.0, %v318
      %v320 = vpop.f32.mrb[0].mxu0
      %321 = vdwg.mxu0
      %v322 = vld [vmem:[%s3] sm:$0x1]
      %v324 = vlaneseq
      %v325 = vshrl.u32 %v324, 7
      %v326 = vsub.s32 0, %v325
      %v327 = vrot.slane %v322, %v326
      %v329 = vmul.f32 %v314, %v327
      %v330 = vmul.f32 %v319, %v327
      %v331 = vld [vmem:[%s4] sm:$0x1]
      %v333 = vlaneseq
      %v334 = vshrl.u32 %v333, 7
      %v335 = vsub.s32 0, %v334
      %v336 = vrot.slane %v331, %v335
      %v338 = vadd.f32 %v329, %v336
      %v339 = vadd.f32 %v330, %v336
      %s340 = sld [smem:[#allocation2]]
      %v341 = vmax.f32 %v338, 0.0
      %v342 = vmax.f32 %v339, 0.0
      %v343 = vmin.f32 %v338, 0.0
      %v344 = vmin.f32 %v339, 0.0
      %v345 = vstv %s340
      %v346 = vmul.f32 %v345, %v343
      %v347 = vmul.f32 %v345, %v344
      %v348 = vadd.f32 %v341, %v346
      %v349 = vadd.f32 %v342, %v347
      %vm350 = vcmask 523264
      %351 = vst.msk [vmem:[%s225] sm:$0xff] %vm350, %v348
      %vm352 = vcmask 519168
      %353 = vst.msk [vmem:[%s225 + $0x8] sm:$0xf] %vm352, %v349
      %p354 = scmp.lt.s32.totalorder %s17, 1
      %s355 = scalar_select %p354, %s17, 1
      %s356 = smul.addr %s355, 2
      %s357 = smul.addr %s356, 8
      %s358 = scalar_lea.vmem %s5, %s357
      // Predicated region
      $region41: #{forward.13} parent=39 // pred_check
        %p359 = pneg %p145
      $region42: #{forward.13} parent=39 // pred_check_branch
        %361 = sbr.rel (%p359) target = $region44
      $region43: #{forward.13} parent=39 // pred_region
        _
      $region44: #{forward.13} parent=39 // pred_fallthru
        _
    $region40: #{forward.13} parent=5 // pred_fallthru
      _
    %p362 = scmp.le.s32.totalorder 2, %s12
    // Predicated region
    $region45: #{forward.13} parent=5 // pred_check
      %p363 = pneg %p362
    $region46: #{forward.13} parent=5 // pred_check_branch
      %365 = sbr.rel (%p363) target = $region48
    $region47: #{forward.13} parent=5 // pred_region
      %s366 = ssub.s32 %s12, 2
      // Predicated region
      $region49: #{forward.13} parent=47 // pred_check
        %p367 = pneg %p151
      $region50: #{forward.13} parent=47 // pred_check_branch
        %369 = sbr.rel (%p367) target = $region52
      $region51: #{forward.13} parent=47 // pred_region
        %p370 = scmp.lt.s32.totalorder %s18, 1
        %s371 = scalar_select %p370, %s18, 1
        %s372 = smul.addr %s371, 2
        %s373 = smul.addr %s372, 8
        %s374 = scalar_lea.vmem %s5, %s373
      $region52: #{forward.13} parent=47 // pred_fallthru
        _
    $region48: #{forward.13} parent=5 // pred_fallthru
      _
  $region6: #{forward.13} parent=0 // loop_footer
    %s16 = sadd.s32 1, %s12
  $region7: #{forward.13} parent=0 // loop_footer_branch
    %11 = sbr.rel target = $region3
  $region8: #{forward.13} parent=0 // loop_exit
    _

// kernel: forward.14
$region0: #{forward.14}
  #allocation0 [shape = 'u32[]', space=smem, size = 0x4, offset = 0x4, fixed_abs, tag = 'smem constant byte address 0x4 - core index']
  #allocation1 [shape = 'u32[144,128]{1,0:T(1,128)}', space=vmem, size = 0x12000, scoped, tag = 'internal scratch']
  %s0 = inlined_call_operand.vmem [shape: f32[12,2,512], index: 0, kind: input, shape index: {}]
  %s1 = inlined_call_operand.vmem [shape: f32[64,512], index: 1, kind: input, shape index: {}]
  %s2 = inlined_call_operand.vmem [shape: f32[12,2,128], index: 2, kind: output, shape index: {}]
  %s3 = sld [smem:[#allocation0]]
  $region25: #{forward.14} parent=0
    _
  %s5 = ssub.s32 1, %s3
  %s6 = scalar_select 0, %s5, %s3
  // Predicated region
  $region2: #{forward.14} parent=0 // pred_check
    _
  $region3: #{forward.14} parent=0 // pred_check_branch
    %8 = sbr.rel (0) target = $region5
  $region4: #{forward.14} parent=0 // pred_region
    _
  $region5: #{forward.14} parent=0 // pred_fallthru
    _
  // Predicated region
  $region6: #{forward.14} parent=0 // pred_check
    _
  $region7: #{forward.14} parent=0 // pred_check_branch
    %10 = sbr.rel (0) target = $region9
  $region8: #{forward.14} parent=0 // pred_region
    _
  $region9: #{forward.14} parent=0 // pred_fallthru
    _
  %v11 = vld [vmem:[%s1] sm:$0xff]
  %v12 = vld [vmem:[%s1 + $0x8] sm:$0xff]
  %v13 = vld [vmem:[%s1 + $0x10] sm:$0xff]
  %v14 = vld [vmem:[%s1 + $0x18] sm:$0xff]
  %v15 = vld [vmem:[%s1 + $0x20] sm:$0xff]
  %v16 = vld [vmem:[%s1 + $0x28] sm:$0xff]
  %v17 = vld [vmem:[%s1 + $0x30] sm:$0xff]
  %v18 = vld [vmem:[%s1 + $0x38] sm:$0xff]
  %v19 = vld [vmem:[%s1 + $0x40] sm:$0xff]
  %v20 = vld [vmem:[%s1 + $0x48] sm:$0xff]
  %v21 = vld [vmem:[%s1 + $0x50] sm:$0xff]
  %v22 = vld [vmem:[%s1 + $0x58] sm:$0xff]
  %v23 = vld [vmem:[%s1 + $0x60] sm:$0xff]
  %v24 = vld [vmem:[%s1 + $0x68] sm:$0xff]
  %v25 = vld [vmem:[%s1 + $0x70] sm:$0xff]
  %v26 = vld [vmem:[%s1 + $0x78] sm:$0xff]
  %v27 = vld [vmem:[%s1 + $0x80] sm:$0xff]
  %v28 = vld [vmem:[%s1 + $0x88] sm:$0xff]
  %v29 = vld [vmem:[%s1 + $0x90] sm:$0xff]
  %v30 = vld [vmem:[%s1 + $0x98] sm:$0xff]
  %v31 = vld [vmem:[%s1 + $0xa0] sm:$0xff]
  %v32 = vld [vmem:[%s1 + $0xa8] sm:$0xff]
  %v33 = vld [vmem:[%s1 + $0xb0] sm:$0xff]
  %v34 = vld [vmem:[%s1 + $0xb8] sm:$0xff]
  %v35 = vld [vmem:[%s1 + $0xc0] sm:$0xff]
  %v36 = vld [vmem:[%s1 + $0xc8] sm:$0xff]
  %v37 = vld [vmem:[%s1 + $0xd0] sm:$0xff]
  %v38 = vld [vmem:[%s1 + $0xd8] sm:$0xff]
  %v39 = vld [vmem:[%s1 + $0xe0] sm:$0xff]
  %v40 = vld [vmem:[%s1 + $0xe8] sm:$0xff]
  %v41 = vld [vmem:[%s1 + $0xf0] sm:$0xff]
  %v42 = vld [vmem:[%s1 + $0xf8] sm:$0xff]
  loop: start=0, step=1, limit=12
  $region10: #{forward.14} parent=0 // loop_pre_header
    _
  $region11: #{forward.14} parent=0 // loop_header
    %s44 = sphi 0, %s48
    %p45 = scmp.ge.s32.totalorder %s44, 12
    %v49 = vphi 0.0, %v280
    %v50 = vphi 0.0, %v274
    %v51 = vphi 0.0, %v313
    %v52 = vphi 0.0, %v307
  $region12: #{forward.14} parent=0 // loop_header_branch
    %47 = sbr.rel (%p45) target = $region16
  $region13: #{forward.14} parent=0 // loop_body
    %s53 = ssub.s32 11, %s44
    %v55 = vcombine.low %v51, %v51
    %v57 = vunpack.c.l.s4 1983009808
    %v58 = vunpack.c.0.s8 %v57
    %v59 = vlaneseq
    %v60 = vshrl.u32 %v59, 7
    %v61 = vsub.s32 %v58, %v60
    %v62 = vrot.slane %v55, %v61
    %vm64 = vcmask 1041408
    %v65 = vsel %vm64, %v49, %v62
    %vm66 = vcmask 523264
    %v68 = vsel %vm66, %v65, 0
    %70 = vmatprep.subr.mxu0 %v12
    %71 = vmatpush1.msra.mxu0 %v11
    %72 = vmatprep.subr.mxu0 %v16
    %73 = vmatpush1.msra.mxu0 %v15
    %74 = vmatprep.subr.mxu0 %v20
    %75 = vmatpush1.msra.mxu0 %v19
    %76 = vmatprep.subr.mxu0 %v24
    %77 = vmatpush1.msra.mxu0 %v23
    %78 = vmatprep.subr.mxu0 %v28
    %79 = vmatpush1.msra.mxu0 %v27
    %80 = vmatprep.subr.mxu0 %v32
    %81 = vmatpush1.msra.mxu0 %v31
    %82 = vmatprep.subr.mxu0 %v36
    %83 = vmatpush1.msra.mxu0 %v35
    %84 = vmatprep.subr.mxu0 %v40
    %85 = vmatpush1.msra.mxu0 %v39
    %86 = vmatprep.subr.mxu0 0.0
    %87 = vmatpush1.msra.mxu0 0.0
    %88 = vmatprep.subr.mxu0 0.0
    %89 = vmatpush1.msra.mxu0 0.0
    %90 = vmatprep.subr.mxu0 0.0
    %91 = vmatpush1.msra.mxu0 0.0
    %92 = vmatprep.subr.mxu0 0.0
    %93 = vmatpush1.msra.mxu0 0.0
    %94 = vmatprep.subr.mxu0 0.0
    %95 = vmatpush1.msra.mxu0 0.0
    %96 = vmatprep.subr.mxu0 0.0
    %97 = vmatpush1.msra.mxu0 0.0
    %98 = vmatprep.subr.mxu0 0.0
    %99 = vmatpush1.msra.mxu0 0.0
    %100 = vmatprep.subr.mxu0 0.0
    %101 = vmatpush1.msra.mxu0 0.0
    %102 = vmatprep.subr.mxu0 0.0
    %103 = vmatpush1.msra.mxu0 0.0
    %104 = vmatprep.subr.mxu0 0.0
    %105 = vmatpush1.msra.mxu0 0.0
    %106 = vmatprep.subr.mxu0 0.0
    %107 = vmatpush1.msra.mxu0 0.0
    %108 = vmatprep.subr.mxu0 0.0
    %109 = vmatpush1.msra.mxu0 0.0
    %110 = vmatprep.subr.mxu0 0.0
    %111 = vmatpush1.msra.mxu0 0.0
    %112 = vmatprep.subr.mxu0 0.0
    %113 = vmatpush1.msra.mxu0 0.0
    %114 = vmatprep.subr.mxu0 0.0
    %115 = vmatpush1.msra.mxu0 0.0
    %116 = vmatprep.subr.mxu0 0.0
    %117 = vmatpush1.msra.mxu0 0.0
    %118 = vmatprep.subr.mxu0 0.0
    %119 = vmatpush1.msra.mxu0 0.0
    %120 = vmatprep.subr.mxu0 0.0
    %121 = vmatpush1.msra.mxu0 0.0
    %122 = vmatprep.subr.mxu0 0.0
    %123 = vmatpush1.msra.mxu0 0.0
    %124 = vmatprep.subr.mxu0 0.0
    %125 = vmatpush1.msra.mxu0 0.0
    %126 = vmatprep.subr.mxu0 0.0
    %127 = vmatpush1.msra.mxu0 0.0
    %128 = vmatprep.subr.mxu0 0.0
    %129 = vmatpush1.msra.mxu0 0.0
    %130 = vmatprep.subr.mxu0 0.0
    %131 = vmatpush1.msra.mxu0 0.0
    %132 = vmatprep.subr.mxu0 0.0
    %133 = vmatpush1.msra.mxu0 0.0
    %134 = vmatprep.mubr.f32.mxu0 0.0
    %135 = vmatmul.mubr.f32.gmra.mrb[0].mxu0 %v68
    %v136 = vpop.f32.mrb[0].mxu0
    %v137 = vadd.f32 0.0, %v136
    %v138 = vpop.f32.mrb[0].mxu0
    %v139 = vadd.f32 0.0, %v138
    %140 = vdwg.mxu0
    %141 = vmatprep.subr.mxu0 %v14
    %142 = vmatpush1.msra.mxu0 %v13
    %143 = vmatprep.subr.mxu0 %v18
    %144 = vmatpush1.msra.mxu0 %v17
    %145 = vmatprep.subr.mxu0 %v22
    %146 = vmatpush1.msra.mxu0 %v21
    %147 = vmatprep.subr.mxu0 %v26
    %148 = vmatpush1.msra.mxu0 %v25
    %149 = vmatprep.subr.mxu0 %v30
    %150 = vmatpush1.msra.mxu0 %v29
    %151 = vmatprep.subr.mxu0 %v34
    %152 = vmatpush1.msra.mxu0 %v33
    %153 = vmatprep.subr.mxu0 %v38
    %154 = vmatpush1.msra.mxu0 %v37
    %155 = vmatprep.subr.mxu0 %v42
    %156 = vmatpush1.msra.mxu0 %v41
    %157 = vmatprep.subr.mxu0 0.0
    %158 = vmatpush1.msra.mxu0 0.0
    %159 = vmatprep.subr.mxu0 0.0
    %160 = vmatpush1.msra.mxu0 0.0
    %161 = vmatprep.subr.mxu0 0.0
    %162 = vmatpush1.msra.mxu0 0.0
    %163 = vmatprep.subr.mxu0 0.0
    %164 = vmatpush1.msra.mxu0 0.0
    %165 = vmatprep.subr.mxu0 0.0
    %166 = vmatpush1.msra.mxu0 0.0
    %167 = vmatprep.subr.mxu0 0.0
    %168 = vmatpush1.msra.mxu0 0.0
    %169 = vmatprep.subr.mxu0 0.0
    %170 = vmatpush1.msra.mxu0 0.0
    %171 = vmatprep.subr.mxu0 0.0
    %172 = vmatpush1.msra.mxu0 0.0
    %173 = vmatprep.subr.mxu0 0.0
    %174 = vmatpush1.msra.mxu0 0.0
    %175 = vmatprep.subr.mxu0 0.0
    %176 = vmatpush1.msra.mxu0 0.0
    %177 = vmatprep.subr.mxu0 0.0
    %178 = vmatpush1.msra.mxu0 0.0
    %179 = vmatprep.subr.mxu0 0.0
    %180 = vmatpush1.msra.mxu0 0.0
    %181 = vmatprep.subr.mxu0 0.0
    %182 = vmatpush1.msra.mxu0 0.0
    %183 = vmatprep.subr.mxu0 0.0
    %184 = vmatpush1.msra.mxu0 0.0
    %185 = vmatprep.subr.mxu0 0.0
    %186 = vmatpush1.msra.mxu0 0.0
    %187 = vmatprep.subr.mxu0 0.0
    %188 = vmatpush1.msra.mxu0 0.0
    %189 = vmatprep.subr.mxu0 0.0
    %190 = vmatpush1.msra.mxu0 0.0
    %191 = vmatprep.subr.mxu0 0.0
    %192 = vmatpush1.msra.mxu0 0.0
    %193 = vmatprep.subr.mxu0 0.0
    %194 = vmatpush1.msra.mxu0 0.0
    %195 = vmatprep.subr.mxu0 0.0
    %196 = vmatpush1.msra.mxu0 0.0
    %197 = vmatprep.subr.mxu0 0.0
    %198 = vmatpush1.msra.mxu0 0.0
    %199 = vmatprep.subr.mxu0 0.0
    %200 = vmatpush1.msra.mxu0 0.0
    %201 = vmatprep.subr.mxu0 0.0
    %202 = vmatpush1.msra.mxu0 0.0
    %203 = vmatprep.subr.mxu0 0.0
    %204 = vmatpush1.msra.mxu0 0.0
    %205 = vmatprep.mubr.f32.mxu0 0.0
    %206 = vmatmul.mubr.f32.gmra.mrb[0].mxu0 %v68
    %v207 = vpop.f32.mrb[0].mxu0
    %v208 = vadd.f32 0.0, %v207
    %v209 = vpop.f32.mrb[0].mxu0
    %v210 = vadd.f32 0.0, %v209
    %211 = vdwg.mxu0
    %s212 = smul.u32 %s44, 4
    %s213 = smul.addr %s212, 2
    %s214 = scalar_lea.vmem %s0, %s213
    %v215 = vld [vmem:[%s214] sm:$0xff]
    %v218 = vcombine.low %v137, %v139
    %v220 = vunpack.c.l.s4 1983009808
    %v221 = vunpack.c.0.s8 %v220
    %v222 = vlaneseq
    %v223 = vshrl.u32 %v222, 7
    %v224 = vsub.s32 %v221, %v223
    %v225 = vrot.slane %v218, %v224
    %v227 = vadd.f32 %v215, %v225
    %s228 = smul.u32 %s53, 4
    %s229 = smul.addr %s228, 2
    %s230 = scalar_lea.vmem %s0, %s229
    %v231 = vld [vmem:[%s230] sm:$0xff]
    %v233 = vrot.slane %v231, 4
    %v237 = vcombine.low %v208, %v210
    %v239 = vunpack.c.l.s4 1983009808
    %v240 = vunpack.c.0.s8 %v239
    %v241 = vlaneseq
    %v242 = vshrl.u32 %v241, 7
    %v243 = vsub.s32 %v240, %v242
    %v244 = vrot.slane %v237, %v243
    %v245 = vcombine.high %v244, %v244
    %v247 = vadd.f32 %v233, %v245
    %v248 = vxor.u32 %v227, 2147483648
    %v249 = vmul.f32 %v248, 1.442695
    %v250 = vpow.pop %v249
    %v251 = vadd.f32 %v250, 1.0
    %v252 = vrcp.pop %v251
    %v253 = vmul.f32 1.0, %v252
    %v255 = vrot.slane %v227, 2
    %v257 = vtanh.pop %v255
    %258 = vrot.lane.b32.xlu0 %v227, 64
    %v259 = vpop.permute.xlu0 %258
    %v260 = vrot.slane %v259, 2
    %v262 = vxor.u32 %v260, 2147483648
    %v263 = vmul.f32 %v262, 1.442695
    %v264 = vpow.pop %v263
    %v265 = vadd.f32 %v264, 1.0
    %v266 = vrcp.pop %v265
    %v267 = vmul.f32 1.0, %v266
    %v268 = vmul.f32 %v253, %v50
    %v269 = vmul.f32 %v253, %v257
    %271 = vrot.lane.b32.xlu0 %v269, 64
    %v272 = vpop.permute.xlu0 %271
    %v274 = vadd.f32 %v268, %v272
    %v275 = vtanh.pop %v274
    %277 = vrot.lane.b32.xlu0 %v275, 64
    %v278 = vpop.permute.xlu0 %277
    %v280 = vmul.f32 %v267, %v278
    %v281 = vxor.u32 %v247, 2147483648
    %v282 = vmul.f32 %v281, 1.442695
    %v283 = vpow.pop %v282
    %v284 = vadd.f32 %v283, 1.0
    %v285 = vrcp.pop %v284
    %v286 = vmul.f32 1.0, %v285
    %v288 = vrot.slane %v247, 2
    %v290 = vtanh.pop %v288
    %291 = vrot.lane.b32.xlu0 %v247, 64
    %v292 = vpop.permute.xlu0 %291
    %v293 = vrot.slane %v292, 2
    %v295 = vxor.u32 %v293, 2147483648
    %v296 = vmul.f32 %v295, 1.442695
    %v297 = vpow.pop %v296
    %v298 = vadd.f32 %v297, 1.0
    %v299 = vrcp.pop %v298
    %v300 = vmul.f32 1.0, %v299
    %v301 = vmul.f32 %v286, %v52
    %v302 = vmul.f32 %v286, %v290
    %304 = vrot.lane.b32.xlu0 %v302, 64
    %v305 = vpop.permute.xlu0 %304
    %v307 = vadd.f32 %v301, %v305
    %v308 = vtanh.pop %v307
    %310 = vrot.lane.b32.xlu0 %v308, 64
    %v311 = vpop.permute.xlu0 %310
    %v313 = vmul.f32 %v300, %v311
    %s314 = smul.u32 %s44, 2
    %s315 = scalar_lea.vmem %s2, %s314
    %vm316 = vcmask 517120
    %317 = vst.msk [vmem:[%s315] sm:$0x3] %vm316, %v280
    %v320 = vunpack.c.l.s4 1983009808
    %v321 = vunpack.c.0.s8 %v320
    %v322 = vlaneseq
    %v323 = vshrl.u32 %v322, 7
    %v324 = vsub.s32 %v321, %v323
    %v325 = vrot.slane %v313, %v324
    %326 = vrot.lane.b32.xlu0 %v325, 64
    %v327 = vpop.permute.xlu0 %326
    %s329 = smul.u32 %s53, 2
    %s330 = scalar_lea.vmem %s2, %s329
    %vm331 = vcmask 1041920
    %332 = vst.msk [vmem:[%s330] sm:$0x3] %vm331, %v327
  $region14: #{forward.14} parent=0 // loop_footer
    %s48 = sadd.s32 1, %s44
  $region15: #{forward.14} parent=0 // loop_footer_branch
    %43 = sbr.rel target = $region11
  $region16: #{forward.14} parent=0 // loop_exit
    _
  // Predicated region
  $region17: #{forward.14} parent=0 // pred_check
    _
  $region18: #{forward.14} parent=0 // pred_check_branch
    %334 = sbr.rel (0) target = $region20
  $region19: #{forward.14} parent=0 // pred_region
    _
  $region20: #{forward.14} parent=0 // pred_fallthru
    _
  // Predicated region
  $region21: #{forward.14} parent=0 // pred_check
    _
  $region22: #{forward.14} parent=0 // pred_check_branch
    %336 = sbr.rel (0) target = $region24
  $region23: #{forward.14} parent=0 // pred_region
    _
  $region24: #{forward.14} parent=0 // pred_fallthru
    _

// kernel: forward.15
$region0: #{forward.15}
  #allocation0 [shape = 'u32[]', space=smem, size = 0x4, offset = 0x4, fixed_abs, tag = 'smem constant byte address 0x4 - core index']
  #allocation1 [shape = 'u32[144,128]{1,0:T(1,128)}', space=vmem, size = 0x12000, scoped, tag = 'internal scratch']
  #allocation2 [shape = 'f32[1]{0:T(128)S(6)}', space=smem, size = 0x200, scoped, tag = 'scoped memory for forward.15']
  %s0 = inlined_call_operand.<no memory space> [shape: f32[1], index: 0, kind: input, shape index: {}]
  %s1 = inlined_call_operand.vmem [shape: f32[2,14,192], index: 1, kind: input, shape index: {}]
  %s2 = inlined_call_operand.vmem [shape: f32[192,32], index: 2, kind: input, shape index: {}]
  %s3 = inlined_call_operand.vmem [shape: f32[2,1,32], index: 3, kind: input, shape index: {}]
  %s4 = inlined_call_operand.vmem [shape: f32[2,1,32], index: 4, kind: input, shape index: {}]
  %s5 = inlined_call_operand.vmem [shape: f32[2,14,32], index: 5, kind: output, shape index: {}]
  %s6 = sld [smem:[#allocation0]]
  $region53: #{forward.15} parent=0
    _
  %s8 = ssub.s32 1, %s6
  %s9 = scalar_select 0, %s8, %s6
  %10 = sst [smem:[#allocation2]] %s0
  loop: start=0, step=1, limit=4
  $region2: #{forward.15} parent=0 // loop_pre_header
    _
  $region3: #{forward.15} parent=0 // loop_header
    %s12 = sphi 0, %s16
    %p13 = scmp.ge.s32.totalorder %s12, 4
    %s20 = sphi 0, %s20
    %s22 = sphi 0, %s20
    %s23 = sphi 0, %s22
    %s37 = sphi 0, %s23
    %s43 = sphi 0, %s45
    %s46 = sphi 0, %s43
    %s47 = sphi 0, %s46
    %s63 = sphi 0, %s47
    %s67 = sphi 0, %s67
    %s69 = sphi 0, %s67
    %s70 = sphi 0, %s69
    %s84 = sphi 0, %s70
    %s90 = sphi 0, %s92
    %s93 = sphi 0, %s90
    %s94 = sphi 0, %s93
    %s110 = sphi 0, %s94
    %s116 = sphi 0, %s118
    %s119 = sphi 0, %s116
    %s120 = sphi 0, %s119
    %s136 = sphi 0, %s120
    %s142 = sphi 0, %s144
    %s145 = sphi 0, %s142
    %s146 = sphi 0, %s145
    %s162 = sphi 0, %s146
  $region4: #{forward.15} parent=0 // loop_header_branch
    %15 = sbr.rel (%p13) target = $region8
  $region5: #{forward.15} parent=0 // loop_body
    %s17 = ssub.s32 %s12, 1
    %s18 = ssub.s32 %s12, 2
    %s19 = sadd.s32 %s12, 1
    %s21 = sadd.s32 %s20, 1
    %p24 = scmp.eq.s32.totalorder %s12, 1
    %p25 = scmp.ne.s32.totalorder %s20, %s22
    %p26 = scmp.eq.s32.totalorder %s12, 0
    %p27 = por %p25, %p26
    %p28 = scmp.ne.s32.totalorder %s20, %s22
    %p29 = scmp.eq.s32.totalorder %s17, 1
    %p30 = por %p28, %p29
    %p31 = scmp.ne.s32.totalorder %s22, %s23
    %p32 = scmp.eq.s32.totalorder %s17, 0
    %p33 = por %p31, %p32
    %p34 = scmp.ne.s32.totalorder %s22, %s23
    %p35 = scmp.eq.s32.totalorder %s18, 1
    %p36 = por %p34, %p35
    %p38 = scmp.ne.s32.totalorder %s23, %s37
    %p39 = scmp.eq.s32.totalorder %s18, 0
    %p40 = por %p38, %p39
    %s41 = ssub.s32 %s12, %s19
    %p42 = scmp.eq.s32.totalorder %s41, 0
    %s44 = sadd.s32 %s43, 1
    %s45 = scalar_select %p42, %s43, %s44
    %p48 = pneg %p42
    %p49 = scmp.eq.s32.totalorder %s12, 1
    %p50 = por %p48, %p49
    %p51 = scmp.ne.s32.totalorder %s43, %s46
    %p52 = scmp.eq.s32.totalorder %s12, 0
    %p53 = por %p51, %p52
    %p54 = scmp.ne.s32.totalorder %s43, %s46
    %p55 = scmp.eq.s32.totalorder %s17, 1
    %p56 = por %p54, %p55
    %p57 = scmp.ne.s32.totalorder %s46, %s47
    %p58 = scmp.eq.s32.totalorder %s17, 0
    %p59 = por %p57, %p58
    %p60 = scmp.ne.s32.totalorder %s46, %s47
    %p61 = scmp.eq.s32.totalorder %s18, 1
    %p62 = por %p60, %p61
    %p64 = scmp.ne.s32.totalorder %s47, %s63
    %p65 = scmp.eq.s32.totalorder %s18, 0
    %p66 = por %p64, %p65
    %s68 = sadd.s32 %s67, 1
    %p71 = scmp.eq.s32.totalorder %s12, 1
    %p72 = scmp.ne.s32.totalorder %s67, %s69
    %p73 = scmp.eq.s32.totalorder %s12, 0
    %p74 = por %p72, %p73
    %p75 = scmp.ne.s32.totalorder %s67, %s69
    %p76 = scmp.eq.s32.totalorder %s17, 1
    %p77 = por %p75, %p76
    %p78 = scmp.ne.s32.totalorder %s69, %s70
    %p79 = scmp.eq.s32.totalorder %s17, 0
    %p80 = por %p78, %p79
    %p81 = scmp.ne.s32.totalorder %s69, %s70
    %p82 = scmp.eq.s32.totalorder %s18, 1
    %p83 = por %p81, %p82
    %p85 = scmp.ne.s32.totalorder %s70, %s84
    %p86 = scmp.eq.s32.totalorder %s18, 0
    %p87 = por %p85, %p86
    %s88 = ssub.s32 %s12, %s19
    %p89 = scmp.eq.s32.totalorder %s88, 0
    %s91 = sadd.s32 %s90, 1
    %s92 = scalar_select %p89, %s90, %s91
    %p95 = pneg %p89
    %p96 = scmp.eq.s32.totalorder %s12, 1
    %p97 = por %p95, %p96
    %p98 = scmp.ne.s32.totalorder %s90, %s93
    %p99 = scmp.eq.s32.totalorder %s12, 0
    %p100 = por %p98, %p99
    %p101 = scmp.ne.s32.totalorder %s90, %s93
    %p102 = scmp.eq.s32.totalorder %s17, 1
    %p103 = por %p101, %p102
    %p104 = scmp.ne.s32.totalorder %s93, %s94
    %p105 = scmp.eq.s32.totalorder %s17, 0
    %p106 = por %p104, %p105
    %p107 = scmp.ne.s32.totalorder %s93, %s94
    %p108 = scmp.eq.s32.totalorder %s18, 1
    %p109 = por %p107, %p108
    %p111 = scmp.ne.s32.totalorder %s94, %s110
    %p112 = scmp.eq.s32.totalorder %s18, 0
    %p113 = por %p111, %p112
    %s114 = ssub.s32 %s12, %s19
    %p115 = scmp.eq.s32.totalorder %s114, 0
    %s117 = sadd.s32 %s116, 1
    %s118 = scalar_select %p115, %s116, %s117
    %p121 = pneg %p115
    %p122 = scmp.eq.s32.totalorder %s12, 1
    %p123 = por %p121, %p122
    %p124 = scmp.ne.s32.totalorder %s116, %s119
    %p125 = scmp.eq.s32.totalorder %s12, 0
    %p126 = por %p124, %p125
    %p127 = scmp.ne.s32.totalorder %s116, %s119
    %p128 = scmp.eq.s32.totalorder %s17, 1
    %p129 = por %p127, %p128
    %p130 = scmp.ne.s32.totalorder %s119, %s120
    %p131 = scmp.eq.s32.totalorder %s17, 0
    %p132 = por %p130, %p131
    %p133 = scmp.ne.s32.totalorder %s119, %s120
    %p134 = scmp.eq.s32.totalorder %s18, 1
    %p135 = por %p133, %p134
    %p137 = scmp.ne.s32.totalorder %s120, %s136
    %p138 = scmp.eq.s32.totalorder %s18, 0
    %p139 = por %p137, %p138
    %s140 = ssub.s32 %s12, %s19
    %p141 = scmp.eq.s32.totalorder %s140, 0
    %s143 = sadd.s32 %s142, 1
    %s144 = scalar_select %p141, %s142, %s143
    %p147 = pneg %p141
    %p148 = scmp.eq.s32.totalorder %s12, 1
    %p149 = por %p147, %p148
    %p150 = scmp.ne.s32.totalorder %s142, %s145
    %p151 = scmp.eq.s32.totalorder %s12, 0
    %p152 = por %p150, %p151
    %p153 = scmp.ne.s32.totalorder %s142, %s145
    %p154 = scmp.eq.s32.totalorder %s17, 1
    %p155 = por %p153, %p154
    %p156 = scmp.ne.s32.totalorder %s145, %s146
    %p157 = scmp.eq.s32.totalorder %s17, 0
    %p158 = por %p156, %p157
    %p159 = scmp.ne.s32.totalorder %s145, %s146
    %p160 = scmp.eq.s32.totalorder %s18, 1
    %p161 = por %p159, %p160
    %p163 = scmp.ne.s32.totalorder %s146, %s162
    %p164 = scmp.eq.s32.totalorder %s18, 0
    %p165 = por %p163, %p164
    %p166 = scmp.le.s32.totalorder 1, %s12
    %p167 = scmp.lt.s32.totalorder %s12, 3
    %p168 = pnand %p166, %p167
    %p169 = pneg %p168
    // Predicated region
    $region9: #{forward.15} parent=5 // pred_check
      _
    $region10: #{forward.15} parent=5 // pred_check_branch
      %171 = sbr.rel (%p168) target = $region12
    $region11: #{forward.15} parent=5 // pred_region
      %s172 = ssub.s32 %s12, 1
      // Predicated region
      $region13: #{forward.15} parent=11 // pred_check
        %p173 = pneg %p33
      $region14: #{forward.15} parent=11 // pred_check_branch
        %175 = sbr.rel (%p173) target = $region16
      $region15: #{forward.15} parent=11 // pred_region
        _
      $region16: #{forward.15} parent=11 // pred_fallthru
        _
      // Predicated region
      $region17: #{forward.15} parent=11 // pred_check
        %p176 = pneg %p80
      $region18: #{forward.15} parent=11 // pred_check_branch
        %178 = sbr.rel (%p176) target = $region20
      $region19: #{forward.15} parent=11 // pred_region
        _
      $region20: #{forward.15} parent=11 // pred_fallthru
        _
    $region12: #{forward.15} parent=5 // pred_fallthru
      _
    %p179 = scmp.lt.s32.totalorder %s12, 2
    // Predicated region
    $region21: #{forward.15} parent=5 // pred_check
      %p180 = pneg %p179
    $region22: #{forward.15} parent=5 // pred_check_branch
      %182 = sbr.rel (%p180) target = $region24
    $region23: #{forward.15} parent=5 // pred_region
      // Predicated region
      $region25: #{forward.15} parent=23 // pred_check
        %p183 = pneg %p53
      $region26: #{forward.15} parent=23 // pred_check_branch
        %185 = sbr.rel (%p183) target = $region28
      $region27: #{forward.15} parent=23 // pred_region
        %p186 = scmp.lt.s32.totalorder %s12, 1
        %s187 = scalar_select %p186, %s12, 1
        %s188 = smul.addr %s187, 4
        %s189 = smul.addr %s188, 8
        %s190 = scalar_lea.vmem %s1, %s189
      $region28: #{forward.15} parent=23 // pred_fallthru
        _
      // Predicated region
      $region29: #{forward.15} parent=23 // pred_check
        %p191 = pneg %p100
      $region30: #{forward.15} parent=23 // pred_check_branch
        %193 = sbr.rel (%p191) target = $region32
      $region31: #{forward.15} parent=23 // pred_region
        %p194 = scmp.lt.s32.totalorder %s12, 1
        %s195 = scalar_select %p194, %s12, 1
        %s196 = scalar_lea.vmem %s3, %s195
      $region32: #{forward.15} parent=23 // pred_fallthru
        _
      // Predicated region
      $region33: #{forward.15} parent=23 // pred_check
        %p197 = pneg %p126
      $region34: #{forward.15} parent=23 // pred_check_branch
        %199 = sbr.rel (%p197) target = $region36
      $region35: #{forward.15} parent=23 // pred_region
        %p200 = scmp.lt.s32.totalorder %s12, 1
        %s201 = scalar_select %p200, %s12, 1
        %s202 = scalar_lea.vmem %s4, %s201
      $region36: #{forward.15} parent=23 // pred_fallthru
        _
    $region24: #{forward.15} parent=5 // pred_fallthru
      _
    %p203 = scmp.le.s32.totalorder 1, %s12
    %p204 = scmp.lt.s32.totalorder %s12, 3
    %p205 = pnand %p203, %p204
    %p206 = pneg %p205
    // Predicated region
    $region37: #{forward.15} parent=5 // pred_check
      _
    $region38: #{forward.15} parent=5 // pred_check_branch
      %208 = sbr.rel (%p205) target = $region40
    $region39: #{forward.15} parent=5 // pred_region
      %s209 = ssub.s32 %s12, 1
      %p210 = pneg %p33
      %p211 = pneg %p30
      %p212 = scmp.lt.s32.totalorder %s17, 1
      %s213 = scalar_select %p212, %s17, 1
      %s214 = smul.addr %s213, 4
      %s215 = smul.addr %s214, 8
      %s216 = scalar_lea.vmem %s1, %s215
      %p217 = pneg %p59
      %p218 = pneg %p56
      %p219 = pneg %p80
      %p220 = pneg %p77
      %p221 = scmp.lt.s32.totalorder %s17, 1
      %s222 = scalar_select %p221, %s17, 1
      %s223 = scalar_lea.vmem %s3, %s222
      %p224 = pneg %p106
      %p225 = pneg %p103
      %p226 = scmp.lt.s32.totalorder %s17, 1
      %s227 = scalar_select %p226, %s17, 1
      %s228 = scalar_lea.vmem %s4, %s227
      %p229 = pneg %p132
      %p230 = pneg %p129
      %p231 = pneg %p158
      %p232 = pneg %p155
      %p233 = scmp.lt.s32.totalorder %s17, 1
      %s234 = scalar_select %p233, %s17, 1
      %s235 = smul.addr %s234, 2
      %s236 = smul.addr %s235, 8
      %s237 = scalar_lea.vmem %s5, %s236
      %p238 = scmp.lt.s32.totalorder %s17, 1
      %s239 = scalar_select %p238, %s17, 1
      %s240 = smul.addr %s239, 4
      %s241 = smul.addr %s240, 8
      %s242 = scalar_lea.vmem %s1, %s241
      %p243 = scmp.lt.s32.totalorder %s17, 1
      %s244 = scalar_select %p243, %s17, 1
      %s245 = scalar_lea.vmem %s3, %s244
      %p246 = scmp.lt.s32.totalorder %s17, 1
      %s247 = scalar_select %p246, %s17, 1
      %s248 = scalar_lea.vmem %s4, %s247
      %p249 = scmp.lt.s32.totalorder %s17, 1
      %s250 = scalar_select %p249, %s17, 1
      %s251 = smul.addr %s250, 2
      %s252 = smul.addr %s251, 8
      %s253 = scalar_lea.vmem %s5, %s252
      %v254 = vld [vmem:[%s242] sm:$0xff]
      %v255 = vld [vmem:[%s242 + $0x8] sm:$0xff]
      %v256 = vld [vmem:[%s242 + $0x10] sm:$0x3f]
      %v257 = vld [vmem:[%s242 + $0x18] sm:$0x3f]
      %v258 = vld [vmem:[%s2] sm:$0xff]
      %v259 = vld [vmem:[%s2 + $0x8] sm:$0xff]
      %v260 = vld [vmem:[%s2 + $0x10] sm:$0xff]
      %v261 = vld [vmem:[%s2 + $0x18] sm:$0xff]
      %v262 = vld [vmem:[%s2 + $0x20] sm:$0xff]
      %v263 = vld [vmem:[%s2 + $0x28] sm:$0xff]
      %v264 = vld [vmem:[%s2 + $0x30] sm:$0xff]
      %v265 = vld [vmem:[%s2 + $0x38] sm:$0xff]
      %v266 = vld [vmem:[%s2 + $0x40] sm:$0xff]
      %v267 = vld [vmem:[%s2 + $0x48] sm:$0xff]
      %v268 = vld [vmem:[%s2 + $0x50] sm:$0xff]
      %v269 = vld [vmem:[%s2 + $0x58] sm:$0xff]
      %v270 = vld [vmem:[%s2 + $0x60] sm:$0xff]
      %v271 = vld [vmem:[%s2 + $0x68] sm:$0xff]
      %v272 = vld [vmem:[%s2 + $0x70] sm:$0xff]
      %v273 = vld [vmem:[%s2 + $0x78] sm:$0xff]
      %v274 = vld [vmem:[%s2 + $0x80] sm:$0xff]
      %v275 = vld [vmem:[%s2 + $0x88] sm:$0xff]
      %v276 = vld [vmem:[%s2 + $0x90] sm:$0xff]
      %v277 = vld [vmem:[%s2 + $0x98] sm:$0xff]
      %v278 = vld [vmem:[%s2 + $0xa0] sm:$0xff]
      %v279 = vld [vmem:[%s2 + $0xa8] sm:$0xff]
      %v280 = vld [vmem:[%s2 + $0xb0] sm:$0xff]
      %v281 = vld [vmem:[%s2 + $0xb8] sm:$0xff]
      %vm282 = vcmask 523264
      %v284 = vsel %vm282, %v255, 0
      %v287 = vsel %vm282, %v257, 0
      %289 = vmatprep.subr.mxu0 0.0
      %290 = vmatpush1.msra.mxu0 %v258
      %291 = vmatprep.subr.mxu0 0.0
      %292 = vmatpush1.msra.mxu0 %v259
      %293 = vmatprep.subr.mxu0 0.0
      %294 = vmatpush1.msra.mxu0 %v260
      %295 = vmatprep.subr.mxu0 0.0
      %296 = vmatpush1.msra.mxu0 %v261
      %297 = vmatprep.subr.mxu0 0.0
      %298 = vmatpush1.msra.mxu0 %v262
      %299 = vmatprep.subr.mxu0 0.0
      %300 = vmatpush1.msra.mxu0 %v263
      %301 = vmatprep.subr.mxu0 0.0
      %302 = vmatpush1.msra.mxu0 %v264
      %303 = vmatprep.subr.mxu0 0.0
      %304 = vmatpush1.msra.mxu0 %v265
      %305 = vmatprep.subr.mxu0 0.0
      %306 = vmatpush1.msra.mxu0 %v266
      %307 = vmatprep.subr.mxu0 0.0
      %308 = vmatpush1.msra.mxu0 %v267
      %309 = vmatprep.subr.mxu0 0.0
      %310 = vmatpush1.msra.mxu0 %v268
      %311 = vmatprep.subr.mxu0 0.0
      %312 = vmatpush1.msra.mxu0 %v269
      %313 = vmatprep.subr.mxu0 0.0
      %314 = vmatpush1.msra.mxu0 %v270
      %315 = vmatprep.subr.mxu0 0.0
      %316 = vmatpush1.msra.mxu0 %v271
      %317 = vmatprep.subr.mxu0 0.0
      %318 = vmatpush1.msra.mxu0 %v272
      %319 = vmatprep.subr.mxu0 0.0
      %320 = vmatpush1.msra.mxu0 %v273
      %321 = vmatprep.subr.mxu0 0.0
      %322 = vmatpush1.msra.mxu0 %v274
      %323 = vmatprep.subr.mxu0 0.0
      %324 = vmatpush1.msra.mxu0 %v275
      %325 = vmatprep.subr.mxu0 0.0
      %326 = vmatpush1.msra.mxu0 %v276
      %327 = vmatprep.subr.mxu0 0.0
      %328 = vmatpush1.msra.mxu0 %v277
      %329 = vmatprep.subr.mxu0 0.0
      %330 = vmatpush1.msra.mxu0 %v278
      %331 = vmatprep.subr.mxu0 0.0
      %332 = vmatpush1.msra.mxu0 %v279
      %333 = vmatprep.subr.mxu0 0.0
      %334 = vmatpush1.msra.mxu0 %v280
      %335 = vmatprep.subr.mxu0 0.0
      %336 = vmatpush1.msra.mxu0 %v281
      %337 = vmatprep.subr.mxu0 0.0
      %338 = vmatpush1.msra.mxu0 0.0
      %339 = vmatprep.subr.mxu0 0.0
      %340 = vmatpush1.msra.mxu0 0.0
      %341 = vmatprep.subr.mxu0 0.0
      %342 = vmatpush1.msra.mxu0 0.0
      %343 = vmatprep.subr.mxu0 0.0
      %344 = vmatpush1.msra.mxu0 0.0
      %345 = vmatprep.subr.mxu0 0.0
      %346 = vmatpush1.msra.mxu0 0.0
      %347 = vmatprep.subr.mxu0 0.0
      %348 = vmatpush1.msra.mxu0 0.0
      %349 = vmatprep.subr.mxu0 0.0
      %350 = vmatpush1.msra.mxu0 0.0
      %351 = vmatprep.subr.mxu0 0.0
      %352 = vmatpush1.msra.mxu0 0.0
      %353 = vmatprep.mubr.f32.mxu0 %v284
      %354 = vmatmul.mubr.f32.gmra.mrb[0].mxu0 %v254
      %v355 = vpop.f32.mrb[0].mxu0
      %v356 = vadd.f32 0.0, %v355
      %v357 = vpop.f32.mrb[0].mxu0
      %358 = vmatprep.mubr.f32.mxu0 %v287
      %359 = vmatmul.mubr.f32.gmra.mrb[0].mxu0 %v256
      %v360 = vpop.f32.mrb[0].mxu0
      %v361 = vadd.f32 0.0, %v360
      %v362 = vpop.f32.mrb[0].mxu0
      %363 = vdwg.mxu0
      %v364 = vld [vmem:[%s245] sm:$0x1]
      %v366 = vlaneseq
      %v367 = vshrl.u32 %v366, 7
      %v368 = vsub.s32 0, %v367
      %v369 = vrot.slane %v364, %v368
      %v371 = vmul.f32 %v356, %v369
      %v372 = vmul.f32 %v361, %v369
      %v373 = vld [vmem:[%s248] sm:$0x1]
      %v375 = vlaneseq
      %v376 = vshrl.u32 %v375, 7
      %v377 = vsub.s32 0, %v376
      %v378 = vrot.slane %v373, %v377
      %v380 = vadd.f32 %v371, %v378
      %v381 = vadd.f32 %v372, %v378
      %s382 = sld [smem:[#allocation2]]
      %v383 = vmax.f32 %v380, 0.0
      %v384 = vmax.f32 %v381, 0.0
      %v385 = vmin.f32 %v380, 0.0
      %v386 = vmin.f32 %v381, 0.0
      %v387 = vstv %s382
      %v388 = vmul.f32 %v387, %v385
      %v389 = vmul.f32 %v387, %v386
      %v390 = vadd.f32 %v383, %v388
      %v391 = vadd.f32 %v384, %v389
      %vm392 = vcmask 261120
      %393 = vst.msk [vmem:[%s253] sm:$0xff] %vm392, %v390
      %vm394 = vcmask 259072
      %395 = vst.msk [vmem:[%s253 + $0x8] sm:$0x3f] %vm394, %v391
      %p396 = scmp.lt.s32.totalorder %s17, 1
      %s397 = scalar_select %p396, %s17, 1
      %s398 = smul.addr %s397, 2
      %s399 = smul.addr %s398, 8
      %s400 = scalar_lea.vmem %s5, %s399
      // Predicated region
      $region41: #{forward.15} parent=39 // pred_check
        %p401 = pneg %p155
      $region42: #{forward.15} parent=39 // pred_check_branch
        %403 = sbr.rel (%p401) target = $region44
      $region43: #{forward.15} parent=39 // pred_region
        _
      $region44: #{forward.15} parent=39 // pred_fallthru
        _
    $region40: #{forward.15} parent=5 // pred_fallthru
      _
    %p404 = scmp.le.s32.totalorder 2, %s12
    // Predicated region
    $region45: #{forward.15} parent=5 // pred_check
      %p405 = pneg %p404
    $region46: #{forward.15} parent=5 // pred_check_branch
      %407 = sbr.rel (%p405) target = $region48
    $region47: #{forward.15} parent=5 // pred_region
      %s408 = ssub.s32 %s12, 2
      // Predicated region
      $region49: #{forward.15} parent=47 // pred_check
        %p409 = pneg %p161
      $region50: #{forward.15} parent=47 // pred_check_branch
        %411 = sbr.rel (%p409) target = $region52
      $region51: #{forward.15} parent=47 // pred_region
        %p412 = scmp.lt.s32.totalorder %s18, 1
        %s413 = scalar_select %p412, %s18, 1
        %s414 = smul.addr %s413, 2
        %s415 = smul.addr %s414, 8
        %s416 = scalar_lea.vmem %s5, %s415
      $region52: #{forward.15} parent=47 // pred_fallthru
        _
    $region48: #{forward.15} parent=5 // pred_fallthru
      _
  $region6: #{forward.15} parent=0 // loop_footer
    %s16 = sadd.s32 1, %s12
  $region7: #{forward.15} parent=0 // loop_footer_branch
    %11 = sbr.rel target = $region3
  $region8: #{forward.15} parent=0 // loop_exit
    _

// kernel: forward.16
$region0: #{forward.16}
  #allocation0 [shape = 'u32[]', space=smem, size = 0x4, offset = 0x4, fixed_abs, tag = 'smem constant byte address 0x4 - core index']
  #allocation1 [shape = 'u32[144,128]{1,0:T(1,128)}', space=vmem, size = 0x12000, scoped, tag = 'internal scratch']
  %s0 = inlined_call_operand.vmem [shape: f32[2], index: 0, kind: input, shape index: {}]
  %s1 = inlined_call_operand.vmem [shape: f32[2,30,256], index: 1, kind: input, shape index: {}]
  %s2 = inlined_call_operand.vmem [shape: f32[256,32], index: 2, kind: input, shape index: {}]
  %s3 = inlined_call_operand.vmem [shape: f32[2,1,32], index: 3, kind: input, shape index: {}]
  %s4 = inlined_call_operand.vmem [shape: f32[2,1,32], index: 4, kind: input, shape index: {}]
  %s5 = inlined_call_operand.vmem [shape: f32[32,16], index: 5, kind: input, shape index: {}]
  %s6 = inlined_call_operand.vmem [shape: f32[2,1,16], index: 6, kind: input, shape index: {}]
  %s7 = inlined_call_operand.vmem [shape: f32[2,1,16], index: 7, kind: input, shape index: {}]
  %s8 = inlined_call_operand.vmem [shape: f32[2,30,16], index: 8, kind: output, shape index: {}]
  %s9 = sld [smem:[#allocation0]]
  $region69: #{forward.16} parent=0
    _
  %s11 = ssub.s32 1, %s9
  %s12 = scalar_select 0, %s11, %s9
  $region1: #{forward.16} parent=0
    #allocation2 [shape = 'u8[512]{0}', space=smem, size = 0x200, scoped, tag = 'input window, operand 0, single buffered']
    #allocation3 [shape = 's32[2]{0}', space=sflag, size = 0x8, scoped, tag = 'scoped memory for forward.16']
    %13 = vsyncpa [#allocation3], 0
    loop: start=0, step=1, limit=4
    $region2: #{forward.16} parent=1 // loop_pre_header
      _
    $region3: #{forward.16} parent=1 // loop_header
      %s15 = sphi 0, %s19
      %p16 = scmp.ge.s32.totalorder %s15, 4
      %s23 = sphi 0, %s23
      %s25 = sphi 0, %s23
      %s26 = sphi 0, %s25
      %s40 = sphi 0, %s26
      %s46 = sphi 0, %s48
      %s49 = sphi 0, %s46
      %s50 = sphi 0, %s49
      %s66 = sphi 0, %s50
      %s70 = sphi 0, %s70
      %s72 = sphi 0, %s70
      %s73 = sphi 0, %s72
      %s87 = sphi 0, %s73
      %s93 = sphi 0, %s95
      %s96 = sphi 0, %s93
      %s97 = sphi 0, %s96
      %s113 = sphi 0, %s97
      %s119 = sphi 0, %s121
      %s122 = sphi 0, %s119
      %s123 = sphi 0, %s122
      %s139 = sphi 0, %s123
      %s143 = sphi 0, %s143
      %s145 = sphi 0, %s143
      %s146 = sphi 0, %s145
      %s160 = sphi 0, %s146
      %s166 = sphi 0, %s168
      %s169 = sphi 0, %s166
      %s170 = sphi 0, %s169
      %s186 = sphi 0, %s170
      %s192 = sphi 0, %s194
      %s195 = sphi 0, %s192
      %s196 = sphi 0, %s195
      %s212 = sphi 0, %s196
      %s218 = sphi 0, %s220
      %s221 = sphi 0, %s218
      %s222 = sphi 0, %s221
      %s238 = sphi 0, %s222
    $region4: #{forward.16} parent=1 // loop_header_branch
      %18 = sbr.rel (%p16) target = $region8
    $region5: #{forward.16} parent=1 // loop_body
      %s20 = ssub.s32 %s15, 1
      %s21 = ssub.s32 %s15, 2
      %s22 = sadd.s32 %s15, 1
      %s24 = sadd.s32 %s23, 1
      %p27 = scmp.eq.s32.totalorder %s15, 1
      %p28 = scmp.ne.s32.totalorder %s23, %s25
      %p29 = scmp.eq.s32.totalorder %s15, 0
      %p30 = por %p28, %p29
      %p31 = scmp.ne.s32.totalorder %s23, %s25
      %p32 = scmp.eq.s32.totalorder %s20, 1
      %p33 = por %p31, %p32
      %p34 = scmp.ne.s32.totalorder %s25, %s26
      %p35 = scmp.eq.s32.totalorder %s20, 0
      %p36 = por %p34, %p35
      %p37 = scmp.ne.s32.totalorder %s25, %s26
      %p38 = scmp.eq.s32.totalorder %s21, 1
      %p39 = por %p37, %p38
      %p41 = scmp.ne.s32.totalorder %s26, %s40
      %p42 = scmp.eq.s32.totalorder %s21, 0
      %p43 = por %p41, %p42
      %s44 = ssub.s32 %s15, %s22
      %p45 = scmp.eq.s32.totalorder %s44, 0
      %s47 = sadd.s32 %s46, 1
      %s48 = scalar_select %p45, %s46, %s47
      %p51 = pneg %p45
      %p52 = scmp.eq.s32.totalorder %s15, 1
      %p53 = por %p51, %p52
      %p54 = scmp.ne.s32.totalorder %s46, %s49
      %p55 = scmp.eq.s32.totalorder %s15, 0
      %p56 = por %p54, %p55
      %p57 = scmp.ne.s32.totalorder %s46, %s49
      %p58 = scmp.eq.s32.totalorder %s20, 1
      %p59 = por %p57, %p58
      %p60 = scmp.ne.s32.totalorder %s49, %s50
      %p61 = scmp.eq.s32.totalorder %s20, 0
      %p62 = por %p60, %p61
      %p63 = scmp.ne.s32.totalorder %s49, %s50
      %p64 = scmp.eq.s32.totalorder %s21, 1
      %p65 = por %p63, %p64
      %p67 = scmp.ne.s32.totalorder %s50, %s66
      %p68 = scmp.eq.s32.totalorder %s21, 0
      %p69 = por %p67, %p68
      %s71 = sadd.s32 %s70, 1
      %p74 = scmp.eq.s32.totalorder %s15, 1
      %p75 = scmp.ne.s32.totalorder %s70, %s72
      %p76 = scmp.eq.s32.totalorder %s15, 0
      %p77 = por %p75, %p76
      %p78 = scmp.ne.s32.totalorder %s70, %s72
      %p79 = scmp.eq.s32.totalorder %s20, 1
      %p80 = por %p78, %p79
      %p81 = scmp.ne.s32.totalorder %s72, %s73
      %p82 = scmp.eq.s32.totalorder %s20, 0
      %p83 = por %p81, %p82
      %p84 = scmp.ne.s32.totalorder %s72, %s73
      %p85 = scmp.eq.s32.totalorder %s21, 1
      %p86 = por %p84, %p85
      %p88 = scmp.ne.s32.totalorder %s73, %s87
      %p89 = scmp.eq.s32.totalorder %s21, 0
      %p90 = por %p88, %p89
      %s91 = ssub.s32 %s15, %s22
      %p92 = scmp.eq.s32.totalorder %s91, 0
      %s94 = sadd.s32 %s93, 1
      %s95 = scalar_select %p92, %s93, %s94
      %p98 = pneg %p92
      %p99 = scmp.eq.s32.totalorder %s15, 1
      %p100 = por %p98, %p99
      %p101 = scmp.ne.s32.totalorder %s93, %s96
      %p102 = scmp.eq.s32.totalorder %s15, 0
      %p103 = por %p101, %p102
      %p104 = scmp.ne.s32.totalorder %s93, %s96
      %p105 = scmp.eq.s32.totalorder %s20, 1
      %p106 = por %p104, %p105
      %p107 = scmp.ne.s32.totalorder %s96, %s97
      %p108 = scmp.eq.s32.totalorder %s20, 0
      %p109 = por %p107, %p108
      %p110 = scmp.ne.s32.totalorder %s96, %s97
      %p111 = scmp.eq.s32.totalorder %s21, 1
      %p112 = por %p110, %p111
      %p114 = scmp.ne.s32.totalorder %s97, %s113
      %p115 = scmp.eq.s32.totalorder %s21, 0
      %p116 = por %p114, %p115
      %s117 = ssub.s32 %s15, %s22
      %p118 = scmp.eq.s32.totalorder %s117, 0
      %s120 = sadd.s32 %s119, 1
      %s121 = scalar_select %p118, %s119, %s120
      %p124 = pneg %p118
      %p125 = scmp.eq.s32.totalorder %s15, 1
      %p126 = por %p124, %p125
      %p127 = scmp.ne.s32.totalorder %s119, %s122
      %p128 = scmp.eq.s32.totalorder %s15, 0
      %p129 = por %p127, %p128
      %p130 = scmp.ne.s32.totalorder %s119, %s122
      %p131 = scmp.eq.s32.totalorder %s20, 1
      %p132 = por %p130, %p131
      %p133 = scmp.ne.s32.totalorder %s122, %s123
      %p134 = scmp.eq.s32.totalorder %s20, 0
      %p135 = por %p133, %p134
      %p136 = scmp.ne.s32.totalorder %s122, %s123
      %p137 = scmp.eq.s32.totalorder %s21, 1
      %p138 = por %p136, %p137
      %p140 = scmp.ne.s32.totalorder %s123, %s139
      %p141 = scmp.eq.s32.totalorder %s21, 0
      %p142 = por %p140, %p141
      %s144 = sadd.s32 %s143, 1
      %p147 = scmp.eq.s32.totalorder %s15, 1
      %p148 = scmp.ne.s32.totalorder %s143, %s145
      %p149 = scmp.eq.s32.totalorder %s15, 0
      %p150 = por %p148, %p149
      %p151 = scmp.ne.s32.totalorder %s143, %s145
      %p152 = scmp.eq.s32.totalorder %s20, 1
      %p153 = por %p151, %p152
      %p154 = scmp.ne.s32.totalorder %s145, %s146
      %p155 = scmp.eq.s32.totalorder %s20, 0
      %p156 = por %p154, %p155
      %p157 = scmp.ne.s32.totalorder %s145, %s146
      %p158 = scmp.eq.s32.totalorder %s21, 1
      %p159 = por %p157, %p158
      %p161 = scmp.ne.s32.totalorder %s146, %s160
      %p162 = scmp.eq.s32.totalorder %s21, 0
      %p163 = por %p161, %p162
      %s164 = ssub.s32 %s15, %s22
      %p165 = scmp.eq.s32.totalorder %s164, 0
      %s167 = sadd.s32 %s166, 1
      %s168 = scalar_select %p165, %s166, %s167
      %p171 = pneg %p165
      %p172 = scmp.eq.s32.totalorder %s15, 1
      %p173 = por %p171, %p172
      %p174 = scmp.ne.s32.totalorder %s166, %s169
      %p175 = scmp.eq.s32.totalorder %s15, 0
      %p176 = por %p174, %p175
      %p177 = scmp.ne.s32.totalorder %s166, %s169
      %p178 = scmp.eq.s32.totalorder %s20, 1
      %p179 = por %p177, %p178
      %p180 = scmp.ne.s32.totalorder %s169, %s170
      %p181 = scmp.eq.s32.totalorder %s20, 0
      %p182 = por %p180, %p181
      %p183 = scmp.ne.s32.totalorder %s169, %s170
      %p184 = scmp.eq.s32.totalorder %s21, 1
      %p185 = por %p183, %p184
      %p187 = scmp.ne.s32.totalorder %s170, %s186
      %p188 = scmp.eq.s32.totalorder %s21, 0
      %p189 = por %p187, %p188
      %s190 = ssub.s32 %s15, %s22
      %p191 = scmp.eq.s32.totalorder %s190, 0
      %s193 = sadd.s32 %s192, 1
      %s194 = scalar_select %p191, %s192, %s193
      %p197 = pneg %p191
      %p198 = scmp.eq.s32.totalorder %s15, 1
      %p199 = por %p197, %p198
      %p200 = scmp.ne.s32.totalorder %s192, %s195
      %p201 = scmp.eq.s32.totalorder %s15, 0
      %p202 = por %p200, %p201
      %p203 = scmp.ne.s32.totalorder %s192, %s195
      %p204 = scmp.eq.s32.totalorder %s20, 1
      %p205 = por %p203, %p204
      %p206 = scmp.ne.s32.totalorder %s195, %s196
      %p207 = scmp.eq.s32.totalorder %s20, 0
      %p208 = por %p206, %p207
      %p209 = scmp.ne.s32.totalorder %s195, %s196
      %p210 = scmp.eq.s32.totalorder %s21, 1
      %p211 = por %p209, %p210
      %p213 = scmp.ne.s32.totalorder %s196, %s212
      %p214 = scmp.eq.s32.totalorder %s21, 0
      %p215 = por %p213, %p214
      %s216 = ssub.s32 %s15, %s22
      %p217 = scmp.eq.s32.totalorder %s216, 0
      %s219 = sadd.s32 %s218, 1
      %s220 = scalar_select %p217, %s218, %s219
      %p223 = pneg %p217
      %p224 = scmp.eq.s32.totalorder %s15, 1
      %p225 = por %p223, %p224
      %p226 = scmp.ne.s32.totalorder %s218, %s221
      %p227 = scmp.eq.s32.totalorder %s15, 0
      %p228 = por %p226, %p227
      %p229 = scmp.ne.s32.totalorder %s218, %s221
      %p230 = scmp.eq.s32.totalorder %s20, 1
      %p231 = por %p229, %p230
      %p232 = scmp.ne.s32.totalorder %s221, %s222
      %p233 = scmp.eq.s32.totalorder %s20, 0
      %p234 = por %p232, %p233
      %p235 = scmp.ne.s32.totalorder %s221, %s222
      %p236 = scmp.eq.s32.totalorder %s21, 1
      %p237 = por %p235, %p236
      %p239 = scmp.ne.s32.totalorder %s222, %s238
      %p240 = scmp.eq.s32.totalorder %s21, 0
      %p241 = por %p239, %p240
      %p242 = scmp.le.s32.totalorder 1, %s15
      %p243 = scmp.lt.s32.totalorder %s15, 3
      %p244 = pnand %p242, %p243
      %p245 = pneg %p244
      // Predicated region
      $region9: #{forward.16} parent=5 // pred_check
        _
      $region10: #{forward.16} parent=5 // pred_check_branch
        %247 = sbr.rel (%p244) target = $region12
      $region11: #{forward.16} parent=5 // pred_region
        %s248 = ssub.s32 %s15, 1
        // Predicated region
        $region13: #{forward.16} parent=11 // pred_check
          %p249 = pneg %p36
        $region14: #{forward.16} parent=11 // pred_check_branch
          %251 = sbr.rel (%p249) target = $region16
        $region15: #{forward.16} parent=11 // pred_region
          %s253 = ssub.s32 16, 16
          %254 = vsyncadd [#allocation3], %s253
          %s256 = sshll.u32 %s0, 4
          %s257 = int_to_ptr.vmem [resolvable:$true] %s256
          %259 = dma.vmem_to_smem %s257, 16, [#allocation2], [#allocation3]
        $region16: #{forward.16} parent=11 // pred_fallthru
          _
        // Predicated region
        $region17: #{forward.16} parent=11 // pred_check
          %p260 = pneg %p83
        $region18: #{forward.16} parent=11 // pred_check_branch
          %262 = sbr.rel (%p260) target = $region20
        $region19: #{forward.16} parent=11 // pred_region
          _
        $region20: #{forward.16} parent=11 // pred_fallthru
          _
        // Predicated region
        $region21: #{forward.16} parent=11 // pred_check
          %p263 = pneg %p156
        $region22: #{forward.16} parent=11 // pred_check_branch
          %265 = sbr.rel (%p263) target = $region24
        $region23: #{forward.16} parent=11 // pred_region
          _
        $region24: #{forward.16} parent=11 // pred_fallthru
          _
      $region12: #{forward.16} parent=5 // pred_fallthru
        _
      %p266 = scmp.lt.s32.totalorder %s15, 2
      // Predicated region
      $region25: #{forward.16} parent=5 // pred_check
        %p267 = pneg %p266
      $region26: #{forward.16} parent=5 // pred_check_branch
        %269 = sbr.rel (%p267) target = $region28
      $region27: #{forward.16} parent=5 // pred_region
        // Predicated region
        $region29: #{forward.16} parent=27 // pred_check
          %p270 = pneg %p56
        $region30: #{forward.16} parent=27 // pred_check_branch
          %272 = sbr.rel (%p270) target = $region32
        $region31: #{forward.16} parent=27 // pred_region
          %p273 = scmp.lt.s32.totalorder %s15, 1
          %s274 = scalar_select %p273, %s15, 1
          %s275 = smul.addr %s274, 8
          %s276 = smul.addr %s275, 8
          %s277 = scalar_lea.vmem %s1, %s276
        $region32: #{forward.16} parent=27 // pred_fallthru
          _
        // Predicated region
        $region33: #{forward.16} parent=27 // pred_check
          %p278 = pneg %p103
        $region34: #{forward.16} parent=27 // pred_check_branch
          %280 = sbr.rel (%p278) target = $region36
        $region35: #{forward.16} parent=27 // pred_region
          %p281 = scmp.lt.s32.totalorder %s15, 1
          %s282 = scalar_select %p281, %s15, 1
          %s283 = scalar_lea.vmem %s3, %s282
        $region36: #{forward.16} parent=27 // pred_fallthru
          _
        // Predicated region
        $region37: #{forward.16} parent=27 // pred_check
          %p284 = pneg %p129
        $region38: #{forward.16} parent=27 // pred_check_branch
          %286 = sbr.rel (%p284) target = $region40
        $region39: #{forward.16} parent=27 // pred_region
          %p287 = scmp.lt.s32.totalorder %s15, 1
          %s288 = scalar_select %p287, %s15, 1
          %s289 = scalar_lea.vmem %s4, %s288
        $region40: #{forward.16} parent=27 // pred_fallthru
          _
        // Predicated region
        $region41: #{forward.16} parent=27 // pred_check
          %p290 = pneg %p176
        $region42: #{forward.16} parent=27 // pred_check_branch
          %292 = sbr.rel (%p290) target = $region44
        $region43: #{forward.16} parent=27 // pred_region
          %p293 = scmp.lt.s32.totalorder %s15, 1
          %s294 = scalar_select %p293, %s15, 1
          %s295 = scalar_lea.vmem %s6, %s294
        $region44: #{forward.16} parent=27 // pred_fallthru
          _
        // Predicated region
        $region45: #{forward.16} parent=27 // pred_check
          %p296 = pneg %p202
        $region46: #{forward.16} parent=27 // pred_check_branch
          %298 = sbr.rel (%p296) target = $region48
        $region47: #{forward.16} parent=27 // pred_region
          %p299 = scmp.lt.s32.totalorder %s15, 1
          %s300 = scalar_select %p299, %s15, 1
          %s301 = scalar_lea.vmem %s7, %s300
        $region48: #{forward.16} parent=27 // pred_fallthru
          _
      $region28: #{forward.16} parent=5 // pred_fallthru
        _
      %p302 = scmp.le.s32.totalorder 1, %s15
      %p303 = scmp.lt.s32.totalorder %s15, 3
      %p304 = pnand %p302, %p303
      %p305 = pneg %p304
      // Predicated region
      $region49: #{forward.16} parent=5 // pred_check
        _
      $region50: #{forward.16} parent=5 // pred_check_branch
        %307 = sbr.rel (%p304) target = $region52
      $region51: #{forward.16} parent=5 // pred_region
        %s308 = ssub.s32 %s15, 1
        // Predicated region
        $region53: #{forward.16} parent=51 // pred_check
          %p309 = pneg %p36
        $region54: #{forward.16} parent=51 // pred_check_branch
          %311 = sbr.rel (%p309) target = $region56
        $region55: #{forward.16} parent=51 // pred_region
          %312 = dma.done [#allocation3], 16
        $region56: #{forward.16} parent=51 // pred_fallthru
          _
        %313 = sfence
        %p314 = pneg %p36
        %p315 = pneg %p33
        %p316 = scmp.lt.s32.totalorder %s20, 1
        %s317 = scalar_select %p316, %s20, 1
        %s318 = smul.addr %s317, 8
        %s319 = smul.addr %s318, 8
        %s320 = scalar_lea.vmem %s1, %s319
        %p321 = pneg %p62
        %p322 = pneg %p59
        %p323 = pneg %p83
        %p324 = pneg %p80
        %p325 = scmp.lt.s32.totalorder %s20, 1
        %s326 = scalar_select %p325, %s20, 1
        %s327 = scalar_lea.vmem %s3, %s326
        %p328 = pneg %p109
        %p329 = pneg %p106
        %p330 = scmp.lt.s32.totalorder %s20, 1
        %s331 = scalar_select %p330, %s20, 1
        %s332 = scalar_lea.vmem %s4, %s331
        %p333 = pneg %p135
        %p334 = pneg %p132
        %p335 = pneg %p156
        %p336 = pneg %p153
        %p337 = scmp.lt.s32.totalorder %s20, 1
        %s338 = scalar_select %p337, %s20, 1
        %s339 = scalar_lea.vmem %s6, %s338
        %p340 = pneg %p182
        %p341 = pneg %p179
        %p342 = scmp.lt.s32.totalorder %s20, 1
        %s343 = scalar_select %p342, %s20, 1
        %s344 = scalar_lea.vmem %s7, %s343
        %p345 = pneg %p208
        %p346 = pneg %p205
        %p347 = pneg %p234
        %p348 = pneg %p231
        %p349 = scmp.lt.s32.totalorder %s20, 1
        %s350 = scalar_select %p349, %s20, 1
        %s351 = smul.addr %s350, 4
        %s352 = smul.addr %s351, 8
        %s353 = scalar_lea.vmem %s8, %s352
        %p354 = scmp.lt.s32.totalorder %s20, 1
        %s355 = scalar_select %p354, %s20, 1
        %s356 = smul.addr %s355, 8
        %s357 = smul.addr %s356, 8
        %s358 = scalar_lea.vmem %s1, %s357
        %p359 = scmp.lt.s32.totalorder %s20, 1
        %s360 = scalar_select %p359, %s20, 1
        %s361 = scalar_lea.vmem %s3, %s360
        %p362 = scmp.lt.s32.totalorder %s20, 1
        %s363 = scalar_select %p362, %s20, 1
        %s364 = scalar_lea.vmem %s4, %s363
        %p365 = scmp.lt.s32.totalorder %s20, 1
        %s366 = scalar_select %p365, %s20, 1
        %s367 = scalar_lea.vmem %s6, %s366
        %p368 = scmp.lt.s32.totalorder %s20, 1
        %s369 = scalar_select %p368, %s20, 1
        %s370 = scalar_lea.vmem %s7, %s369
        %p371 = scmp.lt.s32.totalorder %s20, 1
        %s372 = scalar_select %p371, %s20, 1
        %s373 = smul.addr %s372, 4
        %s374 = smul.addr %s373, 8
        %s375 = scalar_lea.vmem %s8, %s374
        %v376 = vld [vmem:[%s358] sm:$0xff]
        %v377 = vld [vmem:[%s358 + $0x8] sm:$0xff]
        %v378 = vld [vmem:[%s358 + $0x10] sm:$0xff]
        %v379 = vld [vmem:[%s358 + $0x18] sm:$0xff]
        %v380 = vld [vmem:[%s358 + $0x20] sm:$0xff]
        %v381 = vld [vmem:[%s358 + $0x28] sm:$0xff]
        %v382 = vld [vmem:[%s358 + $0x30] sm:$0x3f]
        %v383 = vld [vmem:[%s358 + $0x38] sm:$0x3f]
        %v384 = vld [vmem:[%s2] sm:$0xff]
        %v385 = vld [vmem:[%s2 + $0x8] sm:$0xff]
        %v386 = vld [vmem:[%s2 + $0x10] sm:$0xff]
        %v387 = vld [vmem:[%s2 + $0x18] sm:$0xff]
        %v388 = vld [vmem:[%s2 + $0x20] sm:$0xff]
        %v389 = vld [vmem:[%s2 + $0x28] sm:$0xff]
        %v390 = vld [vmem:[%s2 + $0x30] sm:$0xff]
        %v391 = vld [vmem:[%s2 + $0x38] sm:$0xff]
        %v392 = vld [vmem:[%s2 + $0x40] sm:$0xff]
        %v393 = vld [vmem:[%s2 + $0x48] sm:$0xff]
        %v394 = vld [vmem:[%s2 + $0x50] sm:$0xff]
        %v395 = vld [vmem:[%s2 + $0x58] sm:$0xff]
        %v396 = vld [vmem:[%s2 + $0x60] sm:$0xff]
        %v397 = vld [vmem:[%s2 + $0x68] sm:$0xff]
        %v398 = vld [vmem:[%s2 + $0x70] sm:$0xff]
        %v399 = vld [vmem:[%s2 + $0x78] sm:$0xff]
        %v400 = vld [vmem:[%s2 + $0x80] sm:$0xff]
        %v401 = vld [vmem:[%s2 + $0x88] sm:$0xff]
        %v402 = vld [vmem:[%s2 + $0x90] sm:$0xff]
        %v403 = vld [vmem:[%s2 + $0x98] sm:$0xff]
        %v404 = vld [vmem:[%s2 + $0xa0] sm:$0xff]
        %v405 = vld [vmem:[%s2 + $0xa8] sm:$0xff]
        %v406 = vld [vmem:[%s2 + $0xb0] sm:$0xff]
        %v407 = vld [vmem:[%s2 + $0xb8] sm:$0xff]
        %v408 = vld [vmem:[%s2 + $0xc0] sm:$0xff]
        %v409 = vld [vmem:[%s2 + $0xc8] sm:$0xff]
        %v410 = vld [vmem:[%s2 + $0xd0] sm:$0xff]
        %v411 = vld [vmem:[%s2 + $0xd8] sm:$0xff]
        %v412 = vld [vmem:[%s2 + $0xe0] sm:$0xff]
        %v413 = vld [vmem:[%s2 + $0xe8] sm:$0xff]
        %v414 = vld [vmem:[%s2 + $0xf0] sm:$0xff]
        %v415 = vld [vmem:[%s2 + $0xf8] sm:$0xff]
        %416 = vmatprep.subr.mxu0 0.0
        %417 = vmatpush1.msra.mxu0 %v384
        %418 = vmatprep.subr.mxu0 0.0
        %419 = vmatpush1.msra.mxu0 %v385
        %420 = vmatprep.subr.mxu0 0.0
        %421 = vmatpush1.msra.mxu0 %v386
        %422 = vmatprep.subr.mxu0 0.0
        %423 = vmatpush1.msra.mxu0 %v387
        %424 = vmatprep.subr.mxu0 0.0
        %425 = vmatpush1.msra.mxu0 %v388
        %426 = vmatprep.subr.mxu0 0.0
        %427 = vmatpush1.msra.mxu0 %v389
        %428 = vmatprep.subr.mxu0 0.0
        %429 = vmatpush1.msra.mxu0 %v390
        %430 = vmatprep.subr.mxu0 0.0
        %431 = vmatpush1.msra.mxu0 %v391
        %432 = vmatprep.subr.mxu0 0.0
        %433 = vmatpush1.msra.mxu0 %v392
        %434 = vmatprep.subr.mxu0 0.0
        %435 = vmatpush1.msra.mxu0 %v393
        %436 = vmatprep.subr.mxu0 0.0
        %437 = vmatpush1.msra.mxu0 %v394
        %438 = vmatprep.subr.mxu0 0.0
        %439 = vmatpush1.msra.mxu0 %v395
        %440 = vmatprep.subr.mxu0 0.0
        %441 = vmatpush1.msra.mxu0 %v396
        %442 = vmatprep.subr.mxu0 0.0
        %443 = vmatpush1.msra.mxu0 %v397
        %444 = vmatprep.subr.mxu0 0.0
        %445 = vmatpush1.msra.mxu0 %v398
        %446 = vmatprep.subr.mxu0 0.0
        %447 = vmatpush1.msra.mxu0 %v399
        %448 = vmatprep.subr.mxu0 0.0
        %449 = vmatpush1.msra.mxu0 %v400
        %450 = vmatprep.subr.mxu0 0.0
        %451 = vmatpush1.msra.mxu0 %v401
        %452 = vmatprep.subr.mxu0 0.0
        %453 = vmatpush1.msra.mxu0 %v402
        %454 = vmatprep.subr.mxu0 0.0
        %455 = vmatpush1.msra.mxu0 %v403
        %456 = vmatprep.subr.mxu0 0.0
        %457 = vmatpush1.msra.mxu0 %v404
        %458 = vmatprep.subr.mxu0 0.0
        %459 = vmatpush1.msra.mxu0 %v405
        %460 = vmatprep.subr.mxu0 0.0
        %461 = vmatpush1.msra.mxu0 %v406
        %462 = vmatprep.subr.mxu0 0.0
        %463 = vmatpush1.msra.mxu0 %v407
        %464 = vmatprep.subr.mxu0 0.0
        %465 = vmatpush1.msra.mxu0 %v408
        %466 = vmatprep.subr.mxu0 0.0
        %467 = vmatpush1.msra.mxu0 %v409
        %468 = vmatprep.subr.mxu0 0.0
        %469 = vmatpush1.msra.mxu0 %v410
        %470 = vmatprep.subr.mxu0 0.0
        %471 = vmatpush1.msra.mxu0 %v411
        %472 = vmatprep.subr.mxu0 0.0
        %473 = vmatpush1.msra.mxu0 %v412
        %474 = vmatprep.subr.mxu0 0.0
        %475 = vmatpush1.msra.mxu0 %v413
        %476 = vmatprep.subr.mxu0 0.0
        %477 = vmatpush1.msra.mxu0 %v414
        %478 = vmatprep.subr.mxu0 0.0
        %479 = vmatpush1.msra.mxu0 %v415
        %480 = vmatprep.mubr.f32.mxu0 %v377
        %481 = vmatmul.mubr.f32.gmra.mrb[0].mxu0 %v376
        %v482 = vpop.f32.mrb[0].mxu0
        %v483 = vadd.f32 0.0, %v482
        %v484 = vpop.f32.mrb[0].mxu0
        %485 = vmatprep.mubr.f32.mxu0 %v379
        %486 = vmatmul.mubr.f32.gmra.mrb[0].mxu0 %v378
        %v487 = vpop.f32.mrb[0].mxu0
        %v488 = vadd.f32 0.0, %v487
        %v489 = vpop.f32.mrb[0].mxu0
        %490 = vmatprep.mubr.f32.mxu0 %v381
        %491 = vmatmul.mubr.f32.gmra.mrb[0].mxu0 %v380
        %v492 = vpop.f32.mrb[0].mxu0
        %v493 = vadd.f32 0.0, %v492
        %v494 = vpop.f32.mrb[0].mxu0
        %495 = vmatprep.mubr.f32.mxu0 %v383
        %496 = vmatmul.mubr.f32.gmra.mrb[0].mxu0 %v382
        %v497 = vpop.f32.mrb[0].mxu0
        %v498 = vadd.f32 0.0, %v497
        %v499 = vpop.f32.mrb[0].mxu0
        %500 = vdwg.mxu0
        %v501 = vld [vmem:[%s361] sm:$0x1]
        %v503 = vlaneseq
        %v504 = vshrl.u32 %v503, 7
        %v505 = vsub.s32 0, %v504
        %v506 = vrot.slane %v501, %v505
        %v508 = vmul.f32 %v483, %v506
        %v509 = vmul.f32 %v488, %v506
        %v510 = vmul.f32 %v493, %v506
        %v511 = vmul.f32 %v498, %v506
        %v512 = vld [vmem:[%s364] sm:$0x1]
        %v514 = vlaneseq
        %v515 = vshrl.u32 %v514, 7
        %v516 = vsub.s32 0, %v515
        %v517 = vrot.slane %v512, %v516
        %v519 = vadd.f32 %v508, %v517
        %v520 = vadd.f32 %v509, %v517
        %v521 = vadd.f32 %v510, %v517
        %v522 = vadd.f32 %v511, %v517
        %v523 = vmax.f32 %v519, 0.0
        %v524 = vmax.f32 %v520, 0.0
        %v525 = vmax.f32 %v521, 0.0
        %v526 = vmax.f32 %v522, 0.0
        %s527 = sld [smem:[#allocation2]]
        %v528 = vmin.f32 %v519, 0.0
        %v529 = vmin.f32 %v520, 0.0
        %v530 = vmin.f32 %v521, 0.0
        %v531 = vmin.f32 %v522, 0.0
        %v532 = vstv %s527
        %v533 = vmul.f32 %v532, %v528
        %v534 = vmul.f32 %v532, %v529
        %v535 = vmul.f32 %v532, %v530
        %v536 = vmul.f32 %v532, %v531
        %v537 = vadd.f32 %v523, %v533
        %v538 = vadd.f32 %v524, %v534
        %v539 = vadd.f32 %v525, %v535
        %v540 = vadd.f32 %v526, %v536
        %v541 = vld [vmem:[%s5] sm:$0xff]
        %v542 = vld [vmem:[%s5 + $0x8] sm:$0xff]
        %v543 = vld [vmem:[%s5 + $0x10] sm:$0xff]
        %v544 = vld [vmem:[%s5 + $0x18] sm:$0xff]
        %vm545 = vcmask 261120
        %v547 = vsel %vm545, %v537, 0
        %v550 = vsel %vm545, %v538, 0
        %v553 = vsel %vm545, %v539, 0
        %v556 = vsel %vm545, %v540, 0
        %558 = vmatprep.subr.mxu0 0.0
        %559 = vmatpush1.msra.mxu0 %v541
        %560 = vmatprep.subr.mxu0 0.0
        %561 = vmatpush1.msra.mxu0 %v542
        %562 = vmatprep.subr.mxu0 0.0
        %563 = vmatpush1.msra.mxu0 %v543
        %564 = vmatprep.subr.mxu0 0.0
        %565 = vmatpush1.msra.mxu0 %v544
        %566 = vmatprep.subr.mxu0 0.0
        %567 = vmatpush1.msra.mxu0 0.0
        %568 = vmatprep.subr.mxu0 0.0
        %569 = vmatpush1.msra.mxu0 0.0
        %570 = vmatprep.subr.mxu0 0.0
        %571 = vmatpush1.msra.mxu0 0.0
        %572 = vmatprep.subr.mxu0 0.0
        %573 = vmatpush1.msra.mxu0 0.0
        %574 = vmatprep.subr.mxu0 0.0
        %575 = vmatpush1.msra.mxu0 0.0
        %576 = vmatprep.subr.mxu0 0.0
        %577 = vmatpush1.msra.mxu0 0.0
        %578 = vmatprep.subr.mxu0 0.0
        %579 = vmatpush1.msra.mxu0 0.0
        %580 = vmatprep.subr.mxu0 0.0
        %581 = vmatpush1.msra.mxu0 0.0
        %582 = vmatprep.subr.mxu0 0.0
        %583 = vmatpush1.msra.mxu0 0.0
        %584 = vmatprep.subr.mxu0 0.0
        %585 = vmatpush1.msra.mxu0 0.0
        %586 = vmatprep.subr.mxu0 0.0
        %587 = vmatpush1.msra.mxu0 0.0
        %588 = vmatprep.subr.mxu0 0.0
        %589 = vmatpush1.msra.mxu0 0.0
        %590 = vmatprep.subr.mxu0 0.0
        %591 = vmatpush1.msra.mxu0 0.0
        %592 = vmatprep.subr.mxu0 0.0
        %593 = vmatpush1.msra.mxu0 0.0
        %594 = vmatprep.subr.mxu0 0.0
        %595 = vmatpush1.msra.mxu0 0.0
        %596 = vmatprep.subr.mxu0 0.0
        %597 = vmatpush1.msra.mxu0 0.0
        %598 = vmatprep.subr.mxu0 0.0
        %599 = vmatpush1.msra.mxu0 0.0
        %600 = vmatprep.subr.mxu0 0.0
        %601 = vmatpush1.msra.mxu0 0.0
        %602 = vmatprep.subr.mxu0 0.0
        %603 = vmatpush1.msra.mxu0 0.0
        %604 = vmatprep.subr.mxu0 0.0
        %605 = vmatpush1.msra.mxu0 0.0
        %606 = vmatprep.subr.mxu0 0.0
        %607 = vmatpush1.msra.mxu0 0.0
        %608 = vmatprep.subr.mxu0 0.0
        %609 = vmatpush1.msra.mxu0 0.0
        %610 = vmatprep.subr.mxu0 0.0
        %611 = vmatpush1.msra.mxu0 0.0
        %612 = vmatprep.subr.mxu0 0.0
        %613 = vmatpush1.msra.mxu0 0.0
        %614 = vmatprep.subr.mxu0 0.0
        %615 = vmatpush1.msra.mxu0 0.0
        %616 = vmatprep.subr.mxu0 0.0
        %617 = vmatpush1.msra.mxu0 0.0
        %618 = vmatprep.subr.mxu0 0.0
        %619 = vmatpush1.msra.mxu0 0.0
        %620 = vmatprep.subr.mxu0 0.0
        %621 = vmatpush1.msra.mxu0 0.0
        %622 = vmatprep.mubr.f32.mxu0 0.0
        %623 = vmatmul.mubr.f32.gmra.mrb[0].mxu0 %v547
        %v624 = vpop.f32.mrb[0].mxu0
        %v625 = vadd.f32 0.0, %v624
        %v626 = vpop.f32.mrb[0].mxu0
        %627 = vmatprep.mubr.f32.mxu0 0.0
        %628 = vmatmul.mubr.f32.gmra.mrb[0].mxu0 %v550
        %v629 = vpop.f32.mrb[0].mxu0
        %v630 = vadd.f32 0.0, %v629
        %v631 = vpop.f32.mrb[0].mxu0
        %632 = vmatprep.mubr.f32.mxu0 0.0
        %633 = vmatmul.mubr.f32.gmra.mrb[0].mxu0 %v553
        %v634 = vpop.f32.mrb[0].mxu0
        %v635 = vadd.f32 0.0, %v634
        %v636 = vpop.f32.mrb[0].mxu0
        %637 = vmatprep.mubr.f32.mxu0 0.0
        %638 = vmatmul.mubr.f32.gmra.mrb[0].mxu0 %v556
        %v639 = vpop.f32.mrb[0].mxu0
        %v640 = vadd.f32 0.0, %v639
        %v641 = vpop.f32.mrb[0].mxu0
        %642 = vdwg.mxu0
        %v643 = vld [vmem:[%s367] sm:$0x1]
        %v645 = vlaneseq
        %v646 = vshrl.u32 %v645, 7
        %v647 = vsub.s32 0, %v646
        %v648 = vrot.slane %v643, %v647
        %v650 = vmul.f32 %v625, %v648
        %v651 = vmul.f32 %v630, %v648
        %v652 = vmul.f32 %v635, %v648
        %v653 = vmul.f32 %v640, %v648
        %v654 = vld [vmem:[%s370] sm:$0x1]
        %v656 = vlaneseq
        %v657 = vshrl.u32 %v656, 7
        %v658 = vsub.s32 0, %v657
        %v659 = vrot.slane %v654, %v658
        %v661 = vadd.f32 %v650, %v659
        %v662 = vadd.f32 %v651, %v659
        %v663 = vadd.f32 %v652, %v659
        %v664 = vadd.f32 %v653, %v659
        %v665 = vmax.f32 %v661, 0.0
        %v666 = vmax.f32 %v662, 0.0
        %v667 = vmax.f32 %v663, 0.0
        %v668 = vmax.f32 %v664, 0.0
        %s669 = sld [smem:[#allocation2 + $0x1]]
        %v670 = vmin.f32 %v661, 0.0
        %v671 = vmin.f32 %v662, 0.0
        %v672 = vmin.f32 %v663, 0.0
        %v673 = vmin.f32 %v664, 0.0
        %v674 = vstv %s669
        %v675 = vmul.f32 %v674, %v670
        %v676 = vmul.f32 %v674, %v671
        %v677 = vmul.f32 %v674, %v672
        %v678 = vmul.f32 %v674, %v673
        %v679 = vadd.f32 %v665, %v675
        %v680 = vadd.f32 %v666, %v676
        %v681 = vadd.f32 %v667, %v677
        %v682 = vadd.f32 %v668, %v678
        %vm683 = vcmask 130048
        %684 = vst.msk [vmem:[%s375] sm:$0xff] %vm683, %v679
        %685 = vst.msk [vmem:[%s375 + $0x8] sm:$0xff] %vm683, %v680
        %686 = vst.msk [vmem:[%s375 + $0x10] sm:$0xff] %vm683, %v681
        %vm687 = vcmask 128000
        %688 = vst.msk [vmem:[%s375 + $0x18] sm:$0x3f] %vm687, %v682
        %p689 = scmp.lt.s32.totalorder %s20, 1
        %s690 = scalar_select %p689, %s20, 1
        %s691 = smul.addr %s690, 4
        %s692 = smul.addr %s691, 8
        %s693 = scalar_lea.vmem %s8, %s692
        // Predicated region
        $region57: #{forward.16} parent=51 // pred_check
          %p694 = pneg %p231
        $region58: #{forward.16} parent=51 // pred_check_branch
          %696 = sbr.rel (%p694) target = $region60
        $region59: #{forward.16} parent=51 // pred_region
          _
        $region60: #{forward.16} parent=51 // pred_fallthru
          _
      $region52: #{forward.16} parent=5 // pred_fallthru
        _
      %p697 = scmp.le.s32.totalorder 2, %s15
      // Predicated region
      $region61: #{forward.16} parent=5 // pred_check
        %p698 = pneg %p697
      $region62: #{forward.16} parent=5 // pred_check_branch
        %700 = sbr.rel (%p698) target = $region64
      $region63: #{forward.16} parent=5 // pred_region
        %s701 = ssub.s32 %s15, 2
        // Predicated region
        $region65: #{forward.16} parent=63 // pred_check
          %p702 = pneg %p237
        $region66: #{forward.16} parent=63 // pred_check_branch
          %704 = sbr.rel (%p702) target = $region68
        $region67: #{forward.16} parent=63 // pred_region
          %p705 = scmp.lt.s32.totalorder %s21, 1
          %s706 = scalar_select %p705, %s21, 1
          %s707 = smul.addr %s706, 4
          %s708 = smul.addr %s707, 8
          %s709 = scalar_lea.vmem %s8, %s708
        $region68: #{forward.16} parent=63 // pred_fallthru
          _
      $region64: #{forward.16} parent=5 // pred_fallthru
        _
    $region6: #{forward.16} parent=1 // loop_footer
      %s19 = sadd.s32 1, %s15
    $region7: #{forward.16} parent=1 // loop_footer_branch
      %14 = sbr.rel target = $region3
    $region8: #{forward.16} parent=1 // loop_exit
      _
    %710 = vsyncpa [#allocation3], 1
    %s711 = scalar_lea.sflag [#allocation3], 1
    %712 = vsyncpa %s711, 1

// kernel: forward.17
$region0: #{forward.17}
  #allocation0 [shape = 'u32[]', space=smem, size = 0x4, offset = 0x4, fixed_abs, tag = 'smem constant byte address 0x4 - core index']
  #allocation1 [shape = 'u32[144,128]{1,0:T(1,128)}', space=vmem, size = 0x12000, scoped, tag = 'internal scratch']
  %s0 = inlined_call_operand.vmem [shape: f32[2], index: 0, kind: input, shape index: {}]
  %s1 = inlined_call_operand.vmem [shape: f32[2,64,192], index: 1, kind: input, shape index: {}]
  %s2 = inlined_call_operand.vmem [shape: f32[192,16], index: 2, kind: input, shape index: {}]
  %s3 = inlined_call_operand.vmem [shape: f32[2,1,16], index: 3, kind: input, shape index: {}]
  %s4 = inlined_call_operand.vmem [shape: f32[2,1,16], index: 4, kind: input, shape index: {}]
  %s5 = inlined_call_operand.vmem [shape: f32[16,8], index: 5, kind: input, shape index: {}]
  %s6 = inlined_call_operand.vmem [shape: f32[2,1,8], index: 6, kind: input, shape index: {}]
  %s7 = inlined_call_operand.vmem [shape: f32[2,1,8], index: 7, kind: input, shape index: {}]
  %s8 = inlined_call_operand.vmem [shape: f32[2,64,8], index: 8, kind: output, shape index: {}]
  %s9 = sld [smem:[#allocation0]]
  $region69: #{forward.17} parent=0
    _
  %s11 = ssub.s32 1, %s9
  %s12 = scalar_select 0, %s11, %s9
  $region1: #{forward.17} parent=0
    #allocation2 [shape = 'u8[512]{0}', space=smem, size = 0x200, scoped, tag = 'input window, operand 0, single buffered']
    #allocation3 [shape = 's32[2]{0}', space=sflag, size = 0x8, scoped, tag = 'scoped memory for forward.17']
    %13 = vsyncpa [#allocation3], 0
    loop: start=0, step=1, limit=4
    $region2: #{forward.17} parent=1 // loop_pre_header
      _
    $region3: #{forward.17} parent=1 // loop_header
      %s15 = sphi 0, %s19
      %p16 = scmp.ge.s32.totalorder %s15, 4
      %s23 = sphi 0, %s23
      %s25 = sphi 0, %s23
      %s26 = sphi 0, %s25
      %s40 = sphi 0, %s26
      %s46 = sphi 0, %s48
      %s49 = sphi 0, %s46
      %s50 = sphi 0, %s49
      %s66 = sphi 0, %s50
      %s70 = sphi 0, %s70
      %s72 = sphi 0, %s70
      %s73 = sphi 0, %s72
      %s87 = sphi 0, %s73
      %s93 = sphi 0, %s95
      %s96 = sphi 0, %s93
      %s97 = sphi 0, %s96
      %s113 = sphi 0, %s97
      %s119 = sphi 0, %s121
      %s122 = sphi 0, %s119
      %s123 = sphi 0, %s122
      %s139 = sphi 0, %s123
      %s143 = sphi 0, %s143
      %s145 = sphi 0, %s143
      %s146 = sphi 0, %s145
      %s160 = sphi 0, %s146
      %s166 = sphi 0, %s168
      %s169 = sphi 0, %s166
      %s170 = sphi 0, %s169
      %s186 = sphi 0, %s170
      %s192 = sphi 0, %s194
      %s195 = sphi 0, %s192
      %s196 = sphi 0, %s195
      %s212 = sphi 0, %s196
      %s218 = sphi 0, %s220
      %s221 = sphi 0, %s218
      %s222 = sphi 0, %s221
      %s238 = sphi 0, %s222
    $region4: #{forward.17} parent=1 // loop_header_branch
      %18 = sbr.rel (%p16) target = $region8
    $region5: #{forward.17} parent=1 // loop_body
      %s20 = ssub.s32 %s15, 1
      %s21 = ssub.s32 %s15, 2
      %s22 = sadd.s32 %s15, 1
      %s24 = sadd.s32 %s23, 1
      %p27 = scmp.eq.s32.totalorder %s15, 1
      %p28 = scmp.ne.s32.totalorder %s23, %s25
      %p29 = scmp.eq.s32.totalorder %s15, 0
      %p30 = por %p28, %p29
      %p31 = scmp.ne.s32.totalorder %s23, %s25
      %p32 = scmp.eq.s32.totalorder %s20, 1
      %p33 = por %p31, %p32
      %p34 = scmp.ne.s32.totalorder %s25, %s26
      %p35 = scmp.eq.s32.totalorder %s20, 0
      %p36 = por %p34, %p35
      %p37 = scmp.ne.s32.totalorder %s25, %s26
      %p38 = scmp.eq.s32.totalorder %s21, 1
      %p39 = por %p37, %p38
      %p41 = scmp.ne.s32.totalorder %s26, %s40
      %p42 = scmp.eq.s32.totalorder %s21, 0
      %p43 = por %p41, %p42
      %s44 = ssub.s32 %s15, %s22
      %p45 = scmp.eq.s32.totalorder %s44, 0
      %s47 = sadd.s32 %s46, 1
      %s48 = scalar_select %p45, %s46, %s47
      %p51 = pneg %p45
      %p52 = scmp.eq.s32.totalorder %s15, 1
      %p53 = por %p51, %p52
      %p54 = scmp.ne.s32.totalorder %s46, %s49
      %p55 = scmp.eq.s32.totalorder %s15, 0
      %p56 = por %p54, %p55
      %p57 = scmp.ne.s32.totalorder %s46, %s49
      %p58 = scmp.eq.s32.totalorder %s20, 1
      %p59 = por %p57, %p58
      %p60 = scmp.ne.s32.totalorder %s49, %s50
      %p61 = scmp.eq.s32.totalorder %s20, 0
      %p62 = por %p60, %p61
      %p63 = scmp.ne.s32.totalorder %s49, %s50
      %p64 = scmp.eq.s32.totalorder %s21, 1
      %p65 = por %p63, %p64
      %p67 = scmp.ne.s32.totalorder %s50, %s66
      %p68 = scmp.eq.s32.totalorder %s21, 0
      %p69 = por %p67, %p68
      %s71 = sadd.s32 %s70, 1
      %p74 = scmp.eq.s32.totalorder %s15, 1
      %p75 = scmp.ne.s32.totalorder %s70, %s72
      %p76 = scmp.eq.s32.totalorder %s15, 0
      %p77 = por %p75, %p76
      %p78 = scmp.ne.s32.totalorder %s70, %s72
      %p79 = scmp.eq.s32.totalorder %s20, 1
      %p80 = por %p78, %p79
      %p81 = scmp.ne.s32.totalorder %s72, %s73
      %p82 = scmp.eq.s32.totalorder %s20, 0
      %p83 = por %p81, %p82
      %p84 = scmp.ne.s32.totalorder %s72, %s73
      %p85 = scmp.eq.s32.totalorder %s21, 1
      %p86 = por %p84, %p85
      %p88 = scmp.ne.s32.totalorder %s73, %s87
      %p89 = scmp.eq.s32.totalorder %s21, 0
      %p90 = por %p88, %p89
      %s91 = ssub.s32 %s15, %s22
      %p92 = scmp.eq.s32.totalorder %s91, 0
      %s94 = sadd.s32 %s93, 1
      %s95 = scalar_select %p92, %s93, %s94
      %p98 = pneg %p92
      %p99 = scmp.eq.s32.totalorder %s15, 1
      %p100 = por %p98, %p99
      %p101 = scmp.ne.s32.totalorder %s93, %s96
      %p102 = scmp.eq.s32.totalorder %s15, 0
      %p103 = por %p101, %p102
      %p104 = scmp.ne.s32.totalorder %s93, %s96
      %p105 = scmp.eq.s32.totalorder %s20, 1
      %p106 = por %p104, %p105
      %p107 = scmp.ne.s32.totalorder %s96, %s97
      %p108 = scmp.eq.s32.totalorder %s20, 0
      %p109 = por %p107, %p108
      %p110 = scmp.ne.s32.totalorder %s96, %s97
      %p111 = scmp.eq.s32.totalorder %s21, 1
      %p112 = por %p110, %p111
      %p114 = scmp.ne.s32.totalorder %s97, %s113
      %p115 = scmp.eq.s32.totalorder %s21, 0
      %p116 = por %p114, %p115
      %s117 = ssub.s32 %s15, %s22
      %p118 = scmp.eq.s32.totalorder %s117, 0
      %s120 = sadd.s32 %s119, 1
      %s121 = scalar_select %p118, %s119, %s120
      %p124 = pneg %p118
      %p125 = scmp.eq.s32.totalorder %s15, 1
      %p126 = por %p124, %p125
      %p127 = scmp.ne.s32.totalorder %s119, %s122
      %p128 = scmp.eq.s32.totalorder %s15, 0
      %p129 = por %p127, %p128
      %p130 = scmp.ne.s32.totalorder %s119, %s122
      %p131 = scmp.eq.s32.totalorder %s20, 1
      %p132 = por %p130, %p131
      %p133 = scmp.ne.s32.totalorder %s122, %s123
      %p134 = scmp.eq.s32.totalorder %s20, 0
      %p135 = por %p133, %p134
      %p136 = scmp.ne.s32.totalorder %s122, %s123
      %p137 = scmp.eq.s32.totalorder %s21, 1
      %p138 = por %p136, %p137
      %p140 = scmp.ne.s32.totalorder %s123, %s139
      %p141 = scmp.eq.s32.totalorder %s21, 0
      %p142 = por %p140, %p141
      %s144 = sadd.s32 %s143, 1
      %p147 = scmp.eq.s32.totalorder %s15, 1
      %p148 = scmp.ne.s32.totalorder %s143, %s145
      %p149 = scmp.eq.s32.totalorder %s15, 0
      %p150 = por %p148, %p149
      %p151 = scmp.ne.s32.totalorder %s143, %s145
      %p152 = scmp.eq.s32.totalorder %s20, 1
      %p153 = por %p151, %p152
      %p154 = scmp.ne.s32.totalorder %s145, %s146
      %p155 = scmp.eq.s32.totalorder %s20, 0
      %p156 = por %p154, %p155
      %p157 = scmp.ne.s32.totalorder %s145, %s146
      %p158 = scmp.eq.s32.totalorder %s21, 1
      %p159 = por %p157, %p158
      %p161 = scmp.ne.s32.totalorder %s146, %s160
      %p162 = scmp.eq.s32.totalorder %s21, 0
      %p163 = por %p161, %p162
      %s164 = ssub.s32 %s15, %s22
      %p165 = scmp.eq.s32.totalorder %s164, 0
      %s167 = sadd.s32 %s166, 1
      %s168 = scalar_select %p165, %s166, %s167
      %p171 = pneg %p165
      %p172 = scmp.eq.s32.totalorder %s15, 1
      %p173 = por %p171, %p172
      %p174 = scmp.ne.s32.totalorder %s166, %s169
      %p175 = scmp.eq.s32.totalorder %s15, 0
      %p176 = por %p174, %p175
      %p177 = scmp.ne.s32.totalorder %s166, %s169
      %p178 = scmp.eq.s32.totalorder %s20, 1
      %p179 = por %p177, %p178
      %p180 = scmp.ne.s32.totalorder %s169, %s170
      %p181 = scmp.eq.s32.totalorder %s20, 0
      %p182 = por %p180, %p181
      %p183 = scmp.ne.s32.totalorder %s169, %s170
      %p184 = scmp.eq.s32.totalorder %s21, 1
      %p185 = por %p183, %p184
      %p187 = scmp.ne.s32.totalorder %s170, %s186
      %p188 = scmp.eq.s32.totalorder %s21, 0
      %p189 = por %p187, %p188
      %s190 = ssub.s32 %s15, %s22
      %p191 = scmp.eq.s32.totalorder %s190, 0
      %s193 = sadd.s32 %s192, 1
      %s194 = scalar_select %p191, %s192, %s193
      %p197 = pneg %p191
      %p198 = scmp.eq.s32.totalorder %s15, 1
      %p199 = por %p197, %p198
      %p200 = scmp.ne.s32.totalorder %s192, %s195
      %p201 = scmp.eq.s32.totalorder %s15, 0
      %p202 = por %p200, %p201
      %p203 = scmp.ne.s32.totalorder %s192, %s195
      %p204 = scmp.eq.s32.totalorder %s20, 1
      %p205 = por %p203, %p204
      %p206 = scmp.ne.s32.totalorder %s195, %s196
      %p207 = scmp.eq.s32.totalorder %s20, 0
      %p208 = por %p206, %p207
      %p209 = scmp.ne.s32.totalorder %s195, %s196
      %p210 = scmp.eq.s32.totalorder %s21, 1
      %p211 = por %p209, %p210
      %p213 = scmp.ne.s32.totalorder %s196, %s212
      %p214 = scmp.eq.s32.totalorder %s21, 0
      %p215 = por %p213, %p214
      %s216 = ssub.s32 %s15, %s22
      %p217 = scmp.eq.s32.totalorder %s216, 0
      %s219 = sadd.s32 %s218, 1
      %s220 = scalar_select %p217, %s218, %s219
      %p223 = pneg %p217
      %p224 = scmp.eq.s32.totalorder %s15, 1
      %p225 = por %p223, %p224
      %p226 = scmp.ne.s32.totalorder %s218, %s221
      %p227 = scmp.eq.s32.totalorder %s15, 0
      %p228 = por %p226, %p227
      %p229 = scmp.ne.s32.totalorder %s218, %s221
      %p230 = scmp.eq.s32.totalorder %s20, 1
      %p231 = por %p229, %p230
      %p232 = scmp.ne.s32.totalorder %s221, %s222
      %p233 = scmp.eq.s32.totalorder %s20, 0
      %p234 = por %p232, %p233
      %p235 = scmp.ne.s32.totalorder %s221, %s222
      %p236 = scmp.eq.s32.totalorder %s21, 1
      %p237 = por %p235, %p236
      %p239 = scmp.ne.s32.totalorder %s222, %s238
      %p240 = scmp.eq.s32.totalorder %s21, 0
      %p241 = por %p239, %p240
      %p242 = scmp.le.s32.totalorder 1, %s15
      %p243 = scmp.lt.s32.totalorder %s15, 3
      %p244 = pnand %p242, %p243
      %p245 = pneg %p244
      // Predicated region
      $region9: #{forward.17} parent=5 // pred_check
        _
      $region10: #{forward.17} parent=5 // pred_check_branch
        %247 = sbr.rel (%p244) target = $region12
      $region11: #{forward.17} parent=5 // pred_region
        %s248 = ssub.s32 %s15, 1
        // Predicated region
        $region13: #{forward.17} parent=11 // pred_check
          %p249 = pneg %p36
        $region14: #{forward.17} parent=11 // pred_check_branch
          %251 = sbr.rel (%p249) target = $region16
        $region15: #{forward.17} parent=11 // pred_region
          %s253 = ssub.s32 16, 16
          %254 = vsyncadd [#allocation3], %s253
          %s256 = sshll.u32 %s0, 4
          %s257 = int_to_ptr.vmem [resolvable:$true] %s256
          %259 = dma.vmem_to_smem %s257, 16, [#allocation2], [#allocation3]
        $region16: #{forward.17} parent=11 // pred_fallthru
          _
        // Predicated region
        $region17: #{forward.17} parent=11 // pred_check
          %p260 = pneg %p83
        $region18: #{forward.17} parent=11 // pred_check_branch
          %262 = sbr.rel (%p260) target = $region20
        $region19: #{forward.17} parent=11 // pred_region
          _
        $region20: #{forward.17} parent=11 // pred_fallthru
          _
        // Predicated region
        $region21: #{forward.17} parent=11 // pred_check
          %p263 = pneg %p156
        $region22: #{forward.17} parent=11 // pred_check_branch
          %265 = sbr.rel (%p263) target = $region24
        $region23: #{forward.17} parent=11 // pred_region
          _
        $region24: #{forward.17} parent=11 // pred_fallthru
          _
      $region12: #{forward.17} parent=5 // pred_fallthru
        _
      %p266 = scmp.lt.s32.totalorder %s15, 2
      // Predicated region
      $region25: #{forward.17} parent=5 // pred_check
        %p267 = pneg %p266
      $region26: #{forward.17} parent=5 // pred_check_branch
        %269 = sbr.rel (%p267) target = $region28
      $region27: #{forward.17} parent=5 // pred_region
        // Predicated region
        $region29: #{forward.17} parent=27 // pred_check
          %p270 = pneg %p56
        $region30: #{forward.17} parent=27 // pred_check_branch
          %272 = sbr.rel (%p270) target = $region32
        $region31: #{forward.17} parent=27 // pred_region
          %p273 = scmp.lt.s32.totalorder %s15, 1
          %s274 = scalar_select %p273, %s15, 1
          %s275 = smul.addr %s274, 16
          %s276 = smul.addr %s275, 8
          %s277 = scalar_lea.vmem %s1, %s276
        $region32: #{forward.17} parent=27 // pred_fallthru
          _
        // Predicated region
        $region33: #{forward.17} parent=27 // pred_check
          %p278 = pneg %p103
        $region34: #{forward.17} parent=27 // pred_check_branch
          %280 = sbr.rel (%p278) target = $region36
        $region35: #{forward.17} parent=27 // pred_region
          %p281 = scmp.lt.s32.totalorder %s15, 1
          %s282 = scalar_select %p281, %s15, 1
          %s283 = scalar_lea.vmem %s3, %s282
        $region36: #{forward.17} parent=27 // pred_fallthru
          _
        // Predicated region
        $region37: #{forward.17} parent=27 // pred_check
          %p284 = pneg %p129
        $region38: #{forward.17} parent=27 // pred_check_branch
          %286 = sbr.rel (%p284) target = $region40
        $region39: #{forward.17} parent=27 // pred_region
          %p287 = scmp.lt.s32.totalorder %s15, 1
          %s288 = scalar_select %p287, %s15, 1
          %s289 = scalar_lea.vmem %s4, %s288
        $region40: #{forward.17} parent=27 // pred_fallthru
          _
        // Predicated region
        $region41: #{forward.17} parent=27 // pred_check
          %p290 = pneg %p176
        $region42: #{forward.17} parent=27 // pred_check_branch
          %292 = sbr.rel (%p290) target = $region44
        $region43: #{forward.17} parent=27 // pred_region
          %p293 = scmp.lt.s32.totalorder %s15, 1
          %s294 = scalar_select %p293, %s15, 1
          %s295 = scalar_lea.vmem %s6, %s294
        $region44: #{forward.17} parent=27 // pred_fallthru
          _
        // Predicated region
        $region45: #{forward.17} parent=27 // pred_check
          %p296 = pneg %p202
        $region46: #{forward.17} parent=27 // pred_check_branch
          %298 = sbr.rel (%p296) target = $region48
        $region47: #{forward.17} parent=27 // pred_region
          %p299 = scmp.lt.s32.totalorder %s15, 1
          %s300 = scalar_select %p299, %s15, 1
          %s301 = scalar_lea.vmem %s7, %s300
        $region48: #{forward.17} parent=27 // pred_fallthru
          _
      $region28: #{forward.17} parent=5 // pred_fallthru
        _
      %p302 = scmp.le.s32.totalorder 1, %s15
      %p303 = scmp.lt.s32.totalorder %s15, 3
      %p304 = pnand %p302, %p303
      %p305 = pneg %p304
      // Predicated region
      $region49: #{forward.17} parent=5 // pred_check
        _
      $region50: #{forward.17} parent=5 // pred_check_branch
        %307 = sbr.rel (%p304) target = $region52
      $region51: #{forward.17} parent=5 // pred_region
        %s308 = ssub.s32 %s15, 1
        // Predicated region
        $region53: #{forward.17} parent=51 // pred_check
          %p309 = pneg %p36
        $region54: #{forward.17} parent=51 // pred_check_branch
          %311 = sbr.rel (%p309) target = $region56
        $region55: #{forward.17} parent=51 // pred_region
          %312 = dma.done [#allocation3], 16
        $region56: #{forward.17} parent=51 // pred_fallthru
          _
        %313 = sfence
        %p314 = pneg %p36
        %p315 = pneg %p33
        %p316 = scmp.lt.s32.totalorder %s20, 1
        %s317 = scalar_select %p316, %s20, 1
        %s318 = smul.addr %s317, 16
        %s319 = smul.addr %s318, 8
        %s320 = scalar_lea.vmem %s1, %s319
        %p321 = pneg %p62
        %p322 = pneg %p59
        %p323 = pneg %p83
        %p324 = pneg %p80
        %p325 = scmp.lt.s32.totalorder %s20, 1
        %s326 = scalar_select %p325, %s20, 1
        %s327 = scalar_lea.vmem %s3, %s326
        %p328 = pneg %p109
        %p329 = pneg %p106
        %p330 = scmp.lt.s32.totalorder %s20, 1
        %s331 = scalar_select %p330, %s20, 1
        %s332 = scalar_lea.vmem %s4, %s331
        %p333 = pneg %p135
        %p334 = pneg %p132
        %p335 = pneg %p156
        %p336 = pneg %p153
        %p337 = scmp.lt.s32.totalorder %s20, 1
        %s338 = scalar_select %p337, %s20, 1
        %s339 = scalar_lea.vmem %s6, %s338
        %p340 = pneg %p182
        %p341 = pneg %p179
        %p342 = scmp.lt.s32.totalorder %s20, 1
        %s343 = scalar_select %p342, %s20, 1
        %s344 = scalar_lea.vmem %s7, %s343
        %p345 = pneg %p208
        %p346 = pneg %p205
        %p347 = pneg %p234
        %p348 = pneg %p231
        %p349 = scmp.lt.s32.totalorder %s20, 1
        %s350 = scalar_select %p349, %s20, 1
        %s351 = smul.addr %s350, 8
        %s352 = smul.addr %s351, 8
        %s353 = scalar_lea.vmem %s8, %s352
        %p354 = scmp.lt.s32.totalorder %s20, 1
        %s355 = scalar_select %p354, %s20, 1
        %s356 = smul.addr %s355, 16
        %s357 = smul.addr %s356, 8
        %s358 = scalar_lea.vmem %s1, %s357
        %p359 = scmp.lt.s32.totalorder %s20, 1
        %s360 = scalar_select %p359, %s20, 1
        %s361 = scalar_lea.vmem %s3, %s360
        %p362 = scmp.lt.s32.totalorder %s20, 1
        %s363 = scalar_select %p362, %s20, 1
        %s364 = scalar_lea.vmem %s4, %s363
        %p365 = scmp.lt.s32.totalorder %s20, 1
        %s366 = scalar_select %p365, %s20, 1
        %s367 = scalar_lea.vmem %s6, %s366
        %p368 = scmp.lt.s32.totalorder %s20, 1
        %s369 = scalar_select %p368, %s20, 1
        %s370 = scalar_lea.vmem %s7, %s369
        %p371 = scmp.lt.s32.totalorder %s20, 1
        %s372 = scalar_select %p371, %s20, 1
        %s373 = smul.addr %s372, 8
        %s374 = smul.addr %s373, 8
        %s375 = scalar_lea.vmem %s8, %s374
        %v376 = vld [vmem:[%s358] sm:$0xff]
        %v377 = vld [vmem:[%s358 + $0x8] sm:$0xff]
        %v378 = vld [vmem:[%s358 + $0x10] sm:$0xff]
        %v379 = vld [vmem:[%s358 + $0x18] sm:$0xff]
        %v380 = vld [vmem:[%s358 + $0x20] sm:$0xff]
        %v381 = vld [vmem:[%s358 + $0x28] sm:$0xff]
        %v382 = vld [vmem:[%s358 + $0x30] sm:$0xff]
        %v383 = vld [vmem:[%s358 + $0x38] sm:$0xff]
        %v384 = vld [vmem:[%s358 + $0x40] sm:$0xff]
        %v385 = vld [vmem:[%s358 + $0x48] sm:$0xff]
        %v386 = vld [vmem:[%s358 + $0x50] sm:$0xff]
        %v387 = vld [vmem:[%s358 + $0x58] sm:$0xff]
        %v388 = vld [vmem:[%s358 + $0x60] sm:$0xff]
        %v389 = vld [vmem:[%s358 + $0x68] sm:$0xff]
        %v390 = vld [vmem:[%s358 + $0x70] sm:$0xff]
        %v391 = vld [vmem:[%s358 + $0x78] sm:$0xff]
        %v392 = vld [vmem:[%s2] sm:$0xff]
        %v393 = vld [vmem:[%s2 + $0x8] sm:$0xff]
        %v394 = vld [vmem:[%s2 + $0x10] sm:$0xff]
        %v395 = vld [vmem:[%s2 + $0x18] sm:$0xff]
        %v396 = vld [vmem:[%s2 + $0x20] sm:$0xff]
        %v397 = vld [vmem:[%s2 + $0x28] sm:$0xff]
        %v398 = vld [vmem:[%s2 + $0x30] sm:$0xff]
        %v399 = vld [vmem:[%s2 + $0x38] sm:$0xff]
        %v400 = vld [vmem:[%s2 + $0x40] sm:$0xff]
        %v401 = vld [vmem:[%s2 + $0x48] sm:$0xff]
        %v402 = vld [vmem:[%s2 + $0x50] sm:$0xff]
        %v403 = vld [vmem:[%s2 + $0x58] sm:$0xff]
        %v404 = vld [vmem:[%s2 + $0x60] sm:$0xff]
        %v405 = vld [vmem:[%s2 + $0x68] sm:$0xff]
        %v406 = vld [vmem:[%s2 + $0x70] sm:$0xff]
        %v407 = vld [vmem:[%s2 + $0x78] sm:$0xff]
        %v408 = vld [vmem:[%s2 + $0x80] sm:$0xff]
        %v409 = vld [vmem:[%s2 + $0x88] sm:$0xff]
        %v410 = vld [vmem:[%s2 + $0x90] sm:$0xff]
        %v411 = vld [vmem:[%s2 + $0x98] sm:$0xff]
        %v412 = vld [vmem:[%s2 + $0xa0] sm:$0xff]
        %v413 = vld [vmem:[%s2 + $0xa8] sm:$0xff]
        %v414 = vld [vmem:[%s2 + $0xb0] sm:$0xff]
        %v415 = vld [vmem:[%s2 + $0xb8] sm:$0xff]
        %vm416 = vcmask 523264
        %v418 = vsel %vm416, %v377, 0
        %v421 = vsel %vm416, %v379, 0
        %v424 = vsel %vm416, %v381, 0
        %v427 = vsel %vm416, %v383, 0
        %v430 = vsel %vm416, %v385, 0
        %v433 = vsel %vm416, %v387, 0
        %v436 = vsel %vm416, %v389, 0
        %v439 = vsel %vm416, %v391, 0
        %441 = vmatprep.subr.mxu0 0.0
        %442 = vmatpush1.msra.mxu0 %v392
        %443 = vmatprep.subr.mxu0 0.0
        %444 = vmatpush1.msra.mxu0 %v393
        %445 = vmatprep.subr.mxu0 0.0
        %446 = vmatpush1.msra.mxu0 %v394
        %447 = vmatprep.subr.mxu0 0.0
        %448 = vmatpush1.msra.mxu0 %v395
        %449 = vmatprep.subr.mxu0 0.0
        %450 = vmatpush1.msra.mxu0 %v396
        %451 = vmatprep.subr.mxu0 0.0
        %452 = vmatpush1.msra.mxu0 %v397
        %453 = vmatprep.subr.mxu0 0.0
        %454 = vmatpush1.msra.mxu0 %v398
        %455 = vmatprep.subr.mxu0 0.0
        %456 = vmatpush1.msra.mxu0 %v399
        %457 = vmatprep.subr.mxu0 0.0
        %458 = vmatpush1.msra.mxu0 %v400
        %459 = vmatprep.subr.mxu0 0.0
        %460 = vmatpush1.msra.mxu0 %v401
        %461 = vmatprep.subr.mxu0 0.0
        %462 = vmatpush1.msra.mxu0 %v402
        %463 = vmatprep.subr.mxu0 0.0
        %464 = vmatpush1.msra.mxu0 %v403
        %465 = vmatprep.subr.mxu0 0.0
        %466 = vmatpush1.msra.mxu0 %v404
        %467 = vmatprep.subr.mxu0 0.0
        %468 = vmatpush1.msra.mxu0 %v405
        %469 = vmatprep.subr.mxu0 0.0
        %470 = vmatpush1.msra.mxu0 %v406
        %471 = vmatprep.subr.mxu0 0.0
        %472 = vmatpush1.msra.mxu0 %v407
        %473 = vmatprep.subr.mxu0 0.0
        %474 = vmatpush1.msra.mxu0 %v408
        %475 = vmatprep.subr.mxu0 0.0
        %476 = vmatpush1.msra.mxu0 %v409
        %477 = vmatprep.subr.mxu0 0.0
        %478 = vmatpush1.msra.mxu0 %v410
        %479 = vmatprep.subr.mxu0 0.0
        %480 = vmatpush1.msra.mxu0 %v411
        %481 = vmatprep.subr.mxu0 0.0
        %482 = vmatpush1.msra.mxu0 %v412
        %483 = vmatprep.subr.mxu0 0.0
        %484 = vmatpush1.msra.mxu0 %v413
        %485 = vmatprep.subr.mxu0 0.0
        %486 = vmatpush1.msra.mxu0 %v414
        %487 = vmatprep.subr.mxu0 0.0
        %488 = vmatpush1.msra.mxu0 %v415
        %489 = vmatprep.subr.mxu0 0.0
        %490 = vmatpush1.msra.mxu0 0.0
        %491 = vmatprep.subr.mxu0 0.0
        %492 = vmatpush1.msra.mxu0 0.0
        %493 = vmatprep.subr.mxu0 0.0
        %494 = vmatpush1.msra.mxu0 0.0
        %495 = vmatprep.subr.mxu0 0.0
        %496 = vmatpush1.msra.mxu0 0.0
        %497 = vmatprep.subr.mxu0 0.0
        %498 = vmatpush1.msra.mxu0 0.0
        %499 = vmatprep.subr.mxu0 0.0
        %500 = vmatpush1.msra.mxu0 0.0
        %501 = vmatprep.subr.mxu0 0.0
        %502 = vmatpush1.msra.mxu0 0.0
        %503 = vmatprep.subr.mxu0 0.0
        %504 = vmatpush1.msra.mxu0 0.0
        %505 = vmatprep.mubr.f32.mxu0 %v418
        %506 = vmatmul.mubr.f32.gmra.mrb[0].mxu0 %v376
        %v507 = vpop.f32.mrb[0].mxu0
        %v508 = vadd.f32 0.0, %v507
        %v509 = vpop.f32.mrb[0].mxu0
        %510 = vmatprep.mubr.f32.mxu0 %v421
        %511 = vmatmul.mubr.f32.gmra.mrb[0].mxu0 %v378
        %v512 = vpop.f32.mrb[0].mxu0
        %v513 = vadd.f32 0.0, %v512
        %v514 = vpop.f32.mrb[0].mxu0
        %515 = vmatprep.mubr.f32.mxu0 %v424
        %516 = vmatmul.mubr.f32.gmra.mrb[0].mxu0 %v380
        %v517 = vpop.f32.mrb[0].mxu0
        %v518 = vadd.f32 0.0, %v517
        %v519 = vpop.f32.mrb[0].mxu0
        %520 = vmatprep.mubr.f32.mxu0 %v427
        %521 = vmatmul.mubr.f32.gmra.mrb[0].mxu0 %v382
        %v522 = vpop.f32.mrb[0].mxu0
        %v523 = vadd.f32 0.0, %v522
        %v524 = vpop.f32.mrb[0].mxu0
        %525 = vmatprep.mubr.f32.mxu0 %v430
        %526 = vmatmul.mubr.f32.gmra.mrb[0].mxu0 %v384
        %v527 = vpop.f32.mrb[0].mxu0
        %v528 = vadd.f32 0.0, %v527
        %v529 = vpop.f32.mrb[0].mxu0
        %530 = vmatprep.mubr.f32.mxu0 %v433
        %531 = vmatmul.mubr.f32.gmra.mrb[0].mxu0 %v386
        %v532 = vpop.f32.mrb[0].mxu0
        %v533 = vadd.f32 0.0, %v532
        %v534 = vpop.f32.mrb[0].mxu0
        %535 = vmatprep.mubr.f32.mxu0 %v436
        %536 = vmatmul.mubr.f32.gmra.mrb[0].mxu0 %v388
        %v537 = vpop.f32.mrb[0].mxu0
        %v538 = vadd.f32 0.0, %v537
        %v539 = vpop.f32.mrb[0].mxu0
        %540 = vmatprep.mubr.f32.mxu0 %v439
        %541 = vmatmul.mubr.f32.gmra.mrb[0].mxu0 %v390
        %v542 = vpop.f32.mrb[0].mxu0
        %v543 = vadd.f32 0.0, %v542
        %v544 = vpop.f32.mrb[0].mxu0
        %545 = vdwg.mxu0
        %v546 = vld [vmem:[%s361] sm:$0x1]
        %v548 = vlaneseq
        %v549 = vshrl.u32 %v548, 7
        %v550 = vsub.s32 0, %v549
        %v551 = vrot.slane %v546, %v550
        %v553 = vmul.f32 %v508, %v551
        %v554 = vmul.f32 %v513, %v551
        %v555 = vmul.f32 %v518, %v551
        %v556 = vmul.f32 %v523, %v551
        %v557 = vmul.f32 %v528, %v551
        %v558 = vmul.f32 %v533, %v551
        %v559 = vmul.f32 %v538, %v551
        %v560 = vmul.f32 %v543, %v551
        %v561 = vld [vmem:[%s364] sm:$0x1]
        %v563 = vlaneseq
        %v564 = vshrl.u32 %v563, 7
        %v565 = vsub.s32 0, %v564
        %v566 = vrot.slane %v561, %v565
        %v568 = vadd.f32 %v553, %v566
        %v569 = vadd.f32 %v554, %v566
        %v570 = vadd.f32 %v555, %v566
        %v571 = vadd.f32 %v556, %v566
        %v572 = vadd.f32 %v557, %v566
        %v573 = vadd.f32 %v558, %v566
        %v574 = vadd.f32 %v559, %v566
        %v575 = vadd.f32 %v560, %v566
        %v576 = vmax.f32 %v568, 0.0
        %v577 = vmax.f32 %v569, 0.0
        %v578 = vmax.f32 %v570, 0.0
        %v579 = vmax.f32 %v571, 0.0
        %v580 = vmax.f32 %v572, 0.0
        %v581 = vmax.f32 %v573, 0.0
        %v582 = vmax.f32 %v574, 0.0
        %v583 = vmax.f32 %v575, 0.0
        %s584 = sld [smem:[#allocation2]]
        %v585 = vmin.f32 %v568, 0.0
        %v586 = vmin.f32 %v569, 0.0
        %v587 = vmin.f32 %v570, 0.0
        %v588 = vmin.f32 %v571, 0.0
        %v589 = vmin.f32 %v572, 0.0
        %v590 = vmin.f32 %v573, 0.0
        %v591 = vmin.f32 %v574, 0.0
        %v592 = vmin.f32 %v575, 0.0
        %v593 = vstv %s584
        %v594 = vmul.f32 %v593, %v585
        %v595 = vmul.f32 %v593, %v586
        %v596 = vmul.f32 %v593, %v587
        %v597 = vmul.f32 %v593, %v588
        %v598 = vmul.f32 %v593, %v589
        %v599 = vmul.f32 %v593, %v590
        %v600 = vmul.f32 %v593, %v591
        %v601 = vmul.f32 %v593, %v592
        %v602 = vadd.f32 %v576, %v594
        %v603 = vadd.f32 %v577, %v595
        %v604 = vadd.f32 %v578, %v596
        %v605 = vadd.f32 %v579, %v597
        %v606 = vadd.f32 %v580, %v598
        %v607 = vadd.f32 %v581, %v599
        %v608 = vadd.f32 %v582, %v600
        %v609 = vadd.f32 %v583, %v601
        %v610 = vld [vmem:[%s5] sm:$0xff]
        %v611 = vld [vmem:[%s5 + $0x8] sm:$0xff]
        %vm612 = vcmask 130048
        %v614 = vsel %vm612, %v602, 0
        %v617 = vsel %vm612, %v603, 0
        %v620 = vsel %vm612, %v604, 0
        %v623 = vsel %vm612, %v605, 0
        %v626 = vsel %vm612, %v606, 0
        %v629 = vsel %vm612, %v607, 0
        %v632 = vsel %vm612, %v608, 0
        %v635 = vsel %vm612, %v609, 0
        %637 = vmatprep.subr.mxu0 0.0
        %638 = vmatpush1.msra.mxu0 %v610
        %639 = vmatprep.subr.mxu0 0.0
        %640 = vmatpush1.msra.mxu0 %v611
        %641 = vmatprep.subr.mxu0 0.0
        %642 = vmatpush1.msra.mxu0 0.0
        %643 = vmatprep.subr.mxu0 0.0
        %644 = vmatpush1.msra.mxu0 0.0
        %645 = vmatprep.subr.mxu0 0.0
        %646 = vmatpush1.msra.mxu0 0.0
        %647 = vmatprep.subr.mxu0 0.0
        %648 = vmatpush1.msra.mxu0 0.0
        %649 = vmatprep.subr.mxu0 0.0
        %650 = vmatpush1.msra.mxu0 0.0
        %651 = vmatprep.subr.mxu0 0.0
        %652 = vmatpush1.msra.mxu0 0.0
        %653 = vmatprep.subr.mxu0 0.0
        %654 = vmatpush1.msra.mxu0 0.0
        %655 = vmatprep.subr.mxu0 0.0
        %656 = vmatpush1.msra.mxu0 0.0
        %657 = vmatprep.subr.mxu0 0.0
        %658 = vmatpush1.msra.mxu0 0.0
        %659 = vmatprep.subr.mxu0 0.0
        %660 = vmatpush1.msra.mxu0 0.0
        %661 = vmatprep.subr.mxu0 0.0
        %662 = vmatpush1.msra.mxu0 0.0
        %663 = vmatprep.subr.mxu0 0.0
        %664 = vmatpush1.msra.mxu0 0.0
        %665 = vmatprep.subr.mxu0 0.0
        %666 = vmatpush1.msra.mxu0 0.0
        %667 = vmatprep.subr.mxu0 0.0
        %668 = vmatpush1.msra.mxu0 0.0
        %669 = vmatprep.subr.mxu0 0.0
        %670 = vmatpush1.msra.mxu0 0.0
        %671 = vmatprep.subr.mxu0 0.0
        %672 = vmatpush1.msra.mxu0 0.0
        %673 = vmatprep.subr.mxu0 0.0
        %674 = vmatpush1.msra.mxu0 0.0
        %675 = vmatprep.subr.mxu0 0.0
        %676 = vmatpush1.msra.mxu0 0.0
        %677 = vmatprep.subr.mxu0 0.0
        %678 = vmatpush1.msra.mxu0 0.0
        %679 = vmatprep.subr.mxu0 0.0
        %680 = vmatpush1.msra.mxu0 0.0
        %681 = vmatprep.subr.mxu0 0.0
        %682 = vmatpush1.msra.mxu0 0.0
        %683 = vmatprep.subr.mxu0 0.0
        %684 = vmatpush1.msra.mxu0 0.0
        %685 = vmatprep.subr.mxu0 0.0
        %686 = vmatpush1.msra.mxu0 0.0
        %687 = vmatprep.subr.mxu0 0.0
        %688 = vmatpush1.msra.mxu0 0.0
        %689 = vmatprep.subr.mxu0 0.0
        %690 = vmatpush1.msra.mxu0 0.0
        %691 = vmatprep.subr.mxu0 0.0
        %692 = vmatpush1.msra.mxu0 0.0
        %693 = vmatprep.subr.mxu0 0.0
        %694 = vmatpush1.msra.mxu0 0.0
        %695 = vmatprep.subr.mxu0 0.0
        %696 = vmatpush1.msra.mxu0 0.0
        %697 = vmatprep.subr.mxu0 0.0
        %698 = vmatpush1.msra.mxu0 0.0
        %699 = vmatprep.subr.mxu0 0.0
        %700 = vmatpush1.msra.mxu0 0.0
        %701 = vmatprep.mubr.f32.mxu0 0.0
        %702 = vmatmul.mubr.f32.gmra.mrb[0].mxu0 %v614
        %v703 = vpop.f32.mrb[0].mxu0
        %v704 = vadd.f32 0.0, %v703
        %v705 = vpop.f32.mrb[0].mxu0
        %706 = vmatprep.mubr.f32.mxu0 0.0
        %707 = vmatmul.mubr.f32.gmra.mrb[0].mxu0 %v617
        %v708 = vpop.f32.mrb[0].mxu0
        %v709 = vadd.f32 0.0, %v708
        %v710 = vpop.f32.mrb[0].mxu0
        %711 = vmatprep.mubr.f32.mxu0 0.0
        %712 = vmatmul.mubr.f32.gmra.mrb[0].mxu0 %v620
        %v713 = vpop.f32.mrb[0].mxu0
        %v714 = vadd.f32 0.0, %v713
        %v715 = vpop.f32.mrb[0].mxu0
        %716 = vmatprep.mubr.f32.mxu0 0.0
        %717 = vmatmul.mubr.f32.gmra.mrb[0].mxu0 %v623
        %v718 = vpop.f32.mrb[0].mxu0
        %v719 = vadd.f32 0.0, %v718
        %v720 = vpop.f32.mrb[0].mxu0
        %721 = vmatprep.mubr.f32.mxu0 0.0
        %722 = vmatmul.mubr.f32.gmra.mrb[0].mxu0 %v626
        %v723 = vpop.f32.mrb[0].mxu0
        %v724 = vadd.f32 0.0, %v723
        %v725 = vpop.f32.mrb[0].mxu0
        %726 = vmatprep.mubr.f32.mxu0 0.0
        %727 = vmatmul.mubr.f32.gmra.mrb[0].mxu0 %v629
        %v728 = vpop.f32.mrb[0].mxu0
        %v729 = vadd.f32 0.0, %v728
        %v730 = vpop.f32.mrb[0].mxu0
        %731 = vmatprep.mubr.f32.mxu0 0.0
        %732 = vmatmul.mubr.f32.gmra.mrb[0].mxu0 %v632
        %v733 = vpop.f32.mrb[0].mxu0
        %v734 = vadd.f32 0.0, %v733
        %v735 = vpop.f32.mrb[0].mxu0
        %736 = vmatprep.mubr.f32.mxu0 0.0
        %737 = vmatmul.mubr.f32.gmra.mrb[0].mxu0 %v635
        %v738 = vpop.f32.mrb[0].mxu0
        %v739 = vadd.f32 0.0, %v738
        %v740 = vpop.f32.mrb[0].mxu0
        %741 = vdwg.mxu0
        %v742 = vld [vmem:[%s367] sm:$0x1]
        %v744 = vlaneseq
        %v745 = vshrl.u32 %v744, 7
        %v746 = vsub.s32 0, %v745
        %v747 = vrot.slane %v742, %v746
        %v749 = vmul.f32 %v704, %v747
        %v750 = vmul.f32 %v709, %v747
        %v751 = vmul.f32 %v714, %v747
        %v752 = vmul.f32 %v719, %v747
        %v753 = vmul.f32 %v724, %v747
        %v754 = vmul.f32 %v729, %v747
        %v755 = vmul.f32 %v734, %v747
        %v756 = vmul.f32 %v739, %v747
        %v757 = vld [vmem:[%s370] sm:$0x1]
        %v759 = vlaneseq
        %v760 = vshrl.u32 %v759, 7
        %v761 = vsub.s32 0, %v760
        %v762 = vrot.slane %v757, %v761
        %v764 = vadd.f32 %v749, %v762
        %v765 = vadd.f32 %v750, %v762
        %v766 = vadd.f32 %v751, %v762
        %v767 = vadd.f32 %v752, %v762
        %v768 = vadd.f32 %v753, %v762
        %v769 = vadd.f32 %v754, %v762
        %v770 = vadd.f32 %v755, %v762
        %v771 = vadd.f32 %v756, %v762
        %v772 = vmax.f32 %v764, 0.0
        %v773 = vmax.f32 %v765, 0.0
        %v774 = vmax.f32 %v766, 0.0
        %v775 = vmax.f32 %v767, 0.0
        %v776 = vmax.f32 %v768, 0.0
        %v777 = vmax.f32 %v769, 0.0
        %v778 = vmax.f32 %v770, 0.0
        %v779 = vmax.f32 %v771, 0.0
        %s780 = sld [smem:[#allocation2 + $0x1]]
        %v781 = vmin.f32 %v764, 0.0
        %v782 = vmin.f32 %v765, 0.0
        %v783 = vmin.f32 %v766, 0.0
        %v784 = vmin.f32 %v767, 0.0
        %v785 = vmin.f32 %v768, 0.0
        %v786 = vmin.f32 %v769, 0.0
        %v787 = vmin.f32 %v770, 0.0
        %v788 = vmin.f32 %v771, 0.0
        %v789 = vstv %s780
        %v790 = vmul.f32 %v789, %v781
        %v791 = vmul.f32 %v789, %v782
        %v792 = vmul.f32 %v789, %v783
        %v793 = vmul.f32 %v789, %v784
        %v794 = vmul.f32 %v789, %v785
        %v795 = vmul.f32 %v789, %v786
        %v796 = vmul.f32 %v789, %v787
        %v797 = vmul.f32 %v789, %v788
        %v798 = vadd.f32 %v772, %v790
        %v799 = vadd.f32 %v773, %v791
        %v800 = vadd.f32 %v774, %v792
        %v801 = vadd.f32 %v775, %v793
        %v802 = vadd.f32 %v776, %v794
        %v803 = vadd.f32 %v777, %v795
        %v804 = vadd.f32 %v778, %v796
        %v805 = vadd.f32 %v779, %v797
        %vm806 = vcmask 64512
        %807 = vst.msk [vmem:[%s375] sm:$0xff] %vm806, %v798
        %808 = vst.msk [vmem:[%s375 + $0x8] sm:$0xff] %vm806, %v799
        %809 = vst.msk [vmem:[%s375 + $0x10] sm:$0xff] %vm806, %v800
        %810 = vst.msk [vmem:[%s375 + $0x18] sm:$0xff] %vm806, %v801
        %811 = vst.msk [vmem:[%s375 + $0x20] sm:$0xff] %vm806, %v802
        %812 = vst.msk [vmem:[%s375 + $0x28] sm:$0xff] %vm806, %v803
        %813 = vst.msk [vmem:[%s375 + $0x30] sm:$0xff] %vm806, %v804
        %814 = vst.msk [vmem:[%s375 + $0x38] sm:$0xff] %vm806, %v805
        %p815 = scmp.lt.s32.totalorder %s20, 1
        %s816 = scalar_select %p815, %s20, 1
        %s817 = smul.addr %s816, 8
        %s818 = smul.addr %s817, 8
        %s819 = scalar_lea.vmem %s8, %s818
        // Predicated region
        $region57: #{forward.17} parent=51 // pred_check
          %p820 = pneg %p231
        $region58: #{forward.17} parent=51 // pred_check_branch
          %822 = sbr.rel (%p820) target = $region60
        $region59: #{forward.17} parent=51 // pred_region
          _
        $region60: #{forward.17} parent=51 // pred_fallthru
          _
      $region52: #{forward.17} parent=5 // pred_fallthru
        _
      %p823 = scmp.le.s32.totalorder 2, %s15
      // Predicated region
      $region61: #{forward.17} parent=5 // pred_check
        %p824 = pneg %p823
      $region62: #{forward.17} parent=5 // pred_check_branch
        %826 = sbr.rel (%p824) target = $region64
      $region63: #{forward.17} parent=5 // pred_region
        %s827 = ssub.s32 %s15, 2
        // Predicated region
        $region65: #{forward.17} parent=63 // pred_check
          %p828 = pneg %p237
        $region66: #{forward.17} parent=63 // pred_check_branch
          %830 = sbr.rel (%p828) target = $region68
        $region67: #{forward.17} parent=63 // pred_region
          %p831 = scmp.lt.s32.totalorder %s21, 1
          %s832 = scalar_select %p831, %s21, 1
          %s833 = smul.addr %s832, 8
          %s834 = smul.addr %s833, 8
          %s835 = scalar_lea.vmem %s8, %s834
        $region68: #{forward.17} parent=63 // pred_fallthru
          _
      $region64: #{forward.17} parent=5 // pred_fallthru
        _
    $region6: #{forward.17} parent=1 // loop_footer
      %s19 = sadd.s32 1, %s15
    $region7: #{forward.17} parent=1 // loop_footer_branch
      %14 = sbr.rel target = $region3
    $region8: #{forward.17} parent=1 // loop_exit
      _
    %836 = vsyncpa [#allocation3], 1
    %s837 = scalar_lea.sflag [#allocation3], 1
    %838 = vsyncpa %s837, 1

// kernel: forward.18
$region0: #{forward.18}
  #allocation0 [shape = 'u32[]', space=smem, size = 0x4, offset = 0x4, fixed_abs, tag = 'smem constant byte address 0x4 - core index']
  #allocation1 [shape = 'u32[144,128]{1,0:T(1,128)}', space=vmem, size = 0x12000, scoped, tag = 'internal scratch']
  %s0 = inlined_call_operand.vmem [shape: f32[2], index: 0, kind: input, shape index: {}]
  %s1 = inlined_call_operand.vmem [shape: f32[2,256,64], index: 1, kind: input, shape index: {}]
  %s2 = inlined_call_operand.vmem [shape: f32[64,8], index: 2, kind: input, shape index: {}]
  %s3 = inlined_call_operand.vmem [shape: f32[2,1,8], index: 3, kind: input, shape index: {}]
  %s4 = inlined_call_operand.vmem [shape: f32[2,1,8], index: 4, kind: input, shape index: {}]
  %s5 = inlined_call_operand.vmem [shape: f32[8,4], index: 5, kind: input, shape index: {}]
  %s6 = inlined_call_operand.vmem [shape: f32[2,1,4], index: 6, kind: input, shape index: {}]
  %s7 = inlined_call_operand.vmem [shape: f32[2,1,4], index: 7, kind: input, shape index: {}]
  %s8 = inlined_call_operand.vmem [shape: f32[2,256,4], index: 8, kind: output, shape index: {}]
  %s9 = sld [smem:[#allocation0]]
  $region69: #{forward.18} parent=0
    _
  %s11 = ssub.s32 1, %s9
  %s12 = scalar_select 0, %s11, %s9
  $region1: #{forward.18} parent=0
    #allocation2 [shape = 'u8[512]{0}', space=smem, size = 0x200, scoped, tag = 'input window, operand 0, single buffered']
    #allocation3 [shape = 's32[2]{0}', space=sflag, size = 0x8, scoped, tag = 'scoped memory for forward.18']
    %13 = vsyncpa [#allocation3], 0
    loop: start=0, step=1, limit=4
    $region2: #{forward.18} parent=1 // loop_pre_header
      _
    $region3: #{forward.18} parent=1 // loop_header
      %s15 = sphi 0, %s19
      %p16 = scmp.ge.s32.totalorder %s15, 4
      %s23 = sphi 0, %s23
      %s25 = sphi 0, %s23
      %s26 = sphi 0, %s25
      %s40 = sphi 0, %s26
      %s46 = sphi 0, %s48
      %s49 = sphi 0, %s46
      %s50 = sphi 0, %s49
      %s66 = sphi 0, %s50
      %s70 = sphi 0, %s70
      %s72 = sphi 0, %s70
      %s73 = sphi 0, %s72
      %s87 = sphi 0, %s73
      %s93 = sphi 0, %s95
      %s96 = sphi 0, %s93
      %s97 = sphi 0, %s96
      %s113 = sphi 0, %s97
      %s119 = sphi 0, %s121
      %s122 = sphi 0, %s119
      %s123 = sphi 0, %s122
      %s139 = sphi 0, %s123
      %s143 = sphi 0, %s143
      %s145 = sphi 0, %s143
      %s146 = sphi 0, %s145
      %s160 = sphi 0, %s146
      %s166 = sphi 0, %s168
      %s169 = sphi 0, %s166
      %s170 = sphi 0, %s169
      %s186 = sphi 0, %s170
      %s192 = sphi 0, %s194
      %s195 = sphi 0, %s192
      %s196 = sphi 0, %s195
      %s212 = sphi 0, %s196
      %s218 = sphi 0, %s220
      %s221 = sphi 0, %s218
      %s222 = sphi 0, %s221
      %s238 = sphi 0, %s222
    $region4: #{forward.18} parent=1 // loop_header_branch
      %18 = sbr.rel (%p16) target = $region8
    $region5: #{forward.18} parent=1 // loop_body
      %s20 = ssub.s32 %s15, 1
      %s21 = ssub.s32 %s15, 2
      %s22 = sadd.s32 %s15, 1
      %s24 = sadd.s32 %s23, 1
      %p27 = scmp.eq.s32.totalorder %s15, 1
      %p28 = scmp.ne.s32.totalorder %s23, %s25
      %p29 = scmp.eq.s32.totalorder %s15, 0
      %p30 = por %p28, %p29
      %p31 = scmp.ne.s32.totalorder %s23, %s25
      %p32 = scmp.eq.s32.totalorder %s20, 1
      %p33 = por %p31, %p32
      %p34 = scmp.ne.s32.totalorder %s25, %s26
      %p35 = scmp.eq.s32.totalorder %s20, 0
      %p36 = por %p34, %p35
      %p37 = scmp.ne.s32.totalorder %s25, %s26
      %p38 = scmp.eq.s32.totalorder %s21, 1
      %p39 = por %p37, %p38
      %p41 = scmp.ne.s32.totalorder %s26, %s40
      %p42 = scmp.eq.s32.totalorder %s21, 0
      %p43 = por %p41, %p42
      %s44 = ssub.s32 %s15, %s22
      %p45 = scmp.eq.s32.totalorder %s44, 0
      %s47 = sadd.s32 %s46, 1
      %s48 = scalar_select %p45, %s46, %s47
      %p51 = pneg %p45
      %p52 = scmp.eq.s32.totalorder %s15, 1
      %p53 = por %p51, %p52
      %p54 = scmp.ne.s32.totalorder %s46, %s49
      %p55 = scmp.eq.s32.totalorder %s15, 0
      %p56 = por %p54, %p55
      %p57 = scmp.ne.s32.totalorder %s46, %s49
      %p58 = scmp.eq.s32.totalorder %s20, 1
      %p59 = por %p57, %p58
      %p60 = scmp.ne.s32.totalorder %s49, %s50
      %p61 = scmp.eq.s32.totalorder %s20, 0
      %p62 = por %p60, %p61
      %p63 = scmp.ne.s32.totalorder %s49, %s50
      %p64 = scmp.eq.s32.totalorder %s21, 1
      %p65 = por %p63, %p64
      %p67 = scmp.ne.s32.totalorder %s50, %s66
      %p68 = scmp.eq.s32.totalorder %s21, 0
      %p69 = por %p67, %p68
      %s71 = sadd.s32 %s70, 1
      %p74 = scmp.eq.s32.totalorder %s15, 1
      %p75 = scmp.ne.s32.totalorder %s70, %s72
      %p76 = scmp.eq.s32.totalorder %s15, 0
      %p77 = por %p75, %p76
      %p78 = scmp.ne.s32.totalorder %s70, %s72
      %p79 = scmp.eq.s32.totalorder %s20, 1
      %p80 = por %p78, %p79
      %p81 = scmp.ne.s32.totalorder %s72, %s73
      %p82 = scmp.eq.s32.totalorder %s20, 0
      %p83 = por %p81, %p82
      %p84 = scmp.ne.s32.totalorder %s72, %s73
      %p85 = scmp.eq.s32.totalorder %s21, 1
      %p86 = por %p84, %p85
      %p88 = scmp.ne.s32.totalorder %s73, %s87
      %p89 = scmp.eq.s32.totalorder %s21, 0
      %p90 = por %p88, %p89
      %s91 = ssub.s32 %s15, %s22
      %p92 = scmp.eq.s32.totalorder %s91, 0
      %s94 = sadd.s32 %s93, 1
      %s95 = scalar_select %p92, %s93, %s94
      %p98 = pneg %p92
      %p99 = scmp.eq.s32.totalorder %s15, 1
      %p100 = por %p98, %p99
      %p101 = scmp.ne.s32.totalorder %s93, %s96
      %p102 = scmp.eq.s32.totalorder %s15, 0
      %p103 = por %p101, %p102
      %p104 = scmp.ne.s32.totalorder %s93, %s96
      %p105 = scmp.eq.s32.totalorder %s20, 1
      %p106 = por %p104, %p105
      %p107 = scmp.ne.s32.totalorder %s96, %s97
      %p108 = scmp.eq.s32.totalorder %s20, 0
      %p109 = por %p107, %p108
      %p110 = scmp.ne.s32.totalorder %s96, %s97
      %p111 = scmp.eq.s32.totalorder %s21, 1
      %p112 = por %p110, %p111
      %p114 = scmp.ne.s32.totalorder %s97, %s113
      %p115 = scmp.eq.s32.totalorder %s21, 0
      %p116 = por %p114, %p115
      %s117 = ssub.s32 %s15, %s22
      %p118 = scmp.eq.s32.totalorder %s117, 0
      %s120 = sadd.s32 %s119, 1
      %s121 = scalar_select %p118, %s119, %s120
      %p124 = pneg %p118
      %p125 = scmp.eq.s32.totalorder %s15, 1
      %p126 = por %p124, %p125
      %p127 = scmp.ne.s32.totalorder %s119, %s122
      %p128 = scmp.eq.s32.totalorder %s15, 0
      %p129 = por %p127, %p128
      %p130 = scmp.ne.s32.totalorder %s119, %s122
      %p131 = scmp.eq.s32.totalorder %s20, 1
      %p132 = por %p130, %p131
      %p133 = scmp.ne.s32.totalorder %s122, %s123
      %p134 = scmp.eq.s32.totalorder %s20, 0
      %p135 = por %p133, %p134
      %p136 = scmp.ne.s32.totalorder %s122, %s123
      %p137 = scmp.eq.s32.totalorder %s21, 1
      %p138 = por %p136, %p137
      %p140 = scmp.ne.s32.totalorder %s123, %s139
      %p141 = scmp.eq.s32.totalorder %s21, 0
      %p142 = por %p140, %p141
      %s144 = sadd.s32 %s143, 1
      %p147 = scmp.eq.s32.totalorder %s15, 1
      %p148 = scmp.ne.s32.totalorder %s143, %s145
      %p149 = scmp.eq.s32.totalorder %s15, 0
      %p150 = por %p148, %p149
      %p151 = scmp.ne.s32.totalorder %s143, %s145
      %p152 = scmp.eq.s32.totalorder %s20, 1
      %p153 = por %p151, %p152
      %p154 = scmp.ne.s32.totalorder %s145, %s146
      %p155 = scmp.eq.s32.totalorder %s20, 0
      %p156 = por %p154, %p155
      %p157 = scmp.ne.s32.totalorder %s145, %s146
      %p158 = scmp.eq.s32.totalorder %s21, 1
      %p159 = por %p157, %p158
      %p161 = scmp.ne.s32.totalorder %s146, %s160
      %p162 = scmp.eq.s32.totalorder %s21, 0
      %p163 = por %p161, %p162
      %s164 = ssub.s32 %s15, %s22
      %p165 = scmp.eq.s32.totalorder %s164, 0
      %s167 = sadd.s32 %s166, 1
      %s168 = scalar_select %p165, %s166, %s167
      %p171 = pneg %p165
      %p172 = scmp.eq.s32.totalorder %s15, 1
      %p173 = por %p171, %p172
      %p174 = scmp.ne.s32.totalorder %s166, %s169
      %p175 = scmp.eq.s32.totalorder %s15, 0
      %p176 = por %p174, %p175
      %p177 = scmp.ne.s32.totalorder %s166, %s169
      %p178 = scmp.eq.s32.totalorder %s20, 1
      %p179 = por %p177, %p178
      %p180 = scmp.ne.s32.totalorder %s169, %s170
      %p181 = scmp.eq.s32.totalorder %s20, 0
      %p182 = por %p180, %p181
      %p183 = scmp.ne.s32.totalorder %s169, %s170
      %p184 = scmp.eq.s32.totalorder %s21, 1
      %p185 = por %p183, %p184
      %p187 = scmp.ne.s32.totalorder %s170, %s186
      %p188 = scmp.eq.s32.totalorder %s21, 0
      %p189 = por %p187, %p188
      %s190 = ssub.s32 %s15, %s22
      %p191 = scmp.eq.s32.totalorder %s190, 0
      %s193 = sadd.s32 %s192, 1
      %s194 = scalar_select %p191, %s192, %s193
      %p197 = pneg %p191
      %p198 = scmp.eq.s32.totalorder %s15, 1
      %p199 = por %p197, %p198
      %p200 = scmp.ne.s32.totalorder %s192, %s195
      %p201 = scmp.eq.s32.totalorder %s15, 0
      %p202 = por %p200, %p201
      %p203 = scmp.ne.s32.totalorder %s192, %s195
      %p204 = scmp.eq.s32.totalorder %s20, 1
      %p205 = por %p203, %p204
      %p206 = scmp.ne.s32.totalorder %s195, %s196
      %p207 = scmp.eq.s32.totalorder %s20, 0
      %p208 = por %p206, %p207
      %p209 = scmp.ne.s32.totalorder %s195, %s196
      %p210 = scmp.eq.s32.totalorder %s21, 1
      %p211 = por %p209, %p210
      %p213 = scmp.ne.s32.totalorder %s196, %s212
      %p214 = scmp.eq.s32.totalorder %s21, 0
      %p215 = por %p213, %p214
      %s216 = ssub.s32 %s15, %s22
      %p217 = scmp.eq.s32.totalorder %s216, 0
      %s219 = sadd.s32 %s218, 1
      %s220 = scalar_select %p217, %s218, %s219
      %p223 = pneg %p217
      %p224 = scmp.eq.s32.totalorder %s15, 1
      %p225 = por %p223, %p224
      %p226 = scmp.ne.s32.totalorder %s218, %s221
      %p227 = scmp.eq.s32.totalorder %s15, 0
      %p228 = por %p226, %p227
      %p229 = scmp.ne.s32.totalorder %s218, %s221
      %p230 = scmp.eq.s32.totalorder %s20, 1
      %p231 = por %p229, %p230
      %p232 = scmp.ne.s32.totalorder %s221, %s222
      %p233 = scmp.eq.s32.totalorder %s20, 0
      %p234 = por %p232, %p233
      %p235 = scmp.ne.s32.totalorder %s221, %s222
      %p236 = scmp.eq.s32.totalorder %s21, 1
      %p237 = por %p235, %p236
      %p239 = scmp.ne.s32.totalorder %s222, %s238
      %p240 = scmp.eq.s32.totalorder %s21, 0
      %p241 = por %p239, %p240
      %p242 = scmp.le.s32.totalorder 1, %s15
      %p243 = scmp.lt.s32.totalorder %s15, 3
      %p244 = pnand %p242, %p243
      %p245 = pneg %p244
      // Predicated region
      $region9: #{forward.18} parent=5 // pred_check
        _
      $region10: #{forward.18} parent=5 // pred_check_branch
        %247 = sbr.rel (%p244) target = $region12
      $region11: #{forward.18} parent=5 // pred_region
        %s248 = ssub.s32 %s15, 1
        // Predicated region
        $region13: #{forward.18} parent=11 // pred_check
          %p249 = pneg %p36
        $region14: #{forward.18} parent=11 // pred_check_branch
          %251 = sbr.rel (%p249) target = $region16
        $region15: #{forward.18} parent=11 // pred_region
          %s253 = ssub.s32 16, 16
          %254 = vsyncadd [#allocation3], %s253
          %s256 = sshll.u32 %s0, 4
          %s257 = int_to_ptr.vmem [resolvable:$true] %s256
          %259 = dma.vmem_to_smem %s257, 16, [#allocation2], [#allocation3]
        $region16: #{forward.18} parent=11 // pred_fallthru
          _
        // Predicated region
        $region17: #{forward.18} parent=11 // pred_check
          %p260 = pneg %p83
        $region18: #{forward.18} parent=11 // pred_check_branch
          %262 = sbr.rel (%p260) target = $region20
        $region19: #{forward.18} parent=11 // pred_region
          _
        $region20: #{forward.18} parent=11 // pred_fallthru
          _
        // Predicated region
        $region21: #{forward.18} parent=11 // pred_check
          %p263 = pneg %p156
        $region22: #{forward.18} parent=11 // pred_check_branch
          %265 = sbr.rel (%p263) target = $region24
        $region23: #{forward.18} parent=11 // pred_region
          _
        $region24: #{forward.18} parent=11 // pred_fallthru
          _
      $region12: #{forward.18} parent=5 // pred_fallthru
        _
      %p266 = scmp.lt.s32.totalorder %s15, 2
      // Predicated region
      $region25: #{forward.18} parent=5 // pred_check
        %p267 = pneg %p266
      $region26: #{forward.18} parent=5 // pred_check_branch
        %269 = sbr.rel (%p267) target = $region28
      $region27: #{forward.18} parent=5 // pred_region
        // Predicated region
        $region29: #{forward.18} parent=27 // pred_check
          %p270 = pneg %p56
        $region30: #{forward.18} parent=27 // pred_check_branch
          %272 = sbr.rel (%p270) target = $region32
        $region31: #{forward.18} parent=27 // pred_region
          %p273 = scmp.lt.s32.totalorder %s15, 1
          %s274 = scalar_select %p273, %s15, 1
          %s275 = smul.addr %s274, 32
          %s276 = smul.addr %s275, 8
          %s277 = scalar_lea.vmem %s1, %s276
        $region32: #{forward.18} parent=27 // pred_fallthru
          _
        // Predicated region
        $region33: #{forward.18} parent=27 // pred_check
          %p278 = pneg %p103
        $region34: #{forward.18} parent=27 // pred_check_branch
          %280 = sbr.rel (%p278) target = $region36
        $region35: #{forward.18} parent=27 // pred_region
          %p281 = scmp.lt.s32.totalorder %s15, 1
          %s282 = scalar_select %p281, %s15, 1
          %s283 = scalar_lea.vmem %s3, %s282
        $region36: #{forward.18} parent=27 // pred_fallthru
          _
        // Predicated region
        $region37: #{forward.18} parent=27 // pred_check
          %p284 = pneg %p129
        $region38: #{forward.18} parent=27 // pred_check_branch
          %286 = sbr.rel (%p284) target = $region40
        $region39: #{forward.18} parent=27 // pred_region
          %p287 = scmp.lt.s32.totalorder %s15, 1
          %s288 = scalar_select %p287, %s15, 1
          %s289 = scalar_lea.vmem %s4, %s288
        $region40: #{forward.18} parent=27 // pred_fallthru
          _
        // Predicated region
        $region41: #{forward.18} parent=27 // pred_check
          %p290 = pneg %p176
        $region42: #{forward.18} parent=27 // pred_check_branch
          %292 = sbr.rel (%p290) target = $region44
        $region43: #{forward.18} parent=27 // pred_region
          %p293 = scmp.lt.s32.totalorder %s15, 1
          %s294 = scalar_select %p293, %s15, 1
          %s295 = scalar_lea.vmem %s6, %s294
        $region44: #{forward.18} parent=27 // pred_fallthru
          _
        // Predicated region
        $region45: #{forward.18} parent=27 // pred_check
          %p296 = pneg %p202
        $region46: #{forward.18} parent=27 // pred_check_branch
          %298 = sbr.rel (%p296) target = $region48
        $region47: #{forward.18} parent=27 // pred_region
          %p299 = scmp.lt.s32.totalorder %s15, 1
          %s300 = scalar_select %p299, %s15, 1
          %s301 = scalar_lea.vmem %s7, %s300
        $region48: #{forward.18} parent=27 // pred_fallthru
          _
      $region28: #{forward.18} parent=5 // pred_fallthru
        _
      %p302 = scmp.le.s32.totalorder 1, %s15
      %p303 = scmp.lt.s32.totalorder %s15, 3
      %p304 = pnand %p302, %p303
      %p305 = pneg %p304
      // Predicated region
      $region49: #{forward.18} parent=5 // pred_check
        _
      $region50: #{forward.18} parent=5 // pred_check_branch
        %307 = sbr.rel (%p304) target = $region52
      $region51: #{forward.18} parent=5 // pred_region
        %s308 = ssub.s32 %s15, 1
        // Predicated region
        $region53: #{forward.18} parent=51 // pred_check
          %p309 = pneg %p36
        $region54: #{forward.18} parent=51 // pred_check_branch
          %311 = sbr.rel (%p309) target = $region56
        $region55: #{forward.18} parent=51 // pred_region
          %312 = dma.done [#allocation3], 16
        $region56: #{forward.18} parent=51 // pred_fallthru
          _
        %313 = sfence
        %p314 = pneg %p36
        %p315 = pneg %p33
        %p316 = scmp.lt.s32.totalorder %s20, 1
        %s317 = scalar_select %p316, %s20, 1
        %s318 = smul.addr %s317, 32
        %s319 = smul.addr %s318, 8
        %s320 = scalar_lea.vmem %s1, %s319
        %p321 = pneg %p62
        %p322 = pneg %p59
        %p323 = pneg %p83
        %p324 = pneg %p80
        %p325 = scmp.lt.s32.totalorder %s20, 1
        %s326 = scalar_select %p325, %s20, 1
        %s327 = scalar_lea.vmem %s3, %s326
        %p328 = pneg %p109
        %p329 = pneg %p106
        %p330 = scmp.lt.s32.totalorder %s20, 1
        %s331 = scalar_select %p330, %s20, 1
        %s332 = scalar_lea.vmem %s4, %s331
        %p333 = pneg %p135
        %p334 = pneg %p132
        %p335 = pneg %p156
        %p336 = pneg %p153
        %p337 = scmp.lt.s32.totalorder %s20, 1
        %s338 = scalar_select %p337, %s20, 1
        %s339 = scalar_lea.vmem %s6, %s338
        %p340 = pneg %p182
        %p341 = pneg %p179
        %p342 = scmp.lt.s32.totalorder %s20, 1
        %s343 = scalar_select %p342, %s20, 1
        %s344 = scalar_lea.vmem %s7, %s343
        %p345 = pneg %p208
        %p346 = pneg %p205
        %p347 = pneg %p234
        %p348 = pneg %p231
        %p349 = scmp.lt.s32.totalorder %s20, 1
        %s350 = scalar_select %p349, %s20, 1
        %s351 = smul.addr %s350, 32
        %s352 = smul.addr %s351, 8
        %s353 = scalar_lea.vmem %s8, %s352
        %p354 = scmp.lt.s32.totalorder %s20, 1
        %s355 = scalar_select %p354, %s20, 1
        %s356 = smul.addr %s355, 32
        %s357 = smul.addr %s356, 8
        %s358 = scalar_lea.vmem %s1, %s357
        %p359 = scmp.lt.s32.totalorder %s20, 1
        %s360 = scalar_select %p359, %s20, 1
        %s361 = scalar_lea.vmem %s3, %s360
        %p362 = scmp.lt.s32.totalorder %s20, 1
        %s363 = scalar_select %p362, %s20, 1
        %s364 = scalar_lea.vmem %s4, %s363
        %p365 = scmp.lt.s32.totalorder %s20, 1
        %s366 = scalar_select %p365, %s20, 1
        %s367 = scalar_lea.vmem %s6, %s366
        %p368 = scmp.lt.s32.totalorder %s20, 1
        %s369 = scalar_select %p368, %s20, 1
        %s370 = scalar_lea.vmem %s7, %s369
        %p371 = scmp.lt.s32.totalorder %s20, 1
        %s372 = scalar_select %p371, %s20, 1
        %s373 = smul.addr %s372, 32
        %s374 = smul.addr %s373, 8
        %s375 = scalar_lea.vmem %s8, %s374
        %v376 = vld [vmem:[%s358] sm:$0xff]
        %v377 = vld [vmem:[%s358 + $0x8] sm:$0xff]
        %v378 = vld [vmem:[%s358 + $0x10] sm:$0xff]
        %v379 = vld [vmem:[%s358 + $0x18] sm:$0xff]
        %v380 = vld [vmem:[%s358 + $0x20] sm:$0xff]
        %v381 = vld [vmem:[%s358 + $0x28] sm:$0xff]
        %v382 = vld [vmem:[%s358 + $0x30] sm:$0xff]
        %v383 = vld [vmem:[%s358 + $0x38] sm:$0xff]
        %v384 = vld [vmem:[%s358 + $0x40] sm:$0xff]
        %v385 = vld [vmem:[%s358 + $0x48] sm:$0xff]
        %v386 = vld [vmem:[%s358 + $0x50] sm:$0xff]
        %v387 = vld [vmem:[%s358 + $0x58] sm:$0xff]
        %v388 = vld [vmem:[%s358 + $0x60] sm:$0xff]
        %v389 = vld [vmem:[%s358 + $0x68] sm:$0xff]
        %v390 = vld [vmem:[%s358 + $0x70] sm:$0xff]
        %v391 = vld [vmem:[%s358 + $0x78] sm:$0xff]
        %v392 = vld [vmem:[%s358 + $0x80] sm:$0xff]
        %v393 = vld [vmem:[%s358 + $0x88] sm:$0xff]
        %v394 = vld [vmem:[%s358 + $0x90] sm:$0xff]
        %v395 = vld [vmem:[%s358 + $0x98] sm:$0xff]
        %v396 = vld [vmem:[%s358 + $0xa0] sm:$0xff]
        %v397 = vld [vmem:[%s358 + $0xa8] sm:$0xff]
        %v398 = vld [vmem:[%s358 + $0xb0] sm:$0xff]
        %v399 = vld [vmem:[%s358 + $0xb8] sm:$0xff]
        %v400 = vld [vmem:[%s358 + $0xc0] sm:$0xff]
        %v401 = vld [vmem:[%s358 + $0xc8] sm:$0xff]
        %v402 = vld [vmem:[%s358 + $0xd0] sm:$0xff]
        %v403 = vld [vmem:[%s358 + $0xd8] sm:$0xff]
        %v404 = vld [vmem:[%s358 + $0xe0] sm:$0xff]
        %v405 = vld [vmem:[%s358 + $0xe8] sm:$0xff]
        %v406 = vld [vmem:[%s358 + $0xf0] sm:$0xff]
        %v407 = vld [vmem:[%s358 + $0xf8] sm:$0xff]
        %v408 = vld [vmem:[%s2] sm:$0xff]
        %v409 = vld [vmem:[%s2 + $0x8] sm:$0xff]
        %v410 = vld [vmem:[%s2 + $0x10] sm:$0xff]
        %v411 = vld [vmem:[%s2 + $0x18] sm:$0xff]
        %v412 = vld [vmem:[%s2 + $0x20] sm:$0xff]
        %v413 = vld [vmem:[%s2 + $0x28] sm:$0xff]
        %v414 = vld [vmem:[%s2 + $0x30] sm:$0xff]
        %v415 = vld [vmem:[%s2 + $0x38] sm:$0xff]
        %vm416 = vcmask 523264
        %v418 = vsel %vm416, %v376, 0
        %v421 = vsel %vm416, %v377, 0
        %v424 = vsel %vm416, %v378, 0
        %v427 = vsel %vm416, %v379, 0
        %v430 = vsel %vm416, %v380, 0
        %v433 = vsel %vm416, %v381, 0
        %v436 = vsel %vm416, %v382, 0
        %v439 = vsel %vm416, %v383, 0
        %v442 = vsel %vm416, %v384, 0
        %v445 = vsel %vm416, %v385, 0
        %v448 = vsel %vm416, %v386, 0
        %v451 = vsel %vm416, %v387, 0
        %v454 = vsel %vm416, %v388, 0
        %v457 = vsel %vm416, %v389, 0
        %v460 = vsel %vm416, %v390, 0
        %v463 = vsel %vm416, %v391, 0
        %v466 = vsel %vm416, %v392, 0
        %v469 = vsel %vm416, %v393, 0
        %v472 = vsel %vm416, %v394, 0
        %v475 = vsel %vm416, %v395, 0
        %v478 = vsel %vm416, %v396, 0
        %v481 = vsel %vm416, %v397, 0
        %v484 = vsel %vm416, %v398, 0
        %v487 = vsel %vm416, %v399, 0
        %v490 = vsel %vm416, %v400, 0
        %v493 = vsel %vm416, %v401, 0
        %v496 = vsel %vm416, %v402, 0
        %v499 = vsel %vm416, %v403, 0
        %v502 = vsel %vm416, %v404, 0
        %v505 = vsel %vm416, %v405, 0
        %v508 = vsel %vm416, %v406, 0
        %v511 = vsel %vm416, %v407, 0
        %513 = vmatprep.subr.mxu0 0.0
        %514 = vmatpush1.msra.mxu0 %v408
        %515 = vmatprep.subr.mxu0 0.0
        %516 = vmatpush1.msra.mxu0 %v409
        %517 = vmatprep.subr.mxu0 0.0
        %518 = vmatpush1.msra.mxu0 %v410
        %519 = vmatprep.subr.mxu0 0.0
        %520 = vmatpush1.msra.mxu0 %v411
        %521 = vmatprep.subr.mxu0 0.0
        %522 = vmatpush1.msra.mxu0 %v412
        %523 = vmatprep.subr.mxu0 0.0
        %524 = vmatpush1.msra.mxu0 %v413
        %525 = vmatprep.subr.mxu0 0.0
        %526 = vmatpush1.msra.mxu0 %v414
        %527 = vmatprep.subr.mxu0 0.0
        %528 = vmatpush1.msra.mxu0 %v415
        %529 = vmatprep.subr.mxu0 0.0
        %530 = vmatpush1.msra.mxu0 0.0
        %531 = vmatprep.subr.mxu0 0.0
        %532 = vmatpush1.msra.mxu0 0.0
        %533 = vmatprep.subr.mxu0 0.0
        %534 = vmatpush1.msra.mxu0 0.0
        %535 = vmatprep.subr.mxu0 0.0
        %536 = vmatpush1.msra.mxu0 0.0
        %537 = vmatprep.subr.mxu0 0.0
        %538 = vmatpush1.msra.mxu0 0.0
        %539 = vmatprep.subr.mxu0 0.0
        %540 = vmatpush1.msra.mxu0 0.0
        %541 = vmatprep.subr.mxu0 0.0
        %542 = vmatpush1.msra.mxu0 0.0
        %543 = vmatprep.subr.mxu0 0.0
        %544 = vmatpush1.msra.mxu0 0.0
        %545 = vmatprep.subr.mxu0 0.0
        %546 = vmatpush1.msra.mxu0 0.0
        %547 = vmatprep.subr.mxu0 0.0
        %548 = vmatpush1.msra.mxu0 0.0
        %549 = vmatprep.subr.mxu0 0.0
        %550 = vmatpush1.msra.mxu0 0.0
        %551 = vmatprep.subr.mxu0 0.0
        %552 = vmatpush1.msra.mxu0 0.0
        %553 = vmatprep.subr.mxu0 0.0
        %554 = vmatpush1.msra.mxu0 0.0
        %555 = vmatprep.subr.mxu0 0.0
        %556 = vmatpush1.msra.mxu0 0.0
        %557 = vmatprep.subr.mxu0 0.0
        %558 = vmatpush1.msra.mxu0 0.0
        %559 = vmatprep.subr.mxu0 0.0
        %560 = vmatpush1.msra.mxu0 0.0
        %561 = vmatprep.subr.mxu0 0.0
        %562 = vmatpush1.msra.mxu0 0.0
        %563 = vmatprep.subr.mxu0 0.0
        %564 = vmatpush1.msra.mxu0 0.0
        %565 = vmatprep.subr.mxu0 0.0
        %566 = vmatpush1.msra.mxu0 0.0
        %567 = vmatprep.subr.mxu0 0.0
        %568 = vmatpush1.msra.mxu0 0.0
        %569 = vmatprep.subr.mxu0 0.0
        %570 = vmatpush1.msra.mxu0 0.0
        %571 = vmatprep.subr.mxu0 0.0
        %572 = vmatpush1.msra.mxu0 0.0
        %573 = vmatprep.subr.mxu0 0.0
        %574 = vmatpush1.msra.mxu0 0.0
        %575 = vmatprep.subr.mxu0 0.0
        %576 = vmatpush1.msra.mxu0 0.0
        %577 = vmatprep.mubr.f32.mxu0 0.0
        %578 = vmatmul.mubr.f32.gmra.mrb[0].mxu0 %v418
        %v579 = vpop.f32.mrb[0].mxu0
        %v580 = vadd.f32 0.0, %v579
        %v581 = vpop.f32.mrb[0].mxu0
        %582 = vmatprep.mubr.f32.mxu0 0.0
        %583 = vmatmul.mubr.f32.gmra.mrb[0].mxu0 %v421
        %v584 = vpop.f32.mrb[0].mxu0
        %v585 = vadd.f32 0.0, %v584
        %v586 = vpop.f32.mrb[0].mxu0
        %587 = vmatprep.mubr.f32.mxu0 0.0
        %588 = vmatmul.mubr.f32.gmra.mrb[0].mxu0 %v424
        %v589 = vpop.f32.mrb[0].mxu0
        %v590 = vadd.f32 0.0, %v589
        %v591 = vpop.f32.mrb[0].mxu0
        %592 = vmatprep.mubr.f32.mxu0 0.0
        %593 = vmatmul.mubr.f32.gmra.mrb[0].mxu0 %v427
        %v594 = vpop.f32.mrb[0].mxu0
        %v595 = vadd.f32 0.0, %v594
        %v596 = vpop.f32.mrb[0].mxu0
        %597 = vmatprep.mubr.f32.mxu0 0.0
        %598 = vmatmul.mubr.f32.gmra.mrb[0].mxu0 %v430
        %v599 = vpop.f32.mrb[0].mxu0
        %v600 = vadd.f32 0.0, %v599
        %v601 = vpop.f32.mrb[0].mxu0
        %602 = vmatprep.mubr.f32.mxu0 0.0
        %603 = vmatmul.mubr.f32.gmra.mrb[0].mxu0 %v433
        %v604 = vpop.f32.mrb[0].mxu0
        %v605 = vadd.f32 0.0, %v604
        %v606 = vpop.f32.mrb[0].mxu0
        %607 = vmatprep.mubr.f32.mxu0 0.0
        %608 = vmatmul.mubr.f32.gmra.mrb[0].mxu0 %v436
        %v609 = vpop.f32.mrb[0].mxu0
        %v610 = vadd.f32 0.0, %v609
        %v611 = vpop.f32.mrb[0].mxu0
        %612 = vmatprep.mubr.f32.mxu0 0.0
        %613 = vmatmul.mubr.f32.gmra.mrb[0].mxu0 %v439
        %v614 = vpop.f32.mrb[0].mxu0
        %v615 = vadd.f32 0.0, %v614
        %v616 = vpop.f32.mrb[0].mxu0
        %617 = vmatprep.mubr.f32.mxu0 0.0
        %618 = vmatmul.mubr.f32.gmra.mrb[0].mxu0 %v442
        %v619 = vpop.f32.mrb[0].mxu0
        %v620 = vadd.f32 0.0, %v619
        %v621 = vpop.f32.mrb[0].mxu0
        %622 = vmatprep.mubr.f32.mxu0 0.0
        %623 = vmatmul.mubr.f32.gmra.mrb[0].mxu0 %v445
        %v624 = vpop.f32.mrb[0].mxu0
        %v625 = vadd.f32 0.0, %v624
        %v626 = vpop.f32.mrb[0].mxu0
        %627 = vmatprep.mubr.f32.mxu0 0.0
        %628 = vmatmul.mubr.f32.gmra.mrb[0].mxu0 %v448
        %v629 = vpop.f32.mrb[0].mxu0
        %v630 = vadd.f32 0.0, %v629
        %v631 = vpop.f32.mrb[0].mxu0
        %632 = vmatprep.mubr.f32.mxu0 0.0
        %633 = vmatmul.mubr.f32.gmra.mrb[0].mxu0 %v451
        %v634 = vpop.f32.mrb[0].mxu0
        %v635 = vadd.f32 0.0, %v634
        %v636 = vpop.f32.mrb[0].mxu0
        %637 = vmatprep.mubr.f32.mxu0 0.0
        %638 = vmatmul.mubr.f32.gmra.mrb[0].mxu0 %v454
        %v639 = vpop.f32.mrb[0].mxu0
        %v640 = vadd.f32 0.0, %v639
        %v641 = vpop.f32.mrb[0].mxu0
        %642 = vmatprep.mubr.f32.mxu0 0.0
        %643 = vmatmul.mubr.f32.gmra.mrb[0].mxu0 %v457
        %v644 = vpop.f32.mrb[0].mxu0
        %v645 = vadd.f32 0.0, %v644
        %v646 = vpop.f32.mrb[0].mxu0
        %647 = vmatprep.mubr.f32.mxu0 0.0
        %648 = vmatmul.mubr.f32.gmra.mrb[0].mxu0 %v460
        %v649 = vpop.f32.mrb[0].mxu0
        %v650 = vadd.f32 0.0, %v649
        %v651 = vpop.f32.mrb[0].mxu0
        %652 = vmatprep.mubr.f32.mxu0 0.0
        %653 = vmatmul.mubr.f32.gmra.mrb[0].mxu0 %v463
        %v654 = vpop.f32.mrb[0].mxu0
        %v655 = vadd.f32 0.0, %v654
        %v656 = vpop.f32.mrb[0].mxu0
        %657 = vmatprep.mubr.f32.mxu0 0.0
        %658 = vmatmul.mubr.f32.gmra.mrb[0].mxu0 %v466
        %v659 = vpop.f32.mrb[0].mxu0
        %v660 = vadd.f32 0.0, %v659
        %v661 = vpop.f32.mrb[0].mxu0
        %662 = vmatprep.mubr.f32.mxu0 0.0
        %663 = vmatmul.mubr.f32.gmra.mrb[0].mxu0 %v469
        %v664 = vpop.f32.mrb[0].mxu0
        %v665 = vadd.f32 0.0, %v664
        %v666 = vpop.f32.mrb[0].mxu0
        %667 = vmatprep.mubr.f32.mxu0 0.0
        %668 = vmatmul.mubr.f32.gmra.mrb[0].mxu0 %v472
        %v669 = vpop.f32.mrb[0].mxu0
        %v670 = vadd.f32 0.0, %v669
        %v671 = vpop.f32.mrb[0].mxu0
        %672 = vmatprep.mubr.f32.mxu0 0.0
        %673 = vmatmul.mubr.f32.gmra.mrb[0].mxu0 %v475
        %v674 = vpop.f32.mrb[0].mxu0
        %v675 = vadd.f32 0.0, %v674
        %v676 = vpop.f32.mrb[0].mxu0
        %677 = vmatprep.mubr.f32.mxu0 0.0
        %678 = vmatmul.mubr.f32.gmra.mrb[0].mxu0 %v478
        %v679 = vpop.f32.mrb[0].mxu0
        %v680 = vadd.f32 0.0, %v679
        %v681 = vpop.f32.mrb[0].mxu0
        %682 = vmatprep.mubr.f32.mxu0 0.0
        %683 = vmatmul.mubr.f32.gmra.mrb[0].mxu0 %v481
        %v684 = vpop.f32.mrb[0].mxu0
        %v685 = vadd.f32 0.0, %v684
        %v686 = vpop.f32.mrb[0].mxu0
        %687 = vmatprep.mubr.f32.mxu0 0.0
        %688 = vmatmul.mubr.f32.gmra.mrb[0].mxu0 %v484
        %v689 = vpop.f32.mrb[0].mxu0
        %v690 = vadd.f32 0.0, %v689
        %v691 = vpop.f32.mrb[0].mxu0
        %692 = vmatprep.mubr.f32.mxu0 0.0
        %693 = vmatmul.mubr.f32.gmra.mrb[0].mxu0 %v487
        %v694 = vpop.f32.mrb[0].mxu0
        %v695 = vadd.f32 0.0, %v694
        %v696 = vpop.f32.mrb[0].mxu0
        %697 = vmatprep.mubr.f32.mxu0 0.0
        %698 = vmatmul.mubr.f32.gmra.mrb[0].mxu0 %v490
        %v699 = vpop.f32.mrb[0].mxu0
        %v700 = vadd.f32 0.0, %v699
        %v701 = vpop.f32.mrb[0].mxu0
        %702 = vmatprep.mubr.f32.mxu0 0.0
        %703 = vmatmul.mubr.f32.gmra.mrb[0].mxu0 %v493
        %v704 = vpop.f32.mrb[0].mxu0
        %v705 = vadd.f32 0.0, %v704
        %v706 = vpop.f32.mrb[0].mxu0
        %707 = vmatprep.mubr.f32.mxu0 0.0
        %708 = vmatmul.mubr.f32.gmra.mrb[0].mxu0 %v496
        %v709 = vpop.f32.mrb[0].mxu0
        %v710 = vadd.f32 0.0, %v709
        %v711 = vpop.f32.mrb[0].mxu0
        %712 = vmatprep.mubr.f32.mxu0 0.0
        %713 = vmatmul.mubr.f32.gmra.mrb[0].mxu0 %v499
        %v714 = vpop.f32.mrb[0].mxu0
        %v715 = vadd.f32 0.0, %v714
        %v716 = vpop.f32.mrb[0].mxu0
        %717 = vmatprep.mubr.f32.mxu0 0.0
        %718 = vmatmul.mubr.f32.gmra.mrb[0].mxu0 %v502
        %v719 = vpop.f32.mrb[0].mxu0
        %v720 = vadd.f32 0.0, %v719
        %v721 = vpop.f32.mrb[0].mxu0
        %722 = vmatprep.mubr.f32.mxu0 0.0
        %723 = vmatmul.mubr.f32.gmra.mrb[0].mxu0 %v505
        %v724 = vpop.f32.mrb[0].mxu0
        %v725 = vadd.f32 0.0, %v724
        %v726 = vpop.f32.mrb[0].mxu0
        %727 = vmatprep.mubr.f32.mxu0 0.0
        %728 = vmatmul.mubr.f32.gmra.mrb[0].mxu0 %v508
        %v729 = vpop.f32.mrb[0].mxu0
        %v730 = vadd.f32 0.0, %v729
        %v731 = vpop.f32.mrb[0].mxu0
        %732 = vmatprep.mubr.f32.mxu0 0.0
        %733 = vmatmul.mubr.f32.gmra.mrb[0].mxu0 %v511
        %v734 = vpop.f32.mrb[0].mxu0
        %v735 = vadd.f32 0.0, %v734
        %v736 = vpop.f32.mrb[0].mxu0
        %737 = vdwg.mxu0
        %v738 = vld [vmem:[%s361] sm:$0x1]
        %v740 = vlaneseq
        %v741 = vshrl.u32 %v740, 7
        %v742 = vsub.s32 0, %v741
        %v743 = vrot.slane %v738, %v742
        %v745 = vmul.f32 %v580, %v743
        %v746 = vmul.f32 %v585, %v743
        %v747 = vmul.f32 %v590, %v743
        %v748 = vmul.f32 %v595, %v743
        %v749 = vmul.f32 %v600, %v743
        %v750 = vmul.f32 %v605, %v743
        %v751 = vmul.f32 %v610, %v743
        %v752 = vmul.f32 %v615, %v743
        %v753 = vmul.f32 %v620, %v743
        %v754 = vmul.f32 %v625, %v743
        %v755 = vmul.f32 %v630, %v743
        %v756 = vmul.f32 %v635, %v743
        %v757 = vmul.f32 %v640, %v743
        %v758 = vmul.f32 %v645, %v743
        %v759 = vmul.f32 %v650, %v743
        %v760 = vmul.f32 %v655, %v743
        %v761 = vmul.f32 %v660, %v743
        %v762 = vmul.f32 %v665, %v743
        %v763 = vmul.f32 %v670, %v743
        %v764 = vmul.f32 %v675, %v743
        %v765 = vmul.f32 %v680, %v743
        %v766 = vmul.f32 %v685, %v743
        %v767 = vmul.f32 %v690, %v743
        %v768 = vmul.f32 %v695, %v743
        %v769 = vmul.f32 %v700, %v743
        %v770 = vmul.f32 %v705, %v743
        %v771 = vmul.f32 %v710, %v743
        %v772 = vmul.f32 %v715, %v743
        %v773 = vmul.f32 %v720, %v743
        %v774 = vmul.f32 %v725, %v743
        %v775 = vmul.f32 %v730, %v743
        %v776 = vmul.f32 %v735, %v743
        %v777 = vld [vmem:[%s364] sm:$0x1]
        %v779 = vlaneseq
        %v780 = vshrl.u32 %v779, 7
        %v781 = vsub.s32 0, %v780
        %v782 = vrot.slane %v777, %v781
        %v784 = vadd.f32 %v745, %v782
        %v785 = vadd.f32 %v746, %v782
        %v786 = vadd.f32 %v747, %v782
        %v787 = vadd.f32 %v748, %v782
        %v788 = vadd.f32 %v749, %v782
        %v789 = vadd.f32 %v750, %v782
        %v790 = vadd.f32 %v751, %v782
        %v791 = vadd.f32 %v752, %v782
        %v792 = vadd.f32 %v753, %v782
        %v793 = vadd.f32 %v754, %v782
        %v794 = vadd.f32 %v755, %v782
        %v795 = vadd.f32 %v756, %v782
        %v796 = vadd.f32 %v757, %v782
        %v797 = vadd.f32 %v758, %v782
        %v798 = vadd.f32 %v759, %v782
        %v799 = vadd.f32 %v760, %v782
        %v800 = vadd.f32 %v761, %v782
        %v801 = vadd.f32 %v762, %v782
        %v802 = vadd.f32 %v763, %v782
        %v803 = vadd.f32 %v764, %v782
        %v804 = vadd.f32 %v765, %v782
        %v805 = vadd.f32 %v766, %v782
        %v806 = vadd.f32 %v767, %v782
        %v807 = vadd.f32 %v768, %v782
        %v808 = vadd.f32 %v769, %v782
        %v809 = vadd.f32 %v770, %v782
        %v810 = vadd.f32 %v771, %v782
        %v811 = vadd.f32 %v772, %v782
        %v812 = vadd.f32 %v773, %v782
        %v813 = vadd.f32 %v774, %v782
        %v814 = vadd.f32 %v775, %v782
        %v815 = vadd.f32 %v776, %v782
        %v816 = vmax.f32 %v784, 0.0
        %v817 = vmax.f32 %v785, 0.0
        %v818 = vmax.f32 %v786, 0.0
        %v819 = vmax.f32 %v787, 0.0
        %v820 = vmax.f32 %v788, 0.0
        %v821 = vmax.f32 %v789, 0.0
        %v822 = vmax.f32 %v790, 0.0
        %v823 = vmax.f32 %v791, 0.0
        %v824 = vmax.f32 %v792, 0.0
        %v825 = vmax.f32 %v793, 0.0
        %v826 = vmax.f32 %v794, 0.0
        %v827 = vmax.f32 %v795, 0.0
        %v828 = vmax.f32 %v796, 0.0
        %v829 = vmax.f32 %v797, 0.0
        %v830 = vmax.f32 %v798, 0.0
        %v831 = vmax.f32 %v799, 0.0
        %v832 = vmax.f32 %v800, 0.0
        %v833 = vmax.f32 %v801, 0.0
        %v834 = vmax.f32 %v802, 0.0
        %v835 = vmax.f32 %v803, 0.0
        %v836 = vmax.f32 %v804, 0.0
        %v837 = vmax.f32 %v805, 0.0
        %v838 = vmax.f32 %v806, 0.0
        %v839 = vmax.f32 %v807, 0.0
        %v840 = vmax.f32 %v808, 0.0
        %v841 = vmax.f32 %v809, 0.0
        %v842 = vmax.f32 %v810, 0.0
        %v843 = vmax.f32 %v811, 0.0
        %v844 = vmax.f32 %v812, 0.0
        %v845 = vmax.f32 %v813, 0.0
        %v846 = vmax.f32 %v814, 0.0
        %v847 = vmax.f32 %v815, 0.0
        %s848 = sld [smem:[#allocation2]]
        %v849 = vmin.f32 %v784, 0.0
        %v850 = vmin.f32 %v785, 0.0
        %v851 = vmin.f32 %v786, 0.0
        %v852 = vmin.f32 %v787, 0.0
        %v853 = vmin.f32 %v788, 0.0
        %v854 = vmin.f32 %v789, 0.0
        %v855 = vmin.f32 %v790, 0.0
        %v856 = vmin.f32 %v791, 0.0
        %v857 = vmin.f32 %v792, 0.0
        %v858 = vmin.f32 %v793, 0.0
        %v859 = vmin.f32 %v794, 0.0
        %v860 = vmin.f32 %v795, 0.0
        %v861 = vmin.f32 %v796, 0.0
        %v862 = vmin.f32 %v797, 0.0
        %v863 = vmin.f32 %v798, 0.0
        %v864 = vmin.f32 %v799, 0.0
        %v865 = vmin.f32 %v800, 0.0
        %v866 = vmin.f32 %v801, 0.0
        %v867 = vmin.f32 %v802, 0.0
        %v868 = vmin.f32 %v803, 0.0
        %v869 = vmin.f32 %v804, 0.0
        %v870 = vmin.f32 %v805, 0.0
        %v871 = vmin.f32 %v806, 0.0
        %v872 = vmin.f32 %v807, 0.0
        %v873 = vmin.f32 %v808, 0.0
        %v874 = vmin.f32 %v809, 0.0
        %v875 = vmin.f32 %v810, 0.0
        %v876 = vmin.f32 %v811, 0.0
        %v877 = vmin.f32 %v812, 0.0
        %v878 = vmin.f32 %v813, 0.0
        %v879 = vmin.f32 %v814, 0.0
        %v880 = vmin.f32 %v815, 0.0
        %v881 = vstv %s848
        %v882 = vmul.f32 %v881, %v849
        %v883 = vmul.f32 %v881, %v850
        %v884 = vmul.f32 %v881, %v851
        %v885 = vmul.f32 %v881, %v852
        %v886 = vmul.f32 %v881, %v853
        %v887 = vmul.f32 %v881, %v854
        %v888 = vmul.f32 %v881, %v855
        %v889 = vmul.f32 %v881, %v856
        %v890 = vmul.f32 %v881, %v857
        %v891 = vmul.f32 %v881, %v858
        %v892 = vmul.f32 %v881, %v859
        %v893 = vmul.f32 %v881, %v860
        %v894 = vmul.f32 %v881, %v861
        %v895 = vmul.f32 %v881, %v862
        %v896 = vmul.f32 %v881, %v863
        %v897 = vmul.f32 %v881, %v864
        %v898 = vmul.f32 %v881, %v865
        %v899 = vmul.f32 %v881, %v866
        %v900 = vmul.f32 %v881, %v867
        %v901 = vmul.f32 %v881, %v868
        %v902 = vmul.f32 %v881, %v869
        %v903 = vmul.f32 %v881, %v870
        %v904 = vmul.f32 %v881, %v871
        %v905 = vmul.f32 %v881, %v872
        %v906 = vmul.f32 %v881, %v873
        %v907 = vmul.f32 %v881, %v874
        %v908 = vmul.f32 %v881, %v875
        %v909 = vmul.f32 %v881, %v876
        %v910 = vmul.f32 %v881, %v877
        %v911 = vmul.f32 %v881, %v878
        %v912 = vmul.f32 %v881, %v879
        %v913 = vmul.f32 %v881, %v880
        %v914 = vadd.f32 %v816, %v882
        %v915 = vadd.f32 %v817, %v883
        %v916 = vadd.f32 %v818, %v884
        %v917 = vadd.f32 %v819, %v885
        %v918 = vadd.f32 %v820, %v886
        %v919 = vadd.f32 %v821, %v887
        %v920 = vadd.f32 %v822, %v888
        %v921 = vadd.f32 %v823, %v889
        %v922 = vadd.f32 %v824, %v890
        %v923 = vadd.f32 %v825, %v891
        %v924 = vadd.f32 %v826, %v892
        %v925 = vadd.f32 %v827, %v893
        %v926 = vadd.f32 %v828, %v894
        %v927 = vadd.f32 %v829, %v895
        %v928 = vadd.f32 %v830, %v896
        %v929 = vadd.f32 %v831, %v897
        %v930 = vadd.f32 %v832, %v898
        %v931 = vadd.f32 %v833, %v899
        %v932 = vadd.f32 %v834, %v900
        %v933 = vadd.f32 %v835, %v901
        %v934 = vadd.f32 %v836, %v902
        %v935 = vadd.f32 %v837, %v903
        %v936 = vadd.f32 %v838, %v904
        %v937 = vadd.f32 %v839, %v905
        %v938 = vadd.f32 %v840, %v906
        %v939 = vadd.f32 %v841, %v907
        %v940 = vadd.f32 %v842, %v908
        %v941 = vadd.f32 %v843, %v909
        %v942 = vadd.f32 %v844, %v910
        %v943 = vadd.f32 %v845, %v911
        %v944 = vadd.f32 %v846, %v912
        %v945 = vadd.f32 %v847, %v913
        %v946 = vld [vmem:[%s5] sm:$0xff]
        %vm947 = vcmask 64512
        %v949 = vsel %vm947, %v914, 0
        %v952 = vsel %vm947, %v915, 0
        %v955 = vsel %vm947, %v916, 0
        %v958 = vsel %vm947, %v917, 0
        %v961 = vsel %vm947, %v918, 0
        %v964 = vsel %vm947, %v919, 0
        %v967 = vsel %vm947, %v920, 0
        %v970 = vsel %vm947, %v921, 0
        %v973 = vsel %vm947, %v922, 0
        %v976 = vsel %vm947, %v923, 0
        %v979 = vsel %vm947, %v924, 0
        %v982 = vsel %vm947, %v925, 0
        %v985 = vsel %vm947, %v926, 0
        %v988 = vsel %vm947, %v927, 0
        %v991 = vsel %vm947, %v928, 0
        %v994 = vsel %vm947, %v929, 0
        %v997 = vsel %vm947, %v930, 0
        %v1000 = vsel %vm947, %v931, 0
        %v1003 = vsel %vm947, %v932, 0
        %v1006 = vsel %vm947, %v933, 0
        %v1009 = vsel %vm947, %v934, 0
        %v1012 = vsel %vm947, %v935, 0
        %v1015 = vsel %vm947, %v936, 0
        %v1018 = vsel %vm947, %v937, 0
        %v1021 = vsel %vm947, %v938, 0
        %v1024 = vsel %vm947, %v939, 0
        %v1027 = vsel %vm947, %v940, 0
        %v1030 = vsel %vm947, %v941, 0
        %v1033 = vsel %vm947, %v942, 0
        %v1036 = vsel %vm947, %v943, 0
        %v1039 = vsel %vm947, %v944, 0
        %v1042 = vsel %vm947, %v945, 0
        %1044 = vmatprep.subr.mxu0 0.0
        %1045 = vmatpush1.msra.mxu0 %v946
        %1046 = vmatprep.subr.mxu0 0.0
        %1047 = vmatpush1.msra.mxu0 0.0
        %1048 = vmatprep.subr.mxu0 0.0
        %1049 = vmatpush1.msra.mxu0 0.0
        %1050 = vmatprep.subr.mxu0 0.0
        %1051 = vmatpush1.msra.mxu0 0.0
        %1052 = vmatprep.subr.mxu0 0.0
        %1053 = vmatpush1.msra.mxu0 0.0
        %1054 = vmatprep.subr.mxu0 0.0
        %1055 = vmatpush1.msra.mxu0 0.0
        %1056 = vmatprep.subr.mxu0 0.0
        %1057 = vmatpush1.msra.mxu0 0.0
        %1058 = vmatprep.subr.mxu0 0.0
        %1059 = vmatpush1.msra.mxu0 0.0
        %1060 = vmatprep.subr.mxu0 0.0
        %1061 = vmatpush1.msra.mxu0 0.0
        %1062 = vmatprep.subr.mxu0 0.0
        %1063 = vmatpush1.msra.mxu0 0.0
        %1064 = vmatprep.subr.mxu0 0.0
        %1065 = vmatpush1.msra.mxu0 0.0
        %1066 = vmatprep.subr.mxu0 0.0
        %1067 = vmatpush1.msra.mxu0 0.0
        %1068 = vmatprep.subr.mxu0 0.0
        %1069 = vmatpush1.msra.mxu0 0.0
        %1070 = vmatprep.subr.mxu0 0.0
        %1071 = vmatpush1.msra.mxu0 0.0
        %1072 = vmatprep.subr.mxu0 0.0
        %1073 = vmatpush1.msra.mxu0 0.0
        %1074 = vmatprep.subr.mxu0 0.0
        %1075 = vmatpush1.msra.mxu0 0.0
        %1076 = vmatprep.subr.mxu0 0.0
        %1077 = vmatpush1.msra.mxu0 0.0
        %1078 = vmatprep.subr.mxu0 0.0
        %1079 = vmatpush1.msra.mxu0 0.0
        %1080 = vmatprep.subr.mxu0 0.0
        %1081 = vmatpush1.msra.mxu0 0.0
        %1082 = vmatprep.subr.mxu0 0.0
        %1083 = vmatpush1.msra.mxu0 0.0
        %1084 = vmatprep.subr.mxu0 0.0
        %1085 = vmatpush1.msra.mxu0 0.0
        %1086 = vmatprep.subr.mxu0 0.0
        %1087 = vmatpush1.msra.mxu0 0.0
        %1088 = vmatprep.subr.mxu0 0.0
        %1089 = vmatpush1.msra.mxu0 0.0
        %1090 = vmatprep.subr.mxu0 0.0
        %1091 = vmatpush1.msra.mxu0 0.0
        %1092 = vmatprep.subr.mxu0 0.0
        %1093 = vmatpush1.msra.mxu0 0.0
        %1094 = vmatprep.subr.mxu0 0.0
        %1095 = vmatpush1.msra.mxu0 0.0
        %1096 = vmatprep.subr.mxu0 0.0
        %1097 = vmatpush1.msra.mxu0 0.0
        %1098 = vmatprep.subr.mxu0 0.0
        %1099 = vmatpush1.msra.mxu0 0.0
        %1100 = vmatprep.subr.mxu0 0.0
        %1101 = vmatpush1.msra.mxu0 0.0
        %1102 = vmatprep.subr.mxu0 0.0
        %1103 = vmatpush1.msra.mxu0 0.0
        %1104 = vmatprep.subr.mxu0 0.0
        %1105 = vmatpush1.msra.mxu0 0.0
        %1106 = vmatprep.subr.mxu0 0.0
        %1107 = vmatpush1.msra.mxu0 0.0
        %1108 = vmatprep.mubr.f32.mxu0 0.0
        %1109 = vmatmul.mubr.f32.gmra.mrb[0].mxu0 %v949
        %v1110 = vpop.f32.mrb[0].mxu0
        %v1111 = vadd.f32 0.0, %v1110
        %v1112 = vpop.f32.mrb[0].mxu0
        %1113 = vmatprep.mubr.f32.mxu0 0.0
        %1114 = vmatmul.mubr.f32.gmra.mrb[0].mxu0 %v952
        %v1115 = vpop.f32.mrb[0].mxu0
        %v1116 = vadd.f32 0.0, %v1115
        %v1117 = vpop.f32.mrb[0].mxu0
        %1118 = vmatprep.mubr.f32.mxu0 0.0
        %1119 = vmatmul.mubr.f32.gmra.mrb[0].mxu0 %v955
        %v1120 = vpop.f32.mrb[0].mxu0
        %v1121 = vadd.f32 0.0, %v1120
        %v1122 = vpop.f32.mrb[0].mxu0
        %1123 = vmatprep.mubr.f32.mxu0 0.0
        %1124 = vmatmul.mubr.f32.gmra.mrb[0].mxu0 %v958
        %v1125 = vpop.f32.mrb[0].mxu0
        %v1126 = vadd.f32 0.0, %v1125
        %v1127 = vpop.f32.mrb[0].mxu0
        %1128 = vmatprep.mubr.f32.mxu0 0.0
        %1129 = vmatmul.mubr.f32.gmra.mrb[0].mxu0 %v961
        %v1130 = vpop.f32.mrb[0].mxu0
        %v1131 = vadd.f32 0.0, %v1130
        %v1132 = vpop.f32.mrb[0].mxu0
        %1133 = vmatprep.mubr.f32.mxu0 0.0
        %1134 = vmatmul.mubr.f32.gmra.mrb[0].mxu0 %v964
        %v1135 = vpop.f32.mrb[0].mxu0
        %v1136 = vadd.f32 0.0, %v1135
        %v1137 = vpop.f32.mrb[0].mxu0
        %1138 = vmatprep.mubr.f32.mxu0 0.0
        %1139 = vmatmul.mubr.f32.gmra.mrb[0].mxu0 %v967
        %v1140 = vpop.f32.mrb[0].mxu0
        %v1141 = vadd.f32 0.0, %v1140
        %v1142 = vpop.f32.mrb[0].mxu0
        %1143 = vmatprep.mubr.f32.mxu0 0.0
        %1144 = vmatmul.mubr.f32.gmra.mrb[0].mxu0 %v970
        %v1145 = vpop.f32.mrb[0].mxu0
        %v1146 = vadd.f32 0.0, %v1145
        %v1147 = vpop.f32.mrb[0].mxu0
        %1148 = vmatprep.mubr.f32.mxu0 0.0
        %1149 = vmatmul.mubr.f32.gmra.mrb[0].mxu0 %v973
        %v1150 = vpop.f32.mrb[0].mxu0
        %v1151 = vadd.f32 0.0, %v1150
        %v1152 = vpop.f32.mrb[0].mxu0
        %1153 = vmatprep.mubr.f32.mxu0 0.0
        %1154 = vmatmul.mubr.f32.gmra.mrb[0].mxu0 %v976
        %v1155 = vpop.f32.mrb[0].mxu0
        %v1156 = vadd.f32 0.0, %v1155
        %v1157 = vpop.f32.mrb[0].mxu0
        %1158 = vmatprep.mubr.f32.mxu0 0.0
        %1159 = vmatmul.mubr.f32.gmra.mrb[0].mxu0 %v979
        %v1160 = vpop.f32.mrb[0].mxu0
        %v1161 = vadd.f32 0.0, %v1160
        %v1162 = vpop.f32.mrb[0].mxu0
        %1163 = vmatprep.mubr.f32.mxu0 0.0
        %1164 = vmatmul.mubr.f32.gmra.mrb[0].mxu0 %v982
        %v1165 = vpop.f32.mrb[0].mxu0
        %v1166 = vadd.f32 0.0, %v1165
        %v1167 = vpop.f32.mrb[0].mxu0
        %1168 = vmatprep.mubr.f32.mxu0 0.0
        %1169 = vmatmul.mubr.f32.gmra.mrb[0].mxu0 %v985
        %v1170 = vpop.f32.mrb[0].mxu0
        %v1171 = vadd.f32 0.0, %v1170
        %v1172 = vpop.f32.mrb[0].mxu0
        %1173 = vmatprep.mubr.f32.mxu0 0.0
        %1174 = vmatmul.mubr.f32.gmra.mrb[0].mxu0 %v988
        %v1175 = vpop.f32.mrb[0].mxu0
        %v1176 = vadd.f32 0.0, %v1175
        %v1177 = vpop.f32.mrb[0].mxu0
        %1178 = vmatprep.mubr.f32.mxu0 0.0
        %1179 = vmatmul.mubr.f32.gmra.mrb[0].mxu0 %v991
        %v1180 = vpop.f32.mrb[0].mxu0
        %v1181 = vadd.f32 0.0, %v1180
        %v1182 = vpop.f32.mrb[0].mxu0
        %1183 = vmatprep.mubr.f32.mxu0 0.0
        %1184 = vmatmul.mubr.f32.gmra.mrb[0].mxu0 %v994
        %v1185 = vpop.f32.mrb[0].mxu0
        %v1186 = vadd.f32 0.0, %v1185
        %v1187 = vpop.f32.mrb[0].mxu0
        %1188 = vmatprep.mubr.f32.mxu0 0.0
        %1189 = vmatmul.mubr.f32.gmra.mrb[0].mxu0 %v997
        %v1190 = vpop.f32.mrb[0].mxu0
        %v1191 = vadd.f32 0.0, %v1190
        %v1192 = vpop.f32.mrb[0].mxu0
        %1193 = vmatprep.mubr.f32.mxu0 0.0
        %1194 = vmatmul.mubr.f32.gmra.mrb[0].mxu0 %v1000
        %v1195 = vpop.f32.mrb[0].mxu0
        %v1196 = vadd.f32 0.0, %v1195
        %v1197 = vpop.f32.mrb[0].mxu0
        %1198 = vmatprep.mubr.f32.mxu0 0.0
        %1199 = vmatmul.mubr.f32.gmra.mrb[0].mxu0 %v1003
        %v1200 = vpop.f32.mrb[0].mxu0
        %v1201 = vadd.f32 0.0, %v1200
        %v1202 = vpop.f32.mrb[0].mxu0
        %1203 = vmatprep.mubr.f32.mxu0 0.0
        %1204 = vmatmul.mubr.f32.gmra.mrb[0].mxu0 %v1006
        %v1205 = vpop.f32.mrb[0].mxu0
        %v1206 = vadd.f32 0.0, %v1205
        %v1207 = vpop.f32.mrb[0].mxu0
        %1208 = vmatprep.mubr.f32.mxu0 0.0
        %1209 = vmatmul.mubr.f32.gmra.mrb[0].mxu0 %v1009
        %v1210 = vpop.f32.mrb[0].mxu0
        %v1211 = vadd.f32 0.0, %v1210
        %v1212 = vpop.f32.mrb[0].mxu0
        %1213 = vmatprep.mubr.f32.mxu0 0.0
        %1214 = vmatmul.mubr.f32.gmra.mrb[0].mxu0 %v1012
        %v1215 = vpop.f32.mrb[0].mxu0
        %v1216 = vadd.f32 0.0, %v1215
        %v1217 = vpop.f32.mrb[0].mxu0
        %1218 = vmatprep.mubr.f32.mxu0 0.0
        %1219 = vmatmul.mubr.f32.gmra.mrb[0].mxu0 %v1015
        %v1220 = vpop.f32.mrb[0].mxu0
        %v1221 = vadd.f32 0.0, %v1220
        %v1222 = vpop.f32.mrb[0].mxu0
        %1223 = vmatprep.mubr.f32.mxu0 0.0
        %1224 = vmatmul.mubr.f32.gmra.mrb[0].mxu0 %v1018
        %v1225 = vpop.f32.mrb[0].mxu0
        %v1226 = vadd.f32 0.0, %v1225
        %v1227 = vpop.f32.mrb[0].mxu0
        %1228 = vmatprep.mubr.f32.mxu0 0.0
        %1229 = vmatmul.mubr.f32.gmra.mrb[0].mxu0 %v1021
        %v1230 = vpop.f32.mrb[0].mxu0
        %v1231 = vadd.f32 0.0, %v1230
        %v1232 = vpop.f32.mrb[0].mxu0
        %1233 = vmatprep.mubr.f32.mxu0 0.0
        %1234 = vmatmul.mubr.f32.gmra.mrb[0].mxu0 %v1024
        %v1235 = vpop.f32.mrb[0].mxu0
        %v1236 = vadd.f32 0.0, %v1235
        %v1237 = vpop.f32.mrb[0].mxu0
        %1238 = vmatprep.mubr.f32.mxu0 0.0
        %1239 = vmatmul.mubr.f32.gmra.mrb[0].mxu0 %v1027
        %v1240 = vpop.f32.mrb[0].mxu0
        %v1241 = vadd.f32 0.0, %v1240
        %v1242 = vpop.f32.mrb[0].mxu0
        %1243 = vmatprep.mubr.f32.mxu0 0.0
        %1244 = vmatmul.mubr.f32.gmra.mrb[0].mxu0 %v1030
        %v1245 = vpop.f32.mrb[0].mxu0
        %v1246 = vadd.f32 0.0, %v1245
        %v1247 = vpop.f32.mrb[0].mxu0
        %1248 = vmatprep.mubr.f32.mxu0 0.0
        %1249 = vmatmul.mubr.f32.gmra.mrb[0].mxu0 %v1033
        %v1250 = vpop.f32.mrb[0].mxu0
        %v1251 = vadd.f32 0.0, %v1250
        %v1252 = vpop.f32.mrb[0].mxu0
        %1253 = vmatprep.mubr.f32.mxu0 0.0
        %1254 = vmatmul.mubr.f32.gmra.mrb[0].mxu0 %v1036
        %v1255 = vpop.f32.mrb[0].mxu0
        %v1256 = vadd.f32 0.0, %v1255
        %v1257 = vpop.f32.mrb[0].mxu0
        %1258 = vmatprep.mubr.f32.mxu0 0.0
        %1259 = vmatmul.mubr.f32.gmra.mrb[0].mxu0 %v1039
        %v1260 = vpop.f32.mrb[0].mxu0
        %v1261 = vadd.f32 0.0, %v1260
        %v1262 = vpop.f32.mrb[0].mxu0
        %1263 = vmatprep.mubr.f32.mxu0 0.0
        %1264 = vmatmul.mubr.f32.gmra.mrb[0].mxu0 %v1042
        %v1265 = vpop.f32.mrb[0].mxu0
        %v1266 = vadd.f32 0.0, %v1265
        %v1267 = vpop.f32.mrb[0].mxu0
        %1268 = vdwg.mxu0
        %v1269 = vld [vmem:[%s367] sm:$0x1]
        %v1271 = vlaneseq
        %v1272 = vshrl.u32 %v1271, 7
        %v1273 = vsub.s32 0, %v1272
        %v1274 = vrot.slane %v1269, %v1273
        %v1276 = vmul.f32 %v1111, %v1274
        %v1277 = vmul.f32 %v1116, %v1274
        %v1278 = vmul.f32 %v1121, %v1274
        %v1279 = vmul.f32 %v1126, %v1274
        %v1280 = vmul.f32 %v1131, %v1274
        %v1281 = vmul.f32 %v1136, %v1274
        %v1282 = vmul.f32 %v1141, %v1274
        %v1283 = vmul.f32 %v1146, %v1274
        %v1284 = vmul.f32 %v1151, %v1274
        %v1285 = vmul.f32 %v1156, %v1274
        %v1286 = vmul.f32 %v1161, %v1274
        %v1287 = vmul.f32 %v1166, %v1274
        %v1288 = vmul.f32 %v1171, %v1274
        %v1289 = vmul.f32 %v1176, %v1274
        %v1290 = vmul.f32 %v1181, %v1274
        %v1291 = vmul.f32 %v1186, %v1274
        %v1292 = vmul.f32 %v1191, %v1274
        %v1293 = vmul.f32 %v1196, %v1274
        %v1294 = vmul.f32 %v1201, %v1274
        %v1295 = vmul.f32 %v1206, %v1274
        %v1296 = vmul.f32 %v1211, %v1274
        %v1297 = vmul.f32 %v1216, %v1274
        %v1298 = vmul.f32 %v1221, %v1274
        %v1299 = vmul.f32 %v1226, %v1274
        %v1300 = vmul.f32 %v1231, %v1274
        %v1301 = vmul.f32 %v1236, %v1274
        %v1302 = vmul.f32 %v1241, %v1274
        %v1303 = vmul.f32 %v1246, %v1274
        %v1304 = vmul.f32 %v1251, %v1274
        %v1305 = vmul.f32 %v1256, %v1274
        %v1306 = vmul.f32 %v1261, %v1274
        %v1307 = vmul.f32 %v1266, %v1274
        %v1308 = vld [vmem:[%s370] sm:$0x1]
        %v1310 = vlaneseq
        %v1311 = vshrl.u32 %v1310, 7
        %v1312 = vsub.s32 0, %v1311
        %v1313 = vrot.slane %v1308, %v1312
        %v1315 = vadd.f32 %v1276, %v1313
        %v1316 = vadd.f32 %v1277, %v1313
        %v1317 = vadd.f32 %v1278, %v1313
        %v1318 = vadd.f32 %v1279, %v1313
        %v1319 = vadd.f32 %v1280, %v1313
        %v1320 = vadd.f32 %v1281, %v1313
        %v1321 = vadd.f32 %v1282, %v1313
        %v1322 = vadd.f32 %v1283, %v1313
        %v1323 = vadd.f32 %v1284, %v1313
        %v1324 = vadd.f32 %v1285, %v1313
        %v1325 = vadd.f32 %v1286, %v1313
        %v1326 = vadd.f32 %v1287, %v1313
        %v1327 = vadd.f32 %v1288, %v1313
        %v1328 = vadd.f32 %v1289, %v1313
        %v1329 = vadd.f32 %v1290, %v1313
        %v1330 = vadd.f32 %v1291, %v1313
        %v1331 = vadd.f32 %v1292, %v1313
        %v1332 = vadd.f32 %v1293, %v1313
        %v1333 = vadd.f32 %v1294, %v1313
        %v1334 = vadd.f32 %v1295, %v1313
        %v1335 = vadd.f32 %v1296, %v1313
        %v1336 = vadd.f32 %v1297, %v1313
        %v1337 = vadd.f32 %v1298, %v1313
        %v1338 = vadd.f32 %v1299, %v1313
        %v1339 = vadd.f32 %v1300, %v1313
        %v1340 = vadd.f32 %v1301, %v1313
        %v1341 = vadd.f32 %v1302, %v1313
        %v1342 = vadd.f32 %v1303, %v1313
        %v1343 = vadd.f32 %v1304, %v1313
        %v1344 = vadd.f32 %v1305, %v1313
        %v1345 = vadd.f32 %v1306, %v1313
        %v1346 = vadd.f32 %v1307, %v1313
        %v1347 = vmax.f32 %v1315, 0.0
        %v1348 = vmax.f32 %v1316, 0.0
        %v1349 = vmax.f32 %v1317, 0.0
        %v1350 = vmax.f32 %v1318, 0.0
        %v1351 = vmax.f32 %v1319, 0.0
        %v1352 = vmax.f32 %v1320, 0.0
        %v1353 = vmax.f32 %v1321, 0.0
        %v1354 = vmax.f32 %v1322, 0.0
        %v1355 = vmax.f32 %v1323, 0.0
        %v1356 = vmax.f32 %v1324, 0.0
        %v1357 = vmax.f32 %v1325, 0.0
        %v1358 = vmax.f32 %v1326, 0.0
        %v1359 = vmax.f32 %v1327, 0.0
        %v1360 = vmax.f32 %v1328, 0.0
        %v1361 = vmax.f32 %v1329, 0.0
        %v1362 = vmax.f32 %v1330, 0.0
        %v1363 = vmax.f32 %v1331, 0.0
        %v1364 = vmax.f32 %v1332, 0.0
        %v1365 = vmax.f32 %v1333, 0.0
        %v1366 = vmax.f32 %v1334, 0.0
        %v1367 = vmax.f32 %v1335, 0.0
        %v1368 = vmax.f32 %v1336, 0.0
        %v1369 = vmax.f32 %v1337, 0.0
        %v1370 = vmax.f32 %v1338, 0.0
        %v1371 = vmax.f32 %v1339, 0.0
        %v1372 = vmax.f32 %v1340, 0.0
        %v1373 = vmax.f32 %v1341, 0.0
        %v1374 = vmax.f32 %v1342, 0.0
        %v1375 = vmax.f32 %v1343, 0.0
        %v1376 = vmax.f32 %v1344, 0.0
        %v1377 = vmax.f32 %v1345, 0.0
        %v1378 = vmax.f32 %v1346, 0.0
        %s1379 = sld [smem:[#allocation2 + $0x1]]
        %v1380 = vmin.f32 %v1315, 0.0
        %v1381 = vmin.f32 %v1316, 0.0
        %v1382 = vmin.f32 %v1317, 0.0
        %v1383 = vmin.f32 %v1318, 0.0
        %v1384 = vmin.f32 %v1319, 0.0
        %v1385 = vmin.f32 %v1320, 0.0
        %v1386 = vmin.f32 %v1321, 0.0
        %v1387 = vmin.f32 %v1322, 0.0
        %v1388 = vmin.f32 %v1323, 0.0
        %v1389 = vmin.f32 %v1324, 0.0
        %v1390 = vmin.f32 %v1325, 0.0
        %v1391 = vmin.f32 %v1326, 0.0
        %v1392 = vmin.f32 %v1327, 0.0
        %v1393 = vmin.f32 %v1328, 0.0
        %v1394 = vmin.f32 %v1329, 0.0
        %v1395 = vmin.f32 %v1330, 0.0
        %v1396 = vmin.f32 %v1331, 0.0
        %v1397 = vmin.f32 %v1332, 0.0
        %v1398 = vmin.f32 %v1333, 0.0
        %v1399 = vmin.f32 %v1334, 0.0
        %v1400 = vmin.f32 %v1335, 0.0
        %v1401 = vmin.f32 %v1336, 0.0
        %v1402 = vmin.f32 %v1337, 0.0
        %v1403 = vmin.f32 %v1338, 0.0
        %v1404 = vmin.f32 %v1339, 0.0
        %v1405 = vmin.f32 %v1340, 0.0
        %v1406 = vmin.f32 %v1341, 0.0
        %v1407 = vmin.f32 %v1342, 0.0
        %v1408 = vmin.f32 %v1343, 0.0
        %v1409 = vmin.f32 %v1344, 0.0
        %v1410 = vmin.f32 %v1345, 0.0
        %v1411 = vmin.f32 %v1346, 0.0
        %v1412 = vstv %s1379
        %v1413 = vmul.f32 %v1412, %v1380
        %v1414 = vmul.f32 %v1412, %v1381
        %v1415 = vmul.f32 %v1412, %v1382
        %v1416 = vmul.f32 %v1412, %v1383
        %v1417 = vmul.f32 %v1412, %v1384
        %v1418 = vmul.f32 %v1412, %v1385
        %v1419 = vmul.f32 %v1412, %v1386
        %v1420 = vmul.f32 %v1412, %v1387
        %v1421 = vmul.f32 %v1412, %v1388
        %v1422 = vmul.f32 %v1412, %v1389
        %v1423 = vmul.f32 %v1412, %v1390
        %v1424 = vmul.f32 %v1412, %v1391
        %v1425 = vmul.f32 %v1412, %v1392
        %v1426 = vmul.f32 %v1412, %v1393
        %v1427 = vmul.f32 %v1412, %v1394
        %v1428 = vmul.f32 %v1412, %v1395
        %v1429 = vmul.f32 %v1412, %v1396
        %v1430 = vmul.f32 %v1412, %v1397
        %v1431 = vmul.f32 %v1412, %v1398
        %v1432 = vmul.f32 %v1412, %v1399
        %v1433 = vmul.f32 %v1412, %v1400
        %v1434 = vmul.f32 %v1412, %v1401
        %v1435 = vmul.f32 %v1412, %v1402
        %v1436 = vmul.f32 %v1412, %v1403
        %v1437 = vmul.f32 %v1412, %v1404
        %v1438 = vmul.f32 %v1412, %v1405
        %v1439 = vmul.f32 %v1412, %v1406
        %v1440 = vmul.f32 %v1412, %v1407
        %v1441 = vmul.f32 %v1412, %v1408
        %v1442 = vmul.f32 %v1412, %v1409
        %v1443 = vmul.f32 %v1412, %v1410
        %v1444 = vmul.f32 %v1412, %v1411
        %v1445 = vadd.f32 %v1347, %v1413
        %v1446 = vadd.f32 %v1348, %v1414
        %v1447 = vadd.f32 %v1349, %v1415
        %v1448 = vadd.f32 %v1350, %v1416
        %v1449 = vadd.f32 %v1351, %v1417
        %v1450 = vadd.f32 %v1352, %v1418
        %v1451 = vadd.f32 %v1353, %v1419
        %v1452 = vadd.f32 %v1354, %v1420
        %v1453 = vadd.f32 %v1355, %v1421
        %v1454 = vadd.f32 %v1356, %v1422
        %v1455 = vadd.f32 %v1357, %v1423
        %v1456 = vadd.f32 %v1358, %v1424
        %v1457 = vadd.f32 %v1359, %v1425
        %v1458 = vadd.f32 %v1360, %v1426
        %v1459 = vadd.f32 %v1361, %v1427
        %v1460 = vadd.f32 %v1362, %v1428
        %v1461 = vadd.f32 %v1363, %v1429
        %v1462 = vadd.f32 %v1364, %v1430
        %v1463 = vadd.f32 %v1365, %v1431
        %v1464 = vadd.f32 %v1366, %v1432
        %v1465 = vadd.f32 %v1367, %v1433
        %v1466 = vadd.f32 %v1368, %v1434
        %v1467 = vadd.f32 %v1369, %v1435
        %v1468 = vadd.f32 %v1370, %v1436
        %v1469 = vadd.f32 %v1371, %v1437
        %v1470 = vadd.f32 %v1372, %v1438
        %v1471 = vadd.f32 %v1373, %v1439
        %v1472 = vadd.f32 %v1374, %v1440
        %v1473 = vadd.f32 %v1375, %v1441
        %v1474 = vadd.f32 %v1376, %v1442
        %v1475 = vadd.f32 %v1377, %v1443
        %v1476 = vadd.f32 %v1378, %v1444
        %vm1477 = vcmask 31744
        %1478 = vst.msk [vmem:[%s375] sm:$0xff] %vm1477, %v1445
        %1479 = vst.msk [vmem:[%s375 + $0x8] sm:$0xff] %vm1477, %v1446
        %1480 = vst.msk [vmem:[%s375 + $0x10] sm:$0xff] %vm1477, %v1447
        %1481 = vst.msk [vmem:[%s375 + $0x18] sm:$0xff] %vm1477, %v1448
        %1482 = vst.msk [vmem:[%s375 + $0x20] sm:$0xff] %vm1477, %v1449
        %1483 = vst.msk [vmem:[%s375 + $0x28] sm:$0xff] %vm1477, %v1450
        %1484 = vst.msk [vmem:[%s375 + $0x30] sm:$0xff] %vm1477, %v1451
        %1485 = vst.msk [vmem:[%s375 + $0x38] sm:$0xff] %vm1477, %v1452
        %1486 = vst.msk [vmem:[%s375 + $0x40] sm:$0xff] %vm1477, %v1453
        %1487 = vst.msk [vmem:[%s375 + $0x48] sm:$0xff] %vm1477, %v1454
        %1488 = vst.msk [vmem:[%s375 + $0x50] sm:$0xff] %vm1477, %v1455
        %1489 = vst.msk [vmem:[%s375 + $0x58] sm:$0xff] %vm1477, %v1456
        %1490 = vst.msk [vmem:[%s375 + $0x60] sm:$0xff] %vm1477, %v1457
        %1491 = vst.msk [vmem:[%s375 + $0x68] sm:$0xff] %vm1477, %v1458
        %1492 = vst.msk [vmem:[%s375 + $0x70] sm:$0xff] %vm1477, %v1459
        %1493 = vst.msk [vmem:[%s375 + $0x78] sm:$0xff] %vm1477, %v1460
        %1494 = vst.msk [vmem:[%s375 + $0x80] sm:$0xff] %vm1477, %v1461
        %1495 = vst.msk [vmem:[%s375 + $0x88] sm:$0xff] %vm1477, %v1462
        %1496 = vst.msk [vmem:[%s375 + $0x90] sm:$0xff] %vm1477, %v1463
        %1497 = vst.msk [vmem:[%s375 + $0x98] sm:$0xff] %vm1477, %v1464
        %1498 = vst.msk [vmem:[%s375 + $0xa0] sm:$0xff] %vm1477, %v1465
        %1499 = vst.msk [vmem:[%s375 + $0xa8] sm:$0xff] %vm1477, %v1466
        %1500 = vst.msk [vmem:[%s375 + $0xb0] sm:$0xff] %vm1477, %v1467
        %1501 = vst.msk [vmem:[%s375 + $0xb8] sm:$0xff] %vm1477, %v1468
        %1502 = vst.msk [vmem:[%s375 + $0xc0] sm:$0xff] %vm1477, %v1469
        %1503 = vst.msk [vmem:[%s375 + $0xc8] sm:$0xff] %vm1477, %v1470
        %1504 = vst.msk [vmem:[%s375 + $0xd0] sm:$0xff] %vm1477, %v1471
        %1505 = vst.msk [vmem:[%s375 + $0xd8] sm:$0xff] %vm1477, %v1472
        %1506 = vst.msk [vmem:[%s375 + $0xe0] sm:$0xff] %vm1477, %v1473
        %1507 = vst.msk [vmem:[%s375 + $0xe8] sm:$0xff] %vm1477, %v1474
        %1508 = vst.msk [vmem:[%s375 + $0xf0] sm:$0xff] %vm1477, %v1475
        %1509 = vst.msk [vmem:[%s375 + $0xf8] sm:$0xff] %vm1477, %v1476
        %p1510 = scmp.lt.s32.totalorder %s20, 1
        %s1511 = scalar_select %p1510, %s20, 1
        %s1512 = smul.addr %s1511, 32
        %s1513 = smul.addr %s1512, 8
        %s1514 = scalar_lea.vmem %s8, %s1513
        // Predicated region
        $region57: #{forward.18} parent=51 // pred_check
          %p1515 = pneg %p231
        $region58: #{forward.18} parent=51 // pred_check_branch
          %1517 = sbr.rel (%p1515) target = $region60
        $region59: #{forward.18} parent=51 // pred_region
          _
        $region60: #{forward.18} parent=51 // pred_fallthru
          _
      $region52: #{forward.18} parent=5 // pred_fallthru
        _
      %p1518 = scmp.le.s32.totalorder 2, %s15
      // Predicated region
      $region61: #{forward.18} parent=5 // pred_check
        %p1519 = pneg %p1518
      $region62: #{forward.18} parent=5 // pred_check_branch
        %1521 = sbr.rel (%p1519) target = $region64
      $region63: #{forward.18} parent=5 // pred_region
        %s1522 = ssub.s32 %s15, 2
        // Predicated region
        $region65: #{forward.18} parent=63 // pred_check
          %p1523 = pneg %p237
        $region66: #{forward.18} parent=63 // pred_check_branch
          %1525 = sbr.rel (%p1523) target = $region68
        $region67: #{forward.18} parent=63 // pred_region
          %p1526 = scmp.lt.s32.totalorder %s21, 1
          %s1527 = scalar_select %p1526, %s21, 1
          %s1528 = smul.addr %s1527, 32
          %s1529 = smul.addr %s1528, 8
          %s1530 = scalar_lea.vmem %s8, %s1529
        $region68: #{forward.18} parent=63 // pred_fallthru
          _
      $region64: #{forward.18} parent=5 // pred_fallthru
        _
    $region6: #{forward.18} parent=1 // loop_footer
      %s19 = sadd.s32 1, %s15
    $region7: #{forward.18} parent=1 // loop_footer_branch
      %14 = sbr.rel target = $region3
    $region8: #{forward.18} parent=1 // loop_exit
      _
    %1531 = vsyncpa [#allocation3], 1
    %s1532 = scalar_lea.sflag [#allocation3], 1
    %1533 = vsyncpa %s1532, 1

// kernel: forward.19
$region0: #{forward.19}
  #allocation0 [shape = 'u32[]', space=smem, size = 0x4, offset = 0x4, fixed_abs, tag = 'smem constant byte address 0x4 - core index']
  #allocation1 [shape = 'u32[144,128]{1,0:T(1,128)}', space=vmem, size = 0x12000, scoped, tag = 'internal scratch']
  %s0 = inlined_call_operand.vmem [shape: f32[2], index: 0, kind: input, shape index: {}]
  %s1 = inlined_call_operand.vmem [shape: f32[2,512,16], index: 1, kind: input, shape index: {}]
  %s2 = inlined_call_operand.vmem [shape: f32[16,4], index: 2, kind: input, shape index: {}]
  %s3 = inlined_call_operand.vmem [shape: f32[2,1,4], index: 3, kind: input, shape index: {}]
  %s4 = inlined_call_operand.vmem [shape: f32[2,1,4], index: 4, kind: input, shape index: {}]
  %s5 = inlined_call_operand.vmem [shape: f32[4,1], index: 5, kind: input, shape index: {}]
  %s6 = inlined_call_operand.vmem [shape: f32[2,1,1], index: 6, kind: input, shape index: {}]
  %s7 = inlined_call_operand.vmem [shape: f32[2,1,1], index: 7, kind: input, shape index: {}]
  %s8 = inlined_call_operand.vmem [shape: f32[2,512,1], index: 8, kind: output, shape index: {}]
  %s9 = sld [smem:[#allocation0]]
  $region69: #{forward.19} parent=0
    _
  %s11 = ssub.s32 1, %s9
  %s12 = scalar_select 0, %s11, %s9
  $region1: #{forward.19} parent=0
    #allocation2 [shape = 'u8[512]{0}', space=smem, size = 0x200, scoped, tag = 'input window, operand 0, single buffered']
    #allocation3 [shape = 's32[2]{0}', space=sflag, size = 0x8, scoped, tag = 'scoped memory for forward.19']
    %13 = vsyncpa [#allocation3], 0
    loop: start=0, step=1, limit=4
    $region2: #{forward.19} parent=1 // loop_pre_header
      _
    $region3: #{forward.19} parent=1 // loop_header
      %s15 = sphi 0, %s19
      %p16 = scmp.ge.s32.totalorder %s15, 4
      %s23 = sphi 0, %s23
      %s25 = sphi 0, %s23
      %s26 = sphi 0, %s25
      %s40 = sphi 0, %s26
      %s46 = sphi 0, %s48
      %s49 = sphi 0, %s46
      %s50 = sphi 0, %s49
      %s66 = sphi 0, %s50
      %s70 = sphi 0, %s70
      %s72 = sphi 0, %s70
      %s73 = sphi 0, %s72
      %s87 = sphi 0, %s73
      %s93 = sphi 0, %s95
      %s96 = sphi 0, %s93
      %s97 = sphi 0, %s96
      %s113 = sphi 0, %s97
      %s119 = sphi 0, %s121
      %s122 = sphi 0, %s119
      %s123 = sphi 0, %s122
      %s139 = sphi 0, %s123
      %s143 = sphi 0, %s143
      %s145 = sphi 0, %s143
      %s146 = sphi 0, %s145
      %s160 = sphi 0, %s146
      %s166 = sphi 0, %s168
      %s169 = sphi 0, %s166
      %s170 = sphi 0, %s169
      %s186 = sphi 0, %s170
      %s192 = sphi 0, %s194
      %s195 = sphi 0, %s192
      %s196 = sphi 0, %s195
      %s212 = sphi 0, %s196
      %s218 = sphi 0, %s220
      %s221 = sphi 0, %s218
      %s222 = sphi 0, %s221
      %s238 = sphi 0, %s222
    $region4: #{forward.19} parent=1 // loop_header_branch
      %18 = sbr.rel (%p16) target = $region8
    $region5: #{forward.19} parent=1 // loop_body
      %s20 = ssub.s32 %s15, 1
      %s21 = ssub.s32 %s15, 2
      %s22 = sadd.s32 %s15, 1
      %s24 = sadd.s32 %s23, 1
      %p27 = scmp.eq.s32.totalorder %s15, 1
      %p28 = scmp.ne.s32.totalorder %s23, %s25
      %p29 = scmp.eq.s32.totalorder %s15, 0
      %p30 = por %p28, %p29
      %p31 = scmp.ne.s32.totalorder %s23, %s25
      %p32 = scmp.eq.s32.totalorder %s20, 1
      %p33 = por %p31, %p32
      %p34 = scmp.ne.s32.totalorder %s25, %s26
      %p35 = scmp.eq.s32.totalorder %s20, 0
      %p36 = por %p34, %p35
      %p37 = scmp.ne.s32.totalorder %s25, %s26
      %p38 = scmp.eq.s32.totalorder %s21, 1
      %p39 = por %p37, %p38
      %p41 = scmp.ne.s32.totalorder %s26, %s40
      %p42 = scmp.eq.s32.totalorder %s21, 0
      %p43 = por %p41, %p42
      %s44 = ssub.s32 %s15, %s22
      %p45 = scmp.eq.s32.totalorder %s44, 0
      %s47 = sadd.s32 %s46, 1
      %s48 = scalar_select %p45, %s46, %s47
      %p51 = pneg %p45
      %p52 = scmp.eq.s32.totalorder %s15, 1
      %p53 = por %p51, %p52
      %p54 = scmp.ne.s32.totalorder %s46, %s49
      %p55 = scmp.eq.s32.totalorder %s15, 0
      %p56 = por %p54, %p55
      %p57 = scmp.ne.s32.totalorder %s46, %s49
      %p58 = scmp.eq.s32.totalorder %s20, 1
      %p59 = por %p57, %p58
      %p60 = scmp.ne.s32.totalorder %s49, %s50
      %p61 = scmp.eq.s32.totalorder %s20, 0
      %p62 = por %p60, %p61
      %p63 = scmp.ne.s32.totalorder %s49, %s50
      %p64 = scmp.eq.s32.totalorder %s21, 1
      %p65 = por %p63, %p64
      %p67 = scmp.ne.s32.totalorder %s50, %s66
      %p68 = scmp.eq.s32.totalorder %s21, 0
      %p69 = por %p67, %p68
      %s71 = sadd.s32 %s70, 1
      %p74 = scmp.eq.s32.totalorder %s15, 1
      %p75 = scmp.ne.s32.totalorder %s70, %s72
      %p76 = scmp.eq.s32.totalorder %s15, 0
      %p77 = por %p75, %p76
      %p78 = scmp.ne.s32.totalorder %s70, %s72
      %p79 = scmp.eq.s32.totalorder %s20, 1
      %p80 = por %p78, %p79
      %p81 = scmp.ne.s32.totalorder %s72, %s73
      %p82 = scmp.eq.s32.totalorder %s20, 0
      %p83 = por %p81, %p82
      %p84 = scmp.ne.s32.totalorder %s72, %s73
      %p85 = scmp.eq.s32.totalorder %s21, 1
      %p86 = por %p84, %p85
      %p88 = scmp.ne.s32.totalorder %s73, %s87
      %p89 = scmp.eq.s32.totalorder %s21, 0
      %p90 = por %p88, %p89
      %s91 = ssub.s32 %s15, %s22
      %p92 = scmp.eq.s32.totalorder %s91, 0
      %s94 = sadd.s32 %s93, 1
      %s95 = scalar_select %p92, %s93, %s94
      %p98 = pneg %p92
      %p99 = scmp.eq.s32.totalorder %s15, 1
      %p100 = por %p98, %p99
      %p101 = scmp.ne.s32.totalorder %s93, %s96
      %p102 = scmp.eq.s32.totalorder %s15, 0
      %p103 = por %p101, %p102
      %p104 = scmp.ne.s32.totalorder %s93, %s96
      %p105 = scmp.eq.s32.totalorder %s20, 1
      %p106 = por %p104, %p105
      %p107 = scmp.ne.s32.totalorder %s96, %s97
      %p108 = scmp.eq.s32.totalorder %s20, 0
      %p109 = por %p107, %p108
      %p110 = scmp.ne.s32.totalorder %s96, %s97
      %p111 = scmp.eq.s32.totalorder %s21, 1
      %p112 = por %p110, %p111
      %p114 = scmp.ne.s32.totalorder %s97, %s113
      %p115 = scmp.eq.s32.totalorder %s21, 0
      %p116 = por %p114, %p115
      %s117 = ssub.s32 %s15, %s22
      %p118 = scmp.eq.s32.totalorder %s117, 0
      %s120 = sadd.s32 %s119, 1
      %s121 = scalar_select %p118, %s119, %s120
      %p124 = pneg %p118
      %p125 = scmp.eq.s32.totalorder %s15, 1
      %p126 = por %p124, %p125
      %p127 = scmp.ne.s32.totalorder %s119, %s122
      %p128 = scmp.eq.s32.totalorder %s15, 0
      %p129 = por %p127, %p128
      %p130 = scmp.ne.s32.totalorder %s119, %s122
      %p131 = scmp.eq.s32.totalorder %s20, 1
      %p132 = por %p130, %p131
      %p133 = scmp.ne.s32.totalorder %s122, %s123
      %p134 = scmp.eq.s32.totalorder %s20, 0
      %p135 = por %p133, %p134
      %p136 = scmp.ne.s32.totalorder %s122, %s123
      %p137 = scmp.eq.s32.totalorder %s21, 1
      %p138 = por %p136, %p137
      %p140 = scmp.ne.s32.totalorder %s123, %s139
      %p141 = scmp.eq.s32.totalorder %s21, 0
      %p142 = por %p140, %p141
      %s144 = sadd.s32 %s143, 1
      %p147 = scmp.eq.s32.totalorder %s15, 1
      %p148 = scmp.ne.s32.totalorder %s143, %s145
      %p149 = scmp.eq.s32.totalorder %s15, 0
      %p150 = por %p148, %p149
      %p151 = scmp.ne.s32.totalorder %s143, %s145
      %p152 = scmp.eq.s32.totalorder %s20, 1
      %p153 = por %p151, %p152
      %p154 = scmp.ne.s32.totalorder %s145, %s146
      %p155 = scmp.eq.s32.totalorder %s20, 0
      %p156 = por %p154, %p155
      %p157 = scmp.ne.s32.totalorder %s145, %s146
      %p158 = scmp.eq.s32.totalorder %s21, 1
      %p159 = por %p157, %p158
      %p161 = scmp.ne.s32.totalorder %s146, %s160
      %p162 = scmp.eq.s32.totalorder %s21, 0
      %p163 = por %p161, %p162
      %s164 = ssub.s32 %s15, %s22
      %p165 = scmp.eq.s32.totalorder %s164, 0
      %s167 = sadd.s32 %s166, 1
      %s168 = scalar_select %p165, %s166, %s167
      %p171 = pneg %p165
      %p172 = scmp.eq.s32.totalorder %s15, 1
      %p173 = por %p171, %p172
      %p174 = scmp.ne.s32.totalorder %s166, %s169
      %p175 = scmp.eq.s32.totalorder %s15, 0
      %p176 = por %p174, %p175
      %p177 = scmp.ne.s32.totalorder %s166, %s169
      %p178 = scmp.eq.s32.totalorder %s20, 1
      %p179 = por %p177, %p178
      %p180 = scmp.ne.s32.totalorder %s169, %s170
      %p181 = scmp.eq.s32.totalorder %s20, 0
      %p182 = por %p180, %p181
      %p183 = scmp.ne.s32.totalorder %s169, %s170
      %p184 = scmp.eq.s32.totalorder %s21, 1
      %p185 = por %p183, %p184
      %p187 = scmp.ne.s32.totalorder %s170, %s186
      %p188 = scmp.eq.s32.totalorder %s21, 0
      %p189 = por %p187, %p188
      %s190 = ssub.s32 %s15, %s22
      %p191 = scmp.eq.s32.totalorder %s190, 0
      %s193 = sadd.s32 %s192, 1
      %s194 = scalar_select %p191, %s192, %s193
      %p197 = pneg %p191
      %p198 = scmp.eq.s32.totalorder %s15, 1
      %p199 = por %p197, %p198
      %p200 = scmp.ne.s32.totalorder %s192, %s195
      %p201 = scmp.eq.s32.totalorder %s15, 0
      %p202 = por %p200, %p201
      %p203 = scmp.ne.s32.totalorder %s192, %s195
      %p204 = scmp.eq.s32.totalorder %s20, 1
      %p205 = por %p203, %p204
      %p206 = scmp.ne.s32.totalorder %s195, %s196
      %p207 = scmp.eq.s32.totalorder %s20, 0
      %p208 = por %p206, %p207
      %p209 = scmp.ne.s32.totalorder %s195, %s196
      %p210 = scmp.eq.s32.totalorder %s21, 1
      %p211 = por %p209, %p210
      %p213 = scmp.ne.s32.totalorder %s196, %s212
      %p214 = scmp.eq.s32.totalorder %s21, 0
      %p215 = por %p213, %p214
      %s216 = ssub.s32 %s15, %s22
      %p217 = scmp.eq.s32.totalorder %s216, 0
      %s219 = sadd.s32 %s218, 1
      %s220 = scalar_select %p217, %s218, %s219
      %p223 = pneg %p217
      %p224 = scmp.eq.s32.totalorder %s15, 1
      %p225 = por %p223, %p224
      %p226 = scmp.ne.s32.totalorder %s218, %s221
      %p227 = scmp.eq.s32.totalorder %s15, 0
      %p228 = por %p226, %p227
      %p229 = scmp.ne.s32.totalorder %s218, %s221
      %p230 = scmp.eq.s32.totalorder %s20, 1
      %p231 = por %p229, %p230
      %p232 = scmp.ne.s32.totalorder %s221, %s222
      %p233 = scmp.eq.s32.totalorder %s20, 0
      %p234 = por %p232, %p233
      %p235 = scmp.ne.s32.totalorder %s221, %s222
      %p236 = scmp.eq.s32.totalorder %s21, 1
      %p237 = por %p235, %p236
      %p239 = scmp.ne.s32.totalorder %s222, %s238
      %p240 = scmp.eq.s32.totalorder %s21, 0
      %p241 = por %p239, %p240
      %p242 = scmp.le.s32.totalorder 1, %s15
      %p243 = scmp.lt.s32.totalorder %s15, 3
      %p244 = pnand %p242, %p243
      %p245 = pneg %p244
      // Predicated region
      $region9: #{forward.19} parent=5 // pred_check
        _
      $region10: #{forward.19} parent=5 // pred_check_branch
        %247 = sbr.rel (%p244) target = $region12
      $region11: #{forward.19} parent=5 // pred_region
        %s248 = ssub.s32 %s15, 1
        // Predicated region
        $region13: #{forward.19} parent=11 // pred_check
          %p249 = pneg %p36
        $region14: #{forward.19} parent=11 // pred_check_branch
          %251 = sbr.rel (%p249) target = $region16
        $region15: #{forward.19} parent=11 // pred_region
          %s253 = ssub.s32 16, 16
          %254 = vsyncadd [#allocation3], %s253
          %s256 = sshll.u32 %s0, 4
          %s257 = int_to_ptr.vmem [resolvable:$true] %s256
          %259 = dma.vmem_to_smem %s257, 16, [#allocation2], [#allocation3]
        $region16: #{forward.19} parent=11 // pred_fallthru
          _
        // Predicated region
        $region17: #{forward.19} parent=11 // pred_check
          %p260 = pneg %p83
        $region18: #{forward.19} parent=11 // pred_check_branch
          %262 = sbr.rel (%p260) target = $region20
        $region19: #{forward.19} parent=11 // pred_region
          _
        $region20: #{forward.19} parent=11 // pred_fallthru
          _
        // Predicated region
        $region21: #{forward.19} parent=11 // pred_check
          %p263 = pneg %p156
        $region22: #{forward.19} parent=11 // pred_check_branch
          %265 = sbr.rel (%p263) target = $region24
        $region23: #{forward.19} parent=11 // pred_region
          _
        $region24: #{forward.19} parent=11 // pred_fallthru
          _
      $region12: #{forward.19} parent=5 // pred_fallthru
        _
      %p266 = scmp.lt.s32.totalorder %s15, 2
      // Predicated region
      $region25: #{forward.19} parent=5 // pred_check
        %p267 = pneg %p266
      $region26: #{forward.19} parent=5 // pred_check_branch
        %269 = sbr.rel (%p267) target = $region28
      $region27: #{forward.19} parent=5 // pred_region
        // Predicated region
        $region29: #{forward.19} parent=27 // pred_check
          %p270 = pneg %p56
        $region30: #{forward.19} parent=27 // pred_check_branch
          %272 = sbr.rel (%p270) target = $region32
        $region31: #{forward.19} parent=27 // pred_region
          %p273 = scmp.lt.s32.totalorder %s15, 1
          %s274 = scalar_select %p273, %s15, 1
          %s275 = smul.addr %s274, 64
          %s276 = smul.addr %s275, 8
          %s277 = scalar_lea.vmem %s1, %s276
        $region32: #{forward.19} parent=27 // pred_fallthru
          _
        // Predicated region
        $region33: #{forward.19} parent=27 // pred_check
          %p278 = pneg %p103
        $region34: #{forward.19} parent=27 // pred_check_branch
          %280 = sbr.rel (%p278) target = $region36
        $region35: #{forward.19} parent=27 // pred_region
          %p281 = scmp.lt.s32.totalorder %s15, 1
          %s282 = scalar_select %p281, %s15, 1
          %s283 = scalar_lea.vmem %s3, %s282
        $region36: #{forward.19} parent=27 // pred_fallthru
          _
        // Predicated region
        $region37: #{forward.19} parent=27 // pred_check
          %p284 = pneg %p129
        $region38: #{forward.19} parent=27 // pred_check_branch
          %286 = sbr.rel (%p284) target = $region40
        $region39: #{forward.19} parent=27 // pred_region
          %p287 = scmp.lt.s32.totalorder %s15, 1
          %s288 = scalar_select %p287, %s15, 1
          %s289 = scalar_lea.vmem %s4, %s288
        $region40: #{forward.19} parent=27 // pred_fallthru
          _
        // Predicated region
        $region41: #{forward.19} parent=27 // pred_check
          %p290 = pneg %p176
        $region42: #{forward.19} parent=27 // pred_check_branch
          %292 = sbr.rel (%p290) target = $region44
        $region43: #{forward.19} parent=27 // pred_region
          %p293 = scmp.lt.s32.totalorder %s15, 1
          %s294 = scalar_select %p293, %s15, 1
          %s295 = scalar_lea.vmem %s6, %s294
        $region44: #{forward.19} parent=27 // pred_fallthru
          _
        // Predicated region
        $region45: #{forward.19} parent=27 // pred_check
          %p296 = pneg %p202
        $region46: #{forward.19} parent=27 // pred_check_branch
          %298 = sbr.rel (%p296) target = $region48
        $region47: #{forward.19} parent=27 // pred_region
          %p299 = scmp.lt.s32.totalorder %s15, 1
          %s300 = scalar_select %p299, %s15, 1
          %s301 = scalar_lea.vmem %s7, %s300
        $region48: #{forward.19} parent=27 // pred_fallthru
          _
      $region28: #{forward.19} parent=5 // pred_fallthru
        _
      %p302 = scmp.le.s32.totalorder 1, %s15
      %p303 = scmp.lt.s32.totalorder %s15, 3
      %p304 = pnand %p302, %p303
      %p305 = pneg %p304
      // Predicated region
      $region49: #{forward.19} parent=5 // pred_check
        _
      $region50: #{forward.19} parent=5 // pred_check_branch
        %307 = sbr.rel (%p304) target = $region52
      $region51: #{forward.19} parent=5 // pred_region
        %s308 = ssub.s32 %s15, 1
        // Predicated region
        $region53: #{forward.19} parent=51 // pred_check
          %p309 = pneg %p36
        $region54: #{forward.19} parent=51 // pred_check_branch
          %311 = sbr.rel (%p309) target = $region56
        $region55: #{forward.19} parent=51 // pred_region
          %312 = dma.done [#allocation3], 16
        $region56: #{forward.19} parent=51 // pred_fallthru
          _
        %313 = sfence
        %p314 = pneg %p36
        %p315 = pneg %p33
        %p316 = scmp.lt.s32.totalorder %s20, 1
        %s317 = scalar_select %p316, %s20, 1
        %s318 = smul.addr %s317, 64
        %s319 = smul.addr %s318, 8
        %s320 = scalar_lea.vmem %s1, %s319
        %p321 = pneg %p62
        %p322 = pneg %p59
        %p323 = pneg %p83
        %p324 = pneg %p80
        %p325 = scmp.lt.s32.totalorder %s20, 1
        %s326 = scalar_select %p325, %s20, 1
        %s327 = scalar_lea.vmem %s3, %s326
        %p328 = pneg %p109
        %p329 = pneg %p106
        %p330 = scmp.lt.s32.totalorder %s20, 1
        %s331 = scalar_select %p330, %s20, 1
        %s332 = scalar_lea.vmem %s4, %s331
        %p333 = pneg %p135
        %p334 = pneg %p132
        %p335 = pneg %p156
        %p336 = pneg %p153
        %p337 = scmp.lt.s32.totalorder %s20, 1
        %s338 = scalar_select %p337, %s20, 1
        %s339 = scalar_lea.vmem %s6, %s338
        %p340 = pneg %p182
        %p341 = pneg %p179
        %p342 = scmp.lt.s32.totalorder %s20, 1
        %s343 = scalar_select %p342, %s20, 1
        %s344 = scalar_lea.vmem %s7, %s343
        %p345 = pneg %p208
        %p346 = pneg %p205
        %p347 = pneg %p234
        %p348 = pneg %p231
        %p349 = scmp.lt.s32.totalorder %s20, 1
        %s350 = scalar_select %p349, %s20, 1
        %s351 = smul.addr %s350, 64
        %s352 = smul.addr %s351, 8
        %s353 = scalar_lea.vmem %s8, %s352
        %p354 = scmp.lt.s32.totalorder %s20, 1
        %s355 = scalar_select %p354, %s20, 1
        %s356 = smul.addr %s355, 64
        %s357 = smul.addr %s356, 8
        %s358 = scalar_lea.vmem %s1, %s357
        %p359 = scmp.lt.s32.totalorder %s20, 1
        %s360 = scalar_select %p359, %s20, 1
        %s361 = scalar_lea.vmem %s3, %s360
        %p362 = scmp.lt.s32.totalorder %s20, 1
        %s363 = scalar_select %p362, %s20, 1
        %s364 = scalar_lea.vmem %s4, %s363
        %p365 = scmp.lt.s32.totalorder %s20, 1
        %s366 = scalar_select %p365, %s20, 1
        %s367 = scalar_lea.vmem %s6, %s366
        %p368 = scmp.lt.s32.totalorder %s20, 1
        %s369 = scalar_select %p368, %s20, 1
        %s370 = scalar_lea.vmem %s7, %s369
        %p371 = scmp.lt.s32.totalorder %s20, 1
        %s372 = scalar_select %p371, %s20, 1
        %s373 = smul.addr %s372, 64
        %s374 = smul.addr %s373, 8
        %s375 = scalar_lea.vmem %s8, %s374
        %v376 = vld [vmem:[%s358] sm:$0xff]
        %v377 = vld [vmem:[%s358 + $0x8] sm:$0xff]
        %v378 = vld [vmem:[%s358 + $0x10] sm:$0xff]
        %v379 = vld [vmem:[%s358 + $0x18] sm:$0xff]
        %v380 = vld [vmem:[%s358 + $0x20] sm:$0xff]
        %v381 = vld [vmem:[%s358 + $0x28] sm:$0xff]
        %v382 = vld [vmem:[%s358 + $0x30] sm:$0xff]
        %v383 = vld [vmem:[%s358 + $0x38] sm:$0xff]
        %v384 = vld [vmem:[%s358 + $0x40] sm:$0xff]
        %v385 = vld [vmem:[%s358 + $0x48] sm:$0xff]
        %v386 = vld [vmem:[%s358 + $0x50] sm:$0xff]
        %v387 = vld [vmem:[%s358 + $0x58] sm:$0xff]
        %v388 = vld [vmem:[%s358 + $0x60] sm:$0xff]
        %v389 = vld [vmem:[%s358 + $0x68] sm:$0xff]
        %v390 = vld [vmem:[%s358 + $0x70] sm:$0xff]
        %v391 = vld [vmem:[%s358 + $0x78] sm:$0xff]
        %v392 = vld [vmem:[%s358 + $0x80] sm:$0xff]
        %v393 = vld [vmem:[%s358 + $0x88] sm:$0xff]
        %v394 = vld [vmem:[%s358 + $0x90] sm:$0xff]
        %v395 = vld [vmem:[%s358 + $0x98] sm:$0xff]
        %v396 = vld [vmem:[%s358 + $0xa0] sm:$0xff]
        %v397 = vld [vmem:[%s358 + $0xa8] sm:$0xff]
        %v398 = vld [vmem:[%s358 + $0xb0] sm:$0xff]
        %v399 = vld [vmem:[%s358 + $0xb8] sm:$0xff]
        %v400 = vld [vmem:[%s358 + $0xc0] sm:$0xff]
        %v401 = vld [vmem:[%s358 + $0xc8] sm:$0xff]
        %v402 = vld [vmem:[%s358 + $0xd0] sm:$0xff]
        %v403 = vld [vmem:[%s358 + $0xd8] sm:$0xff]
        %v404 = vld [vmem:[%s358 + $0xe0] sm:$0xff]
        %v405 = vld [vmem:[%s358 + $0xe8] sm:$0xff]
        %v406 = vld [vmem:[%s358 + $0xf0] sm:$0xff]
        %v407 = vld [vmem:[%s358 + $0xf8] sm:$0xff]
        %v408 = vld [vmem:[%s358 + $0x100] sm:$0xff]
        %v409 = vld [vmem:[%s358 + $0x108] sm:$0xff]
        %v410 = vld [vmem:[%s358 + $0x110] sm:$0xff]
        %v411 = vld [vmem:[%s358 + $0x118] sm:$0xff]
        %v412 = vld [vmem:[%s358 + $0x120] sm:$0xff]
        %v413 = vld [vmem:[%s358 + $0x128] sm:$0xff]
        %v414 = vld [vmem:[%s358 + $0x130] sm:$0xff]
        %v415 = vld [vmem:[%s358 + $0x138] sm:$0xff]
        %v416 = vld [vmem:[%s358 + $0x140] sm:$0xff]
        %v417 = vld [vmem:[%s358 + $0x148] sm:$0xff]
        %v418 = vld [vmem:[%s358 + $0x150] sm:$0xff]
        %v419 = vld [vmem:[%s358 + $0x158] sm:$0xff]
        %v420 = vld [vmem:[%s358 + $0x160] sm:$0xff]
        %v421 = vld [vmem:[%s358 + $0x168] sm:$0xff]
        %v422 = vld [vmem:[%s358 + $0x170] sm:$0xff]
        %v423 = vld [vmem:[%s358 + $0x178] sm:$0xff]
        %v424 = vld [vmem:[%s358 + $0x180] sm:$0xff]
        %v425 = vld [vmem:[%s358 + $0x188] sm:$0xff]
        %v426 = vld [vmem:[%s358 + $0x190] sm:$0xff]
        %v427 = vld [vmem:[%s358 + $0x198] sm:$0xff]
        %v428 = vld [vmem:[%s358 + $0x1a0] sm:$0xff]
        %v429 = vld [vmem:[%s358 + $0x1a8] sm:$0xff]
        %v430 = vld [vmem:[%s358 + $0x1b0] sm:$0xff]
        %v431 = vld [vmem:[%s358 + $0x1b8] sm:$0xff]
        %v432 = vld [vmem:[%s358 + $0x1c0] sm:$0xff]
        %v433 = vld [vmem:[%s358 + $0x1c8] sm:$0xff]
        %v434 = vld [vmem:[%s358 + $0x1d0] sm:$0xff]
        %v435 = vld [vmem:[%s358 + $0x1d8] sm:$0xff]
        %v436 = vld [vmem:[%s358 + $0x1e0] sm:$0xff]
        %v437 = vld [vmem:[%s358 + $0x1e8] sm:$0xff]
        %v438 = vld [vmem:[%s358 + $0x1f0] sm:$0xff]
        %v439 = vld [vmem:[%s358 + $0x1f8] sm:$0xff]
        %v440 = vld [vmem:[%s2] sm:$0xff]
        %v441 = vld [vmem:[%s2 + $0x8] sm:$0xff]
        %vm442 = vcmask 130048
        %v444 = vsel %vm442, %v376, 0
        %v447 = vsel %vm442, %v377, 0
        %v450 = vsel %vm442, %v378, 0
        %v453 = vsel %vm442, %v379, 0
        %v456 = vsel %vm442, %v380, 0
        %v459 = vsel %vm442, %v381, 0
        %v462 = vsel %vm442, %v382, 0
        %v465 = vsel %vm442, %v383, 0
        %v468 = vsel %vm442, %v384, 0
        %v471 = vsel %vm442, %v385, 0
        %v474 = vsel %vm442, %v386, 0
        %v477 = vsel %vm442, %v387, 0
        %v480 = vsel %vm442, %v388, 0
        %v483 = vsel %vm442, %v389, 0
        %v486 = vsel %vm442, %v390, 0
        %v489 = vsel %vm442, %v391, 0
        %v492 = vsel %vm442, %v392, 0
        %v495 = vsel %vm442, %v393, 0
        %v498 = vsel %vm442, %v394, 0
        %v501 = vsel %vm442, %v395, 0
        %v504 = vsel %vm442, %v396, 0
        %v507 = vsel %vm442, %v397, 0
        %v510 = vsel %vm442, %v398, 0
        %v513 = vsel %vm442, %v399, 0
        %v516 = vsel %vm442, %v400, 0
        %v519 = vsel %vm442, %v401, 0
        %v522 = vsel %vm442, %v402, 0
        %v525 = vsel %vm442, %v403, 0
        %v528 = vsel %vm442, %v404, 0
        %v531 = vsel %vm442, %v405, 0
        %v534 = vsel %vm442, %v406, 0
        %v537 = vsel %vm442, %v407, 0
        %v540 = vsel %vm442, %v408, 0
        %v543 = vsel %vm442, %v409, 0
        %v546 = vsel %vm442, %v410, 0
        %v549 = vsel %vm442, %v411, 0
        %v552 = vsel %vm442, %v412, 0
        %v555 = vsel %vm442, %v413, 0
        %v558 = vsel %vm442, %v414, 0
        %v561 = vsel %vm442, %v415, 0
        %v564 = vsel %vm442, %v416, 0
        %v567 = vsel %vm442, %v417, 0
        %v570 = vsel %vm442, %v418, 0
        %v573 = vsel %vm442, %v419, 0
        %v576 = vsel %vm442, %v420, 0
        %v579 = vsel %vm442, %v421, 0
        %v582 = vsel %vm442, %v422, 0
        %v585 = vsel %vm442, %v423, 0
        %v588 = vsel %vm442, %v424, 0
        %v591 = vsel %vm442, %v425, 0
        %v594 = vsel %vm442, %v426, 0
        %v597 = vsel %vm442, %v427, 0
        %v600 = vsel %vm442, %v428, 0
        %v603 = vsel %vm442, %v429, 0
        %v606 = vsel %vm442, %v430, 0
        %v609 = vsel %vm442, %v431, 0
        %v612 = vsel %vm442, %v432, 0
        %v615 = vsel %vm442, %v433, 0
        %v618 = vsel %vm442, %v434, 0
        %v621 = vsel %vm442, %v435, 0
        %v624 = vsel %vm442, %v436, 0
        %v627 = vsel %vm442, %v437, 0
        %v630 = vsel %vm442, %v438, 0
        %v633 = vsel %vm442, %v439, 0
        %635 = vmatprep.subr.mxu0 0.0
        %636 = vmatpush1.msra.mxu0 %v440
        %637 = vmatprep.subr.mxu0 0.0
        %638 = vmatpush1.msra.mxu0 %v441
        %639 = vmatprep.subr.mxu0 0.0
        %640 = vmatpush1.msra.mxu0 0.0
        %641 = vmatprep.subr.mxu0 0.0
        %642 = vmatpush1.msra.mxu0 0.0
        %643 = vmatprep.subr.mxu0 0.0
        %644 = vmatpush1.msra.mxu0 0.0
        %645 = vmatprep.subr.mxu0 0.0
        %646 = vmatpush1.msra.mxu0 0.0
        %647 = vmatprep.subr.mxu0 0.0
        %648 = vmatpush1.msra.mxu0 0.0
        %649 = vmatprep.subr.mxu0 0.0
        %650 = vmatpush1.msra.mxu0 0.0
        %651 = vmatprep.subr.mxu0 0.0
        %652 = vmatpush1.msra.mxu0 0.0
        %653 = vmatprep.subr.mxu0 0.0
        %654 = vmatpush1.msra.mxu0 0.0
        %655 = vmatprep.subr.mxu0 0.0
        %656 = vmatpush1.msra.mxu0 0.0
        %657 = vmatprep.subr.mxu0 0.0
        %658 = vmatpush1.msra.mxu0 0.0
        %659 = vmatprep.subr.mxu0 0.0
        %660 = vmatpush1.msra.mxu0 0.0
        %661 = vmatprep.subr.mxu0 0.0
        %662 = vmatpush1.msra.mxu0 0.0
        %663 = vmatprep.subr.mxu0 0.0
        %664 = vmatpush1.msra.mxu0 0.0
        %665 = vmatprep.subr.mxu0 0.0
        %666 = vmatpush1.msra.mxu0 0.0
        %667 = vmatprep.subr.mxu0 0.0
        %668 = vmatpush1.msra.mxu0 0.0
        %669 = vmatprep.subr.mxu0 0.0
        %670 = vmatpush1.msra.mxu0 0.0
        %671 = vmatprep.subr.mxu0 0.0
        %672 = vmatpush1.msra.mxu0 0.0
        %673 = vmatprep.subr.mxu0 0.0
        %674 = vmatpush1.msra.mxu0 0.0
        %675 = vmatprep.subr.mxu0 0.0
        %676 = vmatpush1.msra.mxu0 0.0
        %677 = vmatprep.subr.mxu0 0.0
        %678 = vmatpush1.msra.mxu0 0.0
        %679 = vmatprep.subr.mxu0 0.0
        %680 = vmatpush1.msra.mxu0 0.0
        %681 = vmatprep.subr.mxu0 0.0
        %682 = vmatpush1.msra.mxu0 0.0
        %683 = vmatprep.subr.mxu0 0.0
        %684 = vmatpush1.msra.mxu0 0.0
        %685 = vmatprep.subr.mxu0 0.0
        %686 = vmatpush1.msra.mxu0 0.0
        %687 = vmatprep.subr.mxu0 0.0
        %688 = vmatpush1.msra.mxu0 0.0
        %689 = vmatprep.subr.mxu0 0.0
        %690 = vmatpush1.msra.mxu0 0.0
        %691 = vmatprep.subr.mxu0 0.0
        %692 = vmatpush1.msra.mxu0 0.0
        %693 = vmatprep.subr.mxu0 0.0
        %694 = vmatpush1.msra.mxu0 0.0
        %695 = vmatprep.subr.mxu0 0.0
        %696 = vmatpush1.msra.mxu0 0.0
        %697 = vmatprep.subr.mxu0 0.0
        %698 = vmatpush1.msra.mxu0 0.0
        %699 = vmatprep.mubr.f32.mxu0 0.0
        %700 = vmatmul.mubr.f32.gmra.mrb[0].mxu0 %v444
        %v701 = vpop.f32.mrb[0].mxu0
        %v702 = vadd.f32 0.0, %v701
        %v703 = vpop.f32.mrb[0].mxu0
        %704 = vmatprep.mubr.f32.mxu0 0.0
        %705 = vmatmul.mubr.f32.gmra.mrb[0].mxu0 %v447
        %v706 = vpop.f32.mrb[0].mxu0
        %v707 = vadd.f32 0.0, %v706
        %v708 = vpop.f32.mrb[0].mxu0
        %709 = vmatprep.mubr.f32.mxu0 0.0
        %710 = vmatmul.mubr.f32.gmra.mrb[0].mxu0 %v450
        %v711 = vpop.f32.mrb[0].mxu0
        %v712 = vadd.f32 0.0, %v711
        %v713 = vpop.f32.mrb[0].mxu0
        %714 = vmatprep.mubr.f32.mxu0 0.0
        %715 = vmatmul.mubr.f32.gmra.mrb[0].mxu0 %v453
        %v716 = vpop.f32.mrb[0].mxu0
        %v717 = vadd.f32 0.0, %v716
        %v718 = vpop.f32.mrb[0].mxu0
        %719 = vmatprep.mubr.f32.mxu0 0.0
        %720 = vmatmul.mubr.f32.gmra.mrb[0].mxu0 %v456
        %v721 = vpop.f32.mrb[0].mxu0
        %v722 = vadd.f32 0.0, %v721
        %v723 = vpop.f32.mrb[0].mxu0
        %724 = vmatprep.mubr.f32.mxu0 0.0
        %725 = vmatmul.mubr.f32.gmra.mrb[0].mxu0 %v459
        %v726 = vpop.f32.mrb[0].mxu0
        %v727 = vadd.f32 0.0, %v726
        %v728 = vpop.f32.mrb[0].mxu0
        %729 = vmatprep.mubr.f32.mxu0 0.0
        %730 = vmatmul.mubr.f32.gmra.mrb[0].mxu0 %v462
        %v731 = vpop.f32.mrb[0].mxu0
        %v732 = vadd.f32 0.0, %v731
        %v733 = vpop.f32.mrb[0].mxu0
        %734 = vmatprep.mubr.f32.mxu0 0.0
        %735 = vmatmul.mubr.f32.gmra.mrb[0].mxu0 %v465
        %v736 = vpop.f32.mrb[0].mxu0
        %v737 = vadd.f32 0.0, %v736
        %v738 = vpop.f32.mrb[0].mxu0
        %739 = vmatprep.mubr.f32.mxu0 0.0
        %740 = vmatmul.mubr.f32.gmra.mrb[0].mxu0 %v468
        %v741 = vpop.f32.mrb[0].mxu0
        %v742 = vadd.f32 0.0, %v741
        %v743 = vpop.f32.mrb[0].mxu0
        %744 = vmatprep.mubr.f32.mxu0 0.0
        %745 = vmatmul.mubr.f32.gmra.mrb[0].mxu0 %v471
        %v746 = vpop.f32.mrb[0].mxu0
        %v747 = vadd.f32 0.0, %v746
        %v748 = vpop.f32.mrb[0].mxu0
        %749 = vmatprep.mubr.f32.mxu0 0.0
        %750 = vmatmul.mubr.f32.gmra.mrb[0].mxu0 %v474
        %v751 = vpop.f32.mrb[0].mxu0
        %v752 = vadd.f32 0.0, %v751
        %v753 = vpop.f32.mrb[0].mxu0
        %754 = vmatprep.mubr.f32.mxu0 0.0
        %755 = vmatmul.mubr.f32.gmra.mrb[0].mxu0 %v477
        %v756 = vpop.f32.mrb[0].mxu0
        %v757 = vadd.f32 0.0, %v756
        %v758 = vpop.f32.mrb[0].mxu0
        %759 = vmatprep.mubr.f32.mxu0 0.0
        %760 = vmatmul.mubr.f32.gmra.mrb[0].mxu0 %v480
        %v761 = vpop.f32.mrb[0].mxu0
        %v762 = vadd.f32 0.0, %v761
        %v763 = vpop.f32.mrb[0].mxu0
        %764 = vmatprep.mubr.f32.mxu0 0.0
        %765 = vmatmul.mubr.f32.gmra.mrb[0].mxu0 %v483
        %v766 = vpop.f32.mrb[0].mxu0
        %v767 = vadd.f32 0.0, %v766
        %v768 = vpop.f32.mrb[0].mxu0
        %769 = vmatprep.mubr.f32.mxu0 0.0
        %770 = vmatmul.mubr.f32.gmra.mrb[0].mxu0 %v486
        %v771 = vpop.f32.mrb[0].mxu0
        %v772 = vadd.f32 0.0, %v771
        %v773 = vpop.f32.mrb[0].mxu0
        %774 = vmatprep.mubr.f32.mxu0 0.0
        %775 = vmatmul.mubr.f32.gmra.mrb[0].mxu0 %v489
        %v776 = vpop.f32.mrb[0].mxu0
        %v777 = vadd.f32 0.0, %v776
        %v778 = vpop.f32.mrb[0].mxu0
        %779 = vmatprep.mubr.f32.mxu0 0.0
        %780 = vmatmul.mubr.f32.gmra.mrb[0].mxu0 %v492
        %v781 = vpop.f32.mrb[0].mxu0
        %v782 = vadd.f32 0.0, %v781
        %v783 = vpop.f32.mrb[0].mxu0
        %784 = vmatprep.mubr.f32.mxu0 0.0
        %785 = vmatmul.mubr.f32.gmra.mrb[0].mxu0 %v495
        %v786 = vpop.f32.mrb[0].mxu0
        %v787 = vadd.f32 0.0, %v786
        %v788 = vpop.f32.mrb[0].mxu0
        %789 = vmatprep.mubr.f32.mxu0 0.0
        %790 = vmatmul.mubr.f32.gmra.mrb[0].mxu0 %v498
        %v791 = vpop.f32.mrb[0].mxu0
        %v792 = vadd.f32 0.0, %v791
        %v793 = vpop.f32.mrb[0].mxu0
        %794 = vmatprep.mubr.f32.mxu0 0.0
        %795 = vmatmul.mubr.f32.gmra.mrb[0].mxu0 %v501
        %v796 = vpop.f32.mrb[0].mxu0
        %v797 = vadd.f32 0.0, %v796
        %v798 = vpop.f32.mrb[0].mxu0
        %799 = vmatprep.mubr.f32.mxu0 0.0
        %800 = vmatmul.mubr.f32.gmra.mrb[0].mxu0 %v504
        %v801 = vpop.f32.mrb[0].mxu0
        %v802 = vadd.f32 0.0, %v801
        %v803 = vpop.f32.mrb[0].mxu0
        %804 = vmatprep.mubr.f32.mxu0 0.0
        %805 = vmatmul.mubr.f32.gmra.mrb[0].mxu0 %v507
        %v806 = vpop.f32.mrb[0].mxu0
        %v807 = vadd.f32 0.0, %v806
        %v808 = vpop.f32.mrb[0].mxu0
        %809 = vmatprep.mubr.f32.mxu0 0.0
        %810 = vmatmul.mubr.f32.gmra.mrb[0].mxu0 %v510
        %v811 = vpop.f32.mrb[0].mxu0
        %v812 = vadd.f32 0.0, %v811
        %v813 = vpop.f32.mrb[0].mxu0
        %814 = vmatprep.mubr.f32.mxu0 0.0
        %815 = vmatmul.mubr.f32.gmra.mrb[0].mxu0 %v513
        %v816 = vpop.f32.mrb[0].mxu0
        %v817 = vadd.f32 0.0, %v816
        %v818 = vpop.f32.mrb[0].mxu0
        %819 = vmatprep.mubr.f32.mxu0 0.0
        %820 = vmatmul.mubr.f32.gmra.mrb[0].mxu0 %v516
        %v821 = vpop.f32.mrb[0].mxu0
        %v822 = vadd.f32 0.0, %v821
        %v823 = vpop.f32.mrb[0].mxu0
        %824 = vmatprep.mubr.f32.mxu0 0.0
        %825 = vmatmul.mubr.f32.gmra.mrb[0].mxu0 %v519
        %v826 = vpop.f32.mrb[0].mxu0
        %v827 = vadd.f32 0.0, %v826
        %v828 = vpop.f32.mrb[0].mxu0
        %829 = vmatprep.mubr.f32.mxu0 0.0
        %830 = vmatmul.mubr.f32.gmra.mrb[0].mxu0 %v522
        %v831 = vpop.f32.mrb[0].mxu0
        %v832 = vadd.f32 0.0, %v831
        %v833 = vpop.f32.mrb[0].mxu0
        %834 = vmatprep.mubr.f32.mxu0 0.0
        %835 = vmatmul.mubr.f32.gmra.mrb[0].mxu0 %v525
        %v836 = vpop.f32.mrb[0].mxu0
        %v837 = vadd.f32 0.0, %v836
        %v838 = vpop.f32.mrb[0].mxu0
        %839 = vmatprep.mubr.f32.mxu0 0.0
        %840 = vmatmul.mubr.f32.gmra.mrb[0].mxu0 %v528
        %v841 = vpop.f32.mrb[0].mxu0
        %v842 = vadd.f32 0.0, %v841
        %v843 = vpop.f32.mrb[0].mxu0
        %844 = vmatprep.mubr.f32.mxu0 0.0
        %845 = vmatmul.mubr.f32.gmra.mrb[0].mxu0 %v531
        %v846 = vpop.f32.mrb[0].mxu0
        %v847 = vadd.f32 0.0, %v846
        %v848 = vpop.f32.mrb[0].mxu0
        %849 = vmatprep.mubr.f32.mxu0 0.0
        %850 = vmatmul.mubr.f32.gmra.mrb[0].mxu0 %v534
        %v851 = vpop.f32.mrb[0].mxu0
        %v852 = vadd.f32 0.0, %v851
        %v853 = vpop.f32.mrb[0].mxu0
        %854 = vmatprep.mubr.f32.mxu0 0.0
        %855 = vmatmul.mubr.f32.gmra.mrb[0].mxu0 %v537
        %v856 = vpop.f32.mrb[0].mxu0
        %v857 = vadd.f32 0.0, %v856
        %v858 = vpop.f32.mrb[0].mxu0
        %859 = vmatprep.mubr.f32.mxu0 0.0
        %860 = vmatmul.mubr.f32.gmra.mrb[0].mxu0 %v540
        %v861 = vpop.f32.mrb[0].mxu0
        %v862 = vadd.f32 0.0, %v861
        %v863 = vpop.f32.mrb[0].mxu0
        %864 = vmatprep.mubr.f32.mxu0 0.0
        %865 = vmatmul.mubr.f32.gmra.mrb[0].mxu0 %v543
        %v866 = vpop.f32.mrb[0].mxu0
        %v867 = vadd.f32 0.0, %v866
        %v868 = vpop.f32.mrb[0].mxu0
        %869 = vmatprep.mubr.f32.mxu0 0.0
        %870 = vmatmul.mubr.f32.gmra.mrb[0].mxu0 %v546
        %v871 = vpop.f32.mrb[0].mxu0
        %v872 = vadd.f32 0.0, %v871
        %v873 = vpop.f32.mrb[0].mxu0
        %874 = vmatprep.mubr.f32.mxu0 0.0
        %875 = vmatmul.mubr.f32.gmra.mrb[0].mxu0 %v549
        %v876 = vpop.f32.mrb[0].mxu0
        %v877 = vadd.f32 0.0, %v876
        %v878 = vpop.f32.mrb[0].mxu0
        %879 = vmatprep.mubr.f32.mxu0 0.0
        %880 = vmatmul.mubr.f32.gmra.mrb[0].mxu0 %v552
        %v881 = vpop.f32.mrb[0].mxu0
        %v882 = vadd.f32 0.0, %v881
        %v883 = vpop.f32.mrb[0].mxu0
        %884 = vmatprep.mubr.f32.mxu0 0.0
        %885 = vmatmul.mubr.f32.gmra.mrb[0].mxu0 %v555
        %v886 = vpop.f32.mrb[0].mxu0
        %v887 = vadd.f32 0.0, %v886
        %v888 = vpop.f32.mrb[0].mxu0
        %889 = vmatprep.mubr.f32.mxu0 0.0
        %890 = vmatmul.mubr.f32.gmra.mrb[0].mxu0 %v558
        %v891 = vpop.f32.mrb[0].mxu0
        %v892 = vadd.f32 0.0, %v891
        %v893 = vpop.f32.mrb[0].mxu0
        %894 = vmatprep.mubr.f32.mxu0 0.0
        %895 = vmatmul.mubr.f32.gmra.mrb[0].mxu0 %v561
        %v896 = vpop.f32.mrb[0].mxu0
        %v897 = vadd.f32 0.0, %v896
        %v898 = vpop.f32.mrb[0].mxu0
        %899 = vmatprep.mubr.f32.mxu0 0.0
        %900 = vmatmul.mubr.f32.gmra.mrb[0].mxu0 %v564
        %v901 = vpop.f32.mrb[0].mxu0
        %v902 = vadd.f32 0.0, %v901
        %v903 = vpop.f32.mrb[0].mxu0
        %904 = vmatprep.mubr.f32.mxu0 0.0
        %905 = vmatmul.mubr.f32.gmra.mrb[0].mxu0 %v567
        %v906 = vpop.f32.mrb[0].mxu0
        %v907 = vadd.f32 0.0, %v906
        %v908 = vpop.f32.mrb[0].mxu0
        %909 = vmatprep.mubr.f32.mxu0 0.0
        %910 = vmatmul.mubr.f32.gmra.mrb[0].mxu0 %v570
        %v911 = vpop.f32.mrb[0].mxu0
        %v912 = vadd.f32 0.0, %v911
        %v913 = vpop.f32.mrb[0].mxu0
        %914 = vmatprep.mubr.f32.mxu0 0.0
        %915 = vmatmul.mubr.f32.gmra.mrb[0].mxu0 %v573
        %v916 = vpop.f32.mrb[0].mxu0
        %v917 = vadd.f32 0.0, %v916
        %v918 = vpop.f32.mrb[0].mxu0
        %919 = vmatprep.mubr.f32.mxu0 0.0
        %920 = vmatmul.mubr.f32.gmra.mrb[0].mxu0 %v576
        %v921 = vpop.f32.mrb[0].mxu0
        %v922 = vadd.f32 0.0, %v921
        %v923 = vpop.f32.mrb[0].mxu0
        %924 = vmatprep.mubr.f32.mxu0 0.0
        %925 = vmatmul.mubr.f32.gmra.mrb[0].mxu0 %v579
        %v926 = vpop.f32.mrb[0].mxu0
        %v927 = vadd.f32 0.0, %v926
        %v928 = vpop.f32.mrb[0].mxu0
        %929 = vmatprep.mubr.f32.mxu0 0.0
        %930 = vmatmul.mubr.f32.gmra.mrb[0].mxu0 %v582
        %v931 = vpop.f32.mrb[0].mxu0
        %v932 = vadd.f32 0.0, %v931
        %v933 = vpop.f32.mrb[0].mxu0
        %934 = vmatprep.mubr.f32.mxu0 0.0
        %935 = vmatmul.mubr.f32.gmra.mrb[0].mxu0 %v585
        %v936 = vpop.f32.mrb[0].mxu0
        %v937 = vadd.f32 0.0, %v936
        %v938 = vpop.f32.mrb[0].mxu0
        %939 = vmatprep.mubr.f32.mxu0 0.0
        %940 = vmatmul.mubr.f32.gmra.mrb[0].mxu0 %v588
        %v941 = vpop.f32.mrb[0].mxu0
        %v942 = vadd.f32 0.0, %v941
        %v943 = vpop.f32.mrb[0].mxu0
        %944 = vmatprep.mubr.f32.mxu0 0.0
        %945 = vmatmul.mubr.f32.gmra.mrb[0].mxu0 %v591
        %v946 = vpop.f32.mrb[0].mxu0
        %v947 = vadd.f32 0.0, %v946
        %v948 = vpop.f32.mrb[0].mxu0
        %949 = vmatprep.mubr.f32.mxu0 0.0
        %950 = vmatmul.mubr.f32.gmra.mrb[0].mxu0 %v594
        %v951 = vpop.f32.mrb[0].mxu0
        %v952 = vadd.f32 0.0, %v951
        %v953 = vpop.f32.mrb[0].mxu0
        %954 = vmatprep.mubr.f32.mxu0 0.0
        %955 = vmatmul.mubr.f32.gmra.mrb[0].mxu0 %v597
        %v956 = vpop.f32.mrb[0].mxu0
        %v957 = vadd.f32 0.0, %v956
        %v958 = vpop.f32.mrb[0].mxu0
        %959 = vmatprep.mubr.f32.mxu0 0.0
        %960 = vmatmul.mubr.f32.gmra.mrb[0].mxu0 %v600
        %v961 = vpop.f32.mrb[0].mxu0
        %v962 = vadd.f32 0.0, %v961
        %v963 = vpop.f32.mrb[0].mxu0
        %964 = vmatprep.mubr.f32.mxu0 0.0
        %965 = vmatmul.mubr.f32.gmra.mrb[0].mxu0 %v603
        %v966 = vpop.f32.mrb[0].mxu0
        %v967 = vadd.f32 0.0, %v966
        %v968 = vpop.f32.mrb[0].mxu0
        %969 = vmatprep.mubr.f32.mxu0 0.0
        %970 = vmatmul.mubr.f32.gmra.mrb[0].mxu0 %v606
        %v971 = vpop.f32.mrb[0].mxu0
        %v972 = vadd.f32 0.0, %v971
        %v973 = vpop.f32.mrb[0].mxu0
        %974 = vmatprep.mubr.f32.mxu0 0.0
        %975 = vmatmul.mubr.f32.gmra.mrb[0].mxu0 %v609
        %v976 = vpop.f32.mrb[0].mxu0
        %v977 = vadd.f32 0.0, %v976
        %v978 = vpop.f32.mrb[0].mxu0
        %979 = vmatprep.mubr.f32.mxu0 0.0
        %980 = vmatmul.mubr.f32.gmra.mrb[0].mxu0 %v612
        %v981 = vpop.f32.mrb[0].mxu0
        %v982 = vadd.f32 0.0, %v981
        %v983 = vpop.f32.mrb[0].mxu0
        %984 = vmatprep.mubr.f32.mxu0 0.0
        %985 = vmatmul.mubr.f32.gmra.mrb[0].mxu0 %v615
        %v986 = vpop.f32.mrb[0].mxu0
        %v987 = vadd.f32 0.0, %v986
        %v988 = vpop.f32.mrb[0].mxu0
        %989 = vmatprep.mubr.f32.mxu0 0.0
        %990 = vmatmul.mubr.f32.gmra.mrb[0].mxu0 %v618
        %v991 = vpop.f32.mrb[0].mxu0
        %v992 = vadd.f32 0.0, %v991
        %v993 = vpop.f32.mrb[0].mxu0
        %994 = vmatprep.mubr.f32.mxu0 0.0
        %995 = vmatmul.mubr.f32.gmra.mrb[0].mxu0 %v621
        %v996 = vpop.f32.mrb[0].mxu0
        %v997 = vadd.f32 0.0, %v996
        %v998 = vpop.f32.mrb[0].mxu0
        %999 = vmatprep.mubr.f32.mxu0 0.0
        %1000 = vmatmul.mubr.f32.gmra.mrb[0].mxu0 %v624
        %v1001 = vpop.f32.mrb[0].mxu0
        %v1002 = vadd.f32 0.0, %v1001
        %v1003 = vpop.f32.mrb[0].mxu0
        %1004 = vmatprep.mubr.f32.mxu0 0.0
        %1005 = vmatmul.mubr.f32.gmra.mrb[0].mxu0 %v627
        %v1006 = vpop.f32.mrb[0].mxu0
        %v1007 = vadd.f32 0.0, %v1006
        %v1008 = vpop.f32.mrb[0].mxu0
        %1009 = vmatprep.mubr.f32.mxu0 0.0
        %1010 = vmatmul.mubr.f32.gmra.mrb[0].mxu0 %v630
        %v1011 = vpop.f32.mrb[0].mxu0
        %v1012 = vadd.f32 0.0, %v1011
        %v1013 = vpop.f32.mrb[0].mxu0
        %1014 = vmatprep.mubr.f32.mxu0 0.0
        %1015 = vmatmul.mubr.f32.gmra.mrb[0].mxu0 %v633
        %v1016 = vpop.f32.mrb[0].mxu0
        %v1017 = vadd.f32 0.0, %v1016
        %v1018 = vpop.f32.mrb[0].mxu0
        %1019 = vdwg.mxu0
        %v1020 = vld [vmem:[%s361] sm:$0x1]
        %v1022 = vlaneseq
        %v1023 = vshrl.u32 %v1022, 7
        %v1024 = vsub.s32 0, %v1023
        %v1025 = vrot.slane %v1020, %v1024
        %v1027 = vmul.f32 %v702, %v1025
        %v1028 = vmul.f32 %v707, %v1025
        %v1029 = vmul.f32 %v712, %v1025
        %v1030 = vmul.f32 %v717, %v1025
        %v1031 = vmul.f32 %v722, %v1025
        %v1032 = vmul.f32 %v727, %v1025
        %v1033 = vmul.f32 %v732, %v1025
        %v1034 = vmul.f32 %v737, %v1025
        %v1035 = vmul.f32 %v742, %v1025
        %v1036 = vmul.f32 %v747, %v1025
        %v1037 = vmul.f32 %v752, %v1025
        %v1038 = vmul.f32 %v757, %v1025
        %v1039 = vmul.f32 %v762, %v1025
        %v1040 = vmul.f32 %v767, %v1025
        %v1041 = vmul.f32 %v772, %v1025
        %v1042 = vmul.f32 %v777, %v1025
        %v1043 = vmul.f32 %v782, %v1025
        %v1044 = vmul.f32 %v787, %v1025
        %v1045 = vmul.f32 %v792, %v1025
        %v1046 = vmul.f32 %v797, %v1025
        %v1047 = vmul.f32 %v802, %v1025
        %v1048 = vmul.f32 %v807, %v1025
        %v1049 = vmul.f32 %v812, %v1025
        %v1050 = vmul.f32 %v817, %v1025
        %v1051 = vmul.f32 %v822, %v1025
        %v1052 = vmul.f32 %v827, %v1025
        %v1053 = vmul.f32 %v832, %v1025
        %v1054 = vmul.f32 %v837, %v1025
        %v1055 = vmul.f32 %v842, %v1025
        %v1056 = vmul.f32 %v847, %v1025
        %v1057 = vmul.f32 %v852, %v1025
        %v1058 = vmul.f32 %v857, %v1025
        %v1059 = vmul.f32 %v862, %v1025
        %v1060 = vmul.f32 %v867, %v1025
        %v1061 = vmul.f32 %v872, %v1025
        %v1062 = vmul.f32 %v877, %v1025
        %v1063 = vmul.f32 %v882, %v1025
        %v1064 = vmul.f32 %v887, %v1025
        %v1065 = vmul.f32 %v892, %v1025
        %v1066 = vmul.f32 %v897, %v1025
        %v1067 = vmul.f32 %v902, %v1025
        %v1068 = vmul.f32 %v907, %v1025
        %v1069 = vmul.f32 %v912, %v1025
        %v1070 = vmul.f32 %v917, %v1025
        %v1071 = vmul.f32 %v922, %v1025
        %v1072 = vmul.f32 %v927, %v1025
        %v1073 = vmul.f32 %v932, %v1025
        %v1074 = vmul.f32 %v937, %v1025
        %v1075 = vmul.f32 %v942, %v1025
        %v1076 = vmul.f32 %v947, %v1025
        %v1077 = vmul.f32 %v952, %v1025
        %v1078 = vmul.f32 %v957, %v1025
        %v1079 = vmul.f32 %v962, %v1025
        %v1080 = vmul.f32 %v967, %v1025
        %v1081 = vmul.f32 %v972, %v1025
        %v1082 = vmul.f32 %v977, %v1025
        %v1083 = vmul.f32 %v982, %v1025
        %v1084 = vmul.f32 %v987, %v1025
        %v1085 = vmul.f32 %v992, %v1025
        %v1086 = vmul.f32 %v997, %v1025
        %v1087 = vmul.f32 %v1002, %v1025
        %v1088 = vmul.f32 %v1007, %v1025
        %v1089 = vmul.f32 %v1012, %v1025
        %v1090 = vmul.f32 %v1017, %v1025
        %v1091 = vld [vmem:[%s364] sm:$0x1]
        %v1093 = vlaneseq
        %v1094 = vshrl.u32 %v1093, 7
        %v1095 = vsub.s32 0, %v1094
        %v1096 = vrot.slane %v1091, %v1095
        %v1098 = vadd.f32 %v1027, %v1096
        %v1099 = vadd.f32 %v1028, %v1096
        %v1100 = vadd.f32 %v1029, %v1096
        %v1101 = vadd.f32 %v1030, %v1096
        %v1102 = vadd.f32 %v1031, %v1096
        %v1103 = vadd.f32 %v1032, %v1096
        %v1104 = vadd.f32 %v1033, %v1096
        %v1105 = vadd.f32 %v1034, %v1096
        %v1106 = vadd.f32 %v1035, %v1096
        %v1107 = vadd.f32 %v1036, %v1096
        %v1108 = vadd.f32 %v1037, %v1096
        %v1109 = vadd.f32 %v1038, %v1096
        %v1110 = vadd.f32 %v1039, %v1096
        %v1111 = vadd.f32 %v1040, %v1096
        %v1112 = vadd.f32 %v1041, %v1096
        %v1113 = vadd.f32 %v1042, %v1096
        %v1114 = vadd.f32 %v1043, %v1096
        %v1115 = vadd.f32 %v1044, %v1096
        %v1116 = vadd.f32 %v1045, %v1096
        %v1117 = vadd.f32 %v1046, %v1096
        %v1118 = vadd.f32 %v1047, %v1096
        %v1119 = vadd.f32 %v1048, %v1096
        %v1120 = vadd.f32 %v1049, %v1096
        %v1121 = vadd.f32 %v1050, %v1096
        %v1122 = vadd.f32 %v1051, %v1096
        %v1123 = vadd.f32 %v1052, %v1096
        %v1124 = vadd.f32 %v1053, %v1096
        %v1125 = vadd.f32 %v1054, %v1096
        %v1126 = vadd.f32 %v1055, %v1096
        %v1127 = vadd.f32 %v1056, %v1096
        %v1128 = vadd.f32 %v1057, %v1096
        %v1129 = vadd.f32 %v1058, %v1096
        %v1130 = vadd.f32 %v1059, %v1096
        %v1131 = vadd.f32 %v1060, %v1096
        %v1132 = vadd.f32 %v1061, %v1096
        %v1133 = vadd.f32 %v1062, %v1096
        %v1134 = vadd.f32 %v1063, %v1096
        %v1135 = vadd.f32 %v1064, %v1096
        %v1136 = vadd.f32 %v1065, %v1096
        %v1137 = vadd.f32 %v1066, %v1096
        %v1138 = vadd.f32 %v1067, %v1096
        %v1139 = vadd.f32 %v1068, %v1096
        %v1140 = vadd.f32 %v1069, %v1096
        %v1141 = vadd.f32 %v1070, %v1096
        %v1142 = vadd.f32 %v1071, %v1096
        %v1143 = vadd.f32 %v1072, %v1096
        %v1144 = vadd.f32 %v1073, %v1096
        %v1145 = vadd.f32 %v1074, %v1096
        %v1146 = vadd.f32 %v1075, %v1096
        %v1147 = vadd.f32 %v1076, %v1096
        %v1148 = vadd.f32 %v1077, %v1096
        %v1149 = vadd.f32 %v1078, %v1096
        %v1150 = vadd.f32 %v1079, %v1096
        %v1151 = vadd.f32 %v1080, %v1096
        %v1152 = vadd.f32 %v1081, %v1096
        %v1153 = vadd.f32 %v1082, %v1096
        %v1154 = vadd.f32 %v1083, %v1096
        %v1155 = vadd.f32 %v1084, %v1096
        %v1156 = vadd.f32 %v1085, %v1096
        %v1157 = vadd.f32 %v1086, %v1096
        %v1158 = vadd.f32 %v1087, %v1096
        %v1159 = vadd.f32 %v1088, %v1096
        %v1160 = vadd.f32 %v1089, %v1096
        %v1161 = vadd.f32 %v1090, %v1096
        %v1162 = vmax.f32 %v1098, 0.0
        %v1163 = vmax.f32 %v1099, 0.0
        %v1164 = vmax.f32 %v1100, 0.0
        %v1165 = vmax.f32 %v1101, 0.0
        %v1166 = vmax.f32 %v1102, 0.0
        %v1167 = vmax.f32 %v1103, 0.0
        %v1168 = vmax.f32 %v1104, 0.0
        %v1169 = vmax.f32 %v1105, 0.0
        %v1170 = vmax.f32 %v1106, 0.0
        %v1171 = vmax.f32 %v1107, 0.0
        %v1172 = vmax.f32 %v1108, 0.0
        %v1173 = vmax.f32 %v1109, 0.0
        %v1174 = vmax.f32 %v1110, 0.0
        %v1175 = vmax.f32 %v1111, 0.0
        %v1176 = vmax.f32 %v1112, 0.0
        %v1177 = vmax.f32 %v1113, 0.0
        %v1178 = vmax.f32 %v1114, 0.0
        %v1179 = vmax.f32 %v1115, 0.0
        %v1180 = vmax.f32 %v1116, 0.0
        %v1181 = vmax.f32 %v1117, 0.0
        %v1182 = vmax.f32 %v1118, 0.0
        %v1183 = vmax.f32 %v1119, 0.0
        %v1184 = vmax.f32 %v1120, 0.0
        %v1185 = vmax.f32 %v1121, 0.0
        %v1186 = vmax.f32 %v1122, 0.0
        %v1187 = vmax.f32 %v1123, 0.0
        %v1188 = vmax.f32 %v1124, 0.0
        %v1189 = vmax.f32 %v1125, 0.0
        %v1190 = vmax.f32 %v1126, 0.0
        %v1191 = vmax.f32 %v1127, 0.0
        %v1192 = vmax.f32 %v1128, 0.0
        %v1193 = vmax.f32 %v1129, 0.0
        %v1194 = vmax.f32 %v1130, 0.0
        %v1195 = vmax.f32 %v1131, 0.0
        %v1196 = vmax.f32 %v1132, 0.0
        %v1197 = vmax.f32 %v1133, 0.0
        %v1198 = vmax.f32 %v1134, 0.0
        %v1199 = vmax.f32 %v1135, 0.0
        %v1200 = vmax.f32 %v1136, 0.0
        %v1201 = vmax.f32 %v1137, 0.0
        %v1202 = vmax.f32 %v1138, 0.0
        %v1203 = vmax.f32 %v1139, 0.0
        %v1204 = vmax.f32 %v1140, 0.0
        %v1205 = vmax.f32 %v1141, 0.0
        %v1206 = vmax.f32 %v1142, 0.0
        %v1207 = vmax.f32 %v1143, 0.0
        %v1208 = vmax.f32 %v1144, 0.0
        %v1209 = vmax.f32 %v1145, 0.0
        %v1210 = vmax.f32 %v1146, 0.0
        %v1211 = vmax.f32 %v1147, 0.0
        %v1212 = vmax.f32 %v1148, 0.0
        %v1213 = vmax.f32 %v1149, 0.0
        %v1214 = vmax.f32 %v1150, 0.0
        %v1215 = vmax.f32 %v1151, 0.0
        %v1216 = vmax.f32 %v1152, 0.0
        %v1217 = vmax.f32 %v1153, 0.0
        %v1218 = vmax.f32 %v1154, 0.0
        %v1219 = vmax.f32 %v1155, 0.0
        %v1220 = vmax.f32 %v1156, 0.0
        %v1221 = vmax.f32 %v1157, 0.0
        %v1222 = vmax.f32 %v1158, 0.0
        %v1223 = vmax.f32 %v1159, 0.0
        %v1224 = vmax.f32 %v1160, 0.0
        %v1225 = vmax.f32 %v1161, 0.0
        %s1226 = sld [smem:[#allocation2]]
        %v1227 = vmin.f32 %v1098, 0.0
        %v1228 = vmin.f32 %v1099, 0.0
        %v1229 = vmin.f32 %v1100, 0.0
        %v1230 = vmin.f32 %v1101, 0.0
        %v1231 = vmin.f32 %v1102, 0.0
        %v1232 = vmin.f32 %v1103, 0.0
        %v1233 = vmin.f32 %v1104, 0.0
        %v1234 = vmin.f32 %v1105, 0.0
        %v1235 = vmin.f32 %v1106, 0.0
        %v1236 = vmin.f32 %v1107, 0.0
        %v1237 = vmin.f32 %v1108, 0.0
        %v1238 = vmin.f32 %v1109, 0.0
        %v1239 = vmin.f32 %v1110, 0.0
        %v1240 = vmin.f32 %v1111, 0.0
        %v1241 = vmin.f32 %v1112, 0.0
        %v1242 = vmin.f32 %v1113, 0.0
        %v1243 = vmin.f32 %v1114, 0.0
        %v1244 = vmin.f32 %v1115, 0.0
        %v1245 = vmin.f32 %v1116, 0.0
        %v1246 = vmin.f32 %v1117, 0.0
        %v1247 = vmin.f32 %v1118, 0.0
        %v1248 = vmin.f32 %v1119, 0.0
        %v1249 = vmin.f32 %v1120, 0.0
        %v1250 = vmin.f32 %v1121, 0.0
        %v1251 = vmin.f32 %v1122, 0.0
        %v1252 = vmin.f32 %v1123, 0.0
        %v1253 = vmin.f32 %v1124, 0.0
        %v1254 = vmin.f32 %v1125, 0.0
        %v1255 = vmin.f32 %v1126, 0.0
        %v1256 = vmin.f32 %v1127, 0.0
        %v1257 = vmin.f32 %v1128, 0.0
        %v1258 = vmin.f32 %v1129, 0.0
        %v1259 = vmin.f32 %v1130, 0.0
        %v1260 = vmin.f32 %v1131, 0.0
        %v1261 = vmin.f32 %v1132, 0.0
        %v1262 = vmin.f32 %v1133, 0.0
        %v1263 = vmin.f32 %v1134, 0.0
        %v1264 = vmin.f32 %v1135, 0.0
        %v1265 = vmin.f32 %v1136, 0.0
        %v1266 = vmin.f32 %v1137, 0.0
        %v1267 = vmin.f32 %v1138, 0.0
        %v1268 = vmin.f32 %v1139, 0.0
        %v1269 = vmin.f32 %v1140, 0.0
        %v1270 = vmin.f32 %v1141, 0.0
        %v1271 = vmin.f32 %v1142, 0.0
        %v1272 = vmin.f32 %v1143, 0.0
        %v1273 = vmin.f32 %v1144, 0.0
        %v1274 = vmin.f32 %v1145, 0.0
        %v1275 = vmin.f32 %v1146, 0.0
        %v1276 = vmin.f32 %v1147, 0.0
        %v1277 = vmin.f32 %v1148, 0.0
        %v1278 = vmin.f32 %v1149, 0.0
        %v1279 = vmin.f32 %v1150, 0.0
        %v1280 = vmin.f32 %v1151, 0.0
        %v1281 = vmin.f32 %v1152, 0.0
        %v1282 = vmin.f32 %v1153, 0.0
        %v1283 = vmin.f32 %v1154, 0.0
        %v1284 = vmin.f32 %v1155, 0.0
        %v1285 = vmin.f32 %v1156, 0.0
        %v1286 = vmin.f32 %v1157, 0.0
        %v1287 = vmin.f32 %v1158, 0.0
        %v1288 = vmin.f32 %v1159, 0.0
        %v1289 = vmin.f32 %v1160, 0.0
        %v1290 = vmin.f32 %v1161, 0.0
        %v1291 = vstv %s1226
        %v1292 = vmul.f32 %v1291, %v1227
        %v1293 = vmul.f32 %v1291, %v1228
        %v1294 = vmul.f32 %v1291, %v1229
        %v1295 = vmul.f32 %v1291, %v1230
        %v1296 = vmul.f32 %v1291, %v1231
        %v1297 = vmul.f32 %v1291, %v1232
        %v1298 = vmul.f32 %v1291, %v1233
        %v1299 = vmul.f32 %v1291, %v1234
        %v1300 = vmul.f32 %v1291, %v1235
        %v1301 = vmul.f32 %v1291, %v1236
        %v1302 = vmul.f32 %v1291, %v1237
        %v1303 = vmul.f32 %v1291, %v1238
        %v1304 = vmul.f32 %v1291, %v1239
        %v1305 = vmul.f32 %v1291, %v1240
        %v1306 = vmul.f32 %v1291, %v1241
        %v1307 = vmul.f32 %v1291, %v1242
        %v1308 = vmul.f32 %v1291, %v1243
        %v1309 = vmul.f32 %v1291, %v1244
        %v1310 = vmul.f32 %v1291, %v1245
        %v1311 = vmul.f32 %v1291, %v1246
        %v1312 = vmul.f32 %v1291, %v1247
        %v1313 = vmul.f32 %v1291, %v1248
        %v1314 = vmul.f32 %v1291, %v1249
        %v1315 = vmul.f32 %v1291, %v1250
        %v1316 = vmul.f32 %v1291, %v1251
        %v1317 = vmul.f32 %v1291, %v1252
        %v1318 = vmul.f32 %v1291, %v1253
        %v1319 = vmul.f32 %v1291, %v1254
        %v1320 = vmul.f32 %v1291, %v1255
        %v1321 = vmul.f32 %v1291, %v1256
        %v1322 = vmul.f32 %v1291, %v1257
        %v1323 = vmul.f32 %v1291, %v1258
        %v1324 = vmul.f32 %v1291, %v1259
        %v1325 = vmul.f32 %v1291, %v1260
        %v1326 = vmul.f32 %v1291, %v1261
        %v1327 = vmul.f32 %v1291, %v1262
        %v1328 = vmul.f32 %v1291, %v1263
        %v1329 = vmul.f32 %v1291, %v1264
        %v1330 = vmul.f32 %v1291, %v1265
        %v1331 = vmul.f32 %v1291, %v1266
        %v1332 = vmul.f32 %v1291, %v1267
        %v1333 = vmul.f32 %v1291, %v1268
        %v1334 = vmul.f32 %v1291, %v1269
        %v1335 = vmul.f32 %v1291, %v1270
        %v1336 = vmul.f32 %v1291, %v1271
        %v1337 = vmul.f32 %v1291, %v1272
        %v1338 = vmul.f32 %v1291, %v1273
        %v1339 = vmul.f32 %v1291, %v1274
        %v1340 = vmul.f32 %v1291, %v1275
        %v1341 = vmul.f32 %v1291, %v1276
        %v1342 = vmul.f32 %v1291, %v1277
        %v1343 = vmul.f32 %v1291, %v1278
        %v1344 = vmul.f32 %v1291, %v1279
        %v1345 = vmul.f32 %v1291, %v1280
        %v1346 = vmul.f32 %v1291, %v1281
        %v1347 = vmul.f32 %v1291, %v1282
        %v1348 = vmul.f32 %v1291, %v1283
        %v1349 = vmul.f32 %v1291, %v1284
        %v1350 = vmul.f32 %v1291, %v1285
        %v1351 = vmul.f32 %v1291, %v1286
        %v1352 = vmul.f32 %v1291, %v1287
        %v1353 = vmul.f32 %v1291, %v1288
        %v1354 = vmul.f32 %v1291, %v1289
        %v1355 = vmul.f32 %v1291, %v1290
        %v1356 = vadd.f32 %v1162, %v1292
        %v1357 = vadd.f32 %v1163, %v1293
        %v1358 = vadd.f32 %v1164, %v1294
        %v1359 = vadd.f32 %v1165, %v1295
        %v1360 = vadd.f32 %v1166, %v1296
        %v1361 = vadd.f32 %v1167, %v1297
        %v1362 = vadd.f32 %v1168, %v1298
        %v1363 = vadd.f32 %v1169, %v1299
        %v1364 = vadd.f32 %v1170, %v1300
        %v1365 = vadd.f32 %v1171, %v1301
        %v1366 = vadd.f32 %v1172, %v1302
        %v1367 = vadd.f32 %v1173, %v1303
        %v1368 = vadd.f32 %v1174, %v1304
        %v1369 = vadd.f32 %v1175, %v1305
        %v1370 = vadd.f32 %v1176, %v1306
        %v1371 = vadd.f32 %v1177, %v1307
        %v1372 = vadd.f32 %v1178, %v1308
        %v1373 = vadd.f32 %v1179, %v1309
        %v1374 = vadd.f32 %v1180, %v1310
        %v1375 = vadd.f32 %v1181, %v1311
        %v1376 = vadd.f32 %v1182, %v1312
        %v1377 = vadd.f32 %v1183, %v1313
        %v1378 = vadd.f32 %v1184, %v1314
        %v1379 = vadd.f32 %v1185, %v1315
        %v1380 = vadd.f32 %v1186, %v1316
        %v1381 = vadd.f32 %v1187, %v1317
        %v1382 = vadd.f32 %v1188, %v1318
        %v1383 = vadd.f32 %v1189, %v1319
        %v1384 = vadd.f32 %v1190, %v1320
        %v1385 = vadd.f32 %v1191, %v1321
        %v1386 = vadd.f32 %v1192, %v1322
        %v1387 = vadd.f32 %v1193, %v1323
        %v1388 = vadd.f32 %v1194, %v1324
        %v1389 = vadd.f32 %v1195, %v1325
        %v1390 = vadd.f32 %v1196, %v1326
        %v1391 = vadd.f32 %v1197, %v1327
        %v1392 = vadd.f32 %v1198, %v1328
        %v1393 = vadd.f32 %v1199, %v1329
        %v1394 = vadd.f32 %v1200, %v1330
        %v1395 = vadd.f32 %v1201, %v1331
        %v1396 = vadd.f32 %v1202, %v1332
        %v1397 = vadd.f32 %v1203, %v1333
        %v1398 = vadd.f32 %v1204, %v1334
        %v1399 = vadd.f32 %v1205, %v1335
        %v1400 = vadd.f32 %v1206, %v1336
        %v1401 = vadd.f32 %v1207, %v1337
        %v1402 = vadd.f32 %v1208, %v1338
        %v1403 = vadd.f32 %v1209, %v1339
        %v1404 = vadd.f32 %v1210, %v1340
        %v1405 = vadd.f32 %v1211, %v1341
        %v1406 = vadd.f32 %v1212, %v1342
        %v1407 = vadd.f32 %v1213, %v1343
        %v1408 = vadd.f32 %v1214, %v1344
        %v1409 = vadd.f32 %v1215, %v1345
        %v1410 = vadd.f32 %v1216, %v1346
        %v1411 = vadd.f32 %v1217, %v1347
        %v1412 = vadd.f32 %v1218, %v1348
        %v1413 = vadd.f32 %v1219, %v1349
        %v1414 = vadd.f32 %v1220, %v1350
        %v1415 = vadd.f32 %v1221, %v1351
        %v1416 = vadd.f32 %v1222, %v1352
        %v1417 = vadd.f32 %v1223, %v1353
        %v1418 = vadd.f32 %v1224, %v1354
        %v1419 = vadd.f32 %v1225, %v1355
        %v1420 = vld [vmem:[%s5] sm:$0xf]
        %vm1421 = vcmask 31744
        %v1423 = vsel %vm1421, %v1356, 0
        %v1426 = vsel %vm1421, %v1357, 0
        %v1429 = vsel %vm1421, %v1358, 0
        %v1432 = vsel %vm1421, %v1359, 0
        %v1435 = vsel %vm1421, %v1360, 0
        %v1438 = vsel %vm1421, %v1361, 0
        %v1441 = vsel %vm1421, %v1362, 0
        %v1444 = vsel %vm1421, %v1363, 0
        %v1447 = vsel %vm1421, %v1364, 0
        %v1450 = vsel %vm1421, %v1365, 0
        %v1453 = vsel %vm1421, %v1366, 0
        %v1456 = vsel %vm1421, %v1367, 0
        %v1459 = vsel %vm1421, %v1368, 0
        %v1462 = vsel %vm1421, %v1369, 0
        %v1465 = vsel %vm1421, %v1370, 0
        %v1468 = vsel %vm1421, %v1371, 0
        %v1471 = vsel %vm1421, %v1372, 0
        %v1474 = vsel %vm1421, %v1373, 0
        %v1477 = vsel %vm1421, %v1374, 0
        %v1480 = vsel %vm1421, %v1375, 0
        %v1483 = vsel %vm1421, %v1376, 0
        %v1486 = vsel %vm1421, %v1377, 0
        %v1489 = vsel %vm1421, %v1378, 0
        %v1492 = vsel %vm1421, %v1379, 0
        %v1495 = vsel %vm1421, %v1380, 0
        %v1498 = vsel %vm1421, %v1381, 0
        %v1501 = vsel %vm1421, %v1382, 0
        %v1504 = vsel %vm1421, %v1383, 0
        %v1507 = vsel %vm1421, %v1384, 0
        %v1510 = vsel %vm1421, %v1385, 0
        %v1513 = vsel %vm1421, %v1386, 0
        %v1516 = vsel %vm1421, %v1387, 0
        %v1519 = vsel %vm1421, %v1388, 0
        %v1522 = vsel %vm1421, %v1389, 0
        %v1525 = vsel %vm1421, %v1390, 0
        %v1528 = vsel %vm1421, %v1391, 0
        %v1531 = vsel %vm1421, %v1392, 0
        %v1534 = vsel %vm1421, %v1393, 0
        %v1537 = vsel %vm1421, %v1394, 0
        %v1540 = vsel %vm1421, %v1395, 0
        %v1543 = vsel %vm1421, %v1396, 0
        %v1546 = vsel %vm1421, %v1397, 0
        %v1549 = vsel %vm1421, %v1398, 0
        %v1552 = vsel %vm1421, %v1399, 0
        %v1555 = vsel %vm1421, %v1400, 0
        %v1558 = vsel %vm1421, %v1401, 0
        %v1561 = vsel %vm1421, %v1402, 0
        %v1564 = vsel %vm1421, %v1403, 0
        %v1567 = vsel %vm1421, %v1404, 0
        %v1570 = vsel %vm1421, %v1405, 0
        %v1573 = vsel %vm1421, %v1406, 0
        %v1576 = vsel %vm1421, %v1407, 0
        %v1579 = vsel %vm1421, %v1408, 0
        %v1582 = vsel %vm1421, %v1409, 0
        %v1585 = vsel %vm1421, %v1410, 0
        %v1588 = vsel %vm1421, %v1411, 0
        %v1591 = vsel %vm1421, %v1412, 0
        %v1594 = vsel %vm1421, %v1413, 0
        %v1597 = vsel %vm1421, %v1414, 0
        %v1600 = vsel %vm1421, %v1415, 0
        %v1603 = vsel %vm1421, %v1416, 0
        %v1606 = vsel %vm1421, %v1417, 0
        %v1609 = vsel %vm1421, %v1418, 0
        %v1612 = vsel %vm1421, %v1419, 0
        %vm1614 = vcmask 1043456
        %v1616 = vsel %vm1614, %v1420, 0
        %1618 = vmatprep.subr.mxu0 0.0
        %1619 = vmatpush1.msra.mxu0 %v1616
        %1620 = vmatprep.subr.mxu0 0.0
        %1621 = vmatpush1.msra.mxu0 0.0
        %1622 = vmatprep.subr.mxu0 0.0
        %1623 = vmatpush1.msra.mxu0 0.0
        %1624 = vmatprep.subr.mxu0 0.0
        %1625 = vmatpush1.msra.mxu0 0.0
        %1626 = vmatprep.subr.mxu0 0.0
        %1627 = vmatpush1.msra.mxu0 0.0
        %1628 = vmatprep.subr.mxu0 0.0
        %1629 = vmatpush1.msra.mxu0 0.0
        %1630 = vmatprep.subr.mxu0 0.0
        %1631 = vmatpush1.msra.mxu0 0.0
        %1632 = vmatprep.subr.mxu0 0.0
        %1633 = vmatpush1.msra.mxu0 0.0
        %1634 = vmatprep.subr.mxu0 0.0
        %1635 = vmatpush1.msra.mxu0 0.0
        %1636 = vmatprep.subr.mxu0 0.0
        %1637 = vmatpush1.msra.mxu0 0.0
        %1638 = vmatprep.subr.mxu0 0.0
        %1639 = vmatpush1.msra.mxu0 0.0
        %1640 = vmatprep.subr.mxu0 0.0
        %1641 = vmatpush1.msra.mxu0 0.0
        %1642 = vmatprep.subr.mxu0 0.0
        %1643 = vmatpush1.msra.mxu0 0.0
        %1644 = vmatprep.subr.mxu0 0.0
        %1645 = vmatpush1.msra.mxu0 0.0
        %1646 = vmatprep.subr.mxu0 0.0
        %1647 = vmatpush1.msra.mxu0 0.0
        %1648 = vmatprep.subr.mxu0 0.0
        %1649 = vmatpush1.msra.mxu0 0.0
        %1650 = vmatprep.subr.mxu0 0.0
        %1651 = vmatpush1.msra.mxu0 0.0
        %1652 = vmatprep.subr.mxu0 0.0
        %1653 = vmatpush1.msra.mxu0 0.0
        %1654 = vmatprep.subr.mxu0 0.0
        %1655 = vmatpush1.msra.mxu0 0.0
        %1656 = vmatprep.subr.mxu0 0.0
        %1657 = vmatpush1.msra.mxu0 0.0
        %1658 = vmatprep.subr.mxu0 0.0
        %1659 = vmatpush1.msra.mxu0 0.0
        %1660 = vmatprep.subr.mxu0 0.0
        %1661 = vmatpush1.msra.mxu0 0.0
        %1662 = vmatprep.subr.mxu0 0.0
        %1663 = vmatpush1.msra.mxu0 0.0
        %1664 = vmatprep.subr.mxu0 0.0
        %1665 = vmatpush1.msra.mxu0 0.0
        %1666 = vmatprep.subr.mxu0 0.0
        %1667 = vmatpush1.msra.mxu0 0.0
        %1668 = vmatprep.subr.mxu0 0.0
        %1669 = vmatpush1.msra.mxu0 0.0
        %1670 = vmatprep.subr.mxu0 0.0
        %1671 = vmatpush1.msra.mxu0 0.0
        %1672 = vmatprep.subr.mxu0 0.0
        %1673 = vmatpush1.msra.mxu0 0.0
        %1674 = vmatprep.subr.mxu0 0.0
        %1675 = vmatpush1.msra.mxu0 0.0
        %1676 = vmatprep.subr.mxu0 0.0
        %1677 = vmatpush1.msra.mxu0 0.0
        %1678 = vmatprep.subr.mxu0 0.0
        %1679 = vmatpush1.msra.mxu0 0.0
        %1680 = vmatprep.subr.mxu0 0.0
        %1681 = vmatpush1.msra.mxu0 0.0
        %1682 = vmatprep.mubr.f32.mxu0 0.0
        %1683 = vmatmul.mubr.f32.gmra.mrb[0].mxu0 %v1423
        %v1684 = vpop.f32.mrb[0].mxu0
        %v1685 = vadd.f32 0.0, %v1684
        %v1686 = vpop.f32.mrb[0].mxu0
        %1687 = vmatprep.mubr.f32.mxu0 0.0
        %1688 = vmatmul.mubr.f32.gmra.mrb[0].mxu0 %v1426
        %v1689 = vpop.f32.mrb[0].mxu0
        %v1690 = vadd.f32 0.0, %v1689
        %v1691 = vpop.f32.mrb[0].mxu0
        %1692 = vmatprep.mubr.f32.mxu0 0.0
        %1693 = vmatmul.mubr.f32.gmra.mrb[0].mxu0 %v1429
        %v1694 = vpop.f32.mrb[0].mxu0
        %v1695 = vadd.f32 0.0, %v1694
        %v1696 = vpop.f32.mrb[0].mxu0
        %1697 = vmatprep.mubr.f32.mxu0 0.0
        %1698 = vmatmul.mubr.f32.gmra.mrb[0].mxu0 %v1432
        %v1699 = vpop.f32.mrb[0].mxu0
        %v1700 = vadd.f32 0.0, %v1699
        %v1701 = vpop.f32.mrb[0].mxu0
        %1702 = vmatprep.mubr.f32.mxu0 0.0
        %1703 = vmatmul.mubr.f32.gmra.mrb[0].mxu0 %v1435
        %v1704 = vpop.f32.mrb[0].mxu0
        %v1705 = vadd.f32 0.0, %v1704
        %v1706 = vpop.f32.mrb[0].mxu0
        %1707 = vmatprep.mubr.f32.mxu0 0.0
        %1708 = vmatmul.mubr.f32.gmra.mrb[0].mxu0 %v1438
        %v1709 = vpop.f32.mrb[0].mxu0
        %v1710 = vadd.f32 0.0, %v1709
        %v1711 = vpop.f32.mrb[0].mxu0
        %1712 = vmatprep.mubr.f32.mxu0 0.0
        %1713 = vmatmul.mubr.f32.gmra.mrb[0].mxu0 %v1441
        %v1714 = vpop.f32.mrb[0].mxu0
        %v1715 = vadd.f32 0.0, %v1714
        %v1716 = vpop.f32.mrb[0].mxu0
        %1717 = vmatprep.mubr.f32.mxu0 0.0
        %1718 = vmatmul.mubr.f32.gmra.mrb[0].mxu0 %v1444
        %v1719 = vpop.f32.mrb[0].mxu0
        %v1720 = vadd.f32 0.0, %v1719
        %v1721 = vpop.f32.mrb[0].mxu0
        %1722 = vmatprep.mubr.f32.mxu0 0.0
        %1723 = vmatmul.mubr.f32.gmra.mrb[0].mxu0 %v1447
        %v1724 = vpop.f32.mrb[0].mxu0
        %v1725 = vadd.f32 0.0, %v1724
        %v1726 = vpop.f32.mrb[0].mxu0
        %1727 = vmatprep.mubr.f32.mxu0 0.0
        %1728 = vmatmul.mubr.f32.gmra.mrb[0].mxu0 %v1450
        %v1729 = vpop.f32.mrb[0].mxu0
        %v1730 = vadd.f32 0.0, %v1729
        %v1731 = vpop.f32.mrb[0].mxu0
        %1732 = vmatprep.mubr.f32.mxu0 0.0
        %1733 = vmatmul.mubr.f32.gmra.mrb[0].mxu0 %v1453
        %v1734 = vpop.f32.mrb[0].mxu0
        %v1735 = vadd.f32 0.0, %v1734
        %v1736 = vpop.f32.mrb[0].mxu0
        %1737 = vmatprep.mubr.f32.mxu0 0.0
        %1738 = vmatmul.mubr.f32.gmra.mrb[0].mxu0 %v1456
        %v1739 = vpop.f32.mrb[0].mxu0
        %v1740 = vadd.f32 0.0, %v1739
        %v1741 = vpop.f32.mrb[0].mxu0
        %1742 = vmatprep.mubr.f32.mxu0 0.0
        %1743 = vmatmul.mubr.f32.gmra.mrb[0].mxu0 %v1459
        %v1744 = vpop.f32.mrb[0].mxu0
        %v1745 = vadd.f32 0.0, %v1744
        %v1746 = vpop.f32.mrb[0].mxu0
        %1747 = vmatprep.mubr.f32.mxu0 0.0
        %1748 = vmatmul.mubr.f32.gmra.mrb[0].mxu0 %v1462
        %v1749 = vpop.f32.mrb[0].mxu0
        %v1750 = vadd.f32 0.0, %v1749
        %v1751 = vpop.f32.mrb[0].mxu0
        %1752 = vmatprep.mubr.f32.mxu0 0.0
        %1753 = vmatmul.mubr.f32.gmra.mrb[0].mxu0 %v1465
        %v1754 = vpop.f32.mrb[0].mxu0
        %v1755 = vadd.f32 0.0, %v1754
        %v1756 = vpop.f32.mrb[0].mxu0
        %1757 = vmatprep.mubr.f32.mxu0 0.0
        %1758 = vmatmul.mubr.f32.gmra.mrb[0].mxu0 %v1468
        %v1759 = vpop.f32.mrb[0].mxu0
        %v1760 = vadd.f32 0.0, %v1759
        %v1761 = vpop.f32.mrb[0].mxu0
        %1762 = vmatprep.mubr.f32.mxu0 0.0
        %1763 = vmatmul.mubr.f32.gmra.mrb[0].mxu0 %v1471
        %v1764 = vpop.f32.mrb[0].mxu0
        %v1765 = vadd.f32 0.0, %v1764
        %v1766 = vpop.f32.mrb[0].mxu0
        %1767 = vmatprep.mubr.f32.mxu0 0.0
        %1768 = vmatmul.mubr.f32.gmra.mrb[0].mxu0 %v1474
        %v1769 = vpop.f32.mrb[0].mxu0
        %v1770 = vadd.f32 0.0, %v1769
        %v1771 = vpop.f32.mrb[0].mxu0
        %1772 = vmatprep.mubr.f32.mxu0 0.0
        %1773 = vmatmul.mubr.f32.gmra.mrb[0].mxu0 %v1477
        %v1774 = vpop.f32.mrb[0].mxu0
        %v1775 = vadd.f32 0.0, %v1774
        %v1776 = vpop.f32.mrb[0].mxu0
        %1777 = vmatprep.mubr.f32.mxu0 0.0
        %1778 = vmatmul.mubr.f32.gmra.mrb[0].mxu0 %v1480
        %v1779 = vpop.f32.mrb[0].mxu0
        %v1780 = vadd.f32 0.0, %v1779
        %v1781 = vpop.f32.mrb[0].mxu0
        %1782 = vmatprep.mubr.f32.mxu0 0.0
        %1783 = vmatmul.mubr.f32.gmra.mrb[0].mxu0 %v1483
        %v1784 = vpop.f32.mrb[0].mxu0
        %v1785 = vadd.f32 0.0, %v1784
        %v1786 = vpop.f32.mrb[0].mxu0
        %1787 = vmatprep.mubr.f32.mxu0 0.0
        %1788 = vmatmul.mubr.f32.gmra.mrb[0].mxu0 %v1486
        %v1789 = vpop.f32.mrb[0].mxu0
        %v1790 = vadd.f32 0.0, %v1789
        %v1791 = vpop.f32.mrb[0].mxu0
        %1792 = vmatprep.mubr.f32.mxu0 0.0
        %1793 = vmatmul.mubr.f32.gmra.mrb[0].mxu0 %v1489
        %v1794 = vpop.f32.mrb[0].mxu0
        %v1795 = vadd.f32 0.0, %v1794
        %v1796 = vpop.f32.mrb[0].mxu0
        %1797 = vmatprep.mubr.f32.mxu0 0.0
        %1798 = vmatmul.mubr.f32.gmra.mrb[0].mxu0 %v1492
        %v1799 = vpop.f32.mrb[0].mxu0
        %v1800 = vadd.f32 0.0, %v1799
        %v1801 = vpop.f32.mrb[0].mxu0
        %1802 = vmatprep.mubr.f32.mxu0 0.0
        %1803 = vmatmul.mubr.f32.gmra.mrb[0].mxu0 %v1495
        %v1804 = vpop.f32.mrb[0].mxu0
        %v1805 = vadd.f32 0.0, %v1804
        %v1806 = vpop.f32.mrb[0].mxu0
        %1807 = vmatprep.mubr.f32.mxu0 0.0
        %1808 = vmatmul.mubr.f32.gmra.mrb[0].mxu0 %v1498
        %v1809 = vpop.f32.mrb[0].mxu0
        %v1810 = vadd.f32 0.0, %v1809
        %v1811 = vpop.f32.mrb[0].mxu0
        %1812 = vmatprep.mubr.f32.mxu0 0.0
        %1813 = vmatmul.mubr.f32.gmra.mrb[0].mxu0 %v1501
        %v1814 = vpop.f32.mrb[0].mxu0
        %v1815 = vadd.f32 0.0, %v1814
        %v1816 = vpop.f32.mrb[0].mxu0
        %1817 = vmatprep.mubr.f32.mxu0 0.0
        %1818 = vmatmul.mubr.f32.gmra.mrb[0].mxu0 %v1504
        %v1819 = vpop.f32.mrb[0].mxu0
        %v1820 = vadd.f32 0.0, %v1819
        %v1821 = vpop.f32.mrb[0].mxu0
        %1822 = vmatprep.mubr.f32.mxu0 0.0
        %1823 = vmatmul.mubr.f32.gmra.mrb[0].mxu0 %v1507
        %v1824 = vpop.f32.mrb[0].mxu0
        %v1825 = vadd.f32 0.0, %v1824
        %v1826 = vpop.f32.mrb[0].mxu0
        %1827 = vmatprep.mubr.f32.mxu0 0.0
        %1828 = vmatmul.mubr.f32.gmra.mrb[0].mxu0 %v1510
        %v1829 = vpop.f32.mrb[0].mxu0
        %v1830 = vadd.f32 0.0, %v1829
        %v1831 = vpop.f32.mrb[0].mxu0
        %1832 = vmatprep.mubr.f32.mxu0 0.0
        %1833 = vmatmul.mubr.f32.gmra.mrb[0].mxu0 %v1513
        %v1834 = vpop.f32.mrb[0].mxu0
        %v1835 = vadd.f32 0.0, %v1834
        %v1836 = vpop.f32.mrb[0].mxu0
        %1837 = vmatprep.mubr.f32.mxu0 0.0
        %1838 = vmatmul.mubr.f32.gmra.mrb[0].mxu0 %v1516
        %v1839 = vpop.f32.mrb[0].mxu0
        %v1840 = vadd.f32 0.0, %v1839
        %v1841 = vpop.f32.mrb[0].mxu0
        %1842 = vmatprep.mubr.f32.mxu0 0.0
        %1843 = vmatmul.mubr.f32.gmra.mrb[0].mxu0 %v1519
        %v1844 = vpop.f32.mrb[0].mxu0
        %v1845 = vadd.f32 0.0, %v1844
        %v1846 = vpop.f32.mrb[0].mxu0
        %1847 = vmatprep.mubr.f32.mxu0 0.0
        %1848 = vmatmul.mubr.f32.gmra.mrb[0].mxu0 %v1522
        %v1849 = vpop.f32.mrb[0].mxu0
        %v1850 = vadd.f32 0.0, %v1849
        %v1851 = vpop.f32.mrb[0].mxu0
        %1852 = vmatprep.mubr.f32.mxu0 0.0
        %1853 = vmatmul.mubr.f32.gmra.mrb[0].mxu0 %v1525
        %v1854 = vpop.f32.mrb[0].mxu0
        %v1855 = vadd.f32 0.0, %v1854
        %v1856 = vpop.f32.mrb[0].mxu0
        %1857 = vmatprep.mubr.f32.mxu0 0.0
        %1858 = vmatmul.mubr.f32.gmra.mrb[0].mxu0 %v1528
        %v1859 = vpop.f32.mrb[0].mxu0
        %v1860 = vadd.f32 0.0, %v1859
        %v1861 = vpop.f32.mrb[0].mxu0
        %1862 = vmatprep.mubr.f32.mxu0 0.0
        %1863 = vmatmul.mubr.f32.gmra.mrb[0].mxu0 %v1531
        %v1864 = vpop.f32.mrb[0].mxu0
        %v1865 = vadd.f32 0.0, %v1864
        %v1866 = vpop.f32.mrb[0].mxu0
        %1867 = vmatprep.mubr.f32.mxu0 0.0
        %1868 = vmatmul.mubr.f32.gmra.mrb[0].mxu0 %v1534
        %v1869 = vpop.f32.mrb[0].mxu0
        %v1870 = vadd.f32 0.0, %v1869
        %v1871 = vpop.f32.mrb[0].mxu0
        %1872 = vmatprep.mubr.f32.mxu0 0.0
        %1873 = vmatmul.mubr.f32.gmra.mrb[0].mxu0 %v1537
        %v1874 = vpop.f32.mrb[0].mxu0
        %v1875 = vadd.f32 0.0, %v1874
        %v1876 = vpop.f32.mrb[0].mxu0
        %1877 = vmatprep.mubr.f32.mxu0 0.0
        %1878 = vmatmul.mubr.f32.gmra.mrb[0].mxu0 %v1540
        %v1879 = vpop.f32.mrb[0].mxu0
        %v1880 = vadd.f32 0.0, %v1879
        %v1881 = vpop.f32.mrb[0].mxu0
        %1882 = vmatprep.mubr.f32.mxu0 0.0
        %1883 = vmatmul.mubr.f32.gmra.mrb[0].mxu0 %v1543
        %v1884 = vpop.f32.mrb[0].mxu0
        %v1885 = vadd.f32 0.0, %v1884
        %v1886 = vpop.f32.mrb[0].mxu0
        %1887 = vmatprep.mubr.f32.mxu0 0.0
        %1888 = vmatmul.mubr.f32.gmra.mrb[0].mxu0 %v1546
        %v1889 = vpop.f32.mrb[0].mxu0
        %v1890 = vadd.f32 0.0, %v1889
        %v1891 = vpop.f32.mrb[0].mxu0
        %1892 = vmatprep.mubr.f32.mxu0 0.0
        %1893 = vmatmul.mubr.f32.gmra.mrb[0].mxu0 %v1549
        %v1894 = vpop.f32.mrb[0].mxu0
        %v1895 = vadd.f32 0.0, %v1894
        %v1896 = vpop.f32.mrb[0].mxu0
        %1897 = vmatprep.mubr.f32.mxu0 0.0
        %1898 = vmatmul.mubr.f32.gmra.mrb[0].mxu0 %v1552
        %v1899 = vpop.f32.mrb[0].mxu0
        %v1900 = vadd.f32 0.0, %v1899
        %v1901 = vpop.f32.mrb[0].mxu0
        %1902 = vmatprep.mubr.f32.mxu0 0.0
        %1903 = vmatmul.mubr.f32.gmra.mrb[0].mxu0 %v1555
        %v1904 = vpop.f32.mrb[0].mxu0
        %v1905 = vadd.f32 0.0, %v1904
        %v1906 = vpop.f32.mrb[0].mxu0
        %1907 = vmatprep.mubr.f32.mxu0 0.0
        %1908 = vmatmul.mubr.f32.gmra.mrb[0].mxu0 %v1558
        %v1909 = vpop.f32.mrb[0].mxu0
        %v1910 = vadd.f32 0.0, %v1909
        %v1911 = vpop.f32.mrb[0].mxu0
        %1912 = vmatprep.mubr.f32.mxu0 0.0
        %1913 = vmatmul.mubr.f32.gmra.mrb[0].mxu0 %v1561
        %v1914 = vpop.f32.mrb[0].mxu0
        %v1915 = vadd.f32 0.0, %v1914
        %v1916 = vpop.f32.mrb[0].mxu0
        %1917 = vmatprep.mubr.f32.mxu0 0.0
        %1918 = vmatmul.mubr.f32.gmra.mrb[0].mxu0 %v1564
        %v1919 = vpop.f32.mrb[0].mxu0
        %v1920 = vadd.f32 0.0, %v1919
        %v1921 = vpop.f32.mrb[0].mxu0
        %1922 = vmatprep.mubr.f32.mxu0 0.0
        %1923 = vmatmul.mubr.f32.gmra.mrb[0].mxu0 %v1567
        %v1924 = vpop.f32.mrb[0].mxu0
        %v1925 = vadd.f32 0.0, %v1924
        %v1926 = vpop.f32.mrb[0].mxu0
        %1927 = vmatprep.mubr.f32.mxu0 0.0
        %1928 = vmatmul.mubr.f32.gmra.mrb[0].mxu0 %v1570
        %v1929 = vpop.f32.mrb[0].mxu0
        %v1930 = vadd.f32 0.0, %v1929
        %v1931 = vpop.f32.mrb[0].mxu0
        %1932 = vmatprep.mubr.f32.mxu0 0.0
        %1933 = vmatmul.mubr.f32.gmra.mrb[0].mxu0 %v1573
        %v1934 = vpop.f32.mrb[0].mxu0
        %v1935 = vadd.f32 0.0, %v1934
        %v1936 = vpop.f32.mrb[0].mxu0
        %1937 = vmatprep.mubr.f32.mxu0 0.0
        %1938 = vmatmul.mubr.f32.gmra.mrb[0].mxu0 %v1576
        %v1939 = vpop.f32.mrb[0].mxu0
        %v1940 = vadd.f32 0.0, %v1939
        %v1941 = vpop.f32.mrb[0].mxu0
        %1942 = vmatprep.mubr.f32.mxu0 0.0
        %1943 = vmatmul.mubr.f32.gmra.mrb[0].mxu0 %v1579
        %v1944 = vpop.f32.mrb[0].mxu0
        %v1945 = vadd.f32 0.0, %v1944
        %v1946 = vpop.f32.mrb[0].mxu0
        %1947 = vmatprep.mubr.f32.mxu0 0.0
        %1948 = vmatmul.mubr.f32.gmra.mrb[0].mxu0 %v1582
        %v1949 = vpop.f32.mrb[0].mxu0
        %v1950 = vadd.f32 0.0, %v1949
        %v1951 = vpop.f32.mrb[0].mxu0
        %1952 = vmatprep.mubr.f32.mxu0 0.0
        %1953 = vmatmul.mubr.f32.gmra.mrb[0].mxu0 %v1585
        %v1954 = vpop.f32.mrb[0].mxu0
        %v1955 = vadd.f32 0.0, %v1954
        %v1956 = vpop.f32.mrb[0].mxu0
        %1957 = vmatprep.mubr.f32.mxu0 0.0
        %1958 = vmatmul.mubr.f32.gmra.mrb[0].mxu0 %v1588
        %v1959 = vpop.f32.mrb[0].mxu0
        %v1960 = vadd.f32 0.0, %v1959
        %v1961 = vpop.f32.mrb[0].mxu0
        %1962 = vmatprep.mubr.f32.mxu0 0.0
        %1963 = vmatmul.mubr.f32.gmra.mrb[0].mxu0 %v1591
        %v1964 = vpop.f32.mrb[0].mxu0
        %v1965 = vadd.f32 0.0, %v1964
        %v1966 = vpop.f32.mrb[0].mxu0
        %1967 = vmatprep.mubr.f32.mxu0 0.0
        %1968 = vmatmul.mubr.f32.gmra.mrb[0].mxu0 %v1594
        %v1969 = vpop.f32.mrb[0].mxu0
        %v1970 = vadd.f32 0.0, %v1969
        %v1971 = vpop.f32.mrb[0].mxu0
        %1972 = vmatprep.mubr.f32.mxu0 0.0
        %1973 = vmatmul.mubr.f32.gmra.mrb[0].mxu0 %v1597
        %v1974 = vpop.f32.mrb[0].mxu0
        %v1975 = vadd.f32 0.0, %v1974
        %v1976 = vpop.f32.mrb[0].mxu0
        %1977 = vmatprep.mubr.f32.mxu0 0.0
        %1978 = vmatmul.mubr.f32.gmra.mrb[0].mxu0 %v1600
        %v1979 = vpop.f32.mrb[0].mxu0
        %v1980 = vadd.f32 0.0, %v1979
        %v1981 = vpop.f32.mrb[0].mxu0
        %1982 = vmatprep.mubr.f32.mxu0 0.0
        %1983 = vmatmul.mubr.f32.gmra.mrb[0].mxu0 %v1603
        %v1984 = vpop.f32.mrb[0].mxu0
        %v1985 = vadd.f32 0.0, %v1984
        %v1986 = vpop.f32.mrb[0].mxu0
        %1987 = vmatprep.mubr.f32.mxu0 0.0
        %1988 = vmatmul.mubr.f32.gmra.mrb[0].mxu0 %v1606
        %v1989 = vpop.f32.mrb[0].mxu0
        %v1990 = vadd.f32 0.0, %v1989
        %v1991 = vpop.f32.mrb[0].mxu0
        %1992 = vmatprep.mubr.f32.mxu0 0.0
        %1993 = vmatmul.mubr.f32.gmra.mrb[0].mxu0 %v1609
        %v1994 = vpop.f32.mrb[0].mxu0
        %v1995 = vadd.f32 0.0, %v1994
        %v1996 = vpop.f32.mrb[0].mxu0
        %1997 = vmatprep.mubr.f32.mxu0 0.0
        %1998 = vmatmul.mubr.f32.gmra.mrb[0].mxu0 %v1612
        %v1999 = vpop.f32.mrb[0].mxu0
        %v2000 = vadd.f32 0.0, %v1999
        %v2001 = vpop.f32.mrb[0].mxu0
        %2002 = vdwg.mxu0
        %v2003 = vld [vmem:[%s367] sm:$0x1]
        %v2005 = vlaneseq
        %v2006 = vshrl.u32 %v2005, 7
        %v2007 = vsub.s32 0, %v2006
        %v2008 = vrot.slane %v2003, %v2007
        %v2010 = vmul.f32 %v1685, %v2008
        %v2011 = vmul.f32 %v1690, %v2008
        %v2012 = vmul.f32 %v1695, %v2008
        %v2013 = vmul.f32 %v1700, %v2008
        %v2014 = vmul.f32 %v1705, %v2008
        %v2015 = vmul.f32 %v1710, %v2008
        %v2016 = vmul.f32 %v1715, %v2008
        %v2017 = vmul.f32 %v1720, %v2008
        %v2018 = vmul.f32 %v1725, %v2008
        %v2019 = vmul.f32 %v1730, %v2008
        %v2020 = vmul.f32 %v1735, %v2008
        %v2021 = vmul.f32 %v1740, %v2008
        %v2022 = vmul.f32 %v1745, %v2008
        %v2023 = vmul.f32 %v1750, %v2008
        %v2024 = vmul.f32 %v1755, %v2008
        %v2025 = vmul.f32 %v1760, %v2008
        %v2026 = vmul.f32 %v1765, %v2008
        %v2027 = vmul.f32 %v1770, %v2008
        %v2028 = vmul.f32 %v1775, %v2008
        %v2029 = vmul.f32 %v1780, %v2008
        %v2030 = vmul.f32 %v1785, %v2008
        %v2031 = vmul.f32 %v1790, %v2008
        %v2032 = vmul.f32 %v1795, %v2008
        %v2033 = vmul.f32 %v1800, %v2008
        %v2034 = vmul.f32 %v1805, %v2008
        %v2035 = vmul.f32 %v1810, %v2008
        %v2036 = vmul.f32 %v1815, %v2008
        %v2037 = vmul.f32 %v1820, %v2008
        %v2038 = vmul.f32 %v1825, %v2008
        %v2039 = vmul.f32 %v1830, %v2008
        %v2040 = vmul.f32 %v1835, %v2008
        %v2041 = vmul.f32 %v1840, %v2008
        %v2042 = vmul.f32 %v1845, %v2008
        %v2043 = vmul.f32 %v1850, %v2008
        %v2044 = vmul.f32 %v1855, %v2008
        %v2045 = vmul.f32 %v1860, %v2008
        %v2046 = vmul.f32 %v1865, %v2008
        %v2047 = vmul.f32 %v1870, %v2008
        %v2048 = vmul.f32 %v1875, %v2008
        %v2049 = vmul.f32 %v1880, %v2008
        %v2050 = vmul.f32 %v1885, %v2008
        %v2051 = vmul.f32 %v1890, %v2008
        %v2052 = vmul.f32 %v1895, %v2008
        %v2053 = vmul.f32 %v1900, %v2008
        %v2054 = vmul.f32 %v1905, %v2008
        %v2055 = vmul.f32 %v1910, %v2008
        %v2056 = vmul.f32 %v1915, %v2008
        %v2057 = vmul.f32 %v1920, %v2008
        %v2058 = vmul.f32 %v1925, %v2008
        %v2059 = vmul.f32 %v1930, %v2008
        %v2060 = vmul.f32 %v1935, %v2008
        %v2061 = vmul.f32 %v1940, %v2008
        %v2062 = vmul.f32 %v1945, %v2008
        %v2063 = vmul.f32 %v1950, %v2008
        %v2064 = vmul.f32 %v1955, %v2008
        %v2065 = vmul.f32 %v1960, %v2008
        %v2066 = vmul.f32 %v1965, %v2008
        %v2067 = vmul.f32 %v1970, %v2008
        %v2068 = vmul.f32 %v1975, %v2008
        %v2069 = vmul.f32 %v1980, %v2008
        %v2070 = vmul.f32 %v1985, %v2008
        %v2071 = vmul.f32 %v1990, %v2008
        %v2072 = vmul.f32 %v1995, %v2008
        %v2073 = vmul.f32 %v2000, %v2008
        %v2074 = vld [vmem:[%s370] sm:$0x1]
        %v2076 = vlaneseq
        %v2077 = vshrl.u32 %v2076, 7
        %v2078 = vsub.s32 0, %v2077
        %v2079 = vrot.slane %v2074, %v2078
        %v2081 = vadd.f32 %v2010, %v2079
        %v2082 = vadd.f32 %v2011, %v2079
        %v2083 = vadd.f32 %v2012, %v2079
        %v2084 = vadd.f32 %v2013, %v2079
        %v2085 = vadd.f32 %v2014, %v2079
        %v2086 = vadd.f32 %v2015, %v2079
        %v2087 = vadd.f32 %v2016, %v2079
        %v2088 = vadd.f32 %v2017, %v2079
        %v2089 = vadd.f32 %v2018, %v2079
        %v2090 = vadd.f32 %v2019, %v2079
        %v2091 = vadd.f32 %v2020, %v2079
        %v2092 = vadd.f32 %v2021, %v2079
        %v2093 = vadd.f32 %v2022, %v2079
        %v2094 = vadd.f32 %v2023, %v2079
        %v2095 = vadd.f32 %v2024, %v2079
        %v2096 = vadd.f32 %v2025, %v2079
        %v2097 = vadd.f32 %v2026, %v2079
        %v2098 = vadd.f32 %v2027, %v2079
        %v2099 = vadd.f32 %v2028, %v2079
        %v2100 = vadd.f32 %v2029, %v2079
        %v2101 = vadd.f32 %v2030, %v2079
        %v2102 = vadd.f32 %v2031, %v2079
        %v2103 = vadd.f32 %v2032, %v2079
        %v2104 = vadd.f32 %v2033, %v2079
        %v2105 = vadd.f32 %v2034, %v2079
        %v2106 = vadd.f32 %v2035, %v2079
        %v2107 = vadd.f32 %v2036, %v2079
        %v2108 = vadd.f32 %v2037, %v2079
        %v2109 = vadd.f32 %v2038, %v2079
        %v2110 = vadd.f32 %v2039, %v2079
        %v2111 = vadd.f32 %v2040, %v2079
        %v2112 = vadd.f32 %v2041, %v2079
        %v2113 = vadd.f32 %v2042, %v2079
        %v2114 = vadd.f32 %v2043, %v2079
        %v2115 = vadd.f32 %v2044, %v2079
        %v2116 = vadd.f32 %v2045, %v2079
        %v2117 = vadd.f32 %v2046, %v2079
        %v2118 = vadd.f32 %v2047, %v2079
        %v2119 = vadd.f32 %v2048, %v2079
        %v2120 = vadd.f32 %v2049, %v2079
        %v2121 = vadd.f32 %v2050, %v2079
        %v2122 = vadd.f32 %v2051, %v2079
        %v2123 = vadd.f32 %v2052, %v2079
        %v2124 = vadd.f32 %v2053, %v2079
        %v2125 = vadd.f32 %v2054, %v2079
        %v2126 = vadd.f32 %v2055, %v2079
        %v2127 = vadd.f32 %v2056, %v2079
        %v2128 = vadd.f32 %v2057, %v2079
        %v2129 = vadd.f32 %v2058, %v2079
        %v2130 = vadd.f32 %v2059, %v2079
        %v2131 = vadd.f32 %v2060, %v2079
        %v2132 = vadd.f32 %v2061, %v2079
        %v2133 = vadd.f32 %v2062, %v2079
        %v2134 = vadd.f32 %v2063, %v2079
        %v2135 = vadd.f32 %v2064, %v2079
        %v2136 = vadd.f32 %v2065, %v2079
        %v2137 = vadd.f32 %v2066, %v2079
        %v2138 = vadd.f32 %v2067, %v2079
        %v2139 = vadd.f32 %v2068, %v2079
        %v2140 = vadd.f32 %v2069, %v2079
        %v2141 = vadd.f32 %v2070, %v2079
        %v2142 = vadd.f32 %v2071, %v2079
        %v2143 = vadd.f32 %v2072, %v2079
        %v2144 = vadd.f32 %v2073, %v2079
        %v2145 = vmax.f32 %v2081, 0.0
        %v2146 = vmax.f32 %v2082, 0.0
        %v2147 = vmax.f32 %v2083, 0.0
        %v2148 = vmax.f32 %v2084, 0.0
        %v2149 = vmax.f32 %v2085, 0.0
        %v2150 = vmax.f32 %v2086, 0.0
        %v2151 = vmax.f32 %v2087, 0.0
        %v2152 = vmax.f32 %v2088, 0.0
        %v2153 = vmax.f32 %v2089, 0.0
        %v2154 = vmax.f32 %v2090, 0.0
        %v2155 = vmax.f32 %v2091, 0.0
        %v2156 = vmax.f32 %v2092, 0.0
        %v2157 = vmax.f32 %v2093, 0.0
        %v2158 = vmax.f32 %v2094, 0.0
        %v2159 = vmax.f32 %v2095, 0.0
        %v2160 = vmax.f32 %v2096, 0.0
        %v2161 = vmax.f32 %v2097, 0.0
        %v2162 = vmax.f32 %v2098, 0.0
        %v2163 = vmax.f32 %v2099, 0.0
        %v2164 = vmax.f32 %v2100, 0.0
        %v2165 = vmax.f32 %v2101, 0.0
        %v2166 = vmax.f32 %v2102, 0.0
        %v2167 = vmax.f32 %v2103, 0.0
        %v2168 = vmax.f32 %v2104, 0.0
        %v2169 = vmax.f32 %v2105, 0.0
        %v2170 = vmax.f32 %v2106, 0.0
        %v2171 = vmax.f32 %v2107, 0.0
        %v2172 = vmax.f32 %v2108, 0.0
        %v2173 = vmax.f32 %v2109, 0.0
        %v2174 = vmax.f32 %v2110, 0.0
        %v2175 = vmax.f32 %v2111, 0.0
        %v2176 = vmax.f32 %v2112, 0.0
        %v2177 = vmax.f32 %v2113, 0.0
        %v2178 = vmax.f32 %v2114, 0.0
        %v2179 = vmax.f32 %v2115, 0.0
        %v2180 = vmax.f32 %v2116, 0.0
        %v2181 = vmax.f32 %v2117, 0.0
        %v2182 = vmax.f32 %v2118, 0.0
        %v2183 = vmax.f32 %v2119, 0.0
        %v2184 = vmax.f32 %v2120, 0.0
        %v2185 = vmax.f32 %v2121, 0.0
        %v2186 = vmax.f32 %v2122, 0.0
        %v2187 = vmax.f32 %v2123, 0.0
        %v2188 = vmax.f32 %v2124, 0.0
        %v2189 = vmax.f32 %v2125, 0.0
        %v2190 = vmax.f32 %v2126, 0.0
        %v2191 = vmax.f32 %v2127, 0.0
        %v2192 = vmax.f32 %v2128, 0.0
        %v2193 = vmax.f32 %v2129, 0.0
        %v2194 = vmax.f32 %v2130, 0.0
        %v2195 = vmax.f32 %v2131, 0.0
        %v2196 = vmax.f32 %v2132, 0.0
        %v2197 = vmax.f32 %v2133, 0.0
        %v2198 = vmax.f32 %v2134, 0.0
        %v2199 = vmax.f32 %v2135, 0.0
        %v2200 = vmax.f32 %v2136, 0.0
        %v2201 = vmax.f32 %v2137, 0.0
        %v2202 = vmax.f32 %v2138, 0.0
        %v2203 = vmax.f32 %v2139, 0.0
        %v2204 = vmax.f32 %v2140, 0.0
        %v2205 = vmax.f32 %v2141, 0.0
        %v2206 = vmax.f32 %v2142, 0.0
        %v2207 = vmax.f32 %v2143, 0.0
        %v2208 = vmax.f32 %v2144, 0.0
        %s2209 = sld [smem:[#allocation2 + $0x1]]
        %v2210 = vmin.f32 %v2081, 0.0
        %v2211 = vmin.f32 %v2082, 0.0
        %v2212 = vmin.f32 %v2083, 0.0
        %v2213 = vmin.f32 %v2084, 0.0
        %v2214 = vmin.f32 %v2085, 0.0
        %v2215 = vmin.f32 %v2086, 0.0
        %v2216 = vmin.f32 %v2087, 0.0
        %v2217 = vmin.f32 %v2088, 0.0
        %v2218 = vmin.f32 %v2089, 0.0
        %v2219 = vmin.f32 %v2090, 0.0
        %v2220 = vmin.f32 %v2091, 0.0
        %v2221 = vmin.f32 %v2092, 0.0
        %v2222 = vmin.f32 %v2093, 0.0
        %v2223 = vmin.f32 %v2094, 0.0
        %v2224 = vmin.f32 %v2095, 0.0
        %v2225 = vmin.f32 %v2096, 0.0
        %v2226 = vmin.f32 %v2097, 0.0
        %v2227 = vmin.f32 %v2098, 0.0
        %v2228 = vmin.f32 %v2099, 0.0
        %v2229 = vmin.f32 %v2100, 0.0
        %v2230 = vmin.f32 %v2101, 0.0
        %v2231 = vmin.f32 %v2102, 0.0
        %v2232 = vmin.f32 %v2103, 0.0
        %v2233 = vmin.f32 %v2104, 0.0
        %v2234 = vmin.f32 %v2105, 0.0
        %v2235 = vmin.f32 %v2106, 0.0
        %v2236 = vmin.f32 %v2107, 0.0
        %v2237 = vmin.f32 %v2108, 0.0
        %v2238 = vmin.f32 %v2109, 0.0
        %v2239 = vmin.f32 %v2110, 0.0
        %v2240 = vmin.f32 %v2111, 0.0
        %v2241 = vmin.f32 %v2112, 0.0
        %v2242 = vmin.f32 %v2113, 0.0
        %v2243 = vmin.f32 %v2114, 0.0
        %v2244 = vmin.f32 %v2115, 0.0
        %v2245 = vmin.f32 %v2116, 0.0
        %v2246 = vmin.f32 %v2117, 0.0
        %v2247 = vmin.f32 %v2118, 0.0
        %v2248 = vmin.f32 %v2119, 0.0
        %v2249 = vmin.f32 %v2120, 0.0
        %v2250 = vmin.f32 %v2121, 0.0
        %v2251 = vmin.f32 %v2122, 0.0
        %v2252 = vmin.f32 %v2123, 0.0
        %v2253 = vmin.f32 %v2124, 0.0
        %v2254 = vmin.f32 %v2125, 0.0
        %v2255 = vmin.f32 %v2126, 0.0
        %v2256 = vmin.f32 %v2127, 0.0
        %v2257 = vmin.f32 %v2128, 0.0
        %v2258 = vmin.f32 %v2129, 0.0
        %v2259 = vmin.f32 %v2130, 0.0
        %v2260 = vmin.f32 %v2131, 0.0
        %v2261 = vmin.f32 %v2132, 0.0
        %v2262 = vmin.f32 %v2133, 0.0
        %v2263 = vmin.f32 %v2134, 0.0
        %v2264 = vmin.f32 %v2135, 0.0
        %v2265 = vmin.f32 %v2136, 0.0
        %v2266 = vmin.f32 %v2137, 0.0
        %v2267 = vmin.f32 %v2138, 0.0
        %v2268 = vmin.f32 %v2139, 0.0
        %v2269 = vmin.f32 %v2140, 0.0
        %v2270 = vmin.f32 %v2141, 0.0
        %v2271 = vmin.f32 %v2142, 0.0
        %v2272 = vmin.f32 %v2143, 0.0
        %v2273 = vmin.f32 %v2144, 0.0
        %v2274 = vstv %s2209
        %v2275 = vmul.f32 %v2274, %v2210
        %v2276 = vmul.f32 %v2274, %v2211
        %v2277 = vmul.f32 %v2274, %v2212
        %v2278 = vmul.f32 %v2274, %v2213
        %v2279 = vmul.f32 %v2274, %v2214
        %v2280 = vmul.f32 %v2274, %v2215
        %v2281 = vmul.f32 %v2274, %v2216
        %v2282 = vmul.f32 %v2274, %v2217
        %v2283 = vmul.f32 %v2274, %v2218
        %v2284 = vmul.f32 %v2274, %v2219
        %v2285 = vmul.f32 %v2274, %v2220
        %v2286 = vmul.f32 %v2274, %v2221
        %v2287 = vmul.f32 %v2274, %v2222
        %v2288 = vmul.f32 %v2274, %v2223
        %v2289 = vmul.f32 %v2274, %v2224
        %v2290 = vmul.f32 %v2274, %v2225
        %v2291 = vmul.f32 %v2274, %v2226
        %v2292 = vmul.f32 %v2274, %v2227
        %v2293 = vmul.f32 %v2274, %v2228
        %v2294 = vmul.f32 %v2274, %v2229
        %v2295 = vmul.f32 %v2274, %v2230
        %v2296 = vmul.f32 %v2274, %v2231
        %v2297 = vmul.f32 %v2274, %v2232
        %v2298 = vmul.f32 %v2274, %v2233
        %v2299 = vmul.f32 %v2274, %v2234
        %v2300 = vmul.f32 %v2274, %v2235
        %v2301 = vmul.f32 %v2274, %v2236
        %v2302 = vmul.f32 %v2274, %v2237
        %v2303 = vmul.f32 %v2274, %v2238
        %v2304 = vmul.f32 %v2274, %v2239
        %v2305 = vmul.f32 %v2274, %v2240
        %v2306 = vmul.f32 %v2274, %v2241
        %v2307 = vmul.f32 %v2274, %v2242
        %v2308 = vmul.f32 %v2274, %v2243
        %v2309 = vmul.f32 %v2274, %v2244
        %v2310 = vmul.f32 %v2274, %v2245
        %v2311 = vmul.f32 %v2274, %v2246
        %v2312 = vmul.f32 %v2274, %v2247
        %v2313 = vmul.f32 %v2274, %v2248
        %v2314 = vmul.f32 %v2274, %v2249
        %v2315 = vmul.f32 %v2274, %v2250
        %v2316 = vmul.f32 %v2274, %v2251
        %v2317 = vmul.f32 %v2274, %v2252
        %v2318 = vmul.f32 %v2274, %v2253
        %v2319 = vmul.f32 %v2274, %v2254
        %v2320 = vmul.f32 %v2274, %v2255
        %v2321 = vmul.f32 %v2274, %v2256
        %v2322 = vmul.f32 %v2274, %v2257
        %v2323 = vmul.f32 %v2274, %v2258
        %v2324 = vmul.f32 %v2274, %v2259
        %v2325 = vmul.f32 %v2274, %v2260
        %v2326 = vmul.f32 %v2274, %v2261
        %v2327 = vmul.f32 %v2274, %v2262
        %v2328 = vmul.f32 %v2274, %v2263
        %v2329 = vmul.f32 %v2274, %v2264
        %v2330 = vmul.f32 %v2274, %v2265
        %v2331 = vmul.f32 %v2274, %v2266
        %v2332 = vmul.f32 %v2274, %v2267
        %v2333 = vmul.f32 %v2274, %v2268
        %v2334 = vmul.f32 %v2274, %v2269
        %v2335 = vmul.f32 %v2274, %v2270
        %v2336 = vmul.f32 %v2274, %v2271
        %v2337 = vmul.f32 %v2274, %v2272
        %v2338 = vmul.f32 %v2274, %v2273
        %v2339 = vadd.f32 %v2145, %v2275
        %v2340 = vadd.f32 %v2146, %v2276
        %v2341 = vadd.f32 %v2147, %v2277
        %v2342 = vadd.f32 %v2148, %v2278
        %v2343 = vadd.f32 %v2149, %v2279
        %v2344 = vadd.f32 %v2150, %v2280
        %v2345 = vadd.f32 %v2151, %v2281
        %v2346 = vadd.f32 %v2152, %v2282
        %v2347 = vadd.f32 %v2153, %v2283
        %v2348 = vadd.f32 %v2154, %v2284
        %v2349 = vadd.f32 %v2155, %v2285
        %v2350 = vadd.f32 %v2156, %v2286
        %v2351 = vadd.f32 %v2157, %v2287
        %v2352 = vadd.f32 %v2158, %v2288
        %v2353 = vadd.f32 %v2159, %v2289
        %v2354 = vadd.f32 %v2160, %v2290
        %v2355 = vadd.f32 %v2161, %v2291
        %v2356 = vadd.f32 %v2162, %v2292
        %v2357 = vadd.f32 %v2163, %v2293
        %v2358 = vadd.f32 %v2164, %v2294
        %v2359 = vadd.f32 %v2165, %v2295
        %v2360 = vadd.f32 %v2166, %v2296
        %v2361 = vadd.f32 %v2167, %v2297
        %v2362 = vadd.f32 %v2168, %v2298
        %v2363 = vadd.f32 %v2169, %v2299
        %v2364 = vadd.f32 %v2170, %v2300
        %v2365 = vadd.f32 %v2171, %v2301
        %v2366 = vadd.f32 %v2172, %v2302
        %v2367 = vadd.f32 %v2173, %v2303
        %v2368 = vadd.f32 %v2174, %v2304
        %v2369 = vadd.f32 %v2175, %v2305
        %v2370 = vadd.f32 %v2176, %v2306
        %v2371 = vadd.f32 %v2177, %v2307
        %v2372 = vadd.f32 %v2178, %v2308
        %v2373 = vadd.f32 %v2179, %v2309
        %v2374 = vadd.f32 %v2180, %v2310
        %v2375 = vadd.f32 %v2181, %v2311
        %v2376 = vadd.f32 %v2182, %v2312
        %v2377 = vadd.f32 %v2183, %v2313
        %v2378 = vadd.f32 %v2184, %v2314
        %v2379 = vadd.f32 %v2185, %v2315
        %v2380 = vadd.f32 %v2186, %v2316
        %v2381 = vadd.f32 %v2187, %v2317
        %v2382 = vadd.f32 %v2188, %v2318
        %v2383 = vadd.f32 %v2189, %v2319
        %v2384 = vadd.f32 %v2190, %v2320
        %v2385 = vadd.f32 %v2191, %v2321
        %v2386 = vadd.f32 %v2192, %v2322
        %v2387 = vadd.f32 %v2193, %v2323
        %v2388 = vadd.f32 %v2194, %v2324
        %v2389 = vadd.f32 %v2195, %v2325
        %v2390 = vadd.f32 %v2196, %v2326
        %v2391 = vadd.f32 %v2197, %v2327
        %v2392 = vadd.f32 %v2198, %v2328
        %v2393 = vadd.f32 %v2199, %v2329
        %v2394 = vadd.f32 %v2200, %v2330
        %v2395 = vadd.f32 %v2201, %v2331
        %v2396 = vadd.f32 %v2202, %v2332
        %v2397 = vadd.f32 %v2203, %v2333
        %v2398 = vadd.f32 %v2204, %v2334
        %v2399 = vadd.f32 %v2205, %v2335
        %v2400 = vadd.f32 %v2206, %v2336
        %v2401 = vadd.f32 %v2207, %v2337
        %v2402 = vadd.f32 %v2208, %v2338
        %vm2403 = vcmask 7168
        %2404 = vst.msk [vmem:[%s375] sm:$0xff] %vm2403, %v2339
        %2405 = vst.msk [vmem:[%s375 + $0x8] sm:$0xff] %vm2403, %v2340
        %2406 = vst.msk [vmem:[%s375 + $0x10] sm:$0xff] %vm2403, %v2341
        %2407 = vst.msk [vmem:[%s375 + $0x18] sm:$0xff] %vm2403, %v2342
        %2408 = vst.msk [vmem:[%s375 + $0x20] sm:$0xff] %vm2403, %v2343
        %2409 = vst.msk [vmem:[%s375 + $0x28] sm:$0xff] %vm2403, %v2344
        %2410 = vst.msk [vmem:[%s375 + $0x30] sm:$0xff] %vm2403, %v2345
        %2411 = vst.msk [vmem:[%s375 + $0x38] sm:$0xff] %vm2403, %v2346
        %2412 = vst.msk [vmem:[%s375 + $0x40] sm:$0xff] %vm2403, %v2347
        %2413 = vst.msk [vmem:[%s375 + $0x48] sm:$0xff] %vm2403, %v2348
        %2414 = vst.msk [vmem:[%s375 + $0x50] sm:$0xff] %vm2403, %v2349
        %2415 = vst.msk [vmem:[%s375 + $0x58] sm:$0xff] %vm2403, %v2350
        %2416 = vst.msk [vmem:[%s375 + $0x60] sm:$0xff] %vm2403, %v2351
        %2417 = vst.msk [vmem:[%s375 + $0x68] sm:$0xff] %vm2403, %v2352
        %2418 = vst.msk [vmem:[%s375 + $0x70] sm:$0xff] %vm2403, %v2353
        %2419 = vst.msk [vmem:[%s375 + $0x78] sm:$0xff] %vm2403, %v2354
        %2420 = vst.msk [vmem:[%s375 + $0x80] sm:$0xff] %vm2403, %v2355
        %2421 = vst.msk [vmem:[%s375 + $0x88] sm:$0xff] %vm2403, %v2356
        %2422 = vst.msk [vmem:[%s375 + $0x90] sm:$0xff] %vm2403, %v2357
        %2423 = vst.msk [vmem:[%s375 + $0x98] sm:$0xff] %vm2403, %v2358
        %2424 = vst.msk [vmem:[%s375 + $0xa0] sm:$0xff] %vm2403, %v2359
        %2425 = vst.msk [vmem:[%s375 + $0xa8] sm:$0xff] %vm2403, %v2360
        %2426 = vst.msk [vmem:[%s375 + $0xb0] sm:$0xff] %vm2403, %v2361
        %2427 = vst.msk [vmem:[%s375 + $0xb8] sm:$0xff] %vm2403, %v2362
        %2428 = vst.msk [vmem:[%s375 + $0xc0] sm:$0xff] %vm2403, %v2363
        %2429 = vst.msk [vmem:[%s375 + $0xc8] sm:$0xff] %vm2403, %v2364
        %2430 = vst.msk [vmem:[%s375 + $0xd0] sm:$0xff] %vm2403, %v2365
        %2431 = vst.msk [vmem:[%s375 + $0xd8] sm:$0xff] %vm2403, %v2366
        %2432 = vst.msk [vmem:[%s375 + $0xe0] sm:$0xff] %vm2403, %v2367
        %2433 = vst.msk [vmem:[%s375 + $0xe8] sm:$0xff] %vm2403, %v2368
        %2434 = vst.msk [vmem:[%s375 + $0xf0] sm:$0xff] %vm2403, %v2369
        %2435 = vst.msk [vmem:[%s375 + $0xf8] sm:$0xff] %vm2403, %v2370
        %2436 = vst.msk [vmem:[%s375 + $0x100] sm:$0xff] %vm2403, %v2371
        %2437 = vst.msk [vmem:[%s375 + $0x108] sm:$0xff] %vm2403, %v2372
        %2438 = vst.msk [vmem:[%s375 + $0x110] sm:$0xff] %vm2403, %v2373
        %2439 = vst.msk [vmem:[%s375 + $0x118] sm:$0xff] %vm2403, %v2374
        %2440 = vst.msk [vmem:[%s375 + $0x120] sm:$0xff] %vm2403, %v2375
        %2441 = vst.msk [vmem:[%s375 + $0x128] sm:$0xff] %vm2403, %v2376
        %2442 = vst.msk [vmem:[%s375 + $0x130] sm:$0xff] %vm2403, %v2377
        %2443 = vst.msk [vmem:[%s375 + $0x138] sm:$0xff] %vm2403, %v2378
        %2444 = vst.msk [vmem:[%s375 + $0x140] sm:$0xff] %vm2403, %v2379
        %2445 = vst.msk [vmem:[%s375 + $0x148] sm:$0xff] %vm2403, %v2380
        %2446 = vst.msk [vmem:[%s375 + $0x150] sm:$0xff] %vm2403, %v2381
        %2447 = vst.msk [vmem:[%s375 + $0x158] sm:$0xff] %vm2403, %v2382
        %2448 = vst.msk [vmem:[%s375 + $0x160] sm:$0xff] %vm2403, %v2383
        %2449 = vst.msk [vmem:[%s375 + $0x168] sm:$0xff] %vm2403, %v2384
        %2450 = vst.msk [vmem:[%s375 + $0x170] sm:$0xff] %vm2403, %v2385
        %2451 = vst.msk [vmem:[%s375 + $0x178] sm:$0xff] %vm2403, %v2386
        %2452 = vst.msk [vmem:[%s375 + $0x180] sm:$0xff] %vm2403, %v2387
        %2453 = vst.msk [vmem:[%s375 + $0x188] sm:$0xff] %vm2403, %v2388
        %2454 = vst.msk [vmem:[%s375 + $0x190] sm:$0xff] %vm2403, %v2389
        %2455 = vst.msk [vmem:[%s375 + $0x198] sm:$0xff] %vm2403, %v2390
        %2456 = vst.msk [vmem:[%s375 + $0x1a0] sm:$0xff] %vm2403, %v2391
        %2457 = vst.msk [vmem:[%s375 + $0x1a8] sm:$0xff] %vm2403, %v2392
        %2458 = vst.msk [vmem:[%s375 + $0x1b0] sm:$0xff] %vm2403, %v2393
        %2459 = vst.msk [vmem:[%s375 + $0x1b8] sm:$0xff] %vm2403, %v2394
        %2460 = vst.msk [vmem:[%s375 + $0x1c0] sm:$0xff] %vm2403, %v2395
        %2461 = vst.msk [vmem:[%s375 + $0x1c8] sm:$0xff] %vm2403, %v2396
        %2462 = vst.msk [vmem:[%s375 + $0x1d0] sm:$0xff] %vm2403, %v2397
        %2463 = vst.msk [vmem:[%s375 + $0x1d8] sm:$0xff] %vm2403, %v2398
        %2464 = vst.msk [vmem:[%s375 + $0x1e0] sm:$0xff] %vm2403, %v2399
        %2465 = vst.msk [vmem:[%s375 + $0x1e8] sm:$0xff] %vm2403, %v2400
        %2466 = vst.msk [vmem:[%s375 + $0x1f0] sm:$0xff] %vm2403, %v2401
        %2467 = vst.msk [vmem:[%s375 + $0x1f8] sm:$0xff] %vm2403, %v2402
        %p2468 = scmp.lt.s32.totalorder %s20, 1
        %s2469 = scalar_select %p2468, %s20, 1
        %s2470 = smul.addr %s2469, 64
        %s2471 = smul.addr %s2470, 8
        %s2472 = scalar_lea.vmem %s8, %s2471
        // Predicated region
        $region57: #{forward.19} parent=51 // pred_check
          %p2473 = pneg %p231
        $region58: #{forward.19} parent=51 // pred_check_branch
          %2475 = sbr.rel (%p2473) target = $region60
        $region59: #{forward.19} parent=51 // pred_region
          _
        $region60: #{forward.19} parent=51 // pred_fallthru
          _
      $region52: #{forward.19} parent=5 // pred_fallthru
        _
      %p2476 = scmp.le.s32.totalorder 2, %s15
      // Predicated region
      $region61: #{forward.19} parent=5 // pred_check
        %p2477 = pneg %p2476
      $region62: #{forward.19} parent=5 // pred_check_branch
        %2479 = sbr.rel (%p2477) target = $region64
      $region63: #{forward.19} parent=5 // pred_region
        %s2480 = ssub.s32 %s15, 2
        // Predicated region
        $region65: #{forward.19} parent=63 // pred_check
          %p2481 = pneg %p237
        $region66: #{forward.19} parent=63 // pred_check_branch
          %2483 = sbr.rel (%p2481) target = $region68
        $region67: #{forward.19} parent=63 // pred_region
          %p2484 = scmp.lt.s32.totalorder %s21, 1
          %s2485 = scalar_select %p2484, %s21, 1
          %s2486 = smul.addr %s2485, 64
          %s2487 = smul.addr %s2486, 8
          %s2488 = scalar_lea.vmem %s8, %s2487
        $region68: #{forward.19} parent=63 // pred_fallthru
          _
      $region64: #{forward.19} parent=5 // pred_fallthru
        _
    $region6: #{forward.19} parent=1 // loop_footer
      %s19 = sadd.s32 1, %s15
    $region7: #{forward.19} parent=1 // loop_footer_branch
      %14 = sbr.rel target = $region3
    $region8: #{forward.19} parent=1 // loop_exit
      _
    %2489 = vsyncpa [#allocation3], 1
    %s2490 = scalar_lea.sflag [#allocation3], 1
    %2491 = vsyncpa %s2490, 1

</llo_original>
